<compile_context>
chip_gen: v7x
topology: tpu7x:2x2x1
jax: 0.10.0
libtpu: 0.0.40
codegen_flags: <defaults>
</compile_context>

<pallas_src>
import functools

import jax
import jax.numpy as jnp
from jax.experimental import pallas as pl
from jax.experimental.pallas import tpu as pltpu

EPS = 1e-5


@functools.lru_cache(maxsize=None)
def _vmem_limit_bytes():
    # Chip-derived scoped VMEM budget: 75% of physical, capped, with a sane
    # fallback if the query is unavailable.
    try:
        cap = int(pltpu.get_tpu_info().vmem_capacity_bytes)
        return max(32 * 1024 * 1024, min(cap * 3 // 4, 100 * 1024 * 1024))
    except Exception:
        return 48 * 1024 * 1024


def _cparams(n_grid_axes):
    return pltpu.CompilerParams(
        dimension_semantics=("parallel",) * n_grid_axes,
        vmem_limit_bytes=_vmem_limit_bytes(),
    )


def _round_up(x, m):
    return (x + m - 1) // m * m


def _pad_rows(a, mpad):
    m = a.shape[0]
    if m == mpad:
        return a
    return jnp.pad(a, ((0, mpad - m), (0, 0)))


def _pick_mt(m, cap=1024):
    """M-tile for the 2-D (row-major) passes; prefers a divisor of m (no pad)."""
    if m <= cap:
        return m
    for t in range(cap, 7, -1):
        if t % 8 == 0 and m % t == 0:
            return t
    return cap


def _pick_rowblock(h):
    """Row-block for the conv / pool kernels (divisor of H, at most 8 rows)."""
    if h <= 8:
        return h
    for cand in range(8, 0, -1):
        if h % cand == 0:
            return cand
    return h


# ---------------------------------------------------------------------------
# Pallas kernels
# ---------------------------------------------------------------------------
def _matmul1x1_stats_kernel(x_ref, w_ref, y_ref, stats_ref):
    """Fused 1x1 convs as one matmul over an M-tile + per-tile channel stats."""
    acc = jnp.dot(x_ref[...], w_ref[...], preferred_element_type=jnp.float32)
    y_ref[...] = acc.astype(y_ref.dtype)
    stats_ref[0, 0:1, :] = jnp.sum(acc, axis=0, keepdims=True)
    stats_ref[0, 1:2, :] = jnp.sum(acc * acc, axis=0, keepdims=True)


def _conv_kxk_stats_kernel(x_ref, w_ref, y_ref, stats_ref, *, k, hb, W):
    """Implicit-im2col k x k conv for one (image, row-block).

    x_ref: (1, H+k-1, W+k-1, Cin) bf16 (zero-padded image; same block across
           the row-grid axis, so it is DMA'd once per image).
    w_ref: (k, k*Cin, Cout) bf16 -- the k dx-taps of each kernel row are packed
           along the contraction dim (fatter matmuls -> better MXU fill).
    """
    j = pl.program_id(1)
    cin = x_ref.shape[-1]
    cout = y_ref.shape[-1]
    row0 = j * hb
    acc = jnp.zeros((hb * W, cout), jnp.float32)
    for dy in range(k):
        # Ref-level slices (static along W) -> strided loads, no f32 cast.
        taps = [x_ref[0, pl.ds(row0 + dy, hb), dx:dx + W, :] for dx in range(k)]
        xt = jnp.concatenate(taps, axis=-1).reshape(hb * W, k * cin)
        acc = acc + jnp.dot(xt, w_ref[dy], preferred_element_type=jnp.float32)
    y_ref[0] = acc.reshape(hb, W, cout).astype(y_ref.dtype)
    stats_ref[0, 0, 0:1, :] = jnp.sum(acc, axis=0, keepdims=True)
    stats_ref[0, 0, 1:2, :] = jnp.sum(acc * acc, axis=0, keepdims=True)


def _pool_conv_stats_kernel(x_ref, w_ref, y_ref, stats_ref, *, hb, W):
    """Fused 3x3/stride-1 max-pool (-inf padded input) + 1x1 conv + stats.

    Max compares run in bf16 (exact for max); on v5e (no bf16 VALU) an f32
    compare tree may be preferable.
    """
    j = pl.program_id(1)
    cin = x_ref.shape[-1]
    cout = y_ref.shape[-1]
    row0 = j * hb
    m = x_ref[0, pl.ds(row0, hb), 0:W, :]
    for dy in range(3):
        for dx in range(3):
            if dy == 0 and dx == 0:
                continue
            m = jnp.maximum(m, x_ref[0, pl.ds(row0 + dy, hb), dx:dx + W, :])
    pooled = m.reshape(hb * W, cin)
    acc = jnp.dot(pooled, w_ref[...], preferred_element_type=jnp.float32)
    y_ref[0] = acc.reshape(hb, W, cout).astype(y_ref.dtype)
    stats_ref[0, 0, 0:1, :] = jnp.sum(acc, axis=0, keepdims=True)
    stats_ref[0, 0, 1:2, :] = jnp.sum(acc * acc, axis=0, keepdims=True)


def _bn_relu_reduce_kernel(y_ref, scale_ref, shift_ref, o2_ref, o3_ref, *, c1, c2):
    """BN+ReLU on the two reduce branches of the fused 1x1 output (bf16 out).
    Branch1 is handled later in the concat pass (no extra HBM round trip)."""
    y = y_ref[...].astype(jnp.float32)[:, c1:]
    a = jnp.maximum(y * scale_ref[...] + shift_ref[...], 0.0)
    o2_ref[...] = a[:, :c2].astype(o2_ref.dtype)
    o3_ref[...] = a[:, c2:].astype(o3_ref.dtype)


def _bn_relu_concat_kernel(yf_ref, s1_ref, t1_ref,
                           y2_ref, s2_ref, t2_ref,
                           y3_ref, s3_ref, t3_ref,
                           y4_ref, s4_ref, t4_ref, o_ref, *, c1):
    """BN+ReLU per branch, assembled in-register and written with ONE
    lane-dense full-width store into the concatenated output slab."""
    b1 = jnp.maximum(
        yf_ref[...].astype(jnp.float32)[:, :c1] * s1_ref[...] + t1_ref[...], 0.0)
    b2 = jnp.maximum(y2_ref[...].astype(jnp.float32) * s2_ref[...] + t2_ref[...], 0.0)
    b3 = jnp.maximum(y3_ref[...].astype(jnp.float32) * s3_ref[...] + t3_ref[...], 0.0)
    b4 = jnp.maximum(y4_ref[...].astype(jnp.float32) * s4_ref[...] + t4_ref[...], 0.0)
    o_ref[...] = jnp.concatenate([b1, b2, b3, b4], axis=-1).astype(o_ref.dtype)


# ---------------------------------------------------------------------------
# pallas_call wrappers
# ---------------------------------------------------------------------------
def matmul1x1_stats(x2d, w, mt):
    mpad, cin = x2d.shape
    cout = w.shape[1]
    t = mpad // mt
    return pl.pallas_call(
        _matmul1x1_stats_kernel,
        out_shape=(jax.ShapeDtypeStruct((mpad, cout), jnp.bfloat16),
                   jax.ShapeDtypeStruct((t, 2, cout), jnp.float32)),
        grid=(t,),
        in_specs=[pl.BlockSpec((mt, cin), lambda i: (i, 0)),
                  pl.BlockSpec((cin, cout), lambda i: (0, 0))],
        out_specs=(pl.BlockSpec((mt, cout), lambda i: (i, 0)),
                   pl.BlockSpec((1, 2, cout), lambda i: (i, 0, 0))),
        compiler_params=_cparams(1),
    )(x2d, w)


def conv_kxk_stats(x_nhwc_bf16, w_packed, k):
    n, h, wsp, cin = x_nhwc_bf16.shape
    cout = w_packed.shape[-1]
    p = (k - 1) // 2
    # TODO(synk): fold the zero pad into the kernel (VMEM scratch with a zero
    # border) to avoid this extra bf16 HBM copy at real sizes.
    xp = jnp.pad(x_nhwc_bf16, ((0, 0), (p, p), (p, p), (0, 0)))
    hp, wp = h + 2 * p, wsp + 2 * p
    hb = _pick_rowblock(h)
    nrb = h // hb
    kern = functools.partial(_conv_kxk_stats_kernel, k=k, hb=hb, W=wsp)
    return pl.pallas_call(
        kern,
        out_shape=(jax.ShapeDtypeStruct((n, h, wsp, cout), jnp.bfloat16),
                   jax.ShapeDtypeStruct((n, nrb, 2, cout), jnp.float32)),
        grid=(n, nrb),
        in_specs=[pl.BlockSpec((1, hp, wp, cin), lambda i, j: (i, 0, 0, 0)),
                  pl.BlockSpec((k, k * cin, cout), lambda i, j: (0, 0, 0))],
        out_specs=(pl.BlockSpec((1, hb, wsp, cout), lambda i, j: (i, j, 0, 0)),
                   pl.BlockSpec((1, 1, 2, cout), lambda i, j: (i, j, 0, 0))),
        compiler_params=_cparams(2),
    )(xp, w_packed)


def pool_conv_stats(x_nhwc_bf16, w_io):
    n, h, wsp, cin = x_nhwc_bf16.shape
    cout = w_io.shape[-1]
    # TODO(synk): fold the -inf pad into the kernel at real sizes.
    xp = jnp.pad(x_nhwc_bf16, ((0, 0), (1, 1), (1, 1), (0, 0)),
                 constant_values=-jnp.inf)
    hb = _pick_rowblock(h)
    nrb = h // hb
    kern = functools.partial(_pool_conv_stats_kernel, hb=hb, W=wsp)
    return pl.pallas_call(
        kern,
        out_shape=(jax.ShapeDtypeStruct((n, h, wsp, cout), jnp.bfloat16),
                   jax.ShapeDtypeStruct((n, nrb, 2, cout), jnp.float32)),
        grid=(n, nrb),
        in_specs=[pl.BlockSpec((1, h + 2, wsp + 2, cin), lambda i, j: (i, 0, 0, 0)),
                  pl.BlockSpec((cin, cout), lambda i, j: (0, 0))],
        out_specs=(pl.BlockSpec((1, hb, wsp, cout), lambda i, j: (i, j, 0, 0)),
                   pl.BlockSpec((1, 1, 2, cout), lambda i, j: (i, j, 0, 0))),
        compiler_params=_cparams(2),
    )(xp, w_io)


def bn_relu_reduce(y_f, scale23, shift23, c1, c2, c3, mt):
    mpad, ctot = y_f.shape
    t = mpad // mt
    kern = functools.partial(_bn_relu_reduce_kernel, c1=c1, c2=c2)
    return pl.pallas_call(
        kern,
        out_shape=(jax.ShapeDtypeStruct((mpad, c2), jnp.bfloat16),
                   jax.ShapeDtypeStruct((mpad, c3), jnp.bfloat16)),
        grid=(t,),
        in_specs=[pl.BlockSpec((mt, ctot), lambda i: (i, 0)),
                  pl.BlockSpec((1, c2 + c3), lambda i: (0, 0)),
                  pl.BlockSpec((1, c2 + c3), lambda i: (0, 0))],
        out_specs=(pl.BlockSpec((mt, c2), lambda i: (i, 0)),
                   pl.BlockSpec((mt, c3), lambda i: (i, 0))),
        compiler_params=_cparams(1),
    )(y_f, scale23, shift23)


def bn_relu_concat4(y_f, s1, t1, y2, s2, t2, y3, s3, t3, y4, s4, t4, c1, mt):
    mpad, ctot_f = y_f.shape
    c2, c3, c4 = y2.shape[1], y3.shape[1], y4.shape[1]
    ctot = c1 + c2 + c3 + c4
    t = mpad // mt
    kern = functools.partial(_bn_relu_concat_kernel, c1=c1)
    row = lambda i: (i, 0)
    vec = lambda i: (0, 0)
    return pl.pallas_call(
        kern,
        out_shape=jax.ShapeDtypeStruct((mpad, ctot), jnp.float32),
        grid=(t,),
        in_specs=[pl.BlockSpec((mt, ctot_f), row),
                  pl.BlockSpec((1, c1), vec), pl.BlockSpec((1, c1), vec),
                  pl.BlockSpec((mt, c2), row), pl.BlockSpec((1, c2), vec), pl.BlockSpec((1, c2), vec),
                  pl.BlockSpec((mt, c3), row), pl.BlockSpec((1, c3), vec), pl.BlockSpec((1, c3), vec),
                  pl.BlockSpec((mt, c4), row), pl.BlockSpec((1, c4), vec), pl.BlockSpec((1, c4), vec)],
        out_specs=pl.BlockSpec((mt, ctot), row),
        compiler_params=_cparams(1),
    )(y_f, s1, t1, y2, s2, t2, y3, s3, t3, y4, s4, t4)


# ---------------------------------------------------------------------------
# BatchNorm finalize (tiny per-channel reduction over partial stats)
# ---------------------------------------------------------------------------
def _bn_scale_shift(stats, count, gamma, beta):
    c = stats.shape[-1]
    st = stats.reshape(-1, 2, c)
    s = jnp.sum(st[:, 0, :], axis=0)
    sq = jnp.sum(st[:, 1, :], axis=0)
    mean = s / count
    var = jnp.maximum(sq / count - mean * mean, 0.0)   # biased variance (train mode)
    rstd = jax.lax.rsqrt(var + EPS)
    scale = gamma * rstd
    shift = beta - mean * scale
    return scale.reshape(1, -1).astype(jnp.float32), shift.reshape(1, -1).astype(jnp.float32)


# ---------------------------------------------------------------------------
# Weight layout prep (hoisted outside the jitted forward)
# ---------------------------------------------------------------------------
def _w1x1(w):
    # PyTorch (Cout, Cin, 1, 1) -> (Cin, Cout)
    return jnp.transpose(w[:, :, 0, 0], (1, 0))


def _wkxk_packed(w):
    # PyTorch (Cout, Cin, k, k) -> (k, k*Cin, Cout):
    # for each kernel row dy, the k dx-taps are packed along the contraction
    # dim in (dx, cin) order, matching the in-kernel concatenation order.
    cout, cin, k, _ = w.shape
    return jnp.transpose(w, (2, 3, 1, 0)).reshape(k, k * cin, cout)


def prepare_inception_params(p):
    w1, w2a, w3a = _w1x1(p["b1"]["w"]), _w1x1(p["b2a"]["w"]), _w1x1(p["b3a"]["w"])
    prep = {
        # conv biases are intentionally omitted: they cancel under train-mode BN.
        "w_1x1_fused": jnp.concatenate([w1, w2a, w3a], axis=1).astype(jnp.bfloat16),
        "gamma_1x1": jnp.concatenate([p["b1"]["gamma"], p["b2a"]["gamma"], p["b3a"]["gamma"]]),
        "beta_1x1": jnp.concatenate([p["b1"]["beta"], p["b2a"]["beta"], p["b3a"]["beta"]]),
        "w_3x3": _wkxk_packed(p["b2b"]["w"]).astype(jnp.bfloat16),
        "gamma_3x3": p["b2b"]["gamma"], "beta_3x3": p["b2b"]["beta"],
        "w_5x5": _wkxk_packed(p["b3b"]["w"]).astype(jnp.bfloat16),
        "gamma_5x5": p["b3b"]["gamma"], "beta_5x5": p["b3b"]["beta"],
        "w_pool": _w1x1(p["b4"]["w"]).astype(jnp.bfloat16),
        "gamma_pool": p["b4"]["gamma"], "beta_pool": p["b4"]["beta"],
    }
    dims = (int(w1.shape[1]), int(w2a.shape[1]), int(w3a.shape[1]))  # (out_1x1, red_3x3, red_5x5)
    return prep, dims


# ---------------------------------------------------------------------------
# Forward pass
# ---------------------------------------------------------------------------
def inception_forward(x_nchw, prep, *, dims):
    c1, c2r, c3r = dims
    n, cin, h, w = x_nchw.shape
    m = n * h * w
    mt = _pick_mt(m)
    mpad = _round_up(m, mt)

    x_bf = jnp.transpose(x_nchw, (0, 2, 3, 1)).astype(jnp.bfloat16)   # NHWC bf16

    # fused 1x1 convs on x (branch1 + branch2-reduce + branch3-reduce)
    x2d = _pad_rows(x_bf.reshape(m, cin), mpad)
    y_f, st_f = matmul1x1_stats(x2d, prep["w_1x1_fused"], mt)
    sc_f, sh_f = _bn_scale_shift(st_f, m, prep["gamma_1x1"], prep["beta_1x1"])
    b2a_act, b3a_act = bn_relu_reduce(y_f, sc_f[:, c1:], sh_f[:, c1:], c1, c2r, c3r, mt)

    # branch2: 3x3 conv (implicit im2col, dx-taps packed along K)
    y2, st2 = conv_kxk_stats(b2a_act[:m].reshape(n, h, w, c2r), prep["w_3x3"], 3)
    sc2, sh2 = _bn_scale_shift(st2, m, prep["gamma_3x3"], prep["beta_3x3"])

    # branch3: 5x5 conv
    y3, st3 = conv_kxk_stats(b3a_act[:m].reshape(n, h, w, c3r), prep["w_5x5"], 5)
    sc3, sh3 = _bn_scale_shift(st3, m, prep["gamma_5x5"], prep["beta_5x5"])

    # branch4: fused 3x3 max-pool + 1x1 conv
    y4, st4 = pool_conv_stats(x_bf, prep["w_pool"])
    sc4, sh4 = _bn_scale_shift(st4, m, prep["gamma_pool"], prep["beta_pool"])

    # final BN+ReLU per branch, single lane-dense store into the concat slab
    c3x3, c5x5, c4p = y2.shape[-1], y3.shape[-1], y4.shape[-1]
    out2d = bn_relu_concat4(
        y_f, sc_f[:, :c1], sh_f[:, :c1],
        _pad_rows(y2.reshape(m, c3x3), mpad), sc2, sh2,
        _pad_rows(y3.reshape(m, c5x5), mpad), sc3, sh3,
        _pad_rows(y4.reshape(m, c4p), mpad), sc4, sh4,
        c1, mt)
    out = out2d[:m].reshape(n, h, w, c1 + c3x3 + c5x5 + c4p)
    # TODO(synk): skip this NCHW transpose if the consumer can accept NHWC.
    return jnp.transpose(out, (0, 3, 1, 2))             # NCHW (PyTorch interface)


# ---------------------------------------------------------------------------
# Deterministic parameter construction (synthetic, PyTorch-default BN affine)
# ---------------------------------------------------------------------------
def _init_block(key, cin, cout, k):
    kw, kb = jax.random.split(key)
    return {
        "w": 0.1 * jax.random.normal(kw, (cout, cin, k, k), jnp.float32),
        # bias kept for module parity; unused — cancelled by train-mode BatchNorm.
        "b": 0.1 * jax.random.normal(kb, (cout,), jnp.float32),
        "gamma": jnp.ones((cout,), jnp.float32),
        "beta": jnp.zeros((cout,), jnp.float32),
    }


def make_inception_params(key, in_ch, out_1x1, red_3x3, out_3x3,
                          red_5x5, out_5x5, out_1x1pool):
    keys = jax.random.split(key, 6)
    return {
        "b1": _init_block(keys[0], in_ch, out_1x1, 1),
        "b2a": _init_block(keys[1], in_ch, red_3x3, 1),
        "b2b": _init_block(keys[2], red_3x3, out_3x3, 3),
        "b3a": _init_block(keys[3], in_ch, red_5x5, 1),
        "b3b": _init_block(keys[4], red_5x5, out_5x5, 5),
        "b4": _init_block(keys[5], in_ch, out_1x1pool, 1),
    }


if __name__ == "__main__":
    key = jax.random.PRNGKey(0)
    kx, kp = jax.random.split(key)

    # small shapes: N=2, C_in=4, H=W=16; branch widths 8/8/8/8 -> 32 out channels
    in_ch, out_1x1, red_3x3, out_3x3, red_5x5, out_5x5, out_1x1pool = 4, 8, 4, 8, 4, 8, 8
    x = jax.random.normal(kx, (2, in_ch, 16, 16), jnp.float32)     # NCHW like PyTorch
    params = make_inception_params(kp, in_ch, out_1x1, red_3x3, out_3x3,
                                   red_5x5, out_5x5, out_1x1pool)
    prep, dims = prepare_inception_params(params)

    fwd = jax.jit(functools.partial(inception_forward, dims=dims))
    out = fwd(x, prep)
    jax.block_until_ready(out)
    assert out.shape == (2, out_1x1 + out_3x3 + out_5x5 + out_1x1pool, 16, 16)
    print("KERNEL_OK")
</pallas_src>

<mosaic_0001>
module attributes {stable_mosaic.version = 11 : i64} {
  func.func @_matmul1x1_stats_kernel(%arg0: i32, %arg1: memref<512x4xbf16, #tpu.memory_space<vmem>>, %arg2: memref<4x16xbf16, #tpu.memory_space<vmem>>, %arg3: memref<512x16xbf16, #tpu.memory_space<vmem>>, %arg4: memref<1x2x16xf32, #tpu.memory_space<vmem>>) attributes {dimension_semantics = [#tpu.dimension_semantics<parallel>], iteration_bounds = array<i64: 1>, scalar_prefetch = 0 : i64, scratch_operands = 0 : i64, tpu.core_type = #tpu.core_type<tc>, window_params = [{transform_indices = @transform_0, window_bounds = array<i64: 512, 4>}, {pipeline_mode = #tpu.pipeline_mode<synchronous>, transform_indices = @transform_1, window_bounds = array<i64: 4, 16>}, {transform_indices = @transform_2, window_bounds = array<i64: 512, 16>}, {transform_indices = @transform_3, window_bounds = array<i64: 1, 2, 16>}]} {
    %c0 = arith.constant 0 : index
    %c0_0 = arith.constant 0 : index
    %0 = vector.load %arg1[%c0, %c0_0] : memref<512x4xbf16, #tpu.memory_space<vmem>>, vector<512x4xbf16>
    %c0_1 = arith.constant 0 : index
    %c0_2 = arith.constant 0 : index
    %1 = vector.load %arg2[%c0_1, %c0_2] : memref<4x16xbf16, #tpu.memory_space<vmem>>, vector<4x16xbf16>
    %cst = arith.constant dense<0.000000e+00> : vector<512x16xf32>
    %2 = tpu.matmul %0, %1, %cst {dimension_numbers = #tpu.dot_dimension_numbers<[1], [0], [0], [1], [0, 0, 1, 1], [], []>} : vector<512x4xbf16>, vector<4x16xbf16>, vector<512x16xf32> -> vector<512x16xf32>
    %3 = arith.truncf %2 : vector<512x16xf32> to vector<512x16xbf16>
    %c0_3 = arith.constant 0 : index
    %c0_4 = arith.constant 0 : index
    %4 = vector.load %arg3[%c0_3, %c0_4] : memref<512x16xbf16, #tpu.memory_space<vmem>>, vector<512x16xbf16>
    tpu.vector_store %arg3[%c0_3, %c0_4], %3 {strides = array<i32>} : memref<512x16xbf16, #tpu.memory_space<vmem>>, vector<512x16xbf16>,
    %cst_5 = arith.constant dense<0.000000e+00> : vector<16xf32>
    %5 = vector.multi_reduction <add>, %2, %cst_5 [0] : vector<512x16xf32> to vector<16xf32>
    %6 = vector.shape_cast %5 : vector<16xf32> to vector<1x16xf32>
    %c0_6 = arith.constant 0 : index
    %c0_7 = arith.constant 0 : index
    %c0_8 = arith.constant 0 : index
    %7 = vector.load %arg4[%c0_6, %c0_7, %c0_8] : memref<1x2x16xf32, #tpu.memory_space<vmem>>, vector<1x1x16xf32>
    %8 = vector.shape_cast %7 : vector<1x1x16xf32> to vector<1x16xf32>
    %9 = vector.shape_cast %6 : vector<1x16xf32> to vector<1x1x16xf32>
    tpu.vector_store %arg4[%c0_6, %c0_7, %c0_8], %9 {strides = array<i32>} : memref<1x2x16xf32, #tpu.memory_space<vmem>>, vector<1x1x16xf32>,
    %10 = arith.mulf %2, %2 : vector<512x16xf32>
    %cst_9 = arith.constant dense<0.000000e+00> : vector<16xf32>
    %11 = vector.multi_reduction <add>, %10, %cst_9 [0] : vector<512x16xf32> to vector<16xf32>
    %12 = vector.shape_cast %11 : vector<16xf32> to vector<1x16xf32>
    %c0_10 = arith.constant 0 : index
    %c1 = arith.constant 1 : index
    %c0_11 = arith.constant 0 : index
    %13 = vector.load %arg4[%c0_10, %c1, %c0_11] : memref<1x2x16xf32, #tpu.memory_space<vmem>>, vector<1x1x16xf32>
    %14 = vector.shape_cast %13 : vector<1x1x16xf32> to vector<1x16xf32>
    %15 = vector.shape_cast %12 : vector<1x16xf32> to vector<1x1x16xf32>
    tpu.vector_store %arg4[%c0_10, %c1, %c0_11], %15 {strides = array<i32>} : memref<1x2x16xf32, #tpu.memory_space<vmem>>, vector<1x1x16xf32>,
    return
  }
  func.func @transform_0(%arg0: i32) -> (i32, i32) {
    %c0_i32 = arith.constant 0 : i32
    %c0_i32_0 = arith.constant 0 : i32
    return %arg0, %c0_i32 : i32, i32
  }
  func.func @transform_1(%arg0: i32) -> (i32, i32) {
    %c0_i32 = arith.constant 0 : i32
    %c0_i32_0 = arith.constant 0 : i32
    %c0_i32_1 = arith.constant 0 : i32
    return %c0_i32, %c0_i32_0 : i32, i32
  }
  func.func @transform_2(%arg0: i32) -> (i32, i32) {
    %c0_i32 = arith.constant 0 : i32
    %c0_i32_0 = arith.constant 0 : i32
    return %arg0, %c0_i32 : i32, i32
  }
  func.func @transform_3(%arg0: i32) -> (i32, i32, i32) {
    %c0_i32 = arith.constant 0 : i32
    %c0_i32_0 = arith.constant 0 : i32
    %c0_i32_1 = arith.constant 0 : i32
    return %arg0, %c0_i32, %c0_i32_0 : i32, i32, i32
  }
}

module attributes {stable_mosaic.version = 11 : i64} {
  func.func @_bn_relu_reduce_kernel(%arg0: i32, %arg1: memref<512x16xbf16, #tpu.memory_space<vmem>>, %arg2: memref<1x8xf32, #tpu.memory_space<vmem>>, %arg3: memref<1x8xf32, #tpu.memory_space<vmem>>, %arg4: memref<512x4xbf16, #tpu.memory_space<vmem>>, %arg5: memref<512x4xbf16, #tpu.memory_space<vmem>>) attributes {dimension_semantics = [#tpu.dimension_semantics<parallel>], iteration_bounds = array<i64: 1>, scalar_prefetch = 0 : i64, scratch_operands = 0 : i64, tpu.core_type = #tpu.core_type<tc>, window_params = [{transform_indices = @transform_0, window_bounds = array<i64: 512, 16>}, {pipeline_mode = #tpu.pipeline_mode<synchronous>, transform_indices = @transform_1, window_bounds = array<i64: 1, 8>}, {pipeline_mode = #tpu.pipeline_mode<synchronous>, transform_indices = @transform_2, window_bounds = array<i64: 1, 8>}, {transform_indices = @transform_3, window_bounds = array<i64: 512, 4>}, {transform_indices = @transform_4, window_bounds = array<i64: 512, 4>}]} {
    %c0 = arith.constant 0 : index
    %c0_0 = arith.constant 0 : index
    %0 = vector.load %arg1[%c0, %c0_0] : memref<512x16xbf16, #tpu.memory_space<vmem>>, vector<512x16xbf16>
    %1 = arith.extf %0 : vector<512x16xbf16> to vector<512x16xf32>
    %2 = vector.extract_strided_slice %1 {offsets = [0, 8], sizes = [512, 8], strides = [1, 1]} : vector<512x16xf32> to vector<512x8xf32>
    %c0_1 = arith.constant 0 : index
    %c0_2 = arith.constant 0 : index
    %3 = vector.load %arg2[%c0_1, %c0_2] : memref<1x8xf32, #tpu.memory_space<vmem>>, vector<1x8xf32>
    %4 = vector.broadcast %3 : vector<1x8xf32> to vector<512x8xf32>
    %5 = arith.mulf %2, %4 : vector<512x8xf32>
    %c0_3 = arith.constant 0 : index
    %c0_4 = arith.constant 0 : index
    %6 = vector.load %arg3[%c0_3, %c0_4] : memref<1x8xf32, #tpu.memory_space<vmem>>, vector<1x8xf32>
    %7 = vector.broadcast %6 : vector<1x8xf32> to vector<512x8xf32>
    %8 = arith.addf %5, %7 : vector<512x8xf32>
    %cst = arith.constant 0.000000e+00 : f32
    %9 = vector.broadcast %cst : f32 to vector<512x8xf32>
    %10 = arith.maximumf %8, %9 : vector<512x8xf32>
    %11 = vector.extract_strided_slice %10 {offsets = [0, 0], sizes = [512, 4], strides = [1, 1]} : vector<512x8xf32> to vector<512x4xf32>
    %12 = arith.truncf %11 : vector<512x4xf32> to vector<512x4xbf16>
    %c0_5 = arith.constant 0 : index
    %c0_6 = arith.constant 0 : index
    %13 = vector.load %arg4[%c0_5, %c0_6] : memref<512x4xbf16, #tpu.memory_space<vmem>>, vector<512x4xbf16>
    tpu.vector_store %arg4[%c0_5, %c0_6], %12 {strides = array<i32>} : memref<512x4xbf16, #tpu.memory_space<vmem>>, vector<512x4xbf16>,
    %14 = vector.extract_strided_slice %10 {offsets = [0, 4], sizes = [512, 4], strides = [1, 1]} : vector<512x8xf32> to vector<512x4xf32>
    %15 = arith.truncf %14 : vector<512x4xf32> to vector<512x4xbf16>
    %c0_7 = arith.constant 0 : index
    %c0_8 = arith.constant 0 : index
    %16 = vector.load %arg5[%c0_7, %c0_8] : memref<512x4xbf16, #tpu.memory_space<vmem>>, vector<512x4xbf16>
    tpu.vector_store %arg5[%c0_7, %c0_8], %15 {strides = array<i32>} : memref<512x4xbf16, #tpu.memory_space<vmem>>, vector<512x4xbf16>,
    return
  }
  func.func @transform_0(%arg0: i32) -> (i32, i32) {
    %c0_i32 = arith.constant 0 : i32
    %c0_i32_0 = arith.constant 0 : i32
    return %arg0, %c0_i32 : i32, i32
  }
  func.func @transform_1(%arg0: i32) -> (i32, i32) {
    %c0_i32 = arith.constant 0 : i32
    %c0_i32_0 = arith.constant 0 : i32
    %c0_i32_1 = arith.constant 0 : i32
    return %c0_i32, %c0_i32_0 : i32, i32
  }
  func.func @transform_2(%arg0: i32) -> (i32, i32) {
    %c0_i32 = arith.constant 0 : i32
    %c0_i32_0 = arith.constant 0 : i32
    %c0_i32_1 = arith.constant 0 : i32
    return %c0_i32, %c0_i32_0 : i32, i32
  }
  func.func @transform_3(%arg0: i32) -> (i32, i32) {
    %c0_i32 = arith.constant 0 : i32
    %c0_i32_0 = arith.constant 0 : i32
    return %arg0, %c0_i32 : i32, i32
  }
  func.func @transform_4(%arg0: i32) -> (i32, i32) {
    %c0_i32 = arith.constant 0 : i32
    %c0_i32_0 = arith.constant 0 : i32
    return %arg0, %c0_i32 : i32, i32
  }
}

module attributes {stable_mosaic.version = 11 : i64} {
  func.func @_conv_kxk_stats_kernel(%arg0: i32, %arg1: i32, %arg2: memref<1x20x20x4xbf16, #tpu.memory_space<vmem>>, %arg3: memref<5x20x8xbf16, #tpu.memory_space<vmem>>, %arg4: memref<1x8x16x8xbf16, #tpu.memory_space<vmem>>, %arg5: memref<1x1x2x8xf32, #tpu.memory_space<vmem>>) attributes {dimension_semantics = [#tpu.dimension_semantics<parallel>, #tpu.dimension_semantics<parallel>], iteration_bounds = array<i64: 2, 2>, scalar_prefetch = 0 : i64, scratch_operands = 0 : i64, tpu.core_type = #tpu.core_type<tc>, window_params = [{transform_indices = @transform_0, window_bounds = array<i64: 1, 20, 20, 4>}, {pipeline_mode = #tpu.pipeline_mode<synchronous>, transform_indices = @transform_1, window_bounds = array<i64: 5, 20, 8>}, {transform_indices = @transform_2, window_bounds = array<i64: 1, 8, 16, 8>}, {transform_indices = @transform_3, window_bounds = array<i64: 1, 1, 2, 8>}]} {
    %c8_i32 = arith.constant 8 : i32
    %0 = arith.muli %arg1, %c8_i32 : i32
    %cst = arith.constant 0.000000e+00 : f32
    %1 = vector.broadcast %cst : f32 to vector<128x8xf32>
    %c0_i32 = arith.constant 0 : i32
    %2 = arith.addi %0, %c0_i32 : i32
    %c0 = arith.constant 0 : index
    %3 = arith.index_cast %2 : i32 to index
    %c0_0 = arith.constant 0 : index
    %c0_1 = arith.constant 0 : index
    %4 = vector.load %arg2[%c0, %3, %c0_0, %c0_1] : memref<1x20x20x4xbf16, #tpu.memory_space<vmem>>, vector<1x8x16x4xbf16>
    %5 = vector.shape_cast %4 : vector<1x8x16x4xbf16> to vector<8x16x4xbf16>
    %c0_i32_2 = arith.constant 0 : i32
    %6 = arith.addi %0, %c0_i32_2 : i32
    %c0_3 = arith.constant 0 : index
    %7 = arith.index_cast %6 : i32 to index
    %c1 = arith.constant 1 : index
    %c0_4 = arith.constant 0 : index
    %8 = vector.load %arg2[%c0_3, %7, %c1, %c0_4] : memref<1x20x20x4xbf16, #tpu.memory_space<vmem>>, vector<1x8x16x4xbf16>
    %9 = vector.shape_cast %8 : vector<1x8x16x4xbf16> to vector<8x16x4xbf16>
    %c0_i32_5 = arith.constant 0 : i32
    %10 = arith.addi %0, %c0_i32_5 : i32
    %c0_6 = arith.constant 0 : index
    %11 = arith.index_cast %10 : i32 to index
    %c2 = arith.constant 2 : index
    %c0_7 = arith.constant 0 : index
    %12 = vector.load %arg2[%c0_6, %11, %c2, %c0_7] : memref<1x20x20x4xbf16, #tpu.memory_space<vmem>>, vector<1x8x16x4xbf16>
    %13 = vector.shape_cast %12 : vector<1x8x16x4xbf16> to vector<8x16x4xbf16>
    %c0_i32_8 = arith.constant 0 : i32
    %14 = arith.addi %0, %c0_i32_8 : i32
    %c0_9 = arith.constant 0 : index
    %15 = arith.index_cast %14 : i32 to index
    %c3 = arith.constant 3 : index
    %c0_10 = arith.constant 0 : index
    %16 = vector.load %arg2[%c0_9, %15, %c3, %c0_10] : memref<1x20x20x4xbf16, #tpu.memory_space<vmem>>, vector<1x8x16x4xbf16>
    %17 = vector.shape_cast %16 : vector<1x8x16x4xbf16> to vector<8x16x4xbf16>
    %c0_i32_11 = arith.constant 0 : i32
    %18 = arith.addi %0, %c0_i32_11 : i32
    %c0_12 = arith.constant 0 : index
    %19 = arith.index_cast %18 : i32 to index
    %c4 = arith.constant 4 : index
    %c0_13 = arith.constant 0 : index
    %20 = vector.load %arg2[%c0_12, %19, %c4, %c0_13] : memref<1x20x20x4xbf16, #tpu.memory_space<vmem>>, vector<1x8x16x4xbf16>
    %21 = vector.shape_cast %20 : vector<1x8x16x4xbf16> to vector<8x16x4xbf16>
    %22 = tpu.concatenate %5, %9, %13, %17, %21 in 2 : vector<8x16x4xbf16>, vector<8x16x4xbf16>, vector<8x16x4xbf16>, vector<8x16x4xbf16>, vector<8x16x4xbf16> -> vector<8x16x20xbf16>
    %23 = vector.shape_cast %22 : vector<8x16x20xbf16> to vector<128x20xbf16>
    %c0_14 = arith.constant 0 : index
    %c0_15 = arith.constant 0 : index
    %c0_16 = arith.constant 0 : index
    %24 = vector.load %arg3[%c0_14, %c0_15, %c0_16] : memref<5x20x8xbf16, #tpu.memory_space<vmem>>, vector<1x20x8xbf16>
    %25 = vector.shape_cast %24 : vector<1x20x8xbf16> to vector<20x8xbf16>
    %cst_17 = arith.constant dense<0.000000e+00> : vector<128x8xf32>
    %26 = tpu.matmul %23, %25, %cst_17 {dimension_numbers = #tpu.dot_dimension_numbers<[1], [0], [0], [1], [0, 0, 1, 1], [], []>} : vector<128x20xbf16>, vector<20x8xbf16>, vector<128x8xf32> -> vector<128x8xf32>
    %27 = arith.addf %1, %26 : vector<128x8xf32>
    %c1_i32 = arith.constant 1 : i32
    %28 = arith.addi %0, %c1_i32 : i32
    %c0_18 = arith.constant 0 : index
    %29 = arith.index_cast %28 : i32 to index
    %c0_19 = arith.constant 0 : index
    %c0_20 = arith.constant 0 : index
    %30 = vector.load %arg2[%c0_18, %29, %c0_19, %c0_20] : memref<1x20x20x4xbf16, #tpu.memory_space<vmem>>, vector<1x8x16x4xbf16>
    %31 = vector.shape_cast %30 : vector<1x8x16x4xbf16> to vector<8x16x4xbf16>
    %c1_i32_21 = arith.constant 1 : i32
    %32 = arith.addi %0, %c1_i32_21 : i32
    %c0_22 = arith.constant 0 : index
    %33 = arith.index_cast %32 : i32 to index
    %c1_23 = arith.constant 1 : index
    %c0_24 = arith.constant 0 : index
    %34 = vector.load %arg2[%c0_22, %33, %c1_23, %c0_24] : memref<1x20x20x4xbf16, #tpu.memory_space<vmem>>, vector<1x8x16x4xbf16>
    %35 = vector.shape_cast %34 : vector<1x8x16x4xbf16> to vector<8x16x4xbf16>
    %c1_i32_25 = arith.constant 1 : i32
    %36 = arith.addi %0, %c1_i32_25 : i32
    %c0_26 = arith.constant 0 : index
    %37 = arith.index_cast %36 : i32 to index
    %c2_27 = arith.constant 2 : index
    %c0_28 = arith.constant 0 : index
    %38 = vector.load %arg2[%c0_26, %37, %c2_27, %c0_28] : memref<1x20x20x4xbf16, #tpu.memory_space<vmem>>, vector<1x8x16x4xbf16>
    %39 = vector.shape_cast %38 : vector<1x8x16x4xbf16> to vector<8x16x4xbf16>
    %c1_i32_29 = arith.constant 1 : i32
    %40 = arith.addi %0, %c1_i32_29 : i32
    %c0_30 = arith.constant 0 : index
    %41 = arith.index_cast %40 : i32 to index
    %c3_31 = arith.constant 3 : index
    %c0_32 = arith.constant 0 : index
    %42 = vector.load %arg2[%c0_30, %41, %c3_31, %c0_32] : memref<1x20x20x4xbf16, #tpu.memory_space<vmem>>, vector<1x8x16x4xbf16>
    %43 = vector.shape_cast %42 : vector<1x8x16x4xbf16> to vector<8x16x4xbf16>
    %c1_i32_33 = arith.constant 1 : i32
    %44 = arith.addi %0, %c1_i32_33 : i32
    %c0_34 = arith.constant 0 : index
    %45 = arith.index_cast %44 : i32 to index
    %c4_35 = arith.constant 4 : index
    %c0_36 = arith.constant 0 : index
    %46 = vector.load %arg2[%c0_34, %45, %c4_35, %c0_36] : memref<1x20x20x4xbf16, #tpu.memory_space<vmem>>, vector<1x8x16x4xbf16>
    %47 = vector.shape_cast %46 : vector<1x8x16x4xbf16> to vector<8x16x4xbf16>
    %48 = tpu.concatenate %31, %35, %39, %43, %47 in 2 : vector<8x16x4xbf16>, vector<8x16x4xbf16>, vector<8x16x4xbf16>, vector<8x16x4xbf16>, vector<8x16x4xbf16> -> vector<8x16x20xbf16>
    %49 = vector.shape_cast %48 : vector<8x16x20xbf16> to vector<128x20xbf16>
    %c1_37 = arith.constant 1 : index
    %c0_38 = arith.constant 0 : index
    %c0_39 = arith.constant 0 : index
    %50 = vector.load %arg3[%c1_37, %c0_38, %c0_39] : memref<5x20x8xbf16, #tpu.memory_space<vmem>>, vector<1x20x8xbf16>
    %51 = vector.shape_cast %50 : vector<1x20x8xbf16> to vector<20x8xbf16>
    %cst_40 = arith.constant dense<0.000000e+00> : vector<128x8xf32>
    %52 = tpu.matmul %49, %51, %cst_40 {dimension_numbers = #tpu.dot_dimension_numbers<[1], [0], [0], [1], [0, 0, 1, 1], [], []>} : vector<128x20xbf16>, vector<20x8xbf16>, vector<128x8xf32> -> vector<128x8xf32>
    %53 = arith.addf %27, %52 : vector<128x8xf32>
    %c2_i32 = arith.constant 2 : i32
    %54 = arith.addi %0, %c2_i32 : i32
    %c0_41 = arith.constant 0 : index
    %55 = arith.index_cast %54 : i32 to index
    %c0_42 = arith.constant 0 : index
    %c0_43 = arith.constant 0 : index
    %56 = vector.load %arg2[%c0_41, %55, %c0_42, %c0_43] : memref<1x20x20x4xbf16, #tpu.memory_space<vmem>>, vector<1x8x16x4xbf16>
    %57 = vector.shape_cast %56 : vector<1x8x16x4xbf16> to vector<8x16x4xbf16>
    %c2_i32_44 = arith.constant 2 : i32
    %58 = arith.addi %0, %c2_i32_44 : i32
    %c0_45 = arith.constant 0 : index
    %59 = arith.index_cast %58 : i32 to index
    %c1_46 = arith.constant 1 : index
    %c0_47 = arith.constant 0 : index
    %60 = vector.load %arg2[%c0_45, %59, %c1_46, %c0_47] : memref<1x20x20x4xbf16, #tpu.memory_space<vmem>>, vector<1x8x16x4xbf16>
    %61 = vector.shape_cast %60 : vector<1x8x16x4xbf16> to vector<8x16x4xbf16>
    %c2_i32_48 = arith.constant 2 : i32
    %62 = arith.addi %0, %c2_i32_48 : i32
    %c0_49 = arith.constant 0 : index
    %63 = arith.index_cast %62 : i32 to index
    %c2_50 = arith.constant 2 : index
    %c0_51 = arith.constant 0 : index
    %64 = vector.load %arg2[%c0_49, %63, %c2_50, %c0_51] : memref<1x20x20x4xbf16, #tpu.memory_space<vmem>>, vector<1x8x16x4xbf16>
    %65 = vector.shape_cast %64 : vector<1x8x16x4xbf16> to vector<8x16x4xbf16>
    %c2_i32_52 = arith.constant 2 : i32
    %66 = arith.addi %0, %c2_i32_52 : i32
    %c0_53 = arith.constant 0 : index
    %67 = arith.index_cast %66 : i32 to index
    %c3_54 = arith.constant 3 : index
    %c0_55 = arith.constant 0 : index
    %68 = vector.load %arg2[%c0_53, %67, %c3_54, %c0_55] : memref<1x20x20x4xbf16, #tpu.memory_space<vmem>>, vector<1x8x16x4xbf16>
    %69 = vector.shape_cast %68 : vector<1x8x16x4xbf16> to vector<8x16x4xbf16>
    %c2_i32_56 = arith.constant 2 : i32
    %70 = arith.addi %0, %c2_i32_56 : i32
    %c0_57 = arith.constant 0 : index
    %71 = arith.index_cast %70 : i32 to index
    %c4_58 = arith.constant 4 : index
    %c0_59 = arith.constant 0 : index
    %72 = vector.load %arg2[%c0_57, %71, %c4_58, %c0_59] : memref<1x20x20x4xbf16, #tpu.memory_space<vmem>>, vector<1x8x16x4xbf16>
    %73 = vector.shape_cast %72 : vector<1x8x16x4xbf16> to vector<8x16x4xbf16>
    %74 = tpu.concatenate %57, %61, %65, %69, %73 in 2 : vector<8x16x4xbf16>, vector<8x16x4xbf16>, vector<8x16x4xbf16>, vector<8x16x4xbf16>, vector<8x16x4xbf16> -> vector<8x16x20xbf16>
    %75 = vector.shape_cast %74 : vector<8x16x20xbf16> to vector<128x20xbf16>
    %c2_60 = arith.constant 2 : index
    %c0_61 = arith.constant 0 : index
    %c0_62 = arith.constant 0 : index
    %76 = vector.load %arg3[%c2_60, %c0_61, %c0_62] : memref<5x20x8xbf16, #tpu.memory_space<vmem>>, vector<1x20x8xbf16>
    %77 = vector.shape_cast %76 : vector<1x20x8xbf16> to vector<20x8xbf16>
    %cst_63 = arith.constant dense<0.000000e+00> : vector<128x8xf32>
    %78 = tpu.matmul %75, %77, %cst_63 {dimension_numbers = #tpu.dot_dimension_numbers<[1], [0], [0], [1], [0, 0, 1, 1], [], []>} : vector<128x20xbf16>, vector<20x8xbf16>, vector<128x8xf32> -> vector<128x8xf32>
    %79 = arith.addf %53, %78 : vector<128x8xf32>
    %c3_i32 = arith.constant 3 : i32
    %80 = arith.addi %0, %c3_i32 : i32
    %c0_64 = arith.constant 0 : index
    %81 = arith.index_cast %80 : i32 to index
    %c0_65 = arith.constant 0 : index
    %c0_66 = arith.constant 0 : index
    %82 = vector.load %arg2[%c0_64, %81, %c0_65, %c0_66] : memref<1x20x20x4xbf16, #tpu.memory_space<vmem>>, vector<1x8x16x4xbf16>
    %83 = vector.shape_cast %82 : vector<1x8x16x4xbf16> to vector<8x16x4xbf16>
    %c3_i32_67 = arith.constant 3 : i32
    %84 = arith.addi %0, %c3_i32_67 : i32
    %c0_68 = arith.constant 0 : index
    %85 = arith.index_cast %84 : i32 to index
    %c1_69 = arith.constant 1 : index
    %c0_70 = arith.constant 0 : index
    %86 = vector.load %arg2[%c0_68, %85, %c1_69, %c0_70] : memref<1x20x20x4xbf16, #tpu.memory_space<vmem>>, vector<1x8x16x4xbf16>
    %87 = vector.shape_cast %86 : vector<1x8x16x4xbf16> to vector<8x16x4xbf16>
    %c3_i32_71 = arith.constant 3 : i32
    %88 = arith.addi %0, %c3_i32_71 : i32
    %c0_72 = arith.constant 0 : index
    %89 = arith.index_cast %88 : i32 to index
    %c2_73 = arith.constant 2 : index
    %c0_74 = arith.constant 0 : index
    %90 = vector.load %arg2[%c0_72, %89, %c2_73, %c0_74] : memref<1x20x20x4xbf16, #tpu.memory_space<vmem>>, vector<1x8x16x4xbf16>
    %91 = vector.shape_cast %90 : vector<1x8x16x4xbf16> to vector<8x16x4xbf16>
    %c3_i32_75 = arith.constant 3 : i32
    %92 = arith.addi %0, %c3_i32_75 : i32
    %c0_76 = arith.constant 0 : index
    %93 = arith.index_cast %92 : i32 to index
    %c3_77 = arith.constant 3 : index
    %c0_78 = arith.constant 0 : index
    %94 = vector.load %arg2[%c0_76, %93, %c3_77, %c0_78] : memref<1x20x20x4xbf16, #tpu.memory_space<vmem>>, vector<1x8x16x4xbf16>
    %95 = vector.shape_cast %94 : vector<1x8x16x4xbf16> to vector<8x16x4xbf16>
    %c3_i32_79 = arith.constant 3 : i32
    %96 = arith.addi %0, %c3_i32_79 : i32
    %c0_80 = arith.constant 0 : index
    %97 = arith.index_cast %96 : i32 to index
    %c4_81 = arith.constant 4 : index
    %c0_82 = arith.constant 0 : index
    %98 = vector.load %arg2[%c0_80, %97, %c4_81, %c0_82] : memref<1x20x20x4xbf16, #tpu.memory_space<vmem>>, vector<1x8x16x4xbf16>
    %99 = vector.shape_cast %98 : vector<1x8x16x4xbf16> to vector<8x16x4xbf16>
    %100 = tpu.concatenate %83, %87, %91, %95, %99 in 2 : vector<8x16x4xbf16>, vector<8x16x4xbf16>, vector<8x16x4xbf16>, vector<8x16x4xbf16>, vector<8x16x4xbf16> -> vector<8x16x20xbf16>
    %101 = vector.shape_cast %100 : vector<8x16x20xbf16> to vector<128x20xbf16>
    %c3_83 = arith.constant 3 : index
    %c0_84 = arith.constant 0 : index
    %c0_85 = arith.constant 0 : index
    %102 = vector.load %arg3[%c3_83, %c0_84, %c0_85] : memref<5x20x8xbf16, #tpu.memory_space<vmem>>, vector<1x20x8xbf16>
    %103 = vector.shape_cast %102 : vector<1x20x8xbf16> to vector<20x8xbf16>
    %cst_86 = arith.constant dense<0.000000e+00> : vector<128x8xf32>
    %104 = tpu.matmul %101, %103, %cst_86 {dimension_numbers = #tpu.dot_dimension_numbers<[1], [0], [0], [1], [0, 0, 1, 1], [], []>} : vector<128x20xbf16>, vector<20x8xbf16>, vector<128x8xf32> -> vector<128x8xf32>
    %105 = arith.addf %79, %104 : vector<128x8xf32>
    %c4_i32 = arith.constant 4 : i32
    %106 = arith.addi %0, %c4_i32 : i32
    %c0_87 = arith.constant 0 : index
    %107 = arith.index_cast %106 : i32 to index
    %c0_88 = arith.constant 0 : index
    %c0_89 = arith.constant 0 : index
    %108 = vector.load %arg2[%c0_87, %107, %c0_88, %c0_89] : memref<1x20x20x4xbf16, #tpu.memory_space<vmem>>, vector<1x8x16x4xbf16>
    %109 = vector.shape_cast %108 : vector<1x8x16x4xbf16> to vector<8x16x4xbf16>
    %c4_i32_90 = arith.constant 4 : i32
    %110 = arith.addi %0, %c4_i32_90 : i32
    %c0_91 = arith.constant 0 : index
    %111 = arith.index_cast %110 : i32 to index
    %c1_92 = arith.constant 1 : index
    %c0_93 = arith.constant 0 : index
    %112 = vector.load %arg2[%c0_91, %111, %c1_92, %c0_93] : memref<1x20x20x4xbf16, #tpu.memory_space<vmem>>, vector<1x8x16x4xbf16>
    %113 = vector.shape_cast %112 : vector<1x8x16x4xbf16> to vector<8x16x4xbf16>
    %c4_i32_94 = arith.constant 4 : i32
    %114 = arith.addi %0, %c4_i32_94 : i32
    %c0_95 = arith.constant 0 : index
    %115 = arith.index_cast %114 : i32 to index
    %c2_96 = arith.constant 2 : index
    %c0_97 = arith.constant 0 : index
    %116 = vector.load %arg2[%c0_95, %115, %c2_96, %c0_97] : memref<1x20x20x4xbf16, #tpu.memory_space<vmem>>, vector<1x8x16x4xbf16>
    %117 = vector.shape_cast %116 : vector<1x8x16x4xbf16> to vector<8x16x4xbf16>
    %c4_i32_98 = arith.constant 4 : i32
    %118 = arith.addi %0, %c4_i32_98 : i32
    %c0_99 = arith.constant 0 : index
    %119 = arith.index_cast %118 : i32 to index
    %c3_100 = arith.constant 3 : index
    %c0_101 = arith.constant 0 : index
    %120 = vector.load %arg2[%c0_99, %119, %c3_100, %c0_101] : memref<1x20x20x4xbf16, #tpu.memory_space<vmem>>, vector<1x8x16x4xbf16>
    %121 = vector.shape_cast %120 : vector<1x8x16x4xbf16> to vector<8x16x4xbf16>
    %c4_i32_102 = arith.constant 4 : i32
    %122 = arith.addi %0, %c4_i32_102 : i32
    %c0_103 = arith.constant 0 : index
    %123 = arith.index_cast %122 : i32 to index
    %c4_104 = arith.constant 4 : index
    %c0_105 = arith.constant 0 : index
    %124 = vector.load %arg2[%c0_103, %123, %c4_104, %c0_105] : memref<1x20x20x4xbf16, #tpu.memory_space<vmem>>, vector<1x8x16x4xbf16>
    %125 = vector.shape_cast %124 : vector<1x8x16x4xbf16> to vector<8x16x4xbf16>
    %126 = tpu.concatenate %109, %113, %117, %121, %125 in 2 : vector<8x16x4xbf16>, vector<8x16x4xbf16>, vector<8x16x4xbf16>, vector<8x16x4xbf16>, vector<8x16x4xbf16> -> vector<8x16x20xbf16>
    %127 = vector.shape_cast %126 : vector<8x16x20xbf16> to vector<128x20xbf16>
    %c4_106 = arith.constant 4 : index
    %c0_107 = arith.constant 0 : index
    %c0_108 = arith.constant 0 : index
    %128 = vector.load %arg3[%c4_106, %c0_107, %c0_108] : memref<5x20x8xbf16, #tpu.memory_space<vmem>>, vector<1x20x8xbf16>
    %129 = vector.shape_cast %128 : vector<1x20x8xbf16> to vector<20x8xbf16>
    %cst_109 = arith.constant dense<0.000000e+00> : vector<128x8xf32>
    %130 = tpu.matmul %127, %129, %cst_109 {dimension_numbers = #tpu.dot_dimension_numbers<[1], [0], [0], [1], [0, 0, 1, 1], [], []>} : vector<128x20xbf16>, vector<20x8xbf16>, vector<128x8xf32> -> vector<128x8xf32>
    %131 = arith.addf %105, %130 : vector<128x8xf32>
    %132 = vector.shape_cast %131 : vector<128x8xf32> to vector<8x16x8xf32>
    %133 = arith.truncf %132 : vector<8x16x8xf32> to vector<8x16x8xbf16>
    %c0_110 = arith.constant 0 : index
    %c0_111 = arith.constant 0 : index
    %c0_112 = arith.constant 0 : index
    %c0_113 = arith.constant 0 : index
    %134 = vector.load %arg4[%c0_110, %c0_111, %c0_112, %c0_113] : memref<1x8x16x8xbf16, #tpu.memory_space<vmem>>, vector<1x8x16x8xbf16>
    %135 = vector.shape_cast %134 : vector<1x8x16x8xbf16> to vector<8x16x8xbf16>
    %136 = vector.shape_cast %133 : vector<8x16x8xbf16> to vector<1x8x16x8xbf16>
    tpu.vector_store %arg4[%c0_110, %c0_111, %c0_112, %c0_113], %136 {strides = array<i32>} : memref<1x8x16x8xbf16, #tpu.memory_space<vmem>>, vector<1x8x16x8xbf16>,
    %cst_114 = arith.constant dense<0.000000e+00> : vector<8xf32>
    %137 = vector.multi_reduction <add>, %131, %cst_114 [0] : vector<128x8xf32> to vector<8xf32>
    %138 = vector.shape_cast %137 : vector<8xf32> to vector<1x8xf32>
    %c0_115 = arith.constant 0 : index
    %c0_116 = arith.constant 0 : index
    %c0_117 = arith.constant 0 : index
    %c0_118 = arith.constant 0 : index
    %139 = vector.load %arg5[%c0_115, %c0_116, %c0_117, %c0_118] : memref<1x1x2x8xf32, #tpu.memory_space<vmem>>, vector<1x1x1x8xf32>
    %140 = vector.shape_cast %139 : vector<1x1x1x8xf32> to vector<1x8xf32>
    %141 = vector.shape_cast %138 : vector<1x8xf32> to vector<1x1x1x8xf32>
    tpu.vector_store %arg5[%c0_115, %c0_116, %c0_117, %c0_118], %141 {strides = array<i32>} : memref<1x1x2x8xf32, #tpu.memory_space<vmem>>, vector<1x1x1x8xf32>,
    %142 = arith.mulf %131, %131 : vector<128x8xf32>
    %cst_119 = arith.constant dense<0.000000e+00> : vector<8xf32>
    %143 = vector.multi_reduction <add>, %142, %cst_119 [0] : vector<128x8xf32> to vector<8xf32>
    %144 = vector.shape_cast %143 : vector<8xf32> to vector<1x8xf32>
    %c0_120 = arith.constant 0 : index
    %c0_121 = arith.constant 0 : index
    %c1_122 = arith.constant 1 : index
    %c0_123 = arith.constant 0 : index
    %145 = vector.load %arg5[%c0_120, %c0_121, %c1_122, %c0_123] : memref<1x1x2x8xf32, #tpu.memory_space<vmem>>, vector<1x1x1x8xf32>
    %146 = vector.shape_cast %145 : vector<1x1x1x8xf32> to vector<1x8xf32>
    %147 = vector.shape_cast %144 : vector<1x8xf32> to vector<1x1x1x8xf32>
    tpu.vector_store %arg5[%c0_120, %c0_121, %c1_122, %c0_123], %147 {strides = array<i32>} : memref<1x1x2x8xf32, #tpu.memory_space<vmem>>, vector<1x1x1x8xf32>,
    return
  }
  func.func @transform_0(%arg0: i32, %arg1: i32) -> (i32, i32, i32, i32) {
    %c0_i32 = arith.constant 0 : i32
    %c0_i32_0 = arith.constant 0 : i32
    %c0_i32_1 = arith.constant 0 : i32
    %c0_i32_2 = arith.constant 0 : i32
    return %arg0, %c0_i32, %c0_i32_0, %c0_i32_1 : i32, i32, i32, i32
  }
  func.func @transform_1(%arg0: i32, %arg1: i32) -> (i32, i32, i32) {
    %c0_i32 = arith.constant 0 : i32
    %c0_i32_0 = arith.constant 0 : i32
    %c0_i32_1 = arith.constant 0 : i32
    %c0_i32_2 = arith.constant 0 : i32
    return %c0_i32, %c0_i32_0, %c0_i32_1 : i32, i32, i32
  }
  func.func @transform_2(%arg0: i32, %arg1: i32) -> (i32, i32, i32, i32) {
    %c0_i32 = arith.constant 0 : i32
    %c0_i32_0 = arith.constant 0 : i32
    %c0_i32_1 = arith.constant 0 : i32
    return %arg0, %arg1, %c0_i32, %c0_i32_0 : i32, i32, i32, i32
  }
  func.func @transform_3(%arg0: i32, %arg1: i32) -> (i32, i32, i32, i32) {
    %c0_i32 = arith.constant 0 : i32
    %c0_i32_0 = arith.constant 0 : i32
    %c0_i32_1 = arith.constant 0 : i32
    return %arg0, %arg1, %c0_i32, %c0_i32_0 : i32, i32, i32, i32
  }
}

module attributes {stable_mosaic.version = 11 : i64} {
  func.func @_conv_kxk_stats_kernel(%arg0: i32, %arg1: i32, %arg2: memref<1x18x18x4xbf16, #tpu.memory_space<vmem>>, %arg3: memref<3x12x8xbf16, #tpu.memory_space<vmem>>, %arg4: memref<1x8x16x8xbf16, #tpu.memory_space<vmem>>, %arg5: memref<1x1x2x8xf32, #tpu.memory_space<vmem>>) attributes {dimension_semantics = [#tpu.dimension_semantics<parallel>, #tpu.dimension_semantics<parallel>], iteration_bounds = array<i64: 2, 2>, scalar_prefetch = 0 : i64, scratch_operands = 0 : i64, tpu.core_type = #tpu.core_type<tc>, window_params = [{transform_indices = @transform_0, window_bounds = array<i64: 1, 18, 18, 4>}, {pipeline_mode = #tpu.pipeline_mode<synchronous>, transform_indices = @transform_1, window_bounds = array<i64: 3, 12, 8>}, {transform_indices = @transform_2, window_bounds = array<i64: 1, 8, 16, 8>}, {transform_indices = @transform_3, window_bounds = array<i64: 1, 1, 2, 8>}]} {
    %c8_i32 = arith.constant 8 : i32
    %0 = arith.muli %arg1, %c8_i32 : i32
    %cst = arith.constant 0.000000e+00 : f32
    %1 = vector.broadcast %cst : f32 to vector<128x8xf32>
    %c0_i32 = arith.constant 0 : i32
    %2 = arith.addi %0, %c0_i32 : i32
    %c0 = arith.constant 0 : index
    %3 = arith.index_cast %2 : i32 to index
    %c0_0 = arith.constant 0 : index
    %c0_1 = arith.constant 0 : index
    %4 = vector.load %arg2[%c0, %3, %c0_0, %c0_1] : memref<1x18x18x4xbf16, #tpu.memory_space<vmem>>, vector<1x8x16x4xbf16>
    %5 = vector.shape_cast %4 : vector<1x8x16x4xbf16> to vector<8x16x4xbf16>
    %c0_i32_2 = arith.constant 0 : i32
    %6 = arith.addi %0, %c0_i32_2 : i32
    %c0_3 = arith.constant 0 : index
    %7 = arith.index_cast %6 : i32 to index
    %c1 = arith.constant 1 : index
    %c0_4 = arith.constant 0 : index
    %8 = vector.load %arg2[%c0_3, %7, %c1, %c0_4] : memref<1x18x18x4xbf16, #tpu.memory_space<vmem>>, vector<1x8x16x4xbf16>
    %9 = vector.shape_cast %8 : vector<1x8x16x4xbf16> to vector<8x16x4xbf16>
    %c0_i32_5 = arith.constant 0 : i32
    %10 = arith.addi %0, %c0_i32_5 : i32
    %c0_6 = arith.constant 0 : index
    %11 = arith.index_cast %10 : i32 to index
    %c2 = arith.constant 2 : index
    %c0_7 = arith.constant 0 : index
    %12 = vector.load %arg2[%c0_6, %11, %c2, %c0_7] : memref<1x18x18x4xbf16, #tpu.memory_space<vmem>>, vector<1x8x16x4xbf16>
    %13 = vector.shape_cast %12 : vector<1x8x16x4xbf16> to vector<8x16x4xbf16>
    %14 = tpu.concatenate %5, %9, %13 in 2 : vector<8x16x4xbf16>, vector<8x16x4xbf16>, vector<8x16x4xbf16> -> vector<8x16x12xbf16>
    %15 = vector.shape_cast %14 : vector<8x16x12xbf16> to vector<128x12xbf16>
    %c0_8 = arith.constant 0 : index
    %c0_9 = arith.constant 0 : index
    %c0_10 = arith.constant 0 : index
    %16 = vector.load %arg3[%c0_8, %c0_9, %c0_10] : memref<3x12x8xbf16, #tpu.memory_space<vmem>>, vector<1x12x8xbf16>
    %17 = vector.shape_cast %16 : vector<1x12x8xbf16> to vector<12x8xbf16>
    %cst_11 = arith.constant dense<0.000000e+00> : vector<128x8xf32>
    %18 = tpu.matmul %15, %17, %cst_11 {dimension_numbers = #tpu.dot_dimension_numbers<[1], [0], [0], [1], [0, 0, 1, 1], [], []>} : vector<128x12xbf16>, vector<12x8xbf16>, vector<128x8xf32> -> vector<128x8xf32>
    %19 = arith.addf %1, %18 : vector<128x8xf32>
    %c1_i32 = arith.constant 1 : i32
    %20 = arith.addi %0, %c1_i32 : i32
    %c0_12 = arith.constant 0 : index
    %21 = arith.index_cast %20 : i32 to index
    %c0_13 = arith.constant 0 : index
    %c0_14 = arith.constant 0 : index
    %22 = vector.load %arg2[%c0_12, %21, %c0_13, %c0_14] : memref<1x18x18x4xbf16, #tpu.memory_space<vmem>>, vector<1x8x16x4xbf16>
    %23 = vector.shape_cast %22 : vector<1x8x16x4xbf16> to vector<8x16x4xbf16>
    %c1_i32_15 = arith.constant 1 : i32
    %24 = arith.addi %0, %c1_i32_15 : i32
    %c0_16 = arith.constant 0 : index
    %25 = arith.index_cast %24 : i32 to index
    %c1_17 = arith.constant 1 : index
    %c0_18 = arith.constant 0 : index
    %26 = vector.load %arg2[%c0_16, %25, %c1_17, %c0_18] : memref<1x18x18x4xbf16, #tpu.memory_space<vmem>>, vector<1x8x16x4xbf16>
    %27 = vector.shape_cast %26 : vector<1x8x16x4xbf16> to vector<8x16x4xbf16>
    %c1_i32_19 = arith.constant 1 : i32
    %28 = arith.addi %0, %c1_i32_19 : i32
    %c0_20 = arith.constant 0 : index
    %29 = arith.index_cast %28 : i32 to index
    %c2_21 = arith.constant 2 : index
    %c0_22 = arith.constant 0 : index
    %30 = vector.load %arg2[%c0_20, %29, %c2_21, %c0_22] : memref<1x18x18x4xbf16, #tpu.memory_space<vmem>>, vector<1x8x16x4xbf16>
    %31 = vector.shape_cast %30 : vector<1x8x16x4xbf16> to vector<8x16x4xbf16>
    %32 = tpu.concatenate %23, %27, %31 in 2 : vector<8x16x4xbf16>, vector<8x16x4xbf16>, vector<8x16x4xbf16> -> vector<8x16x12xbf16>
    %33 = vector.shape_cast %32 : vector<8x16x12xbf16> to vector<128x12xbf16>
    %c1_23 = arith.constant 1 : index
    %c0_24 = arith.constant 0 : index
    %c0_25 = arith.constant 0 : index
    %34 = vector.load %arg3[%c1_23, %c0_24, %c0_25] : memref<3x12x8xbf16, #tpu.memory_space<vmem>>, vector<1x12x8xbf16>
    %35 = vector.shape_cast %34 : vector<1x12x8xbf16> to vector<12x8xbf16>
    %cst_26 = arith.constant dense<0.000000e+00> : vector<128x8xf32>
    %36 = tpu.matmul %33, %35, %cst_26 {dimension_numbers = #tpu.dot_dimension_numbers<[1], [0], [0], [1], [0, 0, 1, 1], [], []>} : vector<128x12xbf16>, vector<12x8xbf16>, vector<128x8xf32> -> vector<128x8xf32>
    %37 = arith.addf %19, %36 : vector<128x8xf32>
    %c2_i32 = arith.constant 2 : i32
    %38 = arith.addi %0, %c2_i32 : i32
    %c0_27 = arith.constant 0 : index
    %39 = arith.index_cast %38 : i32 to index
    %c0_28 = arith.constant 0 : index
    %c0_29 = arith.constant 0 : index
    %40 = vector.load %arg2[%c0_27, %39, %c0_28, %c0_29] : memref<1x18x18x4xbf16, #tpu.memory_space<vmem>>, vector<1x8x16x4xbf16>
    %41 = vector.shape_cast %40 : vector<1x8x16x4xbf16> to vector<8x16x4xbf16>
    %c2_i32_30 = arith.constant 2 : i32
    %42 = arith.addi %0, %c2_i32_30 : i32
    %c0_31 = arith.constant 0 : index
    %43 = arith.index_cast %42 : i32 to index
    %c1_32 = arith.constant 1 : index
    %c0_33 = arith.constant 0 : index
    %44 = vector.load %arg2[%c0_31, %43, %c1_32, %c0_33] : memref<1x18x18x4xbf16, #tpu.memory_space<vmem>>, vector<1x8x16x4xbf16>
    %45 = vector.shape_cast %44 : vector<1x8x16x4xbf16> to vector<8x16x4xbf16>
    %c2_i32_34 = arith.constant 2 : i32
    %46 = arith.addi %0, %c2_i32_34 : i32
    %c0_35 = arith.constant 0 : index
    %47 = arith.index_cast %46 : i32 to index
    %c2_36 = arith.constant 2 : index
    %c0_37 = arith.constant 0 : index
    %48 = vector.load %arg2[%c0_35, %47, %c2_36, %c0_37] : memref<1x18x18x4xbf16, #tpu.memory_space<vmem>>, vector<1x8x16x4xbf16>
    %49 = vector.shape_cast %48 : vector<1x8x16x4xbf16> to vector<8x16x4xbf16>
    %50 = tpu.concatenate %41, %45, %49 in 2 : vector<8x16x4xbf16>, vector<8x16x4xbf16>, vector<8x16x4xbf16> -> vector<8x16x12xbf16>
    %51 = vector.shape_cast %50 : vector<8x16x12xbf16> to vector<128x12xbf16>
    %c2_38 = arith.constant 2 : index
    %c0_39 = arith.constant 0 : index
    %c0_40 = arith.constant 0 : index
    %52 = vector.load %arg3[%c2_38, %c0_39, %c0_40] : memref<3x12x8xbf16, #tpu.memory_space<vmem>>, vector<1x12x8xbf16>
    %53 = vector.shape_cast %52 : vector<1x12x8xbf16> to vector<12x8xbf16>
    %cst_41 = arith.constant dense<0.000000e+00> : vector<128x8xf32>
    %54 = tpu.matmul %51, %53, %cst_41 {dimension_numbers = #tpu.dot_dimension_numbers<[1], [0], [0], [1], [0, 0, 1, 1], [], []>} : vector<128x12xbf16>, vector<12x8xbf16>, vector<128x8xf32> -> vector<128x8xf32>
    %55 = arith.addf %37, %54 : vector<128x8xf32>
    %56 = vector.shape_cast %55 : vector<128x8xf32> to vector<8x16x8xf32>
    %57 = arith.truncf %56 : vector<8x16x8xf32> to vector<8x16x8xbf16>
    %c0_42 = arith.constant 0 : index
    %c0_43 = arith.constant 0 : index
    %c0_44 = arith.constant 0 : index
    %c0_45 = arith.constant 0 : index
    %58 = vector.load %arg4[%c0_42, %c0_43, %c0_44, %c0_45] : memref<1x8x16x8xbf16, #tpu.memory_space<vmem>>, vector<1x8x16x8xbf16>
    %59 = vector.shape_cast %58 : vector<1x8x16x8xbf16> to vector<8x16x8xbf16>
    %60 = vector.shape_cast %57 : vector<8x16x8xbf16> to vector<1x8x16x8xbf16>
    tpu.vector_store %arg4[%c0_42, %c0_43, %c0_44, %c0_45], %60 {strides = array<i32>} : memref<1x8x16x8xbf16, #tpu.memory_space<vmem>>, vector<1x8x16x8xbf16>,
    %cst_46 = arith.constant dense<0.000000e+00> : vector<8xf32>
    %61 = vector.multi_reduction <add>, %55, %cst_46 [0] : vector<128x8xf32> to vector<8xf32>
    %62 = vector.shape_cast %61 : vector<8xf32> to vector<1x8xf32>
    %c0_47 = arith.constant 0 : index
    %c0_48 = arith.constant 0 : index
    %c0_49 = arith.constant 0 : index
    %c0_50 = arith.constant 0 : index
    %63 = vector.load %arg5[%c0_47, %c0_48, %c0_49, %c0_50] : memref<1x1x2x8xf32, #tpu.memory_space<vmem>>, vector<1x1x1x8xf32>
    %64 = vector.shape_cast %63 : vector<1x1x1x8xf32> to vector<1x8xf32>
    %65 = vector.shape_cast %62 : vector<1x8xf32> to vector<1x1x1x8xf32>
    tpu.vector_store %arg5[%c0_47, %c0_48, %c0_49, %c0_50], %65 {strides = array<i32>} : memref<1x1x2x8xf32, #tpu.memory_space<vmem>>, vector<1x1x1x8xf32>,
    %66 = arith.mulf %55, %55 : vector<128x8xf32>
    %cst_51 = arith.constant dense<0.000000e+00> : vector<8xf32>
    %67 = vector.multi_reduction <add>, %66, %cst_51 [0] : vector<128x8xf32> to vector<8xf32>
    %68 = vector.shape_cast %67 : vector<8xf32> to vector<1x8xf32>
    %c0_52 = arith.constant 0 : index
    %c0_53 = arith.constant 0 : index
    %c1_54 = arith.constant 1 : index
    %c0_55 = arith.constant 0 : index
    %69 = vector.load %arg5[%c0_52, %c0_53, %c1_54, %c0_55] : memref<1x1x2x8xf32, #tpu.memory_space<vmem>>, vector<1x1x1x8xf32>
    %70 = vector.shape_cast %69 : vector<1x1x1x8xf32> to vector<1x8xf32>
    %71 = vector.shape_cast %68 : vector<1x8xf32> to vector<1x1x1x8xf32>
    tpu.vector_store %arg5[%c0_52, %c0_53, %c1_54, %c0_55], %71 {strides = array<i32>} : memref<1x1x2x8xf32, #tpu.memory_space<vmem>>, vector<1x1x1x8xf32>,
    return
  }
  func.func @transform_0(%arg0: i32, %arg1: i32) -> (i32, i32, i32, i32) {
    %c0_i32 = arith.constant 0 : i32
    %c0_i32_0 = arith.constant 0 : i32
    %c0_i32_1 = arith.constant 0 : i32
    %c0_i32_2 = arith.constant 0 : i32
    return %arg0, %c0_i32, %c0_i32_0, %c0_i32_1 : i32, i32, i32, i32
  }
  func.func @transform_1(%arg0: i32, %arg1: i32) -> (i32, i32, i32) {
    %c0_i32 = arith.constant 0 : i32
    %c0_i32_0 = arith.constant 0 : i32
    %c0_i32_1 = arith.constant 0 : i32
    %c0_i32_2 = arith.constant 0 : i32
    return %c0_i32, %c0_i32_0, %c0_i32_1 : i32, i32, i32
  }
  func.func @transform_2(%arg0: i32, %arg1: i32) -> (i32, i32, i32, i32) {
    %c0_i32 = arith.constant 0 : i32
    %c0_i32_0 = arith.constant 0 : i32
    %c0_i32_1 = arith.constant 0 : i32
    return %arg0, %arg1, %c0_i32, %c0_i32_0 : i32, i32, i32, i32
  }
  func.func @transform_3(%arg0: i32, %arg1: i32) -> (i32, i32, i32, i32) {
    %c0_i32 = arith.constant 0 : i32
    %c0_i32_0 = arith.constant 0 : i32
    %c0_i32_1 = arith.constant 0 : i32
    return %arg0, %arg1, %c0_i32, %c0_i32_0 : i32, i32, i32, i32
  }
}

module attributes {stable_mosaic.version = 11 : i64} {
  func.func @_pool_conv_stats_kernel(%arg0: i32, %arg1: i32, %arg2: memref<1x18x18x4xbf16, #tpu.memory_space<vmem>>, %arg3: memref<4x8xbf16, #tpu.memory_space<vmem>>, %arg4: memref<1x8x16x8xbf16, #tpu.memory_space<vmem>>, %arg5: memref<1x1x2x8xf32, #tpu.memory_space<vmem>>) attributes {dimension_semantics = [#tpu.dimension_semantics<parallel>, #tpu.dimension_semantics<parallel>], iteration_bounds = array<i64: 2, 2>, scalar_prefetch = 0 : i64, scratch_operands = 0 : i64, tpu.core_type = #tpu.core_type<tc>, window_params = [{transform_indices = @transform_0, window_bounds = array<i64: 1, 18, 18, 4>}, {pipeline_mode = #tpu.pipeline_mode<synchronous>, transform_indices = @transform_1, window_bounds = array<i64: 4, 8>}, {transform_indices = @transform_2, window_bounds = array<i64: 1, 8, 16, 8>}, {transform_indices = @transform_3, window_bounds = array<i64: 1, 1, 2, 8>}]} {
    %c8_i32 = arith.constant 8 : i32
    %0 = arith.muli %arg1, %c8_i32 : i32
    %c0 = arith.constant 0 : index
    %1 = arith.index_cast %0 : i32 to index
    %c0_0 = arith.constant 0 : index
    %c0_1 = arith.constant 0 : index
    %2 = vector.load %arg2[%c0, %1, %c0_0, %c0_1] : memref<1x18x18x4xbf16, #tpu.memory_space<vmem>>, vector<1x8x16x4xbf16>
    %3 = vector.shape_cast %2 : vector<1x8x16x4xbf16> to vector<8x16x4xbf16>
    %c0_i32 = arith.constant 0 : i32
    %4 = arith.addi %0, %c0_i32 : i32
    %c0_2 = arith.constant 0 : index
    %5 = arith.index_cast %4 : i32 to index
    %c1 = arith.constant 1 : index
    %c0_3 = arith.constant 0 : index
    %6 = vector.load %arg2[%c0_2, %5, %c1, %c0_3] : memref<1x18x18x4xbf16, #tpu.memory_space<vmem>>, vector<1x8x16x4xbf16>
    %7 = vector.shape_cast %6 : vector<1x8x16x4xbf16> to vector<8x16x4xbf16>
    %8 = arith.maximumf %3, %7 : vector<8x16x4xbf16>
    %c0_i32_4 = arith.constant 0 : i32
    %9 = arith.addi %0, %c0_i32_4 : i32
    %c0_5 = arith.constant 0 : index
    %10 = arith.index_cast %9 : i32 to index
    %c2 = arith.constant 2 : index
    %c0_6 = arith.constant 0 : index
    %11 = vector.load %arg2[%c0_5, %10, %c2, %c0_6] : memref<1x18x18x4xbf16, #tpu.memory_space<vmem>>, vector<1x8x16x4xbf16>
    %12 = vector.shape_cast %11 : vector<1x8x16x4xbf16> to vector<8x16x4xbf16>
    %13 = arith.maximumf %8, %12 : vector<8x16x4xbf16>
    %c1_i32 = arith.constant 1 : i32
    %14 = arith.addi %0, %c1_i32 : i32
    %c0_7 = arith.constant 0 : index
    %15 = arith.index_cast %14 : i32 to index
    %c0_8 = arith.constant 0 : index
    %c0_9 = arith.constant 0 : index
    %16 = vector.load %arg2[%c0_7, %15, %c0_8, %c0_9] : memref<1x18x18x4xbf16, #tpu.memory_space<vmem>>, vector<1x8x16x4xbf16>
    %17 = vector.shape_cast %16 : vector<1x8x16x4xbf16> to vector<8x16x4xbf16>
    %18 = arith.maximumf %13, %17 : vector<8x16x4xbf16>
    %c1_i32_10 = arith.constant 1 : i32
    %19 = arith.addi %0, %c1_i32_10 : i32
    %c0_11 = arith.constant 0 : index
    %20 = arith.index_cast %19 : i32 to index
    %c1_12 = arith.constant 1 : index
    %c0_13 = arith.constant 0 : index
    %21 = vector.load %arg2[%c0_11, %20, %c1_12, %c0_13] : memref<1x18x18x4xbf16, #tpu.memory_space<vmem>>, vector<1x8x16x4xbf16>
    %22 = vector.shape_cast %21 : vector<1x8x16x4xbf16> to vector<8x16x4xbf16>
    %23 = arith.maximumf %18, %22 : vector<8x16x4xbf16>
    %c1_i32_14 = arith.constant 1 : i32
    %24 = arith.addi %0, %c1_i32_14 : i32
    %c0_15 = arith.constant 0 : index
    %25 = arith.index_cast %24 : i32 to index
    %c2_16 = arith.constant 2 : index
    %c0_17 = arith.constant 0 : index
    %26 = vector.load %arg2[%c0_15, %25, %c2_16, %c0_17] : memref<1x18x18x4xbf16, #tpu.memory_space<vmem>>, vector<1x8x16x4xbf16>
    %27 = vector.shape_cast %26 : vector<1x8x16x4xbf16> to vector<8x16x4xbf16>
    %28 = arith.maximumf %23, %27 : vector<8x16x4xbf16>
    %c2_i32 = arith.constant 2 : i32
    %29 = arith.addi %0, %c2_i32 : i32
    %c0_18 = arith.constant 0 : index
    %30 = arith.index_cast %29 : i32 to index
    %c0_19 = arith.constant 0 : index
    %c0_20 = arith.constant 0 : index
    %31 = vector.load %arg2[%c0_18, %30, %c0_19, %c0_20] : memref<1x18x18x4xbf16, #tpu.memory_space<vmem>>, vector<1x8x16x4xbf16>
    %32 = vector.shape_cast %31 : vector<1x8x16x4xbf16> to vector<8x16x4xbf16>
    %33 = arith.maximumf %28, %32 : vector<8x16x4xbf16>
    %c2_i32_21 = arith.constant 2 : i32
    %34 = arith.addi %0, %c2_i32_21 : i32
    %c0_22 = arith.constant 0 : index
    %35 = arith.index_cast %34 : i32 to index
    %c1_23 = arith.constant 1 : index
    %c0_24 = arith.constant 0 : index
    %36 = vector.load %arg2[%c0_22, %35, %c1_23, %c0_24] : memref<1x18x18x4xbf16, #tpu.memory_space<vmem>>, vector<1x8x16x4xbf16>
    %37 = vector.shape_cast %36 : vector<1x8x16x4xbf16> to vector<8x16x4xbf16>
    %38 = arith.maximumf %33, %37 : vector<8x16x4xbf16>
    %c2_i32_25 = arith.constant 2 : i32
    %39 = arith.addi %0, %c2_i32_25 : i32
    %c0_26 = arith.constant 0 : index
    %40 = arith.index_cast %39 : i32 to index
    %c2_27 = arith.constant 2 : index
    %c0_28 = arith.constant 0 : index
    %41 = vector.load %arg2[%c0_26, %40, %c2_27, %c0_28] : memref<1x18x18x4xbf16, #tpu.memory_space<vmem>>, vector<1x8x16x4xbf16>
    %42 = vector.shape_cast %41 : vector<1x8x16x4xbf16> to vector<8x16x4xbf16>
    %43 = arith.maximumf %38, %42 : vector<8x16x4xbf16>
    %44 = vector.shape_cast %43 : vector<8x16x4xbf16> to vector<128x4xbf16>
    %c0_29 = arith.constant 0 : index
    %c0_30 = arith.constant 0 : index
    %45 = vector.load %arg3[%c0_29, %c0_30] : memref<4x8xbf16, #tpu.memory_space<vmem>>, vector<4x8xbf16>
    %cst = arith.constant dense<0.000000e+00> : vector<128x8xf32>
    %46 = tpu.matmul %44, %45, %cst {dimension_numbers = #tpu.dot_dimension_numbers<[1], [0], [0], [1], [0, 0, 1, 1], [], []>} : vector<128x4xbf16>, vector<4x8xbf16>, vector<128x8xf32> -> vector<128x8xf32>
    %47 = vector.shape_cast %46 : vector<128x8xf32> to vector<8x16x8xf32>
    %48 = arith.truncf %47 : vector<8x16x8xf32> to vector<8x16x8xbf16>
    %c0_31 = arith.constant 0 : index
    %c0_32 = arith.constant 0 : index
    %c0_33 = arith.constant 0 : index
    %c0_34 = arith.constant 0 : index
    %49 = vector.load %arg4[%c0_31, %c0_32, %c0_33, %c0_34] : memref<1x8x16x8xbf16, #tpu.memory_space<vmem>>, vector<1x8x16x8xbf16>
    %50 = vector.shape_cast %49 : vector<1x8x16x8xbf16> to vector<8x16x8xbf16>
    %51 = vector.shape_cast %48 : vector<8x16x8xbf16> to vector<1x8x16x8xbf16>
    tpu.vector_store %arg4[%c0_31, %c0_32, %c0_33, %c0_34], %51 {strides = array<i32>} : memref<1x8x16x8xbf16, #tpu.memory_space<vmem>>, vector<1x8x16x8xbf16>,
    %cst_35 = arith.constant dense<0.000000e+00> : vector<8xf32>
    %52 = vector.multi_reduction <add>, %46, %cst_35 [0] : vector<128x8xf32> to vector<8xf32>
    %53 = vector.shape_cast %52 : vector<8xf32> to vector<1x8xf32>
    %c0_36 = arith.constant 0 : index
    %c0_37 = arith.constant 0 : index
    %c0_38 = arith.constant 0 : index
    %c0_39 = arith.constant 0 : index
    %54 = vector.load %arg5[%c0_36, %c0_37, %c0_38, %c0_39] : memref<1x1x2x8xf32, #tpu.memory_space<vmem>>, vector<1x1x1x8xf32>
    %55 = vector.shape_cast %54 : vector<1x1x1x8xf32> to vector<1x8xf32>
    %56 = vector.shape_cast %53 : vector<1x8xf32> to vector<1x1x1x8xf32>
    tpu.vector_store %arg5[%c0_36, %c0_37, %c0_38, %c0_39], %56 {strides = array<i32>} : memref<1x1x2x8xf32, #tpu.memory_space<vmem>>, vector<1x1x1x8xf32>,
    %57 = arith.mulf %46, %46 : vector<128x8xf32>
    %cst_40 = arith.constant dense<0.000000e+00> : vector<8xf32>
    %58 = vector.multi_reduction <add>, %57, %cst_40 [0] : vector<128x8xf32> to vector<8xf32>
    %59 = vector.shape_cast %58 : vector<8xf32> to vector<1x8xf32>
    %c0_41 = arith.constant 0 : index
    %c0_42 = arith.constant 0 : index
    %c1_43 = arith.constant 1 : index
    %c0_44 = arith.constant 0 : index
    %60 = vector.load %arg5[%c0_41, %c0_42, %c1_43, %c0_44] : memref<1x1x2x8xf32, #tpu.memory_space<vmem>>, vector<1x1x1x8xf32>
    %61 = vector.shape_cast %60 : vector<1x1x1x8xf32> to vector<1x8xf32>
    %62 = vector.shape_cast %59 : vector<1x8xf32> to vector<1x1x1x8xf32>
    tpu.vector_store %arg5[%c0_41, %c0_42, %c1_43, %c0_44], %62 {strides = array<i32>} : memref<1x1x2x8xf32, #tpu.memory_space<vmem>>, vector<1x1x1x8xf32>,
    return
  }
  func.func @transform_0(%arg0: i32, %arg1: i32) -> (i32, i32, i32, i32) {
    %c0_i32 = arith.constant 0 : i32
    %c0_i32_0 = arith.constant 0 : i32
    %c0_i32_1 = arith.constant 0 : i32
    %c0_i32_2 = arith.constant 0 : i32
    return %arg0, %c0_i32, %c0_i32_0, %c0_i32_1 : i32, i32, i32, i32
  }
  func.func @transform_1(%arg0: i32, %arg1: i32) -> (i32, i32) {
    %c0_i32 = arith.constant 0 : i32
    %c0_i32_0 = arith.constant 0 : i32
    %c0_i32_1 = arith.constant 0 : i32
    return %c0_i32, %c0_i32_0 : i32, i32
  }
  func.func @transform_2(%arg0: i32, %arg1: i32) -> (i32, i32, i32, i32) {
    %c0_i32 = arith.constant 0 : i32
    %c0_i32_0 = arith.constant 0 : i32
    %c0_i32_1 = arith.constant 0 : i32
    return %arg0, %arg1, %c0_i32, %c0_i32_0 : i32, i32, i32, i32
  }
  func.func @transform_3(%arg0: i32, %arg1: i32) -> (i32, i32, i32, i32) {
    %c0_i32 = arith.constant 0 : i32
    %c0_i32_0 = arith.constant 0 : i32
    %c0_i32_1 = arith.constant 0 : i32
    return %arg0, %arg1, %c0_i32, %c0_i32_0 : i32, i32, i32, i32
  }
}

module attributes {stable_mosaic.version = 11 : i64} {
  func.func @_bn_relu_concat_kernel(%arg0: i32, %arg1: memref<512x16xbf16, #tpu.memory_space<vmem>>, %arg2: memref<1x8xf32, #tpu.memory_space<vmem>>, %arg3: memref<1x8xf32, #tpu.memory_space<vmem>>, %arg4: memref<512x8xbf16, #tpu.memory_space<vmem>>, %arg5: memref<1x8xf32, #tpu.memory_space<vmem>>, %arg6: memref<1x8xf32, #tpu.memory_space<vmem>>, %arg7: memref<512x8xbf16, #tpu.memory_space<vmem>>, %arg8: memref<1x8xf32, #tpu.memory_space<vmem>>, %arg9: memref<1x8xf32, #tpu.memory_space<vmem>>, %arg10: memref<512x8xbf16, #tpu.memory_space<vmem>>, %arg11: memref<1x8xf32, #tpu.memory_space<vmem>>, %arg12: memref<1x8xf32, #tpu.memory_space<vmem>>, %arg13: memref<512x32xf32, #tpu.memory_space<vmem>>) attributes {dimension_semantics = [#tpu.dimension_semantics<parallel>], iteration_bounds = array<i64: 1>, scalar_prefetch = 0 : i64, scratch_operands = 0 : i64, tpu.core_type = #tpu.core_type<tc>, window_params = [{transform_indices = @transform_0, window_bounds = array<i64: 512, 16>}, {pipeline_mode = #tpu.pipeline_mode<synchronous>, transform_indices = @transform_1, window_bounds = array<i64: 1, 8>}, {pipeline_mode = #tpu.pipeline_mode<synchronous>, transform_indices = @transform_2, window_bounds = array<i64: 1, 8>}, {transform_indices = @transform_3, window_bounds = array<i64: 512, 8>}, {pipeline_mode = #tpu.pipeline_mode<synchronous>, transform_indices = @transform_4, window_bounds = array<i64: 1, 8>}, {pipeline_mode = #tpu.pipeline_mode<synchronous>, transform_indices = @transform_5, window_bounds = array<i64: 1, 8>}, {transform_indices = @transform_6, window_bounds = array<i64: 512, 8>}, {pipeline_mode = #tpu.pipeline_mode<synchronous>, transform_indices = @transform_7, window_bounds = array<i64: 1, 8>}, {pipeline_mode = #tpu.pipeline_mode<synchronous>, transform_indices = @transform_8, window_bounds = array<i64: 1, 8>}, {transform_indices = @transform_9, window_bounds = array<i64: 512, 8>}, {pipeline_mode = #tpu.pipeline_mode<synchronous>, transform_indices = @transform_10, window_bounds = array<i64: 1, 8>}, {pipeline_mode = #tpu.pipeline_mode<synchronous>, transform_indices = @transform_11, window_bounds = array<i64: 1, 8>}, {transform_indices = @transform_12, window_bounds = array<i64: 512, 32>}]} {
    %c0 = arith.constant 0 : index
    %c0_0 = arith.constant 0 : index
    %0 = vector.load %arg1[%c0, %c0_0] : memref<512x16xbf16, #tpu.memory_space<vmem>>, vector<512x16xbf16>
    %1 = arith.extf %0 : vector<512x16xbf16> to vector<512x16xf32>
    %2 = vector.extract_strided_slice %1 {offsets = [0, 0], sizes = [512, 8], strides = [1, 1]} : vector<512x16xf32> to vector<512x8xf32>
    %c0_1 = arith.constant 0 : index
    %c0_2 = arith.constant 0 : index
    %3 = vector.load %arg2[%c0_1, %c0_2] : memref<1x8xf32, #tpu.memory_space<vmem>>, vector<1x8xf32>
    %4 = vector.broadcast %3 : vector<1x8xf32> to vector<512x8xf32>
    %5 = arith.mulf %2, %4 : vector<512x8xf32>
    %c0_3 = arith.constant 0 : index
    %c0_4 = arith.constant 0 : index
    %6 = vector.load %arg3[%c0_3, %c0_4] : memref<1x8xf32, #tpu.memory_space<vmem>>, vector<1x8xf32>
    %7 = vector.broadcast %6 : vector<1x8xf32> to vector<512x8xf32>
    %8 = arith.addf %5, %7 : vector<512x8xf32>
    %cst = arith.constant 0.000000e+00 : f32
    %9 = vector.broadcast %cst : f32 to vector<512x8xf32>
    %10 = arith.maximumf %8, %9 : vector<512x8xf32>
    %c0_5 = arith.constant 0 : index
    %c0_6 = arith.constant 0 : index
    %11 = vector.load %arg4[%c0_5, %c0_6] : memref<512x8xbf16, #tpu.memory_space<vmem>>, vector<512x8xbf16>
    %12 = arith.extf %11 : vector<512x8xbf16> to vector<512x8xf32>
    %c0_7 = arith.constant 0 : index
    %c0_8 = arith.constant 0 : index
    %13 = vector.load %arg5[%c0_7, %c0_8] : memref<1x8xf32, #tpu.memory_space<vmem>>, vector<1x8xf32>
    %14 = vector.broadcast %13 : vector<1x8xf32> to vector<512x8xf32>
    %15 = arith.mulf %12, %14 : vector<512x8xf32>
    %c0_9 = arith.constant 0 : index
    %c0_10 = arith.constant 0 : index
    %16 = vector.load %arg6[%c0_9, %c0_10] : memref<1x8xf32, #tpu.memory_space<vmem>>, vector<1x8xf32>
    %17 = vector.broadcast %16 : vector<1x8xf32> to vector<512x8xf32>
    %18 = arith.addf %15, %17 : vector<512x8xf32>
    %cst_11 = arith.constant 0.000000e+00 : f32
    %19 = vector.broadcast %cst_11 : f32 to vector<512x8xf32>
    %20 = arith.maximumf %18, %19 : vector<512x8xf32>
    %c0_12 = arith.constant 0 : index
    %c0_13 = arith.constant 0 : index
    %21 = vector.load %arg7[%c0_12, %c0_13] : memref<512x8xbf16, #tpu.memory_space<vmem>>, vector<512x8xbf16>
    %22 = arith.extf %21 : vector<512x8xbf16> to vector<512x8xf32>
    %c0_14 = arith.constant 0 : index
    %c0_15 = arith.constant 0 : index
    %23 = vector.load %arg8[%c0_14, %c0_15] : memref<1x8xf32, #tpu.memory_space<vmem>>, vector<1x8xf32>
    %24 = vector.broadcast %23 : vector<1x8xf32> to vector<512x8xf32>
    %25 = arith.mulf %22, %24 : vector<512x8xf32>
    %c0_16 = arith.constant 0 : index
    %c0_17 = arith.constant 0 : index
    %26 = vector.load %arg9[%c0_16, %c0_17] : memref<1x8xf32, #tpu.memory_space<vmem>>, vector<1x8xf32>
    %27 = vector.broadcast %26 : vector<1x8xf32> to vector<512x8xf32>
    %28 = arith.addf %25, %27 : vector<512x8xf32>
    %cst_18 = arith.constant 0.000000e+00 : f32
    %29 = vector.broadcast %cst_18 : f32 to vector<512x8xf32>
    %30 = arith.maximumf %28, %29 : vector<512x8xf32>
    %c0_19 = arith.constant 0 : index
    %c0_20 = arith.constant 0 : index
    %31 = vector.load %arg10[%c0_19, %c0_20] : memref<512x8xbf16, #tpu.memory_space<vmem>>, vector<512x8xbf16>
    %32 = arith.extf %31 : vector<512x8xbf16> to vector<512x8xf32>
    %c0_21 = arith.constant 0 : index
    %c0_22 = arith.constant 0 : index
    %33 = vector.load %arg11[%c0_21, %c0_22] : memref<1x8xf32, #tpu.memory_space<vmem>>, vector<1x8xf32>
    %34 = vector.broadcast %33 : vector<1x8xf32> to vector<512x8xf32>
    %35 = arith.mulf %32, %34 : vector<512x8xf32>
    %c0_23 = arith.constant 0 : index
    %c0_24 = arith.constant 0 : index
    %36 = vector.load %arg12[%c0_23, %c0_24] : memref<1x8xf32, #tpu.memory_space<vmem>>, vector<1x8xf32>
    %37 = vector.broadcast %36 : vector<1x8xf32> to vector<512x8xf32>
    %38 = arith.addf %35, %37 : vector<512x8xf32>
    %cst_25 = arith.constant 0.000000e+00 : f32
    %39 = vector.broadcast %cst_25 : f32 to vector<512x8xf32>
    %40 = arith.maximumf %38, %39 : vector<512x8xf32>
    %41 = tpu.concatenate %10, %20, %30, %40 in 1 : vector<512x8xf32>, vector<512x8xf32>, vector<512x8xf32>, vector<512x8xf32> -> vector<512x32xf32>
    %c0_26 = arith.constant 0 : index
    %c0_27 = arith.constant 0 : index
    %42 = vector.load %arg13[%c0_26, %c0_27] : memref<512x32xf32, #tpu.memory_space<vmem>>, vector<512x32xf32>
    tpu.vector_store %arg13[%c0_26, %c0_27], %41 {strides = array<i32>} : memref<512x32xf32, #tpu.memory_space<vmem>>, vector<512x32xf32>,
    return
  }
  func.func @transform_0(%arg0: i32) -> (i32, i32) {
    %c0_i32 = arith.constant 0 : i32
    %c0_i32_0 = arith.constant 0 : i32
    return %arg0, %c0_i32 : i32, i32
  }
  func.func @transform_1(%arg0: i32) -> (i32, i32) {
    %c0_i32 = arith.constant 0 : i32
    %c0_i32_0 = arith.constant 0 : i32
    %c0_i32_1 = arith.constant 0 : i32
    return %c0_i32, %c0_i32_0 : i32, i32
  }
  func.func @transform_2(%arg0: i32) -> (i32, i32) {
    %c0_i32 = arith.constant 0 : i32
    %c0_i32_0 = arith.constant 0 : i32
    %c0_i32_1 = arith.constant 0 : i32
    return %c0_i32, %c0_i32_0 : i32, i32
  }
  func.func @transform_3(%arg0: i32) -> (i32, i32) {
    %c0_i32 = arith.constant 0 : i32
    %c0_i32_0 = arith.constant 0 : i32
    return %arg0, %c0_i32 : i32, i32
  }
  func.func @transform_4(%arg0: i32) -> (i32, i32) {
    %c0_i32 = arith.constant 0 : i32
    %c0_i32_0 = arith.constant 0 : i32
    %c0_i32_1 = arith.constant 0 : i32
    return %c0_i32, %c0_i32_0 : i32, i32
  }
  func.func @transform_5(%arg0: i32) -> (i32, i32) {
    %c0_i32 = arith.constant 0 : i32
    %c0_i32_0 = arith.constant 0 : i32
    %c0_i32_1 = arith.constant 0 : i32
    return %c0_i32, %c0_i32_0 : i32, i32
  }
  func.func @transform_6(%arg0: i32) -> (i32, i32) {
    %c0_i32 = arith.constant 0 : i32
    %c0_i32_0 = arith.constant 0 : i32
    return %arg0, %c0_i32 : i32, i32
  }
  func.func @transform_7(%arg0: i32) -> (i32, i32) {
    %c0_i32 = arith.constant 0 : i32
    %c0_i32_0 = arith.constant 0 : i32
    %c0_i32_1 = arith.constant 0 : i32
    return %c0_i32, %c0_i32_0 : i32, i32
  }
  func.func @transform_8(%arg0: i32) -> (i32, i32) {
    %c0_i32 = arith.constant 0 : i32
    %c0_i32_0 = arith.constant 0 : i32
    %c0_i32_1 = arith.constant 0 : i32
    return %c0_i32, %c0_i32_0 : i32, i32
  }
  func.func @transform_9(%arg0: i32) -> (i32, i32) {
    %c0_i32 = arith.constant 0 : i32
    %c0_i32_0 = arith.constant 0 : i32
    return %arg0, %c0_i32 : i32, i32
  }
  func.func @transform_10(%arg0: i32) -> (i32, i32) {
    %c0_i32 = arith.constant 0 : i32
    %c0_i32_0 = arith.constant 0 : i32
    %c0_i32_1 = arith.constant 0 : i32
    return %c0_i32, %c0_i32_0 : i32, i32
  }
  func.func @transform_11(%arg0: i32) -> (i32, i32) {
    %c0_i32 = arith.constant 0 : i32
    %c0_i32_0 = arith.constant 0 : i32
    %c0_i32_1 = arith.constant 0 : i32
    return %c0_i32, %c0_i32_0 : i32, i32
  }
  func.func @transform_12(%arg0: i32) -> (i32, i32) {
    %c0_i32 = arith.constant 0 : i32
    %c0_i32_0 = arith.constant 0 : i32
    return %arg0, %c0_i32 : i32, i32
  }
}

</mosaic_0001>

<llo_original>
// kernel: inception_forward.6
$region0: #{inception_forward.6}
  #allocation0 [shape = 'u32[]', space=smem, size = 0x4, offset = 0x4, fixed_abs, tag = 'smem constant byte address 0x4 - core index']
  #allocation1 [shape = 'u32[144,128]{1,0:T(1,128)}', space=vmem, size = 0x12000, scoped, tag = 'internal scratch']
  %s0 = inlined_call_operand.vmem [shape: bf16[512,4], index: 0, kind: input, shape index: {}]
  %s1 = inlined_call_operand.vmem [shape: bf16[4,16], index: 1, kind: input, shape index: {}]
  %s2 = inlined_call_operand.vmem [shape: bf16[512,16], index: 2, kind: output, shape index: {0}]
  %s3 = inlined_call_operand.vmem [shape: f32[1,2,16], index: 3, kind: output, shape index: {1}]
  %4 = xla_tuple %s2, %s3
  %s5 = sld [smem:[#allocation0]]
  $region26: #{inception_forward.6} parent=0
    _
  %s7 = ssub.s32 1, %s5
  %s8 = scalar_select 0, %s7, %s5
  // Predicated region
  $region2: #{inception_forward.6} parent=0 // pred_check
    _
  $region3: #{inception_forward.6} parent=0 // pred_check_branch
    %10 = sbr.rel (0) target = $region5
  $region4: #{inception_forward.6} parent=0 // pred_region
    _
  $region5: #{inception_forward.6} parent=0 // pred_fallthru
    _
  // Predicated region
  $region6: #{inception_forward.6} parent=0 // pred_check
    _
  $region7: #{inception_forward.6} parent=0 // pred_check_branch
    %12 = sbr.rel (0) target = $region9
  $region8: #{inception_forward.6} parent=0 // pred_region
    _
  $region9: #{inception_forward.6} parent=0 // pred_fallthru
    _
  %v14 = vld [vmem:[%s0] sm:$0xf]
  %v15 = vld [vmem:[%s0 + $0x4] sm:$0xf]
  %v16 = vld [vmem:[%s0 + $0x8] sm:$0xf]
  %v17 = vld [vmem:[%s0 + $0xc] sm:$0xf]
  %v18 = vld [vmem:[%s0 + $0x10] sm:$0xf]
  %v19 = vld [vmem:[%s0 + $0x14] sm:$0xf]
  %v20 = vld [vmem:[%s0 + $0x18] sm:$0xf]
  %v21 = vld [vmem:[%s0 + $0x1c] sm:$0xf]
  %v22 = vld [vmem:[%s0 + $0x20] sm:$0xf]
  %v23 = vld [vmem:[%s0 + $0x24] sm:$0xf]
  %v24 = vld [vmem:[%s0 + $0x28] sm:$0xf]
  %v25 = vld [vmem:[%s0 + $0x2c] sm:$0xf]
  %v26 = vld [vmem:[%s0 + $0x30] sm:$0xf]
  %v27 = vld [vmem:[%s0 + $0x34] sm:$0xf]
  %v28 = vld [vmem:[%s0 + $0x38] sm:$0xf]
  %v29 = vld [vmem:[%s0 + $0x3c] sm:$0xf]
  %v30 = vld [vmem:[%s0 + $0x40] sm:$0xf]
  %v31 = vld [vmem:[%s0 + $0x44] sm:$0xf]
  %v32 = vld [vmem:[%s0 + $0x48] sm:$0xf]
  %v33 = vld [vmem:[%s0 + $0x4c] sm:$0xf]
  %v34 = vld [vmem:[%s0 + $0x50] sm:$0xf]
  %v35 = vld [vmem:[%s0 + $0x54] sm:$0xf]
  %v36 = vld [vmem:[%s0 + $0x58] sm:$0xf]
  %v37 = vld [vmem:[%s0 + $0x5c] sm:$0xf]
  %v38 = vld [vmem:[%s0 + $0x60] sm:$0xf]
  %v39 = vld [vmem:[%s0 + $0x64] sm:$0xf]
  %v40 = vld [vmem:[%s0 + $0x68] sm:$0xf]
  %v41 = vld [vmem:[%s0 + $0x6c] sm:$0xf]
  %v42 = vld [vmem:[%s0 + $0x70] sm:$0xf]
  %v43 = vld [vmem:[%s0 + $0x74] sm:$0xf]
  %v44 = vld [vmem:[%s0 + $0x78] sm:$0xf]
  %v45 = vld [vmem:[%s0 + $0x7c] sm:$0xf]
  %v46 = vld [vmem:[%s0 + $0x80] sm:$0xf]
  %v47 = vld [vmem:[%s0 + $0x84] sm:$0xf]
  %v48 = vld [vmem:[%s0 + $0x88] sm:$0xf]
  %v49 = vld [vmem:[%s0 + $0x8c] sm:$0xf]
  %v50 = vld [vmem:[%s0 + $0x90] sm:$0xf]
  %v51 = vld [vmem:[%s0 + $0x94] sm:$0xf]
  %v52 = vld [vmem:[%s0 + $0x98] sm:$0xf]
  %v53 = vld [vmem:[%s0 + $0x9c] sm:$0xf]
  %v54 = vld [vmem:[%s0 + $0xa0] sm:$0xf]
  %v55 = vld [vmem:[%s0 + $0xa4] sm:$0xf]
  %v56 = vld [vmem:[%s0 + $0xa8] sm:$0xf]
  %v57 = vld [vmem:[%s0 + $0xac] sm:$0xf]
  %v58 = vld [vmem:[%s0 + $0xb0] sm:$0xf]
  %v59 = vld [vmem:[%s0 + $0xb4] sm:$0xf]
  %v60 = vld [vmem:[%s0 + $0xb8] sm:$0xf]
  %v61 = vld [vmem:[%s0 + $0xbc] sm:$0xf]
  %v62 = vld [vmem:[%s0 + $0xc0] sm:$0xf]
  %v63 = vld [vmem:[%s0 + $0xc4] sm:$0xf]
  %v64 = vld [vmem:[%s0 + $0xc8] sm:$0xf]
  %v65 = vld [vmem:[%s0 + $0xcc] sm:$0xf]
  %v66 = vld [vmem:[%s0 + $0xd0] sm:$0xf]
  %v67 = vld [vmem:[%s0 + $0xd4] sm:$0xf]
  %v68 = vld [vmem:[%s0 + $0xd8] sm:$0xf]
  %v69 = vld [vmem:[%s0 + $0xdc] sm:$0xf]
  %v70 = vld [vmem:[%s0 + $0xe0] sm:$0xf]
  %v71 = vld [vmem:[%s0 + $0xe4] sm:$0xf]
  %v72 = vld [vmem:[%s0 + $0xe8] sm:$0xf]
  %v73 = vld [vmem:[%s0 + $0xec] sm:$0xf]
  %v74 = vld [vmem:[%s0 + $0xf0] sm:$0xf]
  %v75 = vld [vmem:[%s0 + $0xf4] sm:$0xf]
  %v76 = vld [vmem:[%s0 + $0xf8] sm:$0xf]
  %v77 = vld [vmem:[%s0 + $0xfc] sm:$0xf]
  %v78 = vld [vmem:[%s1] sm:$0x3]
  %v143 = vunpack.c.l.b16 %v14
  %v144 = vunpack.c.l.b16 %v15
  %v145 = vunpack.c.l.b16 %v16
  %v146 = vunpack.c.l.b16 %v17
  %v147 = vunpack.c.l.b16 %v18
  %v148 = vunpack.c.l.b16 %v19
  %v149 = vunpack.c.l.b16 %v20
  %v150 = vunpack.c.l.b16 %v21
  %v151 = vunpack.c.l.b16 %v22
  %v152 = vunpack.c.l.b16 %v23
  %v153 = vunpack.c.l.b16 %v24
  %v154 = vunpack.c.l.b16 %v25
  %v155 = vunpack.c.l.b16 %v26
  %v156 = vunpack.c.l.b16 %v27
  %v157 = vunpack.c.l.b16 %v28
  %v158 = vunpack.c.l.b16 %v29
  %v159 = vunpack.c.l.b16 %v30
  %v160 = vunpack.c.l.b16 %v31
  %v161 = vunpack.c.l.b16 %v32
  %v162 = vunpack.c.l.b16 %v33
  %v163 = vunpack.c.l.b16 %v34
  %v164 = vunpack.c.l.b16 %v35
  %v165 = vunpack.c.l.b16 %v36
  %v166 = vunpack.c.l.b16 %v37
  %v167 = vunpack.c.l.b16 %v38
  %v168 = vunpack.c.l.b16 %v39
  %v169 = vunpack.c.l.b16 %v40
  %v170 = vunpack.c.l.b16 %v41
  %v171 = vunpack.c.l.b16 %v42
  %v172 = vunpack.c.l.b16 %v43
  %v173 = vunpack.c.l.b16 %v44
  %v174 = vunpack.c.l.b16 %v45
  %v175 = vunpack.c.l.b16 %v46
  %v176 = vunpack.c.l.b16 %v47
  %v177 = vunpack.c.l.b16 %v48
  %v178 = vunpack.c.l.b16 %v49
  %v179 = vunpack.c.l.b16 %v50
  %v180 = vunpack.c.l.b16 %v51
  %v181 = vunpack.c.l.b16 %v52
  %v182 = vunpack.c.l.b16 %v53
  %v183 = vunpack.c.l.b16 %v54
  %v184 = vunpack.c.l.b16 %v55
  %v185 = vunpack.c.l.b16 %v56
  %v186 = vunpack.c.l.b16 %v57
  %v187 = vunpack.c.l.b16 %v58
  %v188 = vunpack.c.l.b16 %v59
  %v189 = vunpack.c.l.b16 %v60
  %v190 = vunpack.c.l.b16 %v61
  %v191 = vunpack.c.l.b16 %v62
  %v192 = vunpack.c.l.b16 %v63
  %v193 = vunpack.c.l.b16 %v64
  %v194 = vunpack.c.l.b16 %v65
  %v195 = vunpack.c.l.b16 %v66
  %v196 = vunpack.c.l.b16 %v67
  %v197 = vunpack.c.l.b16 %v68
  %v198 = vunpack.c.l.b16 %v69
  %v199 = vunpack.c.l.b16 %v70
  %v200 = vunpack.c.l.b16 %v71
  %v201 = vunpack.c.l.b16 %v72
  %v202 = vunpack.c.l.b16 %v73
  %v203 = vunpack.c.l.b16 %v74
  %v204 = vunpack.c.l.b16 %v75
  %v205 = vunpack.c.l.b16 %v76
  %v206 = vunpack.c.l.b16 %v77
  %v207 = vpack.c.b16 %v144, %v143
  %v208 = vpack.c.b16 %v146, %v145
  %v209 = vpack.c.b16 %v148, %v147
  %v210 = vpack.c.b16 %v150, %v149
  %v211 = vpack.c.b16 %v152, %v151
  %v212 = vpack.c.b16 %v154, %v153
  %v213 = vpack.c.b16 %v156, %v155
  %v214 = vpack.c.b16 %v158, %v157
  %v215 = vpack.c.b16 %v160, %v159
  %v216 = vpack.c.b16 %v162, %v161
  %v217 = vpack.c.b16 %v164, %v163
  %v218 = vpack.c.b16 %v166, %v165
  %v219 = vpack.c.b16 %v168, %v167
  %v220 = vpack.c.b16 %v170, %v169
  %v221 = vpack.c.b16 %v172, %v171
  %v222 = vpack.c.b16 %v174, %v173
  %v223 = vpack.c.b16 %v176, %v175
  %v224 = vpack.c.b16 %v178, %v177
  %v225 = vpack.c.b16 %v180, %v179
  %v226 = vpack.c.b16 %v182, %v181
  %v227 = vpack.c.b16 %v184, %v183
  %v228 = vpack.c.b16 %v186, %v185
  %v229 = vpack.c.b16 %v188, %v187
  %v230 = vpack.c.b16 %v190, %v189
  %v231 = vpack.c.b16 %v192, %v191
  %v232 = vpack.c.b16 %v194, %v193
  %v233 = vpack.c.b16 %v196, %v195
  %v234 = vpack.c.b16 %v198, %v197
  %v235 = vpack.c.b16 %v200, %v199
  %v236 = vpack.c.b16 %v202, %v201
  %v237 = vpack.c.b16 %v204, %v203
  %v238 = vpack.c.b16 %v206, %v205
  %vm239 = vcmask 31744
  %v241 = vsel %vm239, %v207, 0
  %v244 = vsel %vm239, %v208, 0
  %v247 = vsel %vm239, %v209, 0
  %v250 = vsel %vm239, %v210, 0
  %v253 = vsel %vm239, %v211, 0
  %v256 = vsel %vm239, %v212, 0
  %v259 = vsel %vm239, %v213, 0
  %v262 = vsel %vm239, %v214, 0
  %v265 = vsel %vm239, %v215, 0
  %v268 = vsel %vm239, %v216, 0
  %v271 = vsel %vm239, %v217, 0
  %v274 = vsel %vm239, %v218, 0
  %v277 = vsel %vm239, %v219, 0
  %v280 = vsel %vm239, %v220, 0
  %v283 = vsel %vm239, %v221, 0
  %v286 = vsel %vm239, %v222, 0
  %v289 = vsel %vm239, %v223, 0
  %v292 = vsel %vm239, %v224, 0
  %v295 = vsel %vm239, %v225, 0
  %v298 = vsel %vm239, %v226, 0
  %v301 = vsel %vm239, %v227, 0
  %v304 = vsel %vm239, %v228, 0
  %v307 = vsel %vm239, %v229, 0
  %v310 = vsel %vm239, %v230, 0
  %v313 = vsel %vm239, %v231, 0
  %v316 = vsel %vm239, %v232, 0
  %v319 = vsel %vm239, %v233, 0
  %v322 = vsel %vm239, %v234, 0
  %v325 = vsel %vm239, %v235, 0
  %v328 = vsel %vm239, %v236, 0
  %v331 = vsel %vm239, %v237, 0
  %v334 = vsel %vm239, %v238, 0
  %vm336 = vcmask 1041408
  %v338 = vsel %vm336, %v78, 0
  %340 = vmatprep.subr.bf16.mxu0 0
  %341 = vmatpush1.bf16.msra.mxu0 %v338
  %342 = vmatprep.subr.bf16.mxu0 0
  %343 = vmatpush1.bf16.msra.mxu0 0
  %344 = vmatprep.subr.bf16.mxu0 0
  %345 = vmatpush1.bf16.msra.mxu0 0
  %346 = vmatprep.subr.bf16.mxu0 0
  %347 = vmatpush1.bf16.msra.mxu0 0
  %348 = vmatprep.subr.bf16.mxu0 0
  %349 = vmatpush1.bf16.msra.mxu0 0
  %350 = vmatprep.subr.bf16.mxu0 0
  %351 = vmatpush1.bf16.msra.mxu0 0
  %352 = vmatprep.subr.bf16.mxu0 0
  %353 = vmatpush1.bf16.msra.mxu0 0
  %354 = vmatprep.subr.bf16.mxu0 0
  %355 = vmatpush1.bf16.msra.mxu0 0
  %356 = vmatprep.subr.bf16.mxu0 0
  %357 = vmatpush1.bf16.msra.mxu0 0
  %358 = vmatprep.subr.bf16.mxu0 0
  %359 = vmatpush1.bf16.msra.mxu0 0
  %360 = vmatprep.subr.bf16.mxu0 0
  %361 = vmatpush1.bf16.msra.mxu0 0
  %362 = vmatprep.subr.bf16.mxu0 0
  %363 = vmatpush1.bf16.msra.mxu0 0
  %364 = vmatprep.subr.bf16.mxu0 0
  %365 = vmatpush1.bf16.msra.mxu0 0
  %366 = vmatprep.subr.bf16.mxu0 0
  %367 = vmatpush1.bf16.msra.mxu0 0
  %368 = vmatprep.subr.bf16.mxu0 0
  %369 = vmatpush1.bf16.msra.mxu0 0
  %370 = vmatprep.subr.bf16.mxu0 0
  %371 = vmatpush1.bf16.msra.mxu0 0
  %372 = vmatprep.mubr.bf16.mxu0 0
  %373 = vmatmul.mubr.bf16.gmra.mrb[0].mxu0 %v241
  %v374 = vpop.f32.mrb[0].mxu0
  %v375 = vadd.f32 0.0, %v374
  %v376 = vpop.f32.mrb[0].mxu0
  %v377 = vpop.f32.mrb[0].mxu0
  %v378 = vadd.f32 0.0, %v377
  %v379 = vpop.f32.mrb[0].mxu0
  %380 = vmatprep.mubr.bf16.mxu0 0
  %381 = vmatmul.mubr.bf16.gmra.mrb[0].mxu0 %v244
  %v382 = vpop.f32.mrb[0].mxu0
  %v383 = vadd.f32 0.0, %v382
  %v384 = vpop.f32.mrb[0].mxu0
  %v385 = vpop.f32.mrb[0].mxu0
  %v386 = vadd.f32 0.0, %v385
  %v387 = vpop.f32.mrb[0].mxu0
  %388 = vmatprep.mubr.bf16.mxu0 0
  %389 = vmatmul.mubr.bf16.gmra.mrb[0].mxu0 %v247
  %v390 = vpop.f32.mrb[0].mxu0
  %v391 = vadd.f32 0.0, %v390
  %v392 = vpop.f32.mrb[0].mxu0
  %v393 = vpop.f32.mrb[0].mxu0
  %v394 = vadd.f32 0.0, %v393
  %v395 = vpop.f32.mrb[0].mxu0
  %396 = vmatprep.mubr.bf16.mxu0 0
  %397 = vmatmul.mubr.bf16.gmra.mrb[0].mxu0 %v250
  %v398 = vpop.f32.mrb[0].mxu0
  %v399 = vadd.f32 0.0, %v398
  %v400 = vpop.f32.mrb[0].mxu0
  %v401 = vpop.f32.mrb[0].mxu0
  %v402 = vadd.f32 0.0, %v401
  %v403 = vpop.f32.mrb[0].mxu0
  %404 = vmatprep.mubr.bf16.mxu0 0
  %405 = vmatmul.mubr.bf16.gmra.mrb[0].mxu0 %v253
  %v406 = vpop.f32.mrb[0].mxu0
  %v407 = vadd.f32 0.0, %v406
  %v408 = vpop.f32.mrb[0].mxu0
  %v409 = vpop.f32.mrb[0].mxu0
  %v410 = vadd.f32 0.0, %v409
  %v411 = vpop.f32.mrb[0].mxu0
  %412 = vmatprep.mubr.bf16.mxu0 0
  %413 = vmatmul.mubr.bf16.gmra.mrb[0].mxu0 %v256
  %v414 = vpop.f32.mrb[0].mxu0
  %v415 = vadd.f32 0.0, %v414
  %v416 = vpop.f32.mrb[0].mxu0
  %v417 = vpop.f32.mrb[0].mxu0
  %v418 = vadd.f32 0.0, %v417
  %v419 = vpop.f32.mrb[0].mxu0
  %420 = vmatprep.mubr.bf16.mxu0 0
  %421 = vmatmul.mubr.bf16.gmra.mrb[0].mxu0 %v259
  %v422 = vpop.f32.mrb[0].mxu0
  %v423 = vadd.f32 0.0, %v422
  %v424 = vpop.f32.mrb[0].mxu0
  %v425 = vpop.f32.mrb[0].mxu0
  %v426 = vadd.f32 0.0, %v425
  %v427 = vpop.f32.mrb[0].mxu0
  %428 = vmatprep.mubr.bf16.mxu0 0
  %429 = vmatmul.mubr.bf16.gmra.mrb[0].mxu0 %v262
  %v430 = vpop.f32.mrb[0].mxu0
  %v431 = vadd.f32 0.0, %v430
  %v432 = vpop.f32.mrb[0].mxu0
  %v433 = vpop.f32.mrb[0].mxu0
  %v434 = vadd.f32 0.0, %v433
  %v435 = vpop.f32.mrb[0].mxu0
  %436 = vmatprep.mubr.bf16.mxu0 0
  %437 = vmatmul.mubr.bf16.gmra.mrb[0].mxu0 %v265
  %v438 = vpop.f32.mrb[0].mxu0
  %v439 = vadd.f32 0.0, %v438
  %v440 = vpop.f32.mrb[0].mxu0
  %v441 = vpop.f32.mrb[0].mxu0
  %v442 = vadd.f32 0.0, %v441
  %v443 = vpop.f32.mrb[0].mxu0
  %444 = vmatprep.mubr.bf16.mxu0 0
  %445 = vmatmul.mubr.bf16.gmra.mrb[0].mxu0 %v268
  %v446 = vpop.f32.mrb[0].mxu0
  %v447 = vadd.f32 0.0, %v446
  %v448 = vpop.f32.mrb[0].mxu0
  %v449 = vpop.f32.mrb[0].mxu0
  %v450 = vadd.f32 0.0, %v449
  %v451 = vpop.f32.mrb[0].mxu0
  %452 = vmatprep.mubr.bf16.mxu0 0
  %453 = vmatmul.mubr.bf16.gmra.mrb[0].mxu0 %v271
  %v454 = vpop.f32.mrb[0].mxu0
  %v455 = vadd.f32 0.0, %v454
  %v456 = vpop.f32.mrb[0].mxu0
  %v457 = vpop.f32.mrb[0].mxu0
  %v458 = vadd.f32 0.0, %v457
  %v459 = vpop.f32.mrb[0].mxu0
  %460 = vmatprep.mubr.bf16.mxu0 0
  %461 = vmatmul.mubr.bf16.gmra.mrb[0].mxu0 %v274
  %v462 = vpop.f32.mrb[0].mxu0
  %v463 = vadd.f32 0.0, %v462
  %v464 = vpop.f32.mrb[0].mxu0
  %v465 = vpop.f32.mrb[0].mxu0
  %v466 = vadd.f32 0.0, %v465
  %v467 = vpop.f32.mrb[0].mxu0
  %468 = vmatprep.mubr.bf16.mxu0 0
  %469 = vmatmul.mubr.bf16.gmra.mrb[0].mxu0 %v277
  %v470 = vpop.f32.mrb[0].mxu0
  %v471 = vadd.f32 0.0, %v470
  %v472 = vpop.f32.mrb[0].mxu0
  %v473 = vpop.f32.mrb[0].mxu0
  %v474 = vadd.f32 0.0, %v473
  %v475 = vpop.f32.mrb[0].mxu0
  %476 = vmatprep.mubr.bf16.mxu0 0
  %477 = vmatmul.mubr.bf16.gmra.mrb[0].mxu0 %v280
  %v478 = vpop.f32.mrb[0].mxu0
  %v479 = vadd.f32 0.0, %v478
  %v480 = vpop.f32.mrb[0].mxu0
  %v481 = vpop.f32.mrb[0].mxu0
  %v482 = vadd.f32 0.0, %v481
  %v483 = vpop.f32.mrb[0].mxu0
  %484 = vmatprep.mubr.bf16.mxu0 0
  %485 = vmatmul.mubr.bf16.gmra.mrb[0].mxu0 %v283
  %v486 = vpop.f32.mrb[0].mxu0
  %v487 = vadd.f32 0.0, %v486
  %v488 = vpop.f32.mrb[0].mxu0
  %v489 = vpop.f32.mrb[0].mxu0
  %v490 = vadd.f32 0.0, %v489
  %v491 = vpop.f32.mrb[0].mxu0
  %492 = vmatprep.mubr.bf16.mxu0 0
  %493 = vmatmul.mubr.bf16.gmra.mrb[0].mxu0 %v286
  %v494 = vpop.f32.mrb[0].mxu0
  %v495 = vadd.f32 0.0, %v494
  %v496 = vpop.f32.mrb[0].mxu0
  %v497 = vpop.f32.mrb[0].mxu0
  %v498 = vadd.f32 0.0, %v497
  %v499 = vpop.f32.mrb[0].mxu0
  %500 = vmatprep.mubr.bf16.mxu0 0
  %501 = vmatmul.mubr.bf16.gmra.mrb[0].mxu0 %v289
  %v502 = vpop.f32.mrb[0].mxu0
  %v503 = vadd.f32 0.0, %v502
  %v504 = vpop.f32.mrb[0].mxu0
  %v505 = vpop.f32.mrb[0].mxu0
  %v506 = vadd.f32 0.0, %v505
  %v507 = vpop.f32.mrb[0].mxu0
  %508 = vmatprep.mubr.bf16.mxu0 0
  %509 = vmatmul.mubr.bf16.gmra.mrb[0].mxu0 %v292
  %v510 = vpop.f32.mrb[0].mxu0
  %v511 = vadd.f32 0.0, %v510
  %v512 = vpop.f32.mrb[0].mxu0
  %v513 = vpop.f32.mrb[0].mxu0
  %v514 = vadd.f32 0.0, %v513
  %v515 = vpop.f32.mrb[0].mxu0
  %516 = vmatprep.mubr.bf16.mxu0 0
  %517 = vmatmul.mubr.bf16.gmra.mrb[0].mxu0 %v295
  %v518 = vpop.f32.mrb[0].mxu0
  %v519 = vadd.f32 0.0, %v518
  %v520 = vpop.f32.mrb[0].mxu0
  %v521 = vpop.f32.mrb[0].mxu0
  %v522 = vadd.f32 0.0, %v521
  %v523 = vpop.f32.mrb[0].mxu0
  %524 = vmatprep.mubr.bf16.mxu0 0
  %525 = vmatmul.mubr.bf16.gmra.mrb[0].mxu0 %v298
  %v526 = vpop.f32.mrb[0].mxu0
  %v527 = vadd.f32 0.0, %v526
  %v528 = vpop.f32.mrb[0].mxu0
  %v529 = vpop.f32.mrb[0].mxu0
  %v530 = vadd.f32 0.0, %v529
  %v531 = vpop.f32.mrb[0].mxu0
  %532 = vmatprep.mubr.bf16.mxu0 0
  %533 = vmatmul.mubr.bf16.gmra.mrb[0].mxu0 %v301
  %v534 = vpop.f32.mrb[0].mxu0
  %v535 = vadd.f32 0.0, %v534
  %v536 = vpop.f32.mrb[0].mxu0
  %v537 = vpop.f32.mrb[0].mxu0
  %v538 = vadd.f32 0.0, %v537
  %v539 = vpop.f32.mrb[0].mxu0
  %540 = vmatprep.mubr.bf16.mxu0 0
  %541 = vmatmul.mubr.bf16.gmra.mrb[0].mxu0 %v304
  %v542 = vpop.f32.mrb[0].mxu0
  %v543 = vadd.f32 0.0, %v542
  %v544 = vpop.f32.mrb[0].mxu0
  %v545 = vpop.f32.mrb[0].mxu0
  %v546 = vadd.f32 0.0, %v545
  %v547 = vpop.f32.mrb[0].mxu0
  %548 = vmatprep.mubr.bf16.mxu0 0
  %549 = vmatmul.mubr.bf16.gmra.mrb[0].mxu0 %v307
  %v550 = vpop.f32.mrb[0].mxu0
  %v551 = vadd.f32 0.0, %v550
  %v552 = vpop.f32.mrb[0].mxu0
  %v553 = vpop.f32.mrb[0].mxu0
  %v554 = vadd.f32 0.0, %v553
  %v555 = vpop.f32.mrb[0].mxu0
  %556 = vmatprep.mubr.bf16.mxu0 0
  %557 = vmatmul.mubr.bf16.gmra.mrb[0].mxu0 %v310
  %v558 = vpop.f32.mrb[0].mxu0
  %v559 = vadd.f32 0.0, %v558
  %v560 = vpop.f32.mrb[0].mxu0
  %v561 = vpop.f32.mrb[0].mxu0
  %v562 = vadd.f32 0.0, %v561
  %v563 = vpop.f32.mrb[0].mxu0
  %564 = vmatprep.mubr.bf16.mxu0 0
  %565 = vmatmul.mubr.bf16.gmra.mrb[0].mxu0 %v313
  %v566 = vpop.f32.mrb[0].mxu0
  %v567 = vadd.f32 0.0, %v566
  %v568 = vpop.f32.mrb[0].mxu0
  %v569 = vpop.f32.mrb[0].mxu0
  %v570 = vadd.f32 0.0, %v569
  %v571 = vpop.f32.mrb[0].mxu0
  %572 = vmatprep.mubr.bf16.mxu0 0
  %573 = vmatmul.mubr.bf16.gmra.mrb[0].mxu0 %v316
  %v574 = vpop.f32.mrb[0].mxu0
  %v575 = vadd.f32 0.0, %v574
  %v576 = vpop.f32.mrb[0].mxu0
  %v577 = vpop.f32.mrb[0].mxu0
  %v578 = vadd.f32 0.0, %v577
  %v579 = vpop.f32.mrb[0].mxu0
  %580 = vmatprep.mubr.bf16.mxu0 0
  %581 = vmatmul.mubr.bf16.gmra.mrb[0].mxu0 %v319
  %v582 = vpop.f32.mrb[0].mxu0
  %v583 = vadd.f32 0.0, %v582
  %v584 = vpop.f32.mrb[0].mxu0
  %v585 = vpop.f32.mrb[0].mxu0
  %v586 = vadd.f32 0.0, %v585
  %v587 = vpop.f32.mrb[0].mxu0
  %588 = vmatprep.mubr.bf16.mxu0 0
  %589 = vmatmul.mubr.bf16.gmra.mrb[0].mxu0 %v322
  %v590 = vpop.f32.mrb[0].mxu0
  %v591 = vadd.f32 0.0, %v590
  %v592 = vpop.f32.mrb[0].mxu0
  %v593 = vpop.f32.mrb[0].mxu0
  %v594 = vadd.f32 0.0, %v593
  %v595 = vpop.f32.mrb[0].mxu0
  %596 = vmatprep.mubr.bf16.mxu0 0
  %597 = vmatmul.mubr.bf16.gmra.mrb[0].mxu0 %v325
  %v598 = vpop.f32.mrb[0].mxu0
  %v599 = vadd.f32 0.0, %v598
  %v600 = vpop.f32.mrb[0].mxu0
  %v601 = vpop.f32.mrb[0].mxu0
  %v602 = vadd.f32 0.0, %v601
  %v603 = vpop.f32.mrb[0].mxu0
  %604 = vmatprep.mubr.bf16.mxu0 0
  %605 = vmatmul.mubr.bf16.gmra.mrb[0].mxu0 %v328
  %v606 = vpop.f32.mrb[0].mxu0
  %v607 = vadd.f32 0.0, %v606
  %v608 = vpop.f32.mrb[0].mxu0
  %v609 = vpop.f32.mrb[0].mxu0
  %v610 = vadd.f32 0.0, %v609
  %v611 = vpop.f32.mrb[0].mxu0
  %612 = vmatprep.mubr.bf16.mxu0 0
  %613 = vmatmul.mubr.bf16.gmra.mrb[0].mxu0 %v331
  %v614 = vpop.f32.mrb[0].mxu0
  %v615 = vadd.f32 0.0, %v614
  %v616 = vpop.f32.mrb[0].mxu0
  %v617 = vpop.f32.mrb[0].mxu0
  %v618 = vadd.f32 0.0, %v617
  %v619 = vpop.f32.mrb[0].mxu0
  %620 = vmatprep.mubr.bf16.mxu0 0
  %621 = vmatmul.mubr.bf16.gmra.mrb[0].mxu0 %v334
  %v622 = vpop.f32.mrb[0].mxu0
  %v623 = vadd.f32 0.0, %v622
  %v624 = vpop.f32.mrb[0].mxu0
  %v625 = vpop.f32.mrb[0].mxu0
  %v626 = vadd.f32 0.0, %v625
  %v627 = vpop.f32.mrb[0].mxu0
  %628 = vdwg.mxu0
  %v629 = vpack.c.bf16 %v378, %v375
  %v630 = vpack.c.bf16 %v386, %v383
  %v631 = vpack.c.bf16 %v394, %v391
  %v632 = vpack.c.bf16 %v402, %v399
  %v633 = vpack.c.bf16 %v410, %v407
  %v634 = vpack.c.bf16 %v418, %v415
  %v635 = vpack.c.bf16 %v426, %v423
  %v636 = vpack.c.bf16 %v434, %v431
  %v637 = vpack.c.bf16 %v442, %v439
  %v638 = vpack.c.bf16 %v450, %v447
  %v639 = vpack.c.bf16 %v458, %v455
  %v640 = vpack.c.bf16 %v466, %v463
  %v641 = vpack.c.bf16 %v474, %v471
  %v642 = vpack.c.bf16 %v482, %v479
  %v643 = vpack.c.bf16 %v490, %v487
  %v644 = vpack.c.bf16 %v498, %v495
  %v645 = vpack.c.bf16 %v506, %v503
  %v646 = vpack.c.bf16 %v514, %v511
  %v647 = vpack.c.bf16 %v522, %v519
  %v648 = vpack.c.bf16 %v530, %v527
  %v649 = vpack.c.bf16 %v538, %v535
  %v650 = vpack.c.bf16 %v546, %v543
  %v651 = vpack.c.bf16 %v554, %v551
  %v652 = vpack.c.bf16 %v562, %v559
  %v653 = vpack.c.bf16 %v570, %v567
  %v654 = vpack.c.bf16 %v578, %v575
  %v655 = vpack.c.bf16 %v586, %v583
  %v656 = vpack.c.bf16 %v594, %v591
  %v657 = vpack.c.bf16 %v602, %v599
  %v658 = vpack.c.bf16 %v610, %v607
  %v659 = vpack.c.bf16 %v618, %v615
  %v660 = vpack.c.bf16 %v626, %v623
  %v693 = vunpack.c.l.b16 %v629
  %v694 = vunpack.c.h.b16 %v629
  %v695 = vunpack.c.l.b16 %v630
  %v696 = vunpack.c.h.b16 %v630
  %v697 = vunpack.c.l.b16 %v631
  %v698 = vunpack.c.h.b16 %v631
  %v699 = vunpack.c.l.b16 %v632
  %v700 = vunpack.c.h.b16 %v632
  %v701 = vunpack.c.l.b16 %v633
  %v702 = vunpack.c.h.b16 %v633
  %v703 = vunpack.c.l.b16 %v634
  %v704 = vunpack.c.h.b16 %v634
  %v705 = vunpack.c.l.b16 %v635
  %v706 = vunpack.c.h.b16 %v635
  %v707 = vunpack.c.l.b16 %v636
  %v708 = vunpack.c.h.b16 %v636
  %v709 = vunpack.c.l.b16 %v637
  %v710 = vunpack.c.h.b16 %v637
  %v711 = vunpack.c.l.b16 %v638
  %v712 = vunpack.c.h.b16 %v638
  %v713 = vunpack.c.l.b16 %v639
  %v714 = vunpack.c.h.b16 %v639
  %v715 = vunpack.c.l.b16 %v640
  %v716 = vunpack.c.h.b16 %v640
  %v717 = vunpack.c.l.b16 %v641
  %v718 = vunpack.c.h.b16 %v641
  %v719 = vunpack.c.l.b16 %v642
  %v720 = vunpack.c.h.b16 %v642
  %v721 = vunpack.c.l.b16 %v643
  %v722 = vunpack.c.h.b16 %v643
  %v723 = vunpack.c.l.b16 %v644
  %v724 = vunpack.c.h.b16 %v644
  %v725 = vunpack.c.l.b16 %v645
  %v726 = vunpack.c.h.b16 %v645
  %v727 = vunpack.c.l.b16 %v646
  %v728 = vunpack.c.h.b16 %v646
  %v729 = vunpack.c.l.b16 %v647
  %v730 = vunpack.c.h.b16 %v647
  %v731 = vunpack.c.l.b16 %v648
  %v732 = vunpack.c.h.b16 %v648
  %v733 = vunpack.c.l.b16 %v649
  %v734 = vunpack.c.h.b16 %v649
  %v735 = vunpack.c.l.b16 %v650
  %v736 = vunpack.c.h.b16 %v650
  %v737 = vunpack.c.l.b16 %v651
  %v738 = vunpack.c.h.b16 %v651
  %v739 = vunpack.c.l.b16 %v652
  %v740 = vunpack.c.h.b16 %v652
  %v741 = vunpack.c.l.b16 %v653
  %v742 = vunpack.c.h.b16 %v653
  %v743 = vunpack.c.l.b16 %v654
  %v744 = vunpack.c.h.b16 %v654
  %v745 = vunpack.c.l.b16 %v655
  %v746 = vunpack.c.h.b16 %v655
  %v747 = vunpack.c.l.b16 %v656
  %v748 = vunpack.c.h.b16 %v656
  %v749 = vunpack.c.l.b16 %v657
  %v750 = vunpack.c.h.b16 %v657
  %v751 = vunpack.c.l.b16 %v658
  %v752 = vunpack.c.h.b16 %v658
  %v753 = vunpack.c.l.b16 %v659
  %v754 = vunpack.c.h.b16 %v659
  %v755 = vunpack.c.l.b16 %v660
  %v756 = vunpack.c.h.b16 %v660
  %v757 = vpack.c.b16 %v693, %v693
  %v758 = vpack.c.b16 %v694, %v694
  %v759 = vpack.c.b16 %v695, %v695
  %v760 = vpack.c.b16 %v696, %v696
  %v761 = vpack.c.b16 %v697, %v697
  %v762 = vpack.c.b16 %v698, %v698
  %v763 = vpack.c.b16 %v699, %v699
  %v764 = vpack.c.b16 %v700, %v700
  %v765 = vpack.c.b16 %v701, %v701
  %v766 = vpack.c.b16 %v702, %v702
  %v767 = vpack.c.b16 %v703, %v703
  %v768 = vpack.c.b16 %v704, %v704
  %v769 = vpack.c.b16 %v705, %v705
  %v770 = vpack.c.b16 %v706, %v706
  %v771 = vpack.c.b16 %v707, %v707
  %v772 = vpack.c.b16 %v708, %v708
  %v773 = vpack.c.b16 %v709, %v709
  %v774 = vpack.c.b16 %v710, %v710
  %v775 = vpack.c.b16 %v711, %v711
  %v776 = vpack.c.b16 %v712, %v712
  %v777 = vpack.c.b16 %v713, %v713
  %v778 = vpack.c.b16 %v714, %v714
  %v779 = vpack.c.b16 %v715, %v715
  %v780 = vpack.c.b16 %v716, %v716
  %v781 = vpack.c.b16 %v717, %v717
  %v782 = vpack.c.b16 %v718, %v718
  %v783 = vpack.c.b16 %v719, %v719
  %v784 = vpack.c.b16 %v720, %v720
  %v785 = vpack.c.b16 %v721, %v721
  %v786 = vpack.c.b16 %v722, %v722
  %v787 = vpack.c.b16 %v723, %v723
  %v788 = vpack.c.b16 %v724, %v724
  %v789 = vpack.c.b16 %v725, %v725
  %v790 = vpack.c.b16 %v726, %v726
  %v791 = vpack.c.b16 %v727, %v727
  %v792 = vpack.c.b16 %v728, %v728
  %v793 = vpack.c.b16 %v729, %v729
  %v794 = vpack.c.b16 %v730, %v730
  %v795 = vpack.c.b16 %v731, %v731
  %v796 = vpack.c.b16 %v732, %v732
  %v797 = vpack.c.b16 %v733, %v733
  %v798 = vpack.c.b16 %v734, %v734
  %v799 = vpack.c.b16 %v735, %v735
  %v800 = vpack.c.b16 %v736, %v736
  %v801 = vpack.c.b16 %v737, %v737
  %v802 = vpack.c.b16 %v738, %v738
  %v803 = vpack.c.b16 %v739, %v739
  %v804 = vpack.c.b16 %v740, %v740
  %v805 = vpack.c.b16 %v741, %v741
  %v806 = vpack.c.b16 %v742, %v742
  %v807 = vpack.c.b16 %v743, %v743
  %v808 = vpack.c.b16 %v744, %v744
  %v809 = vpack.c.b16 %v745, %v745
  %v810 = vpack.c.b16 %v746, %v746
  %v811 = vpack.c.b16 %v747, %v747
  %v812 = vpack.c.b16 %v748, %v748
  %v813 = vpack.c.b16 %v749, %v749
  %v814 = vpack.c.b16 %v750, %v750
  %v815 = vpack.c.b16 %v751, %v751
  %v816 = vpack.c.b16 %v752, %v752
  %v817 = vpack.c.b16 %v753, %v753
  %v818 = vpack.c.b16 %v754, %v754
  %v819 = vpack.c.b16 %v755, %v755
  %v820 = vpack.c.b16 %v756, %v756
  %vm885 = vcmask 125952
  %886 = vst.msk [vmem:[%s2] sm:$0xf] %vm885, %v757
  %887 = vst.msk [vmem:[%s2 + $0x4] sm:$0xf] %vm885, %v758
  %888 = vst.msk [vmem:[%s2 + $0x8] sm:$0xf] %vm885, %v759
  %889 = vst.msk [vmem:[%s2 + $0xc] sm:$0xf] %vm885, %v760
  %890 = vst.msk [vmem:[%s2 + $0x10] sm:$0xf] %vm885, %v761
  %891 = vst.msk [vmem:[%s2 + $0x14] sm:$0xf] %vm885, %v762
  %892 = vst.msk [vmem:[%s2 + $0x18] sm:$0xf] %vm885, %v763
  %893 = vst.msk [vmem:[%s2 + $0x1c] sm:$0xf] %vm885, %v764
  %894 = vst.msk [vmem:[%s2 + $0x20] sm:$0xf] %vm885, %v765
  %895 = vst.msk [vmem:[%s2 + $0x24] sm:$0xf] %vm885, %v766
  %896 = vst.msk [vmem:[%s2 + $0x28] sm:$0xf] %vm885, %v767
  %897 = vst.msk [vmem:[%s2 + $0x2c] sm:$0xf] %vm885, %v768
  %898 = vst.msk [vmem:[%s2 + $0x30] sm:$0xf] %vm885, %v769
  %899 = vst.msk [vmem:[%s2 + $0x34] sm:$0xf] %vm885, %v770
  %900 = vst.msk [vmem:[%s2 + $0x38] sm:$0xf] %vm885, %v771
  %901 = vst.msk [vmem:[%s2 + $0x3c] sm:$0xf] %vm885, %v772
  %902 = vst.msk [vmem:[%s2 + $0x40] sm:$0xf] %vm885, %v773
  %903 = vst.msk [vmem:[%s2 + $0x44] sm:$0xf] %vm885, %v774
  %904 = vst.msk [vmem:[%s2 + $0x48] sm:$0xf] %vm885, %v775
  %905 = vst.msk [vmem:[%s2 + $0x4c] sm:$0xf] %vm885, %v776
  %906 = vst.msk [vmem:[%s2 + $0x50] sm:$0xf] %vm885, %v777
  %907 = vst.msk [vmem:[%s2 + $0x54] sm:$0xf] %vm885, %v778
  %908 = vst.msk [vmem:[%s2 + $0x58] sm:$0xf] %vm885, %v779
  %909 = vst.msk [vmem:[%s2 + $0x5c] sm:$0xf] %vm885, %v780
  %910 = vst.msk [vmem:[%s2 + $0x60] sm:$0xf] %vm885, %v781
  %911 = vst.msk [vmem:[%s2 + $0x64] sm:$0xf] %vm885, %v782
  %912 = vst.msk [vmem:[%s2 + $0x68] sm:$0xf] %vm885, %v783
  %913 = vst.msk [vmem:[%s2 + $0x6c] sm:$0xf] %vm885, %v784
  %914 = vst.msk [vmem:[%s2 + $0x70] sm:$0xf] %vm885, %v785
  %915 = vst.msk [vmem:[%s2 + $0x74] sm:$0xf] %vm885, %v786
  %916 = vst.msk [vmem:[%s2 + $0x78] sm:$0xf] %vm885, %v787
  %917 = vst.msk [vmem:[%s2 + $0x7c] sm:$0xf] %vm885, %v788
  %918 = vst.msk [vmem:[%s2 + $0x80] sm:$0xf] %vm885, %v789
  %919 = vst.msk [vmem:[%s2 + $0x84] sm:$0xf] %vm885, %v790
  %920 = vst.msk [vmem:[%s2 + $0x88] sm:$0xf] %vm885, %v791
  %921 = vst.msk [vmem:[%s2 + $0x8c] sm:$0xf] %vm885, %v792
  %922 = vst.msk [vmem:[%s2 + $0x90] sm:$0xf] %vm885, %v793
  %923 = vst.msk [vmem:[%s2 + $0x94] sm:$0xf] %vm885, %v794
  %924 = vst.msk [vmem:[%s2 + $0x98] sm:$0xf] %vm885, %v795
  %925 = vst.msk [vmem:[%s2 + $0x9c] sm:$0xf] %vm885, %v796
  %926 = vst.msk [vmem:[%s2 + $0xa0] sm:$0xf] %vm885, %v797
  %927 = vst.msk [vmem:[%s2 + $0xa4] sm:$0xf] %vm885, %v798
  %928 = vst.msk [vmem:[%s2 + $0xa8] sm:$0xf] %vm885, %v799
  %929 = vst.msk [vmem:[%s2 + $0xac] sm:$0xf] %vm885, %v800
  %930 = vst.msk [vmem:[%s2 + $0xb0] sm:$0xf] %vm885, %v801
  %931 = vst.msk [vmem:[%s2 + $0xb4] sm:$0xf] %vm885, %v802
  %932 = vst.msk [vmem:[%s2 + $0xb8] sm:$0xf] %vm885, %v803
  %933 = vst.msk [vmem:[%s2 + $0xbc] sm:$0xf] %vm885, %v804
  %934 = vst.msk [vmem:[%s2 + $0xc0] sm:$0xf] %vm885, %v805
  %935 = vst.msk [vmem:[%s2 + $0xc4] sm:$0xf] %vm885, %v806
  %936 = vst.msk [vmem:[%s2 + $0xc8] sm:$0xf] %vm885, %v807
  %937 = vst.msk [vmem:[%s2 + $0xcc] sm:$0xf] %vm885, %v808
  %938 = vst.msk [vmem:[%s2 + $0xd0] sm:$0xf] %vm885, %v809
  %939 = vst.msk [vmem:[%s2 + $0xd4] sm:$0xf] %vm885, %v810
  %940 = vst.msk [vmem:[%s2 + $0xd8] sm:$0xf] %vm885, %v811
  %941 = vst.msk [vmem:[%s2 + $0xdc] sm:$0xf] %vm885, %v812
  %942 = vst.msk [vmem:[%s2 + $0xe0] sm:$0xf] %vm885, %v813
  %943 = vst.msk [vmem:[%s2 + $0xe4] sm:$0xf] %vm885, %v814
  %944 = vst.msk [vmem:[%s2 + $0xe8] sm:$0xf] %vm885, %v815
  %945 = vst.msk [vmem:[%s2 + $0xec] sm:$0xf] %vm885, %v816
  %946 = vst.msk [vmem:[%s2 + $0xf0] sm:$0xf] %vm885, %v817
  %947 = vst.msk [vmem:[%s2 + $0xf4] sm:$0xf] %vm885, %v818
  %948 = vst.msk [vmem:[%s2 + $0xf8] sm:$0xf] %vm885, %v819
  %949 = vst.msk [vmem:[%s2 + $0xfc] sm:$0xf] %vm885, %v820
  %vm950 = vcmask 130048
  %v951 = vsel %vm950, %v375, 0.0
  %v952 = vsel %vm950, %v378, 0.0
  %v953 = vadd.f32 %v951, %v952
  %v954 = vsel %vm950, %v383, 0.0
  %v955 = vadd.f32 %v953, %v954
  %v956 = vsel %vm950, %v386, 0.0
  %v957 = vadd.f32 %v955, %v956
  %v958 = vsel %vm950, %v391, 0.0
  %v959 = vadd.f32 %v957, %v958
  %v960 = vsel %vm950, %v394, 0.0
  %v961 = vadd.f32 %v959, %v960
  %v962 = vsel %vm950, %v399, 0.0
  %v963 = vadd.f32 %v961, %v962
  %v964 = vsel %vm950, %v402, 0.0
  %v965 = vadd.f32 %v963, %v964
  %v966 = vsel %vm950, %v407, 0.0
  %v967 = vadd.f32 %v965, %v966
  %v968 = vsel %vm950, %v410, 0.0
  %v969 = vadd.f32 %v967, %v968
  %v970 = vsel %vm950, %v415, 0.0
  %v971 = vadd.f32 %v969, %v970
  %v972 = vsel %vm950, %v418, 0.0
  %v973 = vadd.f32 %v971, %v972
  %v974 = vsel %vm950, %v423, 0.0
  %v975 = vadd.f32 %v973, %v974
  %v976 = vsel %vm950, %v426, 0.0
  %v977 = vadd.f32 %v975, %v976
  %v978 = vsel %vm950, %v431, 0.0
  %v979 = vadd.f32 %v977, %v978
  %v980 = vsel %vm950, %v434, 0.0
  %v981 = vadd.f32 %v979, %v980
  %v982 = vsel %vm950, %v439, 0.0
  %v983 = vadd.f32 %v981, %v982
  %v984 = vsel %vm950, %v442, 0.0
  %v985 = vadd.f32 %v983, %v984
  %v986 = vsel %vm950, %v447, 0.0
  %v987 = vadd.f32 %v985, %v986
  %v988 = vsel %vm950, %v450, 0.0
  %v989 = vadd.f32 %v987, %v988
  %v990 = vsel %vm950, %v455, 0.0
  %v991 = vadd.f32 %v989, %v990
  %v992 = vsel %vm950, %v458, 0.0
  %v993 = vadd.f32 %v991, %v992
  %v994 = vsel %vm950, %v463, 0.0
  %v995 = vadd.f32 %v993, %v994
  %v996 = vsel %vm950, %v466, 0.0
  %v997 = vadd.f32 %v995, %v996
  %v998 = vsel %vm950, %v471, 0.0
  %v999 = vadd.f32 %v997, %v998
  %v1000 = vsel %vm950, %v474, 0.0
  %v1001 = vadd.f32 %v999, %v1000
  %v1002 = vsel %vm950, %v479, 0.0
  %v1003 = vadd.f32 %v1001, %v1002
  %v1004 = vsel %vm950, %v482, 0.0
  %v1005 = vadd.f32 %v1003, %v1004
  %v1006 = vsel %vm950, %v487, 0.0
  %v1007 = vadd.f32 %v1005, %v1006
  %v1008 = vsel %vm950, %v490, 0.0
  %v1009 = vadd.f32 %v1007, %v1008
  %v1010 = vsel %vm950, %v495, 0.0
  %v1011 = vadd.f32 %v1009, %v1010
  %v1012 = vsel %vm950, %v498, 0.0
  %v1013 = vadd.f32 %v1011, %v1012
  %v1014 = vsel %vm950, %v503, 0.0
  %v1015 = vadd.f32 %v1013, %v1014
  %v1016 = vsel %vm950, %v506, 0.0
  %v1017 = vadd.f32 %v1015, %v1016
  %v1018 = vsel %vm950, %v511, 0.0
  %v1019 = vadd.f32 %v1017, %v1018
  %v1020 = vsel %vm950, %v514, 0.0
  %v1021 = vadd.f32 %v1019, %v1020
  %v1022 = vsel %vm950, %v519, 0.0
  %v1023 = vadd.f32 %v1021, %v1022
  %v1024 = vsel %vm950, %v522, 0.0
  %v1025 = vadd.f32 %v1023, %v1024
  %v1026 = vsel %vm950, %v527, 0.0
  %v1027 = vadd.f32 %v1025, %v1026
  %v1028 = vsel %vm950, %v530, 0.0
  %v1029 = vadd.f32 %v1027, %v1028
  %v1030 = vsel %vm950, %v535, 0.0
  %v1031 = vadd.f32 %v1029, %v1030
  %v1032 = vsel %vm950, %v538, 0.0
  %v1033 = vadd.f32 %v1031, %v1032
  %v1034 = vsel %vm950, %v543, 0.0
  %v1035 = vadd.f32 %v1033, %v1034
  %v1036 = vsel %vm950, %v546, 0.0
  %v1037 = vadd.f32 %v1035, %v1036
  %v1038 = vsel %vm950, %v551, 0.0
  %v1039 = vadd.f32 %v1037, %v1038
  %v1040 = vsel %vm950, %v554, 0.0
  %v1041 = vadd.f32 %v1039, %v1040
  %v1042 = vsel %vm950, %v559, 0.0
  %v1043 = vadd.f32 %v1041, %v1042
  %v1044 = vsel %vm950, %v562, 0.0
  %v1045 = vadd.f32 %v1043, %v1044
  %v1046 = vsel %vm950, %v567, 0.0
  %v1047 = vadd.f32 %v1045, %v1046
  %v1048 = vsel %vm950, %v570, 0.0
  %v1049 = vadd.f32 %v1047, %v1048
  %v1050 = vsel %vm950, %v575, 0.0
  %v1051 = vadd.f32 %v1049, %v1050
  %v1052 = vsel %vm950, %v578, 0.0
  %v1053 = vadd.f32 %v1051, %v1052
  %v1054 = vsel %vm950, %v583, 0.0
  %v1055 = vadd.f32 %v1053, %v1054
  %v1056 = vsel %vm950, %v586, 0.0
  %v1057 = vadd.f32 %v1055, %v1056
  %v1058 = vsel %vm950, %v591, 0.0
  %v1059 = vadd.f32 %v1057, %v1058
  %v1060 = vsel %vm950, %v594, 0.0
  %v1061 = vadd.f32 %v1059, %v1060
  %v1062 = vsel %vm950, %v599, 0.0
  %v1063 = vadd.f32 %v1061, %v1062
  %v1064 = vsel %vm950, %v602, 0.0
  %v1065 = vadd.f32 %v1063, %v1064
  %v1066 = vsel %vm950, %v607, 0.0
  %v1067 = vadd.f32 %v1065, %v1066
  %v1068 = vsel %vm950, %v610, 0.0
  %v1069 = vadd.f32 %v1067, %v1068
  %v1070 = vsel %vm950, %v615, 0.0
  %v1071 = vadd.f32 %v1069, %v1070
  %v1072 = vsel %vm950, %v618, 0.0
  %v1073 = vadd.f32 %v1071, %v1072
  %v1074 = vsel %vm950, %v623, 0.0
  %v1075 = vadd.f32 %v1073, %v1074
  %v1076 = vsel %vm950, %v626, 0.0
  %v1077 = vadd.f32 %v1075, %v1076
  %v1078 = vrot.slane %v1077, 4
  %v1079 = vadd.f32 %v1077, %v1078
  %v1080 = vrot.slane %v1079, 2
  %v1081 = vadd.f32 %v1079, %v1080
  %v1082 = vrot.slane %v1081, 1
  %v1083 = vadd.f32 %v1081, %v1082
  %vm1084 = vcmask 122880
  %1085 = vst.msk [vmem:[%s3] sm:$0x1] %vm1084, %v1083
  %v1086 = vmul.f32 %v375, %v375
  %v1087 = vmul.f32 %v378, %v378
  %v1088 = vmul.f32 %v383, %v383
  %v1089 = vmul.f32 %v386, %v386
  %v1090 = vmul.f32 %v391, %v391
  %v1091 = vmul.f32 %v394, %v394
  %v1092 = vmul.f32 %v399, %v399
  %v1093 = vmul.f32 %v402, %v402
  %v1094 = vmul.f32 %v407, %v407
  %v1095 = vmul.f32 %v410, %v410
  %v1096 = vmul.f32 %v415, %v415
  %v1097 = vmul.f32 %v418, %v418
  %v1098 = vmul.f32 %v423, %v423
  %v1099 = vmul.f32 %v426, %v426
  %v1100 = vmul.f32 %v431, %v431
  %v1101 = vmul.f32 %v434, %v434
  %v1102 = vmul.f32 %v439, %v439
  %v1103 = vmul.f32 %v442, %v442
  %v1104 = vmul.f32 %v447, %v447
  %v1105 = vmul.f32 %v450, %v450
  %v1106 = vmul.f32 %v455, %v455
  %v1107 = vmul.f32 %v458, %v458
  %v1108 = vmul.f32 %v463, %v463
  %v1109 = vmul.f32 %v466, %v466
  %v1110 = vmul.f32 %v471, %v471
  %v1111 = vmul.f32 %v474, %v474
  %v1112 = vmul.f32 %v479, %v479
  %v1113 = vmul.f32 %v482, %v482
  %v1114 = vmul.f32 %v487, %v487
  %v1115 = vmul.f32 %v490, %v490
  %v1116 = vmul.f32 %v495, %v495
  %v1117 = vmul.f32 %v498, %v498
  %v1118 = vmul.f32 %v503, %v503
  %v1119 = vmul.f32 %v506, %v506
  %v1120 = vmul.f32 %v511, %v511
  %v1121 = vmul.f32 %v514, %v514
  %v1122 = vmul.f32 %v519, %v519
  %v1123 = vmul.f32 %v522, %v522
  %v1124 = vmul.f32 %v527, %v527
  %v1125 = vmul.f32 %v530, %v530
  %v1126 = vmul.f32 %v535, %v535
  %v1127 = vmul.f32 %v538, %v538
  %v1128 = vmul.f32 %v543, %v543
  %v1129 = vmul.f32 %v546, %v546
  %v1130 = vmul.f32 %v551, %v551
  %v1131 = vmul.f32 %v554, %v554
  %v1132 = vmul.f32 %v559, %v559
  %v1133 = vmul.f32 %v562, %v562
  %v1134 = vmul.f32 %v567, %v567
  %v1135 = vmul.f32 %v570, %v570
  %v1136 = vmul.f32 %v575, %v575
  %v1137 = vmul.f32 %v578, %v578
  %v1138 = vmul.f32 %v583, %v583
  %v1139 = vmul.f32 %v586, %v586
  %v1140 = vmul.f32 %v591, %v591
  %v1141 = vmul.f32 %v594, %v594
  %v1142 = vmul.f32 %v599, %v599
  %v1143 = vmul.f32 %v602, %v602
  %v1144 = vmul.f32 %v607, %v607
  %v1145 = vmul.f32 %v610, %v610
  %v1146 = vmul.f32 %v615, %v615
  %v1147 = vmul.f32 %v618, %v618
  %v1148 = vmul.f32 %v623, %v623
  %v1149 = vmul.f32 %v626, %v626
  %v1150 = vsel %vm950, %v1086, 0.0
  %v1151 = vsel %vm950, %v1087, 0.0
  %v1152 = vadd.f32 %v1150, %v1151
  %v1153 = vsel %vm950, %v1088, 0.0
  %v1154 = vadd.f32 %v1152, %v1153
  %v1155 = vsel %vm950, %v1089, 0.0
  %v1156 = vadd.f32 %v1154, %v1155
  %v1157 = vsel %vm950, %v1090, 0.0
  %v1158 = vadd.f32 %v1156, %v1157
  %v1159 = vsel %vm950, %v1091, 0.0
  %v1160 = vadd.f32 %v1158, %v1159
  %v1161 = vsel %vm950, %v1092, 0.0
  %v1162 = vadd.f32 %v1160, %v1161
  %v1163 = vsel %vm950, %v1093, 0.0
  %v1164 = vadd.f32 %v1162, %v1163
  %v1165 = vsel %vm950, %v1094, 0.0
  %v1166 = vadd.f32 %v1164, %v1165
  %v1167 = vsel %vm950, %v1095, 0.0
  %v1168 = vadd.f32 %v1166, %v1167
  %v1169 = vsel %vm950, %v1096, 0.0
  %v1170 = vadd.f32 %v1168, %v1169
  %v1171 = vsel %vm950, %v1097, 0.0
  %v1172 = vadd.f32 %v1170, %v1171
  %v1173 = vsel %vm950, %v1098, 0.0
  %v1174 = vadd.f32 %v1172, %v1173
  %v1175 = vsel %vm950, %v1099, 0.0
  %v1176 = vadd.f32 %v1174, %v1175
  %v1177 = vsel %vm950, %v1100, 0.0
  %v1178 = vadd.f32 %v1176, %v1177
  %v1179 = vsel %vm950, %v1101, 0.0
  %v1180 = vadd.f32 %v1178, %v1179
  %v1181 = vsel %vm950, %v1102, 0.0
  %v1182 = vadd.f32 %v1180, %v1181
  %v1183 = vsel %vm950, %v1103, 0.0
  %v1184 = vadd.f32 %v1182, %v1183
  %v1185 = vsel %vm950, %v1104, 0.0
  %v1186 = vadd.f32 %v1184, %v1185
  %v1187 = vsel %vm950, %v1105, 0.0
  %v1188 = vadd.f32 %v1186, %v1187
  %v1189 = vsel %vm950, %v1106, 0.0
  %v1190 = vadd.f32 %v1188, %v1189
  %v1191 = vsel %vm950, %v1107, 0.0
  %v1192 = vadd.f32 %v1190, %v1191
  %v1193 = vsel %vm950, %v1108, 0.0
  %v1194 = vadd.f32 %v1192, %v1193
  %v1195 = vsel %vm950, %v1109, 0.0
  %v1196 = vadd.f32 %v1194, %v1195
  %v1197 = vsel %vm950, %v1110, 0.0
  %v1198 = vadd.f32 %v1196, %v1197
  %v1199 = vsel %vm950, %v1111, 0.0
  %v1200 = vadd.f32 %v1198, %v1199
  %v1201 = vsel %vm950, %v1112, 0.0
  %v1202 = vadd.f32 %v1200, %v1201
  %v1203 = vsel %vm950, %v1113, 0.0
  %v1204 = vadd.f32 %v1202, %v1203
  %v1205 = vsel %vm950, %v1114, 0.0
  %v1206 = vadd.f32 %v1204, %v1205
  %v1207 = vsel %vm950, %v1115, 0.0
  %v1208 = vadd.f32 %v1206, %v1207
  %v1209 = vsel %vm950, %v1116, 0.0
  %v1210 = vadd.f32 %v1208, %v1209
  %v1211 = vsel %vm950, %v1117, 0.0
  %v1212 = vadd.f32 %v1210, %v1211
  %v1213 = vsel %vm950, %v1118, 0.0
  %v1214 = vadd.f32 %v1212, %v1213
  %v1215 = vsel %vm950, %v1119, 0.0
  %v1216 = vadd.f32 %v1214, %v1215
  %v1217 = vsel %vm950, %v1120, 0.0
  %v1218 = vadd.f32 %v1216, %v1217
  %v1219 = vsel %vm950, %v1121, 0.0
  %v1220 = vadd.f32 %v1218, %v1219
  %v1221 = vsel %vm950, %v1122, 0.0
  %v1222 = vadd.f32 %v1220, %v1221
  %v1223 = vsel %vm950, %v1123, 0.0
  %v1224 = vadd.f32 %v1222, %v1223
  %v1225 = vsel %vm950, %v1124, 0.0
  %v1226 = vadd.f32 %v1224, %v1225
  %v1227 = vsel %vm950, %v1125, 0.0
  %v1228 = vadd.f32 %v1226, %v1227
  %v1229 = vsel %vm950, %v1126, 0.0
  %v1230 = vadd.f32 %v1228, %v1229
  %v1231 = vsel %vm950, %v1127, 0.0
  %v1232 = vadd.f32 %v1230, %v1231
  %v1233 = vsel %vm950, %v1128, 0.0
  %v1234 = vadd.f32 %v1232, %v1233
  %v1235 = vsel %vm950, %v1129, 0.0
  %v1236 = vadd.f32 %v1234, %v1235
  %v1237 = vsel %vm950, %v1130, 0.0
  %v1238 = vadd.f32 %v1236, %v1237
  %v1239 = vsel %vm950, %v1131, 0.0
  %v1240 = vadd.f32 %v1238, %v1239
  %v1241 = vsel %vm950, %v1132, 0.0
  %v1242 = vadd.f32 %v1240, %v1241
  %v1243 = vsel %vm950, %v1133, 0.0
  %v1244 = vadd.f32 %v1242, %v1243
  %v1245 = vsel %vm950, %v1134, 0.0
  %v1246 = vadd.f32 %v1244, %v1245
  %v1247 = vsel %vm950, %v1135, 0.0
  %v1248 = vadd.f32 %v1246, %v1247
  %v1249 = vsel %vm950, %v1136, 0.0
  %v1250 = vadd.f32 %v1248, %v1249
  %v1251 = vsel %vm950, %v1137, 0.0
  %v1252 = vadd.f32 %v1250, %v1251
  %v1253 = vsel %vm950, %v1138, 0.0
  %v1254 = vadd.f32 %v1252, %v1253
  %v1255 = vsel %vm950, %v1139, 0.0
  %v1256 = vadd.f32 %v1254, %v1255
  %v1257 = vsel %vm950, %v1140, 0.0
  %v1258 = vadd.f32 %v1256, %v1257
  %v1259 = vsel %vm950, %v1141, 0.0
  %v1260 = vadd.f32 %v1258, %v1259
  %v1261 = vsel %vm950, %v1142, 0.0
  %v1262 = vadd.f32 %v1260, %v1261
  %v1263 = vsel %vm950, %v1143, 0.0
  %v1264 = vadd.f32 %v1262, %v1263
  %v1265 = vsel %vm950, %v1144, 0.0
  %v1266 = vadd.f32 %v1264, %v1265
  %v1267 = vsel %vm950, %v1145, 0.0
  %v1268 = vadd.f32 %v1266, %v1267
  %v1269 = vsel %vm950, %v1146, 0.0
  %v1270 = vadd.f32 %v1268, %v1269
  %v1271 = vsel %vm950, %v1147, 0.0
  %v1272 = vadd.f32 %v1270, %v1271
  %v1273 = vsel %vm950, %v1148, 0.0
  %v1274 = vadd.f32 %v1272, %v1273
  %v1275 = vsel %vm950, %v1149, 0.0
  %v1276 = vadd.f32 %v1274, %v1275
  %v1277 = vrot.slane %v1276, 4
  %v1278 = vadd.f32 %v1276, %v1277
  %v1279 = vrot.slane %v1278, 2
  %v1280 = vadd.f32 %v1278, %v1279
  %v1281 = vrot.slane %v1280, 1
  %v1282 = vadd.f32 %v1280, %v1281
  %1283 = vst.msk [vmem:[%s3 + $0x1] sm:$0x1] %vm1084, %v1282
  // Predicated region
  $region10: #{inception_forward.6} parent=0 // pred_check
    _
  $region11: #{inception_forward.6} parent=0 // pred_check_branch
    %1285 = sbr.rel (0) target = $region13
  $region12: #{inception_forward.6} parent=0 // pred_region
    _
  $region13: #{inception_forward.6} parent=0 // pred_fallthru
    _
  // Predicated region
  $region14: #{inception_forward.6} parent=0 // pred_check
    _
  $region15: #{inception_forward.6} parent=0 // pred_check_branch
    %1287 = sbr.rel (0) target = $region17
  $region16: #{inception_forward.6} parent=0 // pred_region
    _
  $region17: #{inception_forward.6} parent=0 // pred_fallthru
    _
  // Predicated region
  $region18: #{inception_forward.6} parent=0 // pred_check
    _
  $region19: #{inception_forward.6} parent=0 // pred_check_branch
    %1289 = sbr.rel (0) target = $region21
  $region20: #{inception_forward.6} parent=0 // pred_region
    _
  $region21: #{inception_forward.6} parent=0 // pred_fallthru
    _
  // Predicated region
  $region22: #{inception_forward.6} parent=0 // pred_check
    _
  $region23: #{inception_forward.6} parent=0 // pred_check_branch
    %1291 = sbr.rel (0) target = $region25
  $region24: #{inception_forward.6} parent=0 // pred_region
    _
  $region25: #{inception_forward.6} parent=0 // pred_fallthru
    _

// kernel: inception_forward.7
$region0: #{inception_forward.7}
  #allocation0 [shape = 'u32[]', space=smem, size = 0x4, offset = 0x4, fixed_abs, tag = 'smem constant byte address 0x4 - core index']
  #allocation1 [shape = 'u32[144,128]{1,0:T(1,128)}', space=vmem, size = 0x12000, scoped, tag = 'internal scratch']
  %s0 = inlined_call_operand.vmem [shape: bf16[512,16], index: 0, kind: input, shape index: {}]
  %s1 = inlined_call_operand.vmem [shape: f32[1,8], index: 1, kind: input, shape index: {}]
  %s2 = inlined_call_operand.vmem [shape: f32[1,8], index: 2, kind: input, shape index: {}]
  %s3 = inlined_call_operand.vmem [shape: bf16[512,4], index: 3, kind: output, shape index: {0}]
  %s4 = inlined_call_operand.vmem [shape: bf16[512,4], index: 4, kind: output, shape index: {1}]
  %5 = xla_tuple %s3, %s4
  %s6 = sld [smem:[#allocation0]]
  $region30: #{inception_forward.7} parent=0
    _
  %s8 = ssub.s32 1, %s6
  %s9 = scalar_select 0, %s8, %s6
  // Predicated region
  $region2: #{inception_forward.7} parent=0 // pred_check
    _
  $region3: #{inception_forward.7} parent=0 // pred_check_branch
    %11 = sbr.rel (0) target = $region5
  $region4: #{inception_forward.7} parent=0 // pred_region
    _
  $region5: #{inception_forward.7} parent=0 // pred_fallthru
    _
  // Predicated region
  $region6: #{inception_forward.7} parent=0 // pred_check
    _
  $region7: #{inception_forward.7} parent=0 // pred_check_branch
    %13 = sbr.rel (0) target = $region9
  $region8: #{inception_forward.7} parent=0 // pred_region
    _
  $region9: #{inception_forward.7} parent=0 // pred_fallthru
    _
  // Predicated region
  $region10: #{inception_forward.7} parent=0 // pred_check
    _
  $region11: #{inception_forward.7} parent=0 // pred_check_branch
    %15 = sbr.rel (0) target = $region13
  $region12: #{inception_forward.7} parent=0 // pred_region
    _
  $region13: #{inception_forward.7} parent=0 // pred_fallthru
    _
  %v16 = vld [vmem:[%s0] sm:$0xf]
  %v17 = vld [vmem:[%s0 + $0x4] sm:$0xf]
  %v18 = vld [vmem:[%s0 + $0x8] sm:$0xf]
  %v19 = vld [vmem:[%s0 + $0xc] sm:$0xf]
  %v20 = vld [vmem:[%s0 + $0x10] sm:$0xf]
  %v21 = vld [vmem:[%s0 + $0x14] sm:$0xf]
  %v22 = vld [vmem:[%s0 + $0x18] sm:$0xf]
  %v23 = vld [vmem:[%s0 + $0x1c] sm:$0xf]
  %v24 = vld [vmem:[%s0 + $0x20] sm:$0xf]
  %v25 = vld [vmem:[%s0 + $0x24] sm:$0xf]
  %v26 = vld [vmem:[%s0 + $0x28] sm:$0xf]
  %v27 = vld [vmem:[%s0 + $0x2c] sm:$0xf]
  %v28 = vld [vmem:[%s0 + $0x30] sm:$0xf]
  %v29 = vld [vmem:[%s0 + $0x34] sm:$0xf]
  %v30 = vld [vmem:[%s0 + $0x38] sm:$0xf]
  %v31 = vld [vmem:[%s0 + $0x3c] sm:$0xf]
  %v32 = vld [vmem:[%s0 + $0x40] sm:$0xf]
  %v33 = vld [vmem:[%s0 + $0x44] sm:$0xf]
  %v34 = vld [vmem:[%s0 + $0x48] sm:$0xf]
  %v35 = vld [vmem:[%s0 + $0x4c] sm:$0xf]
  %v36 = vld [vmem:[%s0 + $0x50] sm:$0xf]
  %v37 = vld [vmem:[%s0 + $0x54] sm:$0xf]
  %v38 = vld [vmem:[%s0 + $0x58] sm:$0xf]
  %v39 = vld [vmem:[%s0 + $0x5c] sm:$0xf]
  %v40 = vld [vmem:[%s0 + $0x60] sm:$0xf]
  %v41 = vld [vmem:[%s0 + $0x64] sm:$0xf]
  %v42 = vld [vmem:[%s0 + $0x68] sm:$0xf]
  %v43 = vld [vmem:[%s0 + $0x6c] sm:$0xf]
  %v44 = vld [vmem:[%s0 + $0x70] sm:$0xf]
  %v45 = vld [vmem:[%s0 + $0x74] sm:$0xf]
  %v46 = vld [vmem:[%s0 + $0x78] sm:$0xf]
  %v47 = vld [vmem:[%s0 + $0x7c] sm:$0xf]
  %v48 = vld [vmem:[%s0 + $0x80] sm:$0xf]
  %v49 = vld [vmem:[%s0 + $0x84] sm:$0xf]
  %v50 = vld [vmem:[%s0 + $0x88] sm:$0xf]
  %v51 = vld [vmem:[%s0 + $0x8c] sm:$0xf]
  %v52 = vld [vmem:[%s0 + $0x90] sm:$0xf]
  %v53 = vld [vmem:[%s0 + $0x94] sm:$0xf]
  %v54 = vld [vmem:[%s0 + $0x98] sm:$0xf]
  %v55 = vld [vmem:[%s0 + $0x9c] sm:$0xf]
  %v56 = vld [vmem:[%s0 + $0xa0] sm:$0xf]
  %v57 = vld [vmem:[%s0 + $0xa4] sm:$0xf]
  %v58 = vld [vmem:[%s0 + $0xa8] sm:$0xf]
  %v59 = vld [vmem:[%s0 + $0xac] sm:$0xf]
  %v60 = vld [vmem:[%s0 + $0xb0] sm:$0xf]
  %v61 = vld [vmem:[%s0 + $0xb4] sm:$0xf]
  %v62 = vld [vmem:[%s0 + $0xb8] sm:$0xf]
  %v63 = vld [vmem:[%s0 + $0xbc] sm:$0xf]
  %v64 = vld [vmem:[%s0 + $0xc0] sm:$0xf]
  %v65 = vld [vmem:[%s0 + $0xc4] sm:$0xf]
  %v66 = vld [vmem:[%s0 + $0xc8] sm:$0xf]
  %v67 = vld [vmem:[%s0 + $0xcc] sm:$0xf]
  %v68 = vld [vmem:[%s0 + $0xd0] sm:$0xf]
  %v69 = vld [vmem:[%s0 + $0xd4] sm:$0xf]
  %v70 = vld [vmem:[%s0 + $0xd8] sm:$0xf]
  %v71 = vld [vmem:[%s0 + $0xdc] sm:$0xf]
  %v72 = vld [vmem:[%s0 + $0xe0] sm:$0xf]
  %v73 = vld [vmem:[%s0 + $0xe4] sm:$0xf]
  %v74 = vld [vmem:[%s0 + $0xe8] sm:$0xf]
  %v75 = vld [vmem:[%s0 + $0xec] sm:$0xf]
  %v76 = vld [vmem:[%s0 + $0xf0] sm:$0xf]
  %v77 = vld [vmem:[%s0 + $0xf4] sm:$0xf]
  %v78 = vld [vmem:[%s0 + $0xf8] sm:$0xf]
  %v79 = vld [vmem:[%s0 + $0xfc] sm:$0xf]
  %v80 = vunpack.c.l.bf16 %v16
  %v81 = vunpack.c.l.bf16 %v17
  %v82 = vunpack.c.l.bf16 %v18
  %v83 = vunpack.c.l.bf16 %v19
  %v84 = vunpack.c.l.bf16 %v20
  %v85 = vunpack.c.l.bf16 %v21
  %v86 = vunpack.c.l.bf16 %v22
  %v87 = vunpack.c.l.bf16 %v23
  %v88 = vunpack.c.l.bf16 %v24
  %v89 = vunpack.c.l.bf16 %v25
  %v90 = vunpack.c.l.bf16 %v26
  %v91 = vunpack.c.l.bf16 %v27
  %v92 = vunpack.c.l.bf16 %v28
  %v93 = vunpack.c.l.bf16 %v29
  %v94 = vunpack.c.l.bf16 %v30
  %v95 = vunpack.c.l.bf16 %v31
  %v96 = vunpack.c.l.bf16 %v32
  %v97 = vunpack.c.l.bf16 %v33
  %v98 = vunpack.c.l.bf16 %v34
  %v99 = vunpack.c.l.bf16 %v35
  %v100 = vunpack.c.l.bf16 %v36
  %v101 = vunpack.c.l.bf16 %v37
  %v102 = vunpack.c.l.bf16 %v38
  %v103 = vunpack.c.l.bf16 %v39
  %v104 = vunpack.c.l.bf16 %v40
  %v105 = vunpack.c.l.bf16 %v41
  %v106 = vunpack.c.l.bf16 %v42
  %v107 = vunpack.c.l.bf16 %v43
  %v108 = vunpack.c.l.bf16 %v44
  %v109 = vunpack.c.l.bf16 %v45
  %v110 = vunpack.c.l.bf16 %v46
  %v111 = vunpack.c.l.bf16 %v47
  %v112 = vunpack.c.l.bf16 %v48
  %v113 = vunpack.c.l.bf16 %v49
  %v114 = vunpack.c.l.bf16 %v50
  %v115 = vunpack.c.l.bf16 %v51
  %v116 = vunpack.c.l.bf16 %v52
  %v117 = vunpack.c.l.bf16 %v53
  %v118 = vunpack.c.l.bf16 %v54
  %v119 = vunpack.c.l.bf16 %v55
  %v120 = vunpack.c.l.bf16 %v56
  %v121 = vunpack.c.l.bf16 %v57
  %v122 = vunpack.c.l.bf16 %v58
  %v123 = vunpack.c.l.bf16 %v59
  %v124 = vunpack.c.l.bf16 %v60
  %v125 = vunpack.c.l.bf16 %v61
  %v126 = vunpack.c.l.bf16 %v62
  %v127 = vunpack.c.l.bf16 %v63
  %v128 = vunpack.c.l.bf16 %v64
  %v129 = vunpack.c.l.bf16 %v65
  %v130 = vunpack.c.l.bf16 %v66
  %v131 = vunpack.c.l.bf16 %v67
  %v132 = vunpack.c.l.bf16 %v68
  %v133 = vunpack.c.l.bf16 %v69
  %v134 = vunpack.c.l.bf16 %v70
  %v135 = vunpack.c.l.bf16 %v71
  %v136 = vunpack.c.l.bf16 %v72
  %v137 = vunpack.c.l.bf16 %v73
  %v138 = vunpack.c.l.bf16 %v74
  %v139 = vunpack.c.l.bf16 %v75
  %v140 = vunpack.c.l.bf16 %v76
  %v141 = vunpack.c.l.bf16 %v77
  %v142 = vunpack.c.l.bf16 %v78
  %v143 = vunpack.c.l.bf16 %v79
  %v144 = vld [vmem:[%s1] sm:$0x1]
  %v146 = vlaneseq
  %v147 = vshrl.u32 %v146, 7
  %v148 = vsub.s32 0, %v147
  %v149 = vrot.slane %v144, %v148
  %150 = vrot.lane.b32.xlu0 %v149, 8
  %v151 = vpop.permute.xlu0 %150
  %v153 = vmul.f32 %v80, %v151
  %v154 = vmul.f32 %v81, %v151
  %v155 = vmul.f32 %v82, %v151
  %v156 = vmul.f32 %v83, %v151
  %v157 = vmul.f32 %v84, %v151
  %v158 = vmul.f32 %v85, %v151
  %v159 = vmul.f32 %v86, %v151
  %v160 = vmul.f32 %v87, %v151
  %v161 = vmul.f32 %v88, %v151
  %v162 = vmul.f32 %v89, %v151
  %v163 = vmul.f32 %v90, %v151
  %v164 = vmul.f32 %v91, %v151
  %v165 = vmul.f32 %v92, %v151
  %v166 = vmul.f32 %v93, %v151
  %v167 = vmul.f32 %v94, %v151
  %v168 = vmul.f32 %v95, %v151
  %v169 = vmul.f32 %v96, %v151
  %v170 = vmul.f32 %v97, %v151
  %v171 = vmul.f32 %v98, %v151
  %v172 = vmul.f32 %v99, %v151
  %v173 = vmul.f32 %v100, %v151
  %v174 = vmul.f32 %v101, %v151
  %v175 = vmul.f32 %v102, %v151
  %v176 = vmul.f32 %v103, %v151
  %v177 = vmul.f32 %v104, %v151
  %v178 = vmul.f32 %v105, %v151
  %v179 = vmul.f32 %v106, %v151
  %v180 = vmul.f32 %v107, %v151
  %v181 = vmul.f32 %v108, %v151
  %v182 = vmul.f32 %v109, %v151
  %v183 = vmul.f32 %v110, %v151
  %v184 = vmul.f32 %v111, %v151
  %v185 = vmul.f32 %v112, %v151
  %v186 = vmul.f32 %v113, %v151
  %v187 = vmul.f32 %v114, %v151
  %v188 = vmul.f32 %v115, %v151
  %v189 = vmul.f32 %v116, %v151
  %v190 = vmul.f32 %v117, %v151
  %v191 = vmul.f32 %v118, %v151
  %v192 = vmul.f32 %v119, %v151
  %v193 = vmul.f32 %v120, %v151
  %v194 = vmul.f32 %v121, %v151
  %v195 = vmul.f32 %v122, %v151
  %v196 = vmul.f32 %v123, %v151
  %v197 = vmul.f32 %v124, %v151
  %v198 = vmul.f32 %v125, %v151
  %v199 = vmul.f32 %v126, %v151
  %v200 = vmul.f32 %v127, %v151
  %v201 = vmul.f32 %v128, %v151
  %v202 = vmul.f32 %v129, %v151
  %v203 = vmul.f32 %v130, %v151
  %v204 = vmul.f32 %v131, %v151
  %v205 = vmul.f32 %v132, %v151
  %v206 = vmul.f32 %v133, %v151
  %v207 = vmul.f32 %v134, %v151
  %v208 = vmul.f32 %v135, %v151
  %v209 = vmul.f32 %v136, %v151
  %v210 = vmul.f32 %v137, %v151
  %v211 = vmul.f32 %v138, %v151
  %v212 = vmul.f32 %v139, %v151
  %v213 = vmul.f32 %v140, %v151
  %v214 = vmul.f32 %v141, %v151
  %v215 = vmul.f32 %v142, %v151
  %v216 = vmul.f32 %v143, %v151
  %v217 = vld [vmem:[%s2] sm:$0x1]
  %v219 = vlaneseq
  %v220 = vshrl.u32 %v219, 7
  %v221 = vsub.s32 0, %v220
  %v222 = vrot.slane %v217, %v221
  %223 = vrot.lane.b32.xlu0 %v222, 8
  %v224 = vpop.permute.xlu0 %223
  %v226 = vadd.f32 %v153, %v224
  %v227 = vadd.f32 %v154, %v224
  %v228 = vadd.f32 %v155, %v224
  %v229 = vadd.f32 %v156, %v224
  %v230 = vadd.f32 %v157, %v224
  %v231 = vadd.f32 %v158, %v224
  %v232 = vadd.f32 %v159, %v224
  %v233 = vadd.f32 %v160, %v224
  %v234 = vadd.f32 %v161, %v224
  %v235 = vadd.f32 %v162, %v224
  %v236 = vadd.f32 %v163, %v224
  %v237 = vadd.f32 %v164, %v224
  %v238 = vadd.f32 %v165, %v224
  %v239 = vadd.f32 %v166, %v224
  %v240 = vadd.f32 %v167, %v224
  %v241 = vadd.f32 %v168, %v224
  %v242 = vadd.f32 %v169, %v224
  %v243 = vadd.f32 %v170, %v224
  %v244 = vadd.f32 %v171, %v224
  %v245 = vadd.f32 %v172, %v224
  %v246 = vadd.f32 %v173, %v224
  %v247 = vadd.f32 %v174, %v224
  %v248 = vadd.f32 %v175, %v224
  %v249 = vadd.f32 %v176, %v224
  %v250 = vadd.f32 %v177, %v224
  %v251 = vadd.f32 %v178, %v224
  %v252 = vadd.f32 %v179, %v224
  %v253 = vadd.f32 %v180, %v224
  %v254 = vadd.f32 %v181, %v224
  %v255 = vadd.f32 %v182, %v224
  %v256 = vadd.f32 %v183, %v224
  %v257 = vadd.f32 %v184, %v224
  %v258 = vadd.f32 %v185, %v224
  %v259 = vadd.f32 %v186, %v224
  %v260 = vadd.f32 %v187, %v224
  %v261 = vadd.f32 %v188, %v224
  %v262 = vadd.f32 %v189, %v224
  %v263 = vadd.f32 %v190, %v224
  %v264 = vadd.f32 %v191, %v224
  %v265 = vadd.f32 %v192, %v224
  %v266 = vadd.f32 %v193, %v224
  %v267 = vadd.f32 %v194, %v224
  %v268 = vadd.f32 %v195, %v224
  %v269 = vadd.f32 %v196, %v224
  %v270 = vadd.f32 %v197, %v224
  %v271 = vadd.f32 %v198, %v224
  %v272 = vadd.f32 %v199, %v224
  %v273 = vadd.f32 %v200, %v224
  %v274 = vadd.f32 %v201, %v224
  %v275 = vadd.f32 %v202, %v224
  %v276 = vadd.f32 %v203, %v224
  %v277 = vadd.f32 %v204, %v224
  %v278 = vadd.f32 %v205, %v224
  %v279 = vadd.f32 %v206, %v224
  %v280 = vadd.f32 %v207, %v224
  %v281 = vadd.f32 %v208, %v224
  %v282 = vadd.f32 %v209, %v224
  %v283 = vadd.f32 %v210, %v224
  %v284 = vadd.f32 %v211, %v224
  %v285 = vadd.f32 %v212, %v224
  %v286 = vadd.f32 %v213, %v224
  %v287 = vadd.f32 %v214, %v224
  %v288 = vadd.f32 %v215, %v224
  %v289 = vadd.f32 %v216, %v224
  %v290 = vmax.f32 %v226, 0.0
  %v291 = vmax.f32 %v227, 0.0
  %v292 = vmax.f32 %v228, 0.0
  %v293 = vmax.f32 %v229, 0.0
  %v294 = vmax.f32 %v230, 0.0
  %v295 = vmax.f32 %v231, 0.0
  %v296 = vmax.f32 %v232, 0.0
  %v297 = vmax.f32 %v233, 0.0
  %v298 = vmax.f32 %v234, 0.0
  %v299 = vmax.f32 %v235, 0.0
  %v300 = vmax.f32 %v236, 0.0
  %v301 = vmax.f32 %v237, 0.0
  %v302 = vmax.f32 %v238, 0.0
  %v303 = vmax.f32 %v239, 0.0
  %v304 = vmax.f32 %v240, 0.0
  %v305 = vmax.f32 %v241, 0.0
  %v306 = vmax.f32 %v242, 0.0
  %v307 = vmax.f32 %v243, 0.0
  %v308 = vmax.f32 %v244, 0.0
  %v309 = vmax.f32 %v245, 0.0
  %v310 = vmax.f32 %v246, 0.0
  %v311 = vmax.f32 %v247, 0.0
  %v312 = vmax.f32 %v248, 0.0
  %v313 = vmax.f32 %v249, 0.0
  %v314 = vmax.f32 %v250, 0.0
  %v315 = vmax.f32 %v251, 0.0
  %v316 = vmax.f32 %v252, 0.0
  %v317 = vmax.f32 %v253, 0.0
  %v318 = vmax.f32 %v254, 0.0
  %v319 = vmax.f32 %v255, 0.0
  %v320 = vmax.f32 %v256, 0.0
  %v321 = vmax.f32 %v257, 0.0
  %v322 = vmax.f32 %v258, 0.0
  %v323 = vmax.f32 %v259, 0.0
  %v324 = vmax.f32 %v260, 0.0
  %v325 = vmax.f32 %v261, 0.0
  %v326 = vmax.f32 %v262, 0.0
  %v327 = vmax.f32 %v263, 0.0
  %v328 = vmax.f32 %v264, 0.0
  %v329 = vmax.f32 %v265, 0.0
  %v330 = vmax.f32 %v266, 0.0
  %v331 = vmax.f32 %v267, 0.0
  %v332 = vmax.f32 %v268, 0.0
  %v333 = vmax.f32 %v269, 0.0
  %v334 = vmax.f32 %v270, 0.0
  %v335 = vmax.f32 %v271, 0.0
  %v336 = vmax.f32 %v272, 0.0
  %v337 = vmax.f32 %v273, 0.0
  %v338 = vmax.f32 %v274, 0.0
  %v339 = vmax.f32 %v275, 0.0
  %v340 = vmax.f32 %v276, 0.0
  %v341 = vmax.f32 %v277, 0.0
  %v342 = vmax.f32 %v278, 0.0
  %v343 = vmax.f32 %v279, 0.0
  %v344 = vmax.f32 %v280, 0.0
  %v345 = vmax.f32 %v281, 0.0
  %v346 = vmax.f32 %v282, 0.0
  %v347 = vmax.f32 %v283, 0.0
  %v348 = vmax.f32 %v284, 0.0
  %v349 = vmax.f32 %v285, 0.0
  %v350 = vmax.f32 %v286, 0.0
  %v351 = vmax.f32 %v287, 0.0
  %v352 = vmax.f32 %v288, 0.0
  %v353 = vmax.f32 %v289, 0.0
  %v354 = vpack.c.bf16 %v291, %v290
  %v355 = vpack.c.bf16 %v293, %v292
  %v356 = vpack.c.bf16 %v295, %v294
  %v357 = vpack.c.bf16 %v297, %v296
  %v358 = vpack.c.bf16 %v299, %v298
  %v359 = vpack.c.bf16 %v301, %v300
  %v360 = vpack.c.bf16 %v303, %v302
  %v361 = vpack.c.bf16 %v305, %v304
  %v362 = vpack.c.bf16 %v307, %v306
  %v363 = vpack.c.bf16 %v309, %v308
  %v364 = vpack.c.bf16 %v311, %v310
  %v365 = vpack.c.bf16 %v313, %v312
  %v366 = vpack.c.bf16 %v315, %v314
  %v367 = vpack.c.bf16 %v317, %v316
  %v368 = vpack.c.bf16 %v319, %v318
  %v369 = vpack.c.bf16 %v321, %v320
  %v370 = vpack.c.bf16 %v323, %v322
  %v371 = vpack.c.bf16 %v325, %v324
  %v372 = vpack.c.bf16 %v327, %v326
  %v373 = vpack.c.bf16 %v329, %v328
  %v374 = vpack.c.bf16 %v331, %v330
  %v375 = vpack.c.bf16 %v333, %v332
  %v376 = vpack.c.bf16 %v335, %v334
  %v377 = vpack.c.bf16 %v337, %v336
  %v378 = vpack.c.bf16 %v339, %v338
  %v379 = vpack.c.bf16 %v341, %v340
  %v380 = vpack.c.bf16 %v343, %v342
  %v381 = vpack.c.bf16 %v345, %v344
  %v382 = vpack.c.bf16 %v347, %v346
  %v383 = vpack.c.bf16 %v349, %v348
  %v384 = vpack.c.bf16 %v351, %v350
  %v385 = vpack.c.bf16 %v353, %v352
  %v418 = vunpack.c.l.b16 %v354
  %v419 = vunpack.c.h.b16 %v354
  %v420 = vunpack.c.l.b16 %v355
  %v421 = vunpack.c.h.b16 %v355
  %v422 = vunpack.c.l.b16 %v356
  %v423 = vunpack.c.h.b16 %v356
  %v424 = vunpack.c.l.b16 %v357
  %v425 = vunpack.c.h.b16 %v357
  %v426 = vunpack.c.l.b16 %v358
  %v427 = vunpack.c.h.b16 %v358
  %v428 = vunpack.c.l.b16 %v359
  %v429 = vunpack.c.h.b16 %v359
  %v430 = vunpack.c.l.b16 %v360
  %v431 = vunpack.c.h.b16 %v360
  %v432 = vunpack.c.l.b16 %v361
  %v433 = vunpack.c.h.b16 %v361
  %v434 = vunpack.c.l.b16 %v362
  %v435 = vunpack.c.h.b16 %v362
  %v436 = vunpack.c.l.b16 %v363
  %v437 = vunpack.c.h.b16 %v363
  %v438 = vunpack.c.l.b16 %v364
  %v439 = vunpack.c.h.b16 %v364
  %v440 = vunpack.c.l.b16 %v365
  %v441 = vunpack.c.h.b16 %v365
  %v442 = vunpack.c.l.b16 %v366
  %v443 = vunpack.c.h.b16 %v366
  %v444 = vunpack.c.l.b16 %v367
  %v445 = vunpack.c.h.b16 %v367
  %v446 = vunpack.c.l.b16 %v368
  %v447 = vunpack.c.h.b16 %v368
  %v448 = vunpack.c.l.b16 %v369
  %v449 = vunpack.c.h.b16 %v369
  %v450 = vunpack.c.l.b16 %v370
  %v451 = vunpack.c.h.b16 %v370
  %v452 = vunpack.c.l.b16 %v371
  %v453 = vunpack.c.h.b16 %v371
  %v454 = vunpack.c.l.b16 %v372
  %v455 = vunpack.c.h.b16 %v372
  %v456 = vunpack.c.l.b16 %v373
  %v457 = vunpack.c.h.b16 %v373
  %v458 = vunpack.c.l.b16 %v374
  %v459 = vunpack.c.h.b16 %v374
  %v460 = vunpack.c.l.b16 %v375
  %v461 = vunpack.c.h.b16 %v375
  %v462 = vunpack.c.l.b16 %v376
  %v463 = vunpack.c.h.b16 %v376
  %v464 = vunpack.c.l.b16 %v377
  %v465 = vunpack.c.h.b16 %v377
  %v466 = vunpack.c.l.b16 %v378
  %v467 = vunpack.c.h.b16 %v378
  %v468 = vunpack.c.l.b16 %v379
  %v469 = vunpack.c.h.b16 %v379
  %v470 = vunpack.c.l.b16 %v380
  %v471 = vunpack.c.h.b16 %v380
  %v472 = vunpack.c.l.b16 %v381
  %v473 = vunpack.c.h.b16 %v381
  %v474 = vunpack.c.l.b16 %v382
  %v475 = vunpack.c.h.b16 %v382
  %v476 = vunpack.c.l.b16 %v383
  %v477 = vunpack.c.h.b16 %v383
  %v478 = vunpack.c.l.b16 %v384
  %v479 = vunpack.c.h.b16 %v384
  %v480 = vunpack.c.l.b16 %v385
  %v481 = vunpack.c.h.b16 %v385
  %v482 = vpack.c.b16 %v418, %v418
  %v483 = vpack.c.b16 %v419, %v419
  %v484 = vpack.c.b16 %v420, %v420
  %v485 = vpack.c.b16 %v421, %v421
  %v486 = vpack.c.b16 %v422, %v422
  %v487 = vpack.c.b16 %v423, %v423
  %v488 = vpack.c.b16 %v424, %v424
  %v489 = vpack.c.b16 %v425, %v425
  %v490 = vpack.c.b16 %v426, %v426
  %v491 = vpack.c.b16 %v427, %v427
  %v492 = vpack.c.b16 %v428, %v428
  %v493 = vpack.c.b16 %v429, %v429
  %v494 = vpack.c.b16 %v430, %v430
  %v495 = vpack.c.b16 %v431, %v431
  %v496 = vpack.c.b16 %v432, %v432
  %v497 = vpack.c.b16 %v433, %v433
  %v498 = vpack.c.b16 %v434, %v434
  %v499 = vpack.c.b16 %v435, %v435
  %v500 = vpack.c.b16 %v436, %v436
  %v501 = vpack.c.b16 %v437, %v437
  %v502 = vpack.c.b16 %v438, %v438
  %v503 = vpack.c.b16 %v439, %v439
  %v504 = vpack.c.b16 %v440, %v440
  %v505 = vpack.c.b16 %v441, %v441
  %v506 = vpack.c.b16 %v442, %v442
  %v507 = vpack.c.b16 %v443, %v443
  %v508 = vpack.c.b16 %v444, %v444
  %v509 = vpack.c.b16 %v445, %v445
  %v510 = vpack.c.b16 %v446, %v446
  %v511 = vpack.c.b16 %v447, %v447
  %v512 = vpack.c.b16 %v448, %v448
  %v513 = vpack.c.b16 %v449, %v449
  %v514 = vpack.c.b16 %v450, %v450
  %v515 = vpack.c.b16 %v451, %v451
  %v516 = vpack.c.b16 %v452, %v452
  %v517 = vpack.c.b16 %v453, %v453
  %v518 = vpack.c.b16 %v454, %v454
  %v519 = vpack.c.b16 %v455, %v455
  %v520 = vpack.c.b16 %v456, %v456
  %v521 = vpack.c.b16 %v457, %v457
  %v522 = vpack.c.b16 %v458, %v458
  %v523 = vpack.c.b16 %v459, %v459
  %v524 = vpack.c.b16 %v460, %v460
  %v525 = vpack.c.b16 %v461, %v461
  %v526 = vpack.c.b16 %v462, %v462
  %v527 = vpack.c.b16 %v463, %v463
  %v528 = vpack.c.b16 %v464, %v464
  %v529 = vpack.c.b16 %v465, %v465
  %v530 = vpack.c.b16 %v466, %v466
  %v531 = vpack.c.b16 %v467, %v467
  %v532 = vpack.c.b16 %v468, %v468
  %v533 = vpack.c.b16 %v469, %v469
  %v534 = vpack.c.b16 %v470, %v470
  %v535 = vpack.c.b16 %v471, %v471
  %v536 = vpack.c.b16 %v472, %v472
  %v537 = vpack.c.b16 %v473, %v473
  %v538 = vpack.c.b16 %v474, %v474
  %v539 = vpack.c.b16 %v475, %v475
  %v540 = vpack.c.b16 %v476, %v476
  %v541 = vpack.c.b16 %v477, %v477
  %v542 = vpack.c.b16 %v478, %v478
  %v543 = vpack.c.b16 %v479, %v479
  %v544 = vpack.c.b16 %v480, %v480
  %v545 = vpack.c.b16 %v481, %v481
  %546 = vrot.lane.b32.xlu0 %v482, 120
  %v547 = vpop.permute.xlu0 %546
  %548 = vrot.lane.b32.xlu0 %v483, 120
  %v549 = vpop.permute.xlu0 %548
  %550 = vrot.lane.b32.xlu0 %v484, 120
  %v551 = vpop.permute.xlu0 %550
  %552 = vrot.lane.b32.xlu0 %v485, 120
  %v553 = vpop.permute.xlu0 %552
  %554 = vrot.lane.b32.xlu0 %v486, 120
  %v555 = vpop.permute.xlu0 %554
  %556 = vrot.lane.b32.xlu0 %v487, 120
  %v557 = vpop.permute.xlu0 %556
  %558 = vrot.lane.b32.xlu0 %v488, 120
  %v559 = vpop.permute.xlu0 %558
  %560 = vrot.lane.b32.xlu0 %v489, 120
  %v561 = vpop.permute.xlu0 %560
  %562 = vrot.lane.b32.xlu0 %v490, 120
  %v563 = vpop.permute.xlu0 %562
  %564 = vrot.lane.b32.xlu0 %v491, 120
  %v565 = vpop.permute.xlu0 %564
  %566 = vrot.lane.b32.xlu0 %v492, 120
  %v567 = vpop.permute.xlu0 %566
  %568 = vrot.lane.b32.xlu0 %v493, 120
  %v569 = vpop.permute.xlu0 %568
  %570 = vrot.lane.b32.xlu0 %v494, 120
  %v571 = vpop.permute.xlu0 %570
  %572 = vrot.lane.b32.xlu0 %v495, 120
  %v573 = vpop.permute.xlu0 %572
  %574 = vrot.lane.b32.xlu0 %v496, 120
  %v575 = vpop.permute.xlu0 %574
  %576 = vrot.lane.b32.xlu0 %v497, 120
  %v577 = vpop.permute.xlu0 %576
  %578 = vrot.lane.b32.xlu0 %v498, 120
  %v579 = vpop.permute.xlu0 %578
  %580 = vrot.lane.b32.xlu0 %v499, 120
  %v581 = vpop.permute.xlu0 %580
  %582 = vrot.lane.b32.xlu0 %v500, 120
  %v583 = vpop.permute.xlu0 %582
  %584 = vrot.lane.b32.xlu0 %v501, 120
  %v585 = vpop.permute.xlu0 %584
  %586 = vrot.lane.b32.xlu0 %v502, 120
  %v587 = vpop.permute.xlu0 %586
  %588 = vrot.lane.b32.xlu0 %v503, 120
  %v589 = vpop.permute.xlu0 %588
  %590 = vrot.lane.b32.xlu0 %v504, 120
  %v591 = vpop.permute.xlu0 %590
  %592 = vrot.lane.b32.xlu0 %v505, 120
  %v593 = vpop.permute.xlu0 %592
  %594 = vrot.lane.b32.xlu0 %v506, 120
  %v595 = vpop.permute.xlu0 %594
  %596 = vrot.lane.b32.xlu0 %v507, 120
  %v597 = vpop.permute.xlu0 %596
  %598 = vrot.lane.b32.xlu0 %v508, 120
  %v599 = vpop.permute.xlu0 %598
  %600 = vrot.lane.b32.xlu0 %v509, 120
  %v601 = vpop.permute.xlu0 %600
  %602 = vrot.lane.b32.xlu0 %v510, 120
  %v603 = vpop.permute.xlu0 %602
  %604 = vrot.lane.b32.xlu0 %v511, 120
  %v605 = vpop.permute.xlu0 %604
  %606 = vrot.lane.b32.xlu0 %v512, 120
  %v607 = vpop.permute.xlu0 %606
  %608 = vrot.lane.b32.xlu0 %v513, 120
  %v609 = vpop.permute.xlu0 %608
  %610 = vrot.lane.b32.xlu0 %v514, 120
  %v611 = vpop.permute.xlu0 %610
  %612 = vrot.lane.b32.xlu0 %v515, 120
  %v613 = vpop.permute.xlu0 %612
  %614 = vrot.lane.b32.xlu0 %v516, 120
  %v615 = vpop.permute.xlu0 %614
  %616 = vrot.lane.b32.xlu0 %v517, 120
  %v617 = vpop.permute.xlu0 %616
  %618 = vrot.lane.b32.xlu0 %v518, 120
  %v619 = vpop.permute.xlu0 %618
  %620 = vrot.lane.b32.xlu0 %v519, 120
  %v621 = vpop.permute.xlu0 %620
  %622 = vrot.lane.b32.xlu0 %v520, 120
  %v623 = vpop.permute.xlu0 %622
  %624 = vrot.lane.b32.xlu0 %v521, 120
  %v625 = vpop.permute.xlu0 %624
  %626 = vrot.lane.b32.xlu0 %v522, 120
  %v627 = vpop.permute.xlu0 %626
  %628 = vrot.lane.b32.xlu0 %v523, 120
  %v629 = vpop.permute.xlu0 %628
  %630 = vrot.lane.b32.xlu0 %v524, 120
  %v631 = vpop.permute.xlu0 %630
  %632 = vrot.lane.b32.xlu0 %v525, 120
  %v633 = vpop.permute.xlu0 %632
  %634 = vrot.lane.b32.xlu0 %v526, 120
  %v635 = vpop.permute.xlu0 %634
  %636 = vrot.lane.b32.xlu0 %v527, 120
  %v637 = vpop.permute.xlu0 %636
  %638 = vrot.lane.b32.xlu0 %v528, 120
  %v639 = vpop.permute.xlu0 %638
  %640 = vrot.lane.b32.xlu0 %v529, 120
  %v641 = vpop.permute.xlu0 %640
  %642 = vrot.lane.b32.xlu0 %v530, 120
  %v643 = vpop.permute.xlu0 %642
  %644 = vrot.lane.b32.xlu0 %v531, 120
  %v645 = vpop.permute.xlu0 %644
  %646 = vrot.lane.b32.xlu0 %v532, 120
  %v647 = vpop.permute.xlu0 %646
  %648 = vrot.lane.b32.xlu0 %v533, 120
  %v649 = vpop.permute.xlu0 %648
  %650 = vrot.lane.b32.xlu0 %v534, 120
  %v651 = vpop.permute.xlu0 %650
  %652 = vrot.lane.b32.xlu0 %v535, 120
  %v653 = vpop.permute.xlu0 %652
  %654 = vrot.lane.b32.xlu0 %v536, 120
  %v655 = vpop.permute.xlu0 %654
  %656 = vrot.lane.b32.xlu0 %v537, 120
  %v657 = vpop.permute.xlu0 %656
  %658 = vrot.lane.b32.xlu0 %v538, 120
  %v659 = vpop.permute.xlu0 %658
  %660 = vrot.lane.b32.xlu0 %v539, 120
  %v661 = vpop.permute.xlu0 %660
  %662 = vrot.lane.b32.xlu0 %v540, 120
  %v663 = vpop.permute.xlu0 %662
  %664 = vrot.lane.b32.xlu0 %v541, 120
  %v665 = vpop.permute.xlu0 %664
  %666 = vrot.lane.b32.xlu0 %v542, 120
  %v667 = vpop.permute.xlu0 %666
  %668 = vrot.lane.b32.xlu0 %v543, 120
  %v669 = vpop.permute.xlu0 %668
  %670 = vrot.lane.b32.xlu0 %v544, 120
  %v671 = vpop.permute.xlu0 %670
  %672 = vrot.lane.b32.xlu0 %v545, 120
  %v673 = vpop.permute.xlu0 %672
  %vm738 = vcmask 27648
  %739 = vst.msk [vmem:[%s3] sm:$0xf] %vm738, %v547
  %740 = vst.msk [vmem:[%s3 + $0x4] sm:$0xf] %vm738, %v549
  %741 = vst.msk [vmem:[%s3 + $0x8] sm:$0xf] %vm738, %v551
  %742 = vst.msk [vmem:[%s3 + $0xc] sm:$0xf] %vm738, %v553
  %743 = vst.msk [vmem:[%s3 + $0x10] sm:$0xf] %vm738, %v555
  %744 = vst.msk [vmem:[%s3 + $0x14] sm:$0xf] %vm738, %v557
  %745 = vst.msk [vmem:[%s3 + $0x18] sm:$0xf] %vm738, %v559
  %746 = vst.msk [vmem:[%s3 + $0x1c] sm:$0xf] %vm738, %v561
  %747 = vst.msk [vmem:[%s3 + $0x20] sm:$0xf] %vm738, %v563
  %748 = vst.msk [vmem:[%s3 + $0x24] sm:$0xf] %vm738, %v565
  %749 = vst.msk [vmem:[%s3 + $0x28] sm:$0xf] %vm738, %v567
  %750 = vst.msk [vmem:[%s3 + $0x2c] sm:$0xf] %vm738, %v569
  %751 = vst.msk [vmem:[%s3 + $0x30] sm:$0xf] %vm738, %v571
  %752 = vst.msk [vmem:[%s3 + $0x34] sm:$0xf] %vm738, %v573
  %753 = vst.msk [vmem:[%s3 + $0x38] sm:$0xf] %vm738, %v575
  %754 = vst.msk [vmem:[%s3 + $0x3c] sm:$0xf] %vm738, %v577
  %755 = vst.msk [vmem:[%s3 + $0x40] sm:$0xf] %vm738, %v579
  %756 = vst.msk [vmem:[%s3 + $0x44] sm:$0xf] %vm738, %v581
  %757 = vst.msk [vmem:[%s3 + $0x48] sm:$0xf] %vm738, %v583
  %758 = vst.msk [vmem:[%s3 + $0x4c] sm:$0xf] %vm738, %v585
  %759 = vst.msk [vmem:[%s3 + $0x50] sm:$0xf] %vm738, %v587
  %760 = vst.msk [vmem:[%s3 + $0x54] sm:$0xf] %vm738, %v589
  %761 = vst.msk [vmem:[%s3 + $0x58] sm:$0xf] %vm738, %v591
  %762 = vst.msk [vmem:[%s3 + $0x5c] sm:$0xf] %vm738, %v593
  %763 = vst.msk [vmem:[%s3 + $0x60] sm:$0xf] %vm738, %v595
  %764 = vst.msk [vmem:[%s3 + $0x64] sm:$0xf] %vm738, %v597
  %765 = vst.msk [vmem:[%s3 + $0x68] sm:$0xf] %vm738, %v599
  %766 = vst.msk [vmem:[%s3 + $0x6c] sm:$0xf] %vm738, %v601
  %767 = vst.msk [vmem:[%s3 + $0x70] sm:$0xf] %vm738, %v603
  %768 = vst.msk [vmem:[%s3 + $0x74] sm:$0xf] %vm738, %v605
  %769 = vst.msk [vmem:[%s3 + $0x78] sm:$0xf] %vm738, %v607
  %770 = vst.msk [vmem:[%s3 + $0x7c] sm:$0xf] %vm738, %v609
  %771 = vst.msk [vmem:[%s3 + $0x80] sm:$0xf] %vm738, %v611
  %772 = vst.msk [vmem:[%s3 + $0x84] sm:$0xf] %vm738, %v613
  %773 = vst.msk [vmem:[%s3 + $0x88] sm:$0xf] %vm738, %v615
  %774 = vst.msk [vmem:[%s3 + $0x8c] sm:$0xf] %vm738, %v617
  %775 = vst.msk [vmem:[%s3 + $0x90] sm:$0xf] %vm738, %v619
  %776 = vst.msk [vmem:[%s3 + $0x94] sm:$0xf] %vm738, %v621
  %777 = vst.msk [vmem:[%s3 + $0x98] sm:$0xf] %vm738, %v623
  %778 = vst.msk [vmem:[%s3 + $0x9c] sm:$0xf] %vm738, %v625
  %779 = vst.msk [vmem:[%s3 + $0xa0] sm:$0xf] %vm738, %v627
  %780 = vst.msk [vmem:[%s3 + $0xa4] sm:$0xf] %vm738, %v629
  %781 = vst.msk [vmem:[%s3 + $0xa8] sm:$0xf] %vm738, %v631
  %782 = vst.msk [vmem:[%s3 + $0xac] sm:$0xf] %vm738, %v633
  %783 = vst.msk [vmem:[%s3 + $0xb0] sm:$0xf] %vm738, %v635
  %784 = vst.msk [vmem:[%s3 + $0xb4] sm:$0xf] %vm738, %v637
  %785 = vst.msk [vmem:[%s3 + $0xb8] sm:$0xf] %vm738, %v639
  %786 = vst.msk [vmem:[%s3 + $0xbc] sm:$0xf] %vm738, %v641
  %787 = vst.msk [vmem:[%s3 + $0xc0] sm:$0xf] %vm738, %v643
  %788 = vst.msk [vmem:[%s3 + $0xc4] sm:$0xf] %vm738, %v645
  %789 = vst.msk [vmem:[%s3 + $0xc8] sm:$0xf] %vm738, %v647
  %790 = vst.msk [vmem:[%s3 + $0xcc] sm:$0xf] %vm738, %v649
  %791 = vst.msk [vmem:[%s3 + $0xd0] sm:$0xf] %vm738, %v651
  %792 = vst.msk [vmem:[%s3 + $0xd4] sm:$0xf] %vm738, %v653
  %793 = vst.msk [vmem:[%s3 + $0xd8] sm:$0xf] %vm738, %v655
  %794 = vst.msk [vmem:[%s3 + $0xdc] sm:$0xf] %vm738, %v657
  %795 = vst.msk [vmem:[%s3 + $0xe0] sm:$0xf] %vm738, %v659
  %796 = vst.msk [vmem:[%s3 + $0xe4] sm:$0xf] %vm738, %v661
  %797 = vst.msk [vmem:[%s3 + $0xe8] sm:$0xf] %vm738, %v663
  %798 = vst.msk [vmem:[%s3 + $0xec] sm:$0xf] %vm738, %v665
  %799 = vst.msk [vmem:[%s3 + $0xf0] sm:$0xf] %vm738, %v667
  %800 = vst.msk [vmem:[%s3 + $0xf4] sm:$0xf] %vm738, %v669
  %801 = vst.msk [vmem:[%s3 + $0xf8] sm:$0xf] %vm738, %v671
  %802 = vst.msk [vmem:[%s3 + $0xfc] sm:$0xf] %vm738, %v673
  %803 = vrot.lane.b32.xlu0 %v482, 116
  %v804 = vpop.permute.xlu0 %803
  %805 = vrot.lane.b32.xlu0 %v483, 116
  %v806 = vpop.permute.xlu0 %805
  %807 = vrot.lane.b32.xlu0 %v484, 116
  %v808 = vpop.permute.xlu0 %807
  %809 = vrot.lane.b32.xlu0 %v485, 116
  %v810 = vpop.permute.xlu0 %809
  %811 = vrot.lane.b32.xlu0 %v486, 116
  %v812 = vpop.permute.xlu0 %811
  %813 = vrot.lane.b32.xlu0 %v487, 116
  %v814 = vpop.permute.xlu0 %813
  %815 = vrot.lane.b32.xlu0 %v488, 116
  %v816 = vpop.permute.xlu0 %815
  %817 = vrot.lane.b32.xlu0 %v489, 116
  %v818 = vpop.permute.xlu0 %817
  %819 = vrot.lane.b32.xlu0 %v490, 116
  %v820 = vpop.permute.xlu0 %819
  %821 = vrot.lane.b32.xlu0 %v491, 116
  %v822 = vpop.permute.xlu0 %821
  %823 = vrot.lane.b32.xlu0 %v492, 116
  %v824 = vpop.permute.xlu0 %823
  %825 = vrot.lane.b32.xlu0 %v493, 116
  %v826 = vpop.permute.xlu0 %825
  %827 = vrot.lane.b32.xlu0 %v494, 116
  %v828 = vpop.permute.xlu0 %827
  %829 = vrot.lane.b32.xlu0 %v495, 116
  %v830 = vpop.permute.xlu0 %829
  %831 = vrot.lane.b32.xlu0 %v496, 116
  %v832 = vpop.permute.xlu0 %831
  %833 = vrot.lane.b32.xlu0 %v497, 116
  %v834 = vpop.permute.xlu0 %833
  %835 = vrot.lane.b32.xlu0 %v498, 116
  %v836 = vpop.permute.xlu0 %835
  %837 = vrot.lane.b32.xlu0 %v499, 116
  %v838 = vpop.permute.xlu0 %837
  %839 = vrot.lane.b32.xlu0 %v500, 116
  %v840 = vpop.permute.xlu0 %839
  %841 = vrot.lane.b32.xlu0 %v501, 116
  %v842 = vpop.permute.xlu0 %841
  %843 = vrot.lane.b32.xlu0 %v502, 116
  %v844 = vpop.permute.xlu0 %843
  %845 = vrot.lane.b32.xlu0 %v503, 116
  %v846 = vpop.permute.xlu0 %845
  %847 = vrot.lane.b32.xlu0 %v504, 116
  %v848 = vpop.permute.xlu0 %847
  %849 = vrot.lane.b32.xlu0 %v505, 116
  %v850 = vpop.permute.xlu0 %849
  %851 = vrot.lane.b32.xlu0 %v506, 116
  %v852 = vpop.permute.xlu0 %851
  %853 = vrot.lane.b32.xlu0 %v507, 116
  %v854 = vpop.permute.xlu0 %853
  %855 = vrot.lane.b32.xlu0 %v508, 116
  %v856 = vpop.permute.xlu0 %855
  %857 = vrot.lane.b32.xlu0 %v509, 116
  %v858 = vpop.permute.xlu0 %857
  %859 = vrot.lane.b32.xlu0 %v510, 116
  %v860 = vpop.permute.xlu0 %859
  %861 = vrot.lane.b32.xlu0 %v511, 116
  %v862 = vpop.permute.xlu0 %861
  %863 = vrot.lane.b32.xlu0 %v512, 116
  %v864 = vpop.permute.xlu0 %863
  %865 = vrot.lane.b32.xlu0 %v513, 116
  %v866 = vpop.permute.xlu0 %865
  %867 = vrot.lane.b32.xlu0 %v514, 116
  %v868 = vpop.permute.xlu0 %867
  %869 = vrot.lane.b32.xlu0 %v515, 116
  %v870 = vpop.permute.xlu0 %869
  %871 = vrot.lane.b32.xlu0 %v516, 116
  %v872 = vpop.permute.xlu0 %871
  %873 = vrot.lane.b32.xlu0 %v517, 116
  %v874 = vpop.permute.xlu0 %873
  %875 = vrot.lane.b32.xlu0 %v518, 116
  %v876 = vpop.permute.xlu0 %875
  %877 = vrot.lane.b32.xlu0 %v519, 116
  %v878 = vpop.permute.xlu0 %877
  %879 = vrot.lane.b32.xlu0 %v520, 116
  %v880 = vpop.permute.xlu0 %879
  %881 = vrot.lane.b32.xlu0 %v521, 116
  %v882 = vpop.permute.xlu0 %881
  %883 = vrot.lane.b32.xlu0 %v522, 116
  %v884 = vpop.permute.xlu0 %883
  %885 = vrot.lane.b32.xlu0 %v523, 116
  %v886 = vpop.permute.xlu0 %885
  %887 = vrot.lane.b32.xlu0 %v524, 116
  %v888 = vpop.permute.xlu0 %887
  %889 = vrot.lane.b32.xlu0 %v525, 116
  %v890 = vpop.permute.xlu0 %889
  %891 = vrot.lane.b32.xlu0 %v526, 116
  %v892 = vpop.permute.xlu0 %891
  %893 = vrot.lane.b32.xlu0 %v527, 116
  %v894 = vpop.permute.xlu0 %893
  %895 = vrot.lane.b32.xlu0 %v528, 116
  %v896 = vpop.permute.xlu0 %895
  %897 = vrot.lane.b32.xlu0 %v529, 116
  %v898 = vpop.permute.xlu0 %897
  %899 = vrot.lane.b32.xlu0 %v530, 116
  %v900 = vpop.permute.xlu0 %899
  %901 = vrot.lane.b32.xlu0 %v531, 116
  %v902 = vpop.permute.xlu0 %901
  %903 = vrot.lane.b32.xlu0 %v532, 116
  %v904 = vpop.permute.xlu0 %903
  %905 = vrot.lane.b32.xlu0 %v533, 116
  %v906 = vpop.permute.xlu0 %905
  %907 = vrot.lane.b32.xlu0 %v534, 116
  %v908 = vpop.permute.xlu0 %907
  %909 = vrot.lane.b32.xlu0 %v535, 116
  %v910 = vpop.permute.xlu0 %909
  %911 = vrot.lane.b32.xlu0 %v536, 116
  %v912 = vpop.permute.xlu0 %911
  %913 = vrot.lane.b32.xlu0 %v537, 116
  %v914 = vpop.permute.xlu0 %913
  %915 = vrot.lane.b32.xlu0 %v538, 116
  %v916 = vpop.permute.xlu0 %915
  %917 = vrot.lane.b32.xlu0 %v539, 116
  %v918 = vpop.permute.xlu0 %917
  %919 = vrot.lane.b32.xlu0 %v540, 116
  %v920 = vpop.permute.xlu0 %919
  %921 = vrot.lane.b32.xlu0 %v541, 116
  %v922 = vpop.permute.xlu0 %921
  %923 = vrot.lane.b32.xlu0 %v542, 116
  %v924 = vpop.permute.xlu0 %923
  %925 = vrot.lane.b32.xlu0 %v543, 116
  %v926 = vpop.permute.xlu0 %925
  %927 = vrot.lane.b32.xlu0 %v544, 116
  %v928 = vpop.permute.xlu0 %927
  %929 = vrot.lane.b32.xlu0 %v545, 116
  %v930 = vpop.permute.xlu0 %929
  %995 = vst.msk [vmem:[%s4] sm:$0xf] %vm738, %v804
  %996 = vst.msk [vmem:[%s4 + $0x4] sm:$0xf] %vm738, %v806
  %997 = vst.msk [vmem:[%s4 + $0x8] sm:$0xf] %vm738, %v808
  %998 = vst.msk [vmem:[%s4 + $0xc] sm:$0xf] %vm738, %v810
  %999 = vst.msk [vmem:[%s4 + $0x10] sm:$0xf] %vm738, %v812
  %1000 = vst.msk [vmem:[%s4 + $0x14] sm:$0xf] %vm738, %v814
  %1001 = vst.msk [vmem:[%s4 + $0x18] sm:$0xf] %vm738, %v816
  %1002 = vst.msk [vmem:[%s4 + $0x1c] sm:$0xf] %vm738, %v818
  %1003 = vst.msk [vmem:[%s4 + $0x20] sm:$0xf] %vm738, %v820
  %1004 = vst.msk [vmem:[%s4 + $0x24] sm:$0xf] %vm738, %v822
  %1005 = vst.msk [vmem:[%s4 + $0x28] sm:$0xf] %vm738, %v824
  %1006 = vst.msk [vmem:[%s4 + $0x2c] sm:$0xf] %vm738, %v826
  %1007 = vst.msk [vmem:[%s4 + $0x30] sm:$0xf] %vm738, %v828
  %1008 = vst.msk [vmem:[%s4 + $0x34] sm:$0xf] %vm738, %v830
  %1009 = vst.msk [vmem:[%s4 + $0x38] sm:$0xf] %vm738, %v832
  %1010 = vst.msk [vmem:[%s4 + $0x3c] sm:$0xf] %vm738, %v834
  %1011 = vst.msk [vmem:[%s4 + $0x40] sm:$0xf] %vm738, %v836
  %1012 = vst.msk [vmem:[%s4 + $0x44] sm:$0xf] %vm738, %v838
  %1013 = vst.msk [vmem:[%s4 + $0x48] sm:$0xf] %vm738, %v840
  %1014 = vst.msk [vmem:[%s4 + $0x4c] sm:$0xf] %vm738, %v842
  %1015 = vst.msk [vmem:[%s4 + $0x50] sm:$0xf] %vm738, %v844
  %1016 = vst.msk [vmem:[%s4 + $0x54] sm:$0xf] %vm738, %v846
  %1017 = vst.msk [vmem:[%s4 + $0x58] sm:$0xf] %vm738, %v848
  %1018 = vst.msk [vmem:[%s4 + $0x5c] sm:$0xf] %vm738, %v850
  %1019 = vst.msk [vmem:[%s4 + $0x60] sm:$0xf] %vm738, %v852
  %1020 = vst.msk [vmem:[%s4 + $0x64] sm:$0xf] %vm738, %v854
  %1021 = vst.msk [vmem:[%s4 + $0x68] sm:$0xf] %vm738, %v856
  %1022 = vst.msk [vmem:[%s4 + $0x6c] sm:$0xf] %vm738, %v858
  %1023 = vst.msk [vmem:[%s4 + $0x70] sm:$0xf] %vm738, %v860
  %1024 = vst.msk [vmem:[%s4 + $0x74] sm:$0xf] %vm738, %v862
  %1025 = vst.msk [vmem:[%s4 + $0x78] sm:$0xf] %vm738, %v864
  %1026 = vst.msk [vmem:[%s4 + $0x7c] sm:$0xf] %vm738, %v866
  %1027 = vst.msk [vmem:[%s4 + $0x80] sm:$0xf] %vm738, %v868
  %1028 = vst.msk [vmem:[%s4 + $0x84] sm:$0xf] %vm738, %v870
  %1029 = vst.msk [vmem:[%s4 + $0x88] sm:$0xf] %vm738, %v872
  %1030 = vst.msk [vmem:[%s4 + $0x8c] sm:$0xf] %vm738, %v874
  %1031 = vst.msk [vmem:[%s4 + $0x90] sm:$0xf] %vm738, %v876
  %1032 = vst.msk [vmem:[%s4 + $0x94] sm:$0xf] %vm738, %v878
  %1033 = vst.msk [vmem:[%s4 + $0x98] sm:$0xf] %vm738, %v880
  %1034 = vst.msk [vmem:[%s4 + $0x9c] sm:$0xf] %vm738, %v882
  %1035 = vst.msk [vmem:[%s4 + $0xa0] sm:$0xf] %vm738, %v884
  %1036 = vst.msk [vmem:[%s4 + $0xa4] sm:$0xf] %vm738, %v886
  %1037 = vst.msk [vmem:[%s4 + $0xa8] sm:$0xf] %vm738, %v888
  %1038 = vst.msk [vmem:[%s4 + $0xac] sm:$0xf] %vm738, %v890
  %1039 = vst.msk [vmem:[%s4 + $0xb0] sm:$0xf] %vm738, %v892
  %1040 = vst.msk [vmem:[%s4 + $0xb4] sm:$0xf] %vm738, %v894
  %1041 = vst.msk [vmem:[%s4 + $0xb8] sm:$0xf] %vm738, %v896
  %1042 = vst.msk [vmem:[%s4 + $0xbc] sm:$0xf] %vm738, %v898
  %1043 = vst.msk [vmem:[%s4 + $0xc0] sm:$0xf] %vm738, %v900
  %1044 = vst.msk [vmem:[%s4 + $0xc4] sm:$0xf] %vm738, %v902
  %1045 = vst.msk [vmem:[%s4 + $0xc8] sm:$0xf] %vm738, %v904
  %1046 = vst.msk [vmem:[%s4 + $0xcc] sm:$0xf] %vm738, %v906
  %1047 = vst.msk [vmem:[%s4 + $0xd0] sm:$0xf] %vm738, %v908
  %1048 = vst.msk [vmem:[%s4 + $0xd4] sm:$0xf] %vm738, %v910
  %1049 = vst.msk [vmem:[%s4 + $0xd8] sm:$0xf] %vm738, %v912
  %1050 = vst.msk [vmem:[%s4 + $0xdc] sm:$0xf] %vm738, %v914
  %1051 = vst.msk [vmem:[%s4 + $0xe0] sm:$0xf] %vm738, %v916
  %1052 = vst.msk [vmem:[%s4 + $0xe4] sm:$0xf] %vm738, %v918
  %1053 = vst.msk [vmem:[%s4 + $0xe8] sm:$0xf] %vm738, %v920
  %1054 = vst.msk [vmem:[%s4 + $0xec] sm:$0xf] %vm738, %v922
  %1055 = vst.msk [vmem:[%s4 + $0xf0] sm:$0xf] %vm738, %v924
  %1056 = vst.msk [vmem:[%s4 + $0xf4] sm:$0xf] %vm738, %v926
  %1057 = vst.msk [vmem:[%s4 + $0xf8] sm:$0xf] %vm738, %v928
  %1058 = vst.msk [vmem:[%s4 + $0xfc] sm:$0xf] %vm738, %v930
  // Predicated region
  $region14: #{inception_forward.7} parent=0 // pred_check
    _
  $region15: #{inception_forward.7} parent=0 // pred_check_branch
    %1060 = sbr.rel (0) target = $region17
  $region16: #{inception_forward.7} parent=0 // pred_region
    _
  $region17: #{inception_forward.7} parent=0 // pred_fallthru
    _
  // Predicated region
  $region18: #{inception_forward.7} parent=0 // pred_check
    _
  $region19: #{inception_forward.7} parent=0 // pred_check_branch
    %1062 = sbr.rel (0) target = $region21
  $region20: #{inception_forward.7} parent=0 // pred_region
    _
  $region21: #{inception_forward.7} parent=0 // pred_fallthru
    _
  // Predicated region
  $region22: #{inception_forward.7} parent=0 // pred_check
    _
  $region23: #{inception_forward.7} parent=0 // pred_check_branch
    %1064 = sbr.rel (0) target = $region25
  $region24: #{inception_forward.7} parent=0 // pred_region
    _
  $region25: #{inception_forward.7} parent=0 // pred_fallthru
    _
  // Predicated region
  $region26: #{inception_forward.7} parent=0 // pred_check
    _
  $region27: #{inception_forward.7} parent=0 // pred_check_branch
    %1066 = sbr.rel (0) target = $region29
  $region28: #{inception_forward.7} parent=0 // pred_region
    _
  $region29: #{inception_forward.7} parent=0 // pred_fallthru
    _

// kernel: inception_forward.8
$region0: #{inception_forward.8}
  #allocation0 [shape = 'u32[]', space=smem, size = 0x4, offset = 0x4, fixed_abs, tag = 'smem constant byte address 0x4 - core index']
  #allocation1 [shape = 'u32[144,128]{1,0:T(1,128)}', space=vmem, size = 0x12000, scoped, tag = 'internal scratch']
  %s0 = inlined_call_operand.vmem [shape: bf16[2,18,18,4], index: 0, kind: input, shape index: {}]
  %s1 = inlined_call_operand.vmem [shape: bf16[3,12,8], index: 1, kind: input, shape index: {}]
  %s2 = inlined_call_operand.vmem [shape: bf16[2,16,16,8], index: 2, kind: output, shape index: {0}]
  %s3 = inlined_call_operand.vmem [shape: f32[2,2,2,8], index: 3, kind: output, shape index: {1}]
  %4 = xla_tuple %s2, %s3
  %s5 = sld [smem:[#allocation0]]
  $region49: #{inception_forward.8} parent=0
    _
  %s7 = ssub.s32 1, %s5
  %s8 = scalar_select 0, %s7, %s5
  loop: start=0, step=1, limit=6
  $region2: #{inception_forward.8} parent=0 // loop_pre_header
    _
  $region3: #{inception_forward.8} parent=0 // loop_header
    %s10 = sphi 0, %s14
    %p11 = scmp.ge.s32.totalorder %s10, 6
    %s17 = sphi 0, %s29
    %s18 = sphi 0, %s25
    %s19 = sphi 0, %s17
    %s20 = sphi 0, %s18
    %s21 = sphi 0, %s19
    %s22 = sphi 0, %s20
    %s32 = sphi 0, %s34
    %s35 = sphi 0, %s32
    %s36 = sphi 0, %s35
    %s52 = sphi 0, %s36
    %s56 = sphi 0, %s56
    %s58 = sphi 0, %s56
    %s59 = sphi 0, %s58
    %s73 = sphi 0, %s59
    %s81 = sphi 0, %s83
    %s84 = sphi 0, %s81
    %s85 = sphi 0, %s84
    %s101 = sphi 0, %s85
    %s109 = sphi 0, %s111
    %s112 = sphi 0, %s109
    %s113 = sphi 0, %s112
    %s129 = sphi 0, %s113
  $region4: #{inception_forward.8} parent=0 // loop_header_branch
    %13 = sbr.rel (%p11) target = $region8
  $region5: #{inception_forward.8} parent=0 // loop_body
    %s15 = ssub.s32 %s10, 1
    %s16 = ssub.s32 %s10, 2
    %s23 = sadd.s32 1, %s18
    %p24 = scmp.ge.s32.totalorder %s23, 2
    %s25 = scalar_select %p24, 0, %s23
    %s26 = sadd.s32 1, %s17
    %s27 = scalar_select %p24, %s26, %s17
    %p28 = scmp.ge.s32.totalorder %s27, 2
    %s29 = scalar_select %p28, 0, %s27
    %s30 = ssub.s32 %s17, %s29
    %p31 = scmp.eq.s32.totalorder %s30, 0
    %s33 = sadd.s32 %s32, 1
    %s34 = scalar_select %p31, %s32, %s33
    %p37 = pneg %p31
    %p38 = scmp.eq.s32.totalorder %s10, 3
    %p39 = por %p37, %p38
    %p40 = scmp.ne.s32.totalorder %s32, %s35
    %p41 = scmp.eq.s32.totalorder %s10, 0
    %p42 = por %p40, %p41
    %p43 = scmp.ne.s32.totalorder %s32, %s35
    %p44 = scmp.eq.s32.totalorder %s15, 3
    %p45 = por %p43, %p44
    %p46 = scmp.ne.s32.totalorder %s35, %s36
    %p47 = scmp.eq.s32.totalorder %s15, 0
    %p48 = por %p46, %p47
    %p49 = scmp.ne.s32.totalorder %s35, %s36
    %p50 = scmp.eq.s32.totalorder %s16, 3
    %p51 = por %p49, %p50
    %p53 = scmp.ne.s32.totalorder %s36, %s52
    %p54 = scmp.eq.s32.totalorder %s16, 0
    %p55 = por %p53, %p54
    %s57 = sadd.s32 %s56, 1
    %p60 = scmp.eq.s32.totalorder %s10, 3
    %p61 = scmp.ne.s32.totalorder %s56, %s58
    %p62 = scmp.eq.s32.totalorder %s10, 0
    %p63 = por %p61, %p62
    %p64 = scmp.ne.s32.totalorder %s56, %s58
    %p65 = scmp.eq.s32.totalorder %s15, 3
    %p66 = por %p64, %p65
    %p67 = scmp.ne.s32.totalorder %s58, %s59
    %p68 = scmp.eq.s32.totalorder %s15, 0
    %p69 = por %p67, %p68
    %p70 = scmp.ne.s32.totalorder %s58, %s59
    %p71 = scmp.eq.s32.totalorder %s16, 3
    %p72 = por %p70, %p71
    %p74 = scmp.ne.s32.totalorder %s59, %s73
    %p75 = scmp.eq.s32.totalorder %s16, 0
    %p76 = por %p74, %p75
    %s77 = ssub.s32 %s17, %s29
    %s78 = ssub.s32 %s18, %s25
    %s79 = sor.u32 %s77, %s78
    %p80 = scmp.eq.s32.totalorder %s79, 0
    %s82 = sadd.s32 %s81, 1
    %s83 = scalar_select %p80, %s81, %s82
    %p86 = pneg %p80
    %p87 = scmp.eq.s32.totalorder %s10, 3
    %p88 = por %p86, %p87
    %p89 = scmp.ne.s32.totalorder %s81, %s84
    %p90 = scmp.eq.s32.totalorder %s10, 0
    %p91 = por %p89, %p90
    %p92 = scmp.ne.s32.totalorder %s81, %s84
    %p93 = scmp.eq.s32.totalorder %s15, 3
    %p94 = por %p92, %p93
    %p95 = scmp.ne.s32.totalorder %s84, %s85
    %p96 = scmp.eq.s32.totalorder %s15, 0
    %p97 = por %p95, %p96
    %p98 = scmp.ne.s32.totalorder %s84, %s85
    %p99 = scmp.eq.s32.totalorder %s16, 3
    %p100 = por %p98, %p99
    %p102 = scmp.ne.s32.totalorder %s85, %s101
    %p103 = scmp.eq.s32.totalorder %s16, 0
    %p104 = por %p102, %p103
    %s105 = ssub.s32 %s17, %s29
    %s106 = ssub.s32 %s18, %s25
    %s107 = sor.u32 %s105, %s106
    %p108 = scmp.eq.s32.totalorder %s107, 0
    %s110 = sadd.s32 %s109, 1
    %s111 = scalar_select %p108, %s109, %s110
    %p114 = pneg %p108
    %p115 = scmp.eq.s32.totalorder %s10, 3
    %p116 = por %p114, %p115
    %p117 = scmp.ne.s32.totalorder %s109, %s112
    %p118 = scmp.eq.s32.totalorder %s10, 0
    %p119 = por %p117, %p118
    %p120 = scmp.ne.s32.totalorder %s109, %s112
    %p121 = scmp.eq.s32.totalorder %s15, 3
    %p122 = por %p120, %p121
    %p123 = scmp.ne.s32.totalorder %s112, %s113
    %p124 = scmp.eq.s32.totalorder %s15, 0
    %p125 = por %p123, %p124
    %p126 = scmp.ne.s32.totalorder %s112, %s113
    %p127 = scmp.eq.s32.totalorder %s16, 3
    %p128 = por %p126, %p127
    %p130 = scmp.ne.s32.totalorder %s113, %s129
    %p131 = scmp.eq.s32.totalorder %s16, 0
    %p132 = por %p130, %p131
    %p133 = scmp.le.s32.totalorder 1, %s10
    %p134 = scmp.lt.s32.totalorder %s10, 5
    %p135 = pnand %p133, %p134
    %p136 = pneg %p135
    // Predicated region
    $region9: #{inception_forward.8} parent=5 // pred_check
      _
    $region10: #{inception_forward.8} parent=5 // pred_check_branch
      %138 = sbr.rel (%p135) target = $region12
    $region11: #{inception_forward.8} parent=5 // pred_region
      %s139 = ssub.s32 %s10, 1
      // Predicated region
      $region13: #{inception_forward.8} parent=11 // pred_check
        %p140 = pneg %p69
      $region14: #{inception_forward.8} parent=11 // pred_check_branch
        %142 = sbr.rel (%p140) target = $region16
      $region15: #{inception_forward.8} parent=11 // pred_region
        _
      $region16: #{inception_forward.8} parent=11 // pred_fallthru
        _
    $region12: #{inception_forward.8} parent=5 // pred_fallthru
      _
    %p143 = scmp.lt.s32.totalorder %s10, 4
    // Predicated region
    $region17: #{inception_forward.8} parent=5 // pred_check
      %p144 = pneg %p143
    $region18: #{inception_forward.8} parent=5 // pred_check_branch
      %146 = sbr.rel (%p144) target = $region20
    $region19: #{inception_forward.8} parent=5 // pred_region
      // Predicated region
      $region21: #{inception_forward.8} parent=19 // pred_check
        %p147 = pneg %p42
      $region22: #{inception_forward.8} parent=19 // pred_check_branch
        %149 = sbr.rel (%p147) target = $region24
      $region23: #{inception_forward.8} parent=19 // pred_region
        %p150 = scmp.lt.s32.totalorder %s17, 1
        %s151 = scalar_select %p150, %s17, 1
        %s152 = smul.addr %s151, 54
        %s153 = smul.addr %s152, 4
        %s154 = scalar_lea.vmem %s0, %s153
      $region24: #{inception_forward.8} parent=19 // pred_fallthru
        _
    $region20: #{inception_forward.8} parent=5 // pred_fallthru
      _
    %p155 = scmp.le.s32.totalorder 1, %s10
    %p156 = scmp.lt.s32.totalorder %s10, 5
    %p157 = pnand %p155, %p156
    %p158 = pneg %p157
    // Predicated region
    $region25: #{inception_forward.8} parent=5 // pred_check
      _
    $region26: #{inception_forward.8} parent=5 // pred_check_branch
      %160 = sbr.rel (%p157) target = $region28
    $region27: #{inception_forward.8} parent=5 // pred_region
      %s161 = ssub.s32 %s10, 1
      %p162 = scmp.lt.s32.totalorder %s19, 1
      %s163 = scalar_select %p162, %s19, 1
      %s164 = smul.addr %s163, 54
      %s165 = smul.addr %s164, 4
      %s166 = scalar_lea.vmem %s0, %s165
      %p167 = pneg %p48
      %p168 = pneg %p45
      %p169 = pneg %p69
      %p170 = pneg %p66
      %p171 = pneg %p97
      %p172 = pneg %p94
      %s173 = smul.u32 8, %s20
      %p174 = scmp.lt.s32.totalorder %s19, 1
      %s175 = scalar_select %p174, %s19, 1
      %p176 = scmp.lt.s32.totalorder %s173, 15
      %s177 = scalar_select %p176, %s173, 15
      %s178 = smul.addr %s177, 2
      %s179 = smul.addr %s175, 32
      %s180 = sadd.s32 %s178, %s179
      %s181 = smul.addr %s180, 4
      %s182 = scalar_lea.vmem %s2, %s181
      %p183 = pneg %p125
      %p184 = pneg %p122
      %p185 = scmp.lt.s32.totalorder %s19, 1
      %s186 = scalar_select %p185, %s19, 1
      %p187 = scmp.lt.s32.totalorder %s20, 1
      %s188 = scalar_select %p187, %s20, 1
      %s189 = smul.addr %s186, 2
      %s190 = sadd.s32 %s188, %s189
      %s191 = smul.addr %s190, 2
      %s192 = scalar_lea.vmem %s3, %s191
      %p193 = scmp.lt.s32.totalorder %s19, 1
      %s194 = scalar_select %p193, %s19, 1
      %s195 = smul.addr %s194, 54
      %s196 = smul.addr %s195, 4
      %s197 = scalar_lea.vmem %s0, %s196
      %s198 = smul.u32 8, %s20
      %p199 = scmp.lt.s32.totalorder %s19, 1
      %s200 = scalar_select %p199, %s19, 1
      %p201 = scmp.lt.s32.totalorder %s198, 15
      %s202 = scalar_select %p201, %s198, 15
      %s203 = smul.addr %s202, 2
      %s204 = smul.addr %s200, 32
      %s205 = sadd.s32 %s203, %s204
      %s206 = smul.addr %s205, 4
      %s207 = scalar_lea.vmem %s2, %s206
      %s208 = smul.u32 8, %s20
      %p209 = scmp.lt.s32.totalorder %s19, 1
      %s210 = scalar_select %p209, %s19, 1
      %p211 = scmp.lt.s32.totalorder %s20, 1
      %s212 = scalar_select %p211, %s20, 1
      %s213 = smul.addr %s210, 2
      %s214 = sadd.s32 %s212, %s213
      %s215 = smul.addr %s214, 2
      %s216 = scalar_lea.vmem %s3, %s215
      %s218 = smul.u32 %s20, 8
      %s219 = smul.u32 %s218, 3
      %s220 = smul.addr %s219, 4
      %s221 = scalar_lea.vmem %s197, %s220
      %v222 = vld [vmem:[%s221] sm:$0xf]
      %v223 = vld [vmem:[%s221 + $0x4] sm:$0xf]
      %v224 = vld [vmem:[%s221 + $0xc] sm:$0xf]
      %v225 = vld [vmem:[%s221 + $0x10] sm:$0xf]
      %v226 = vld [vmem:[%s221 + $0x18] sm:$0xf]
      %v227 = vld [vmem:[%s221 + $0x1c] sm:$0xf]
      %v228 = vld [vmem:[%s221 + $0x24] sm:$0xf]
      %v229 = vld [vmem:[%s221 + $0x28] sm:$0xf]
      %v230 = vld [vmem:[%s221 + $0x30] sm:$0xf]
      %v231 = vld [vmem:[%s221 + $0x34] sm:$0xf]
      %v232 = vld [vmem:[%s221 + $0x3c] sm:$0xf]
      %v233 = vld [vmem:[%s221 + $0x40] sm:$0xf]
      %v234 = vld [vmem:[%s221 + $0x48] sm:$0xf]
      %v235 = vld [vmem:[%s221 + $0x4c] sm:$0xf]
      %v236 = vld [vmem:[%s221 + $0x54] sm:$0xf]
      %v237 = vld [vmem:[%s221 + $0x58] sm:$0xf]
      %v238 = vld [vmem:[%s221 + $0x8] sm:$0x1]
      %v239 = vld [vmem:[%s221 + $0x14] sm:$0x1]
      %v240 = vld [vmem:[%s221 + $0x20] sm:$0x1]
      %v241 = vld [vmem:[%s221 + $0x2c] sm:$0x1]
      %v242 = vld [vmem:[%s221 + $0x38] sm:$0x1]
      %v243 = vld [vmem:[%s221 + $0x44] sm:$0x1]
      %v244 = vld [vmem:[%s221 + $0x50] sm:$0x1]
      %v245 = vld [vmem:[%s221 + $0x5c] sm:$0x1]
      %v246 = vld [vmem:[%s221] sm:$0xe]
      %v247 = vld [vmem:[%s221 + $0xc] sm:$0xe]
      %v248 = vld [vmem:[%s221 + $0x18] sm:$0xe]
      %v249 = vld [vmem:[%s221 + $0x24] sm:$0xe]
      %v250 = vld [vmem:[%s221 + $0x30] sm:$0xe]
      %v251 = vld [vmem:[%s221 + $0x3c] sm:$0xe]
      %v252 = vld [vmem:[%s221 + $0x48] sm:$0xe]
      %v253 = vld [vmem:[%s221 + $0x54] sm:$0xe]
      %v270 = vunpack.c.l.b16 %v222
      %v271 = vunpack.c.l.b16 %v223
      %v272 = vunpack.c.l.b16 %v224
      %v273 = vunpack.c.l.b16 %v225
      %v274 = vunpack.c.l.b16 %v226
      %v275 = vunpack.c.l.b16 %v227
      %v276 = vunpack.c.l.b16 %v228
      %v277 = vunpack.c.l.b16 %v229
      %v278 = vunpack.c.l.b16 %v230
      %v279 = vunpack.c.l.b16 %v231
      %v280 = vunpack.c.l.b16 %v232
      %v281 = vunpack.c.l.b16 %v233
      %v282 = vunpack.c.l.b16 %v234
      %v283 = vunpack.c.l.b16 %v235
      %v284 = vunpack.c.l.b16 %v236
      %v285 = vunpack.c.l.b16 %v237
      %v286 = vpack.c.b16 %v271, %v270
      %v287 = vpack.c.b16 %v273, %v272
      %v288 = vpack.c.b16 %v275, %v274
      %v289 = vpack.c.b16 %v277, %v276
      %v290 = vpack.c.b16 %v279, %v278
      %v291 = vpack.c.b16 %v281, %v280
      %v292 = vpack.c.b16 %v283, %v282
      %v293 = vpack.c.b16 %v285, %v284
      %v302 = vunpack.c.l.b16 %v238
      %v303 = vunpack.c.l.b16 %v239
      %v304 = vunpack.c.l.b16 %v240
      %v305 = vunpack.c.l.b16 %v241
      %v306 = vunpack.c.l.b16 %v242
      %v307 = vunpack.c.l.b16 %v243
      %v308 = vunpack.c.l.b16 %v244
      %v309 = vunpack.c.l.b16 %v245
      %v310 = vpack.c.b16 %v302, %v302
      %v311 = vpack.c.b16 %v303, %v303
      %v312 = vpack.c.b16 %v304, %v304
      %v313 = vpack.c.b16 %v305, %v305
      %v314 = vpack.c.b16 %v306, %v306
      %v315 = vpack.c.b16 %v307, %v307
      %v316 = vpack.c.b16 %v308, %v308
      %v317 = vpack.c.b16 %v309, %v309
      %vm318 = vsmask.f32 7424
      %v320 = vshrl.u32 %v286, 16
      %v322 = vshll.u32 %v286, 16
      %v324 = vrot.slane %v322, 1
      %v325 = vor.u32 %v320, %v324
      %v327 = vshll.u32 %v310, 16
      %v329 = vrot.slane %v327, 1
      %v330 = vsel %vm318, %v325, %v329
      %v332 = vshrl.u32 %v287, 16
      %v334 = vshll.u32 %v287, 16
      %v336 = vrot.slane %v334, 1
      %v337 = vor.u32 %v332, %v336
      %v339 = vshll.u32 %v311, 16
      %v341 = vrot.slane %v339, 1
      %v342 = vsel %vm318, %v337, %v341
      %v344 = vshrl.u32 %v288, 16
      %v346 = vshll.u32 %v288, 16
      %v348 = vrot.slane %v346, 1
      %v349 = vor.u32 %v344, %v348
      %v351 = vshll.u32 %v312, 16
      %v353 = vrot.slane %v351, 1
      %v354 = vsel %vm318, %v349, %v353
      %v356 = vshrl.u32 %v289, 16
      %v358 = vshll.u32 %v289, 16
      %v360 = vrot.slane %v358, 1
      %v361 = vor.u32 %v356, %v360
      %v363 = vshll.u32 %v313, 16
      %v365 = vrot.slane %v363, 1
      %v366 = vsel %vm318, %v361, %v365
      %v368 = vshrl.u32 %v290, 16
      %v370 = vshll.u32 %v290, 16
      %v372 = vrot.slane %v370, 1
      %v373 = vor.u32 %v368, %v372
      %v375 = vshll.u32 %v314, 16
      %v377 = vrot.slane %v375, 1
      %v378 = vsel %vm318, %v373, %v377
      %v380 = vshrl.u32 %v291, 16
      %v382 = vshll.u32 %v291, 16
      %v384 = vrot.slane %v382, 1
      %v385 = vor.u32 %v380, %v384
      %v387 = vshll.u32 %v315, 16
      %v389 = vrot.slane %v387, 1
      %v390 = vsel %vm318, %v385, %v389
      %v392 = vshrl.u32 %v292, 16
      %v394 = vshll.u32 %v292, 16
      %v396 = vrot.slane %v394, 1
      %v397 = vor.u32 %v392, %v396
      %v399 = vshll.u32 %v316, 16
      %v401 = vrot.slane %v399, 1
      %v402 = vsel %vm318, %v397, %v401
      %v404 = vshrl.u32 %v293, 16
      %v406 = vshll.u32 %v293, 16
      %v408 = vrot.slane %v406, 1
      %v409 = vor.u32 %v404, %v408
      %v411 = vshll.u32 %v317, 16
      %v413 = vrot.slane %v411, 1
      %v414 = vsel %vm318, %v409, %v413
      %415 = vrot.lane.b32.xlu0 %v330, 4
      %v416 = vpop.permute.xlu0 %415
      %417 = vrot.lane.b32.xlu0 %v342, 4
      %v418 = vpop.permute.xlu0 %417
      %419 = vrot.lane.b32.xlu0 %v354, 4
      %v420 = vpop.permute.xlu0 %419
      %421 = vrot.lane.b32.xlu0 %v366, 4
      %v422 = vpop.permute.xlu0 %421
      %423 = vrot.lane.b32.xlu0 %v378, 4
      %v424 = vpop.permute.xlu0 %423
      %425 = vrot.lane.b32.xlu0 %v390, 4
      %v426 = vpop.permute.xlu0 %425
      %427 = vrot.lane.b32.xlu0 %v402, 4
      %v428 = vpop.permute.xlu0 %427
      %429 = vrot.lane.b32.xlu0 %v414, 4
      %v430 = vpop.permute.xlu0 %429
      %v439 = vunpack.c.l.b16 %v246
      %v440 = vunpack.c.l.b16 %v247
      %v441 = vunpack.c.l.b16 %v248
      %v442 = vunpack.c.l.b16 %v249
      %v443 = vunpack.c.l.b16 %v250
      %v444 = vunpack.c.l.b16 %v251
      %v445 = vunpack.c.l.b16 %v252
      %v446 = vunpack.c.l.b16 %v253
      %v447 = vpack.c.b16 %v271, %v439
      %v448 = vpack.c.b16 %v273, %v440
      %v449 = vpack.c.b16 %v275, %v441
      %v450 = vpack.c.b16 %v277, %v442
      %v451 = vpack.c.b16 %v279, %v443
      %v452 = vpack.c.b16 %v281, %v444
      %v453 = vpack.c.b16 %v283, %v445
      %v454 = vpack.c.b16 %v285, %v446
      %vm455 = vcmask 1046528
      %v456 = vrot.slane %v447, 1
      %v457 = vrot.slane %v310, 1
      %v458 = vsel %vm455, %v456, %v457
      %v459 = vrot.slane %v448, 1
      %v460 = vrot.slane %v311, 1
      %v461 = vsel %vm455, %v459, %v460
      %v462 = vrot.slane %v449, 1
      %v463 = vrot.slane %v312, 1
      %v464 = vsel %vm455, %v462, %v463
      %v465 = vrot.slane %v450, 1
      %v466 = vrot.slane %v313, 1
      %v467 = vsel %vm455, %v465, %v466
      %v468 = vrot.slane %v451, 1
      %v469 = vrot.slane %v314, 1
      %v470 = vsel %vm455, %v468, %v469
      %v471 = vrot.slane %v452, 1
      %v472 = vrot.slane %v315, 1
      %v473 = vsel %vm455, %v471, %v472
      %v474 = vrot.slane %v453, 1
      %v475 = vrot.slane %v316, 1
      %v476 = vsel %vm455, %v474, %v475
      %v477 = vrot.slane %v454, 1
      %v478 = vrot.slane %v317, 1
      %v479 = vsel %vm455, %v477, %v478
      %480 = vrot.lane.b32.xlu0 %v458, 8
      %v481 = vpop.permute.xlu0 %480
      %482 = vrot.lane.b32.xlu0 %v461, 8
      %v483 = vpop.permute.xlu0 %482
      %484 = vrot.lane.b32.xlu0 %v464, 8
      %v485 = vpop.permute.xlu0 %484
      %486 = vrot.lane.b32.xlu0 %v467, 8
      %v487 = vpop.permute.xlu0 %486
      %488 = vrot.lane.b32.xlu0 %v470, 8
      %v489 = vpop.permute.xlu0 %488
      %490 = vrot.lane.b32.xlu0 %v473, 8
      %v491 = vpop.permute.xlu0 %490
      %492 = vrot.lane.b32.xlu0 %v476, 8
      %v493 = vpop.permute.xlu0 %492
      %494 = vrot.lane.b32.xlu0 %v479, 8
      %v495 = vpop.permute.xlu0 %494
      %vm496 = vcmask 31744
      %v498 = vsel %vm496, %v286, %v416
      %v500 = vsel %vm496, %v287, %v418
      %v502 = vsel %vm496, %v288, %v420
      %v504 = vsel %vm496, %v289, %v422
      %v506 = vsel %vm496, %v290, %v424
      %v508 = vsel %vm496, %v291, %v426
      %v510 = vsel %vm496, %v292, %v428
      %v512 = vsel %vm496, %v293, %v430
      %vm513 = vcmask 64512
      %v515 = vsel %vm513, %v498, %v481
      %v517 = vsel %vm513, %v500, %v483
      %v519 = vsel %vm513, %v502, %v485
      %v521 = vsel %vm513, %v504, %v487
      %v523 = vsel %vm513, %v506, %v489
      %v525 = vsel %vm513, %v508, %v491
      %v527 = vsel %vm513, %v510, %v493
      %v529 = vsel %vm513, %v512, %v495
      %v530 = vld [vmem:[%s1] sm:$0xf]
      %v531 = vld [vmem:[%s1 + $0x4] sm:$0x3]
      %s532 = sadd.s32 %s218, 1
      %s533 = smul.u32 %s532, 3
      %s534 = smul.addr %s533, 4
      %s535 = scalar_lea.vmem %s197, %s534
      %v536 = vld [vmem:[%s535] sm:$0xf]
      %v537 = vld [vmem:[%s535 + $0x4] sm:$0xf]
      %v538 = vld [vmem:[%s535 + $0xc] sm:$0xf]
      %v539 = vld [vmem:[%s535 + $0x10] sm:$0xf]
      %v540 = vld [vmem:[%s535 + $0x18] sm:$0xf]
      %v541 = vld [vmem:[%s535 + $0x1c] sm:$0xf]
      %v542 = vld [vmem:[%s535 + $0x24] sm:$0xf]
      %v543 = vld [vmem:[%s535 + $0x28] sm:$0xf]
      %v544 = vld [vmem:[%s535 + $0x30] sm:$0xf]
      %v545 = vld [vmem:[%s535 + $0x34] sm:$0xf]
      %v546 = vld [vmem:[%s535 + $0x3c] sm:$0xf]
      %v547 = vld [vmem:[%s535 + $0x40] sm:$0xf]
      %v548 = vld [vmem:[%s535 + $0x48] sm:$0xf]
      %v549 = vld [vmem:[%s535 + $0x4c] sm:$0xf]
      %v550 = vld [vmem:[%s535 + $0x54] sm:$0xf]
      %v551 = vld [vmem:[%s535 + $0x58] sm:$0xf]
      %v552 = vld [vmem:[%s535 + $0x8] sm:$0x1]
      %v553 = vld [vmem:[%s535 + $0x14] sm:$0x1]
      %v554 = vld [vmem:[%s535 + $0x20] sm:$0x1]
      %v555 = vld [vmem:[%s535 + $0x2c] sm:$0x1]
      %v556 = vld [vmem:[%s535 + $0x38] sm:$0x1]
      %v557 = vld [vmem:[%s535 + $0x44] sm:$0x1]
      %v558 = vld [vmem:[%s535 + $0x50] sm:$0x1]
      %v559 = vld [vmem:[%s535 + $0x5c] sm:$0x1]
      %v560 = vld [vmem:[%s535] sm:$0xe]
      %v561 = vld [vmem:[%s535 + $0xc] sm:$0xe]
      %v562 = vld [vmem:[%s535 + $0x18] sm:$0xe]
      %v563 = vld [vmem:[%s535 + $0x24] sm:$0xe]
      %v564 = vld [vmem:[%s535 + $0x30] sm:$0xe]
      %v565 = vld [vmem:[%s535 + $0x3c] sm:$0xe]
      %v566 = vld [vmem:[%s535 + $0x48] sm:$0xe]
      %v567 = vld [vmem:[%s535 + $0x54] sm:$0xe]
      %v584 = vunpack.c.l.b16 %v536
      %v585 = vunpack.c.l.b16 %v537
      %v586 = vunpack.c.l.b16 %v538
      %v587 = vunpack.c.l.b16 %v539
      %v588 = vunpack.c.l.b16 %v540
      %v589 = vunpack.c.l.b16 %v541
      %v590 = vunpack.c.l.b16 %v542
      %v591 = vunpack.c.l.b16 %v543
      %v592 = vunpack.c.l.b16 %v544
      %v593 = vunpack.c.l.b16 %v545
      %v594 = vunpack.c.l.b16 %v546
      %v595 = vunpack.c.l.b16 %v547
      %v596 = vunpack.c.l.b16 %v548
      %v597 = vunpack.c.l.b16 %v549
      %v598 = vunpack.c.l.b16 %v550
      %v599 = vunpack.c.l.b16 %v551
      %v600 = vpack.c.b16 %v585, %v584
      %v601 = vpack.c.b16 %v587, %v586
      %v602 = vpack.c.b16 %v589, %v588
      %v603 = vpack.c.b16 %v591, %v590
      %v604 = vpack.c.b16 %v593, %v592
      %v605 = vpack.c.b16 %v595, %v594
      %v606 = vpack.c.b16 %v597, %v596
      %v607 = vpack.c.b16 %v599, %v598
      %v616 = vunpack.c.l.b16 %v552
      %v617 = vunpack.c.l.b16 %v553
      %v618 = vunpack.c.l.b16 %v554
      %v619 = vunpack.c.l.b16 %v555
      %v620 = vunpack.c.l.b16 %v556
      %v621 = vunpack.c.l.b16 %v557
      %v622 = vunpack.c.l.b16 %v558
      %v623 = vunpack.c.l.b16 %v559
      %v624 = vpack.c.b16 %v616, %v616
      %v625 = vpack.c.b16 %v617, %v617
      %v626 = vpack.c.b16 %v618, %v618
      %v627 = vpack.c.b16 %v619, %v619
      %v628 = vpack.c.b16 %v620, %v620
      %v629 = vpack.c.b16 %v621, %v621
      %v630 = vpack.c.b16 %v622, %v622
      %v631 = vpack.c.b16 %v623, %v623
      %v633 = vshrl.u32 %v600, 16
      %v635 = vshll.u32 %v600, 16
      %v637 = vrot.slane %v635, 1
      %v638 = vor.u32 %v633, %v637
      %v640 = vshll.u32 %v624, 16
      %v642 = vrot.slane %v640, 1
      %v643 = vsel %vm318, %v638, %v642
      %v645 = vshrl.u32 %v601, 16
      %v647 = vshll.u32 %v601, 16
      %v649 = vrot.slane %v647, 1
      %v650 = vor.u32 %v645, %v649
      %v652 = vshll.u32 %v625, 16
      %v654 = vrot.slane %v652, 1
      %v655 = vsel %vm318, %v650, %v654
      %v657 = vshrl.u32 %v602, 16
      %v659 = vshll.u32 %v602, 16
      %v661 = vrot.slane %v659, 1
      %v662 = vor.u32 %v657, %v661
      %v664 = vshll.u32 %v626, 16
      %v666 = vrot.slane %v664, 1
      %v667 = vsel %vm318, %v662, %v666
      %v669 = vshrl.u32 %v603, 16
      %v671 = vshll.u32 %v603, 16
      %v673 = vrot.slane %v671, 1
      %v674 = vor.u32 %v669, %v673
      %v676 = vshll.u32 %v627, 16
      %v678 = vrot.slane %v676, 1
      %v679 = vsel %vm318, %v674, %v678
      %v681 = vshrl.u32 %v604, 16
      %v683 = vshll.u32 %v604, 16
      %v685 = vrot.slane %v683, 1
      %v686 = vor.u32 %v681, %v685
      %v688 = vshll.u32 %v628, 16
      %v690 = vrot.slane %v688, 1
      %v691 = vsel %vm318, %v686, %v690
      %v693 = vshrl.u32 %v605, 16
      %v695 = vshll.u32 %v605, 16
      %v697 = vrot.slane %v695, 1
      %v698 = vor.u32 %v693, %v697
      %v700 = vshll.u32 %v629, 16
      %v702 = vrot.slane %v700, 1
      %v703 = vsel %vm318, %v698, %v702
      %v705 = vshrl.u32 %v606, 16
      %v707 = vshll.u32 %v606, 16
      %v709 = vrot.slane %v707, 1
      %v710 = vor.u32 %v705, %v709
      %v712 = vshll.u32 %v630, 16
      %v714 = vrot.slane %v712, 1
      %v715 = vsel %vm318, %v710, %v714
      %v717 = vshrl.u32 %v607, 16
      %v719 = vshll.u32 %v607, 16
      %v721 = vrot.slane %v719, 1
      %v722 = vor.u32 %v717, %v721
      %v724 = vshll.u32 %v631, 16
      %v726 = vrot.slane %v724, 1
      %v727 = vsel %vm318, %v722, %v726
      %728 = vrot.lane.b32.xlu0 %v643, 4
      %v729 = vpop.permute.xlu0 %728
      %730 = vrot.lane.b32.xlu0 %v655, 4
      %v731 = vpop.permute.xlu0 %730
      %732 = vrot.lane.b32.xlu0 %v667, 4
      %v733 = vpop.permute.xlu0 %732
      %734 = vrot.lane.b32.xlu0 %v679, 4
      %v735 = vpop.permute.xlu0 %734
      %736 = vrot.lane.b32.xlu0 %v691, 4
      %v737 = vpop.permute.xlu0 %736
      %738 = vrot.lane.b32.xlu0 %v703, 4
      %v739 = vpop.permute.xlu0 %738
      %740 = vrot.lane.b32.xlu0 %v715, 4
      %v741 = vpop.permute.xlu0 %740
      %742 = vrot.lane.b32.xlu0 %v727, 4
      %v743 = vpop.permute.xlu0 %742
      %v752 = vunpack.c.l.b16 %v560
      %v753 = vunpack.c.l.b16 %v561
      %v754 = vunpack.c.l.b16 %v562
      %v755 = vunpack.c.l.b16 %v563
      %v756 = vunpack.c.l.b16 %v564
      %v757 = vunpack.c.l.b16 %v565
      %v758 = vunpack.c.l.b16 %v566
      %v759 = vunpack.c.l.b16 %v567
      %v760 = vpack.c.b16 %v585, %v752
      %v761 = vpack.c.b16 %v587, %v753
      %v762 = vpack.c.b16 %v589, %v754
      %v763 = vpack.c.b16 %v591, %v755
      %v764 = vpack.c.b16 %v593, %v756
      %v765 = vpack.c.b16 %v595, %v757
      %v766 = vpack.c.b16 %v597, %v758
      %v767 = vpack.c.b16 %v599, %v759
      %v768 = vrot.slane %v760, 1
      %v769 = vrot.slane %v624, 1
      %v770 = vsel %vm455, %v768, %v769
      %v771 = vrot.slane %v761, 1
      %v772 = vrot.slane %v625, 1
      %v773 = vsel %vm455, %v771, %v772
      %v774 = vrot.slane %v762, 1
      %v775 = vrot.slane %v626, 1
      %v776 = vsel %vm455, %v774, %v775
      %v777 = vrot.slane %v763, 1
      %v778 = vrot.slane %v627, 1
      %v779 = vsel %vm455, %v777, %v778
      %v780 = vrot.slane %v764, 1
      %v781 = vrot.slane %v628, 1
      %v782 = vsel %vm455, %v780, %v781
      %v783 = vrot.slane %v765, 1
      %v784 = vrot.slane %v629, 1
      %v785 = vsel %vm455, %v783, %v784
      %v786 = vrot.slane %v766, 1
      %v787 = vrot.slane %v630, 1
      %v788 = vsel %vm455, %v786, %v787
      %v789 = vrot.slane %v767, 1
      %v790 = vrot.slane %v631, 1
      %v791 = vsel %vm455, %v789, %v790
      %792 = vrot.lane.b32.xlu0 %v770, 8
      %v793 = vpop.permute.xlu0 %792
      %794 = vrot.lane.b32.xlu0 %v773, 8
      %v795 = vpop.permute.xlu0 %794
      %796 = vrot.lane.b32.xlu0 %v776, 8
      %v797 = vpop.permute.xlu0 %796
      %798 = vrot.lane.b32.xlu0 %v779, 8
      %v799 = vpop.permute.xlu0 %798
      %800 = vrot.lane.b32.xlu0 %v782, 8
      %v801 = vpop.permute.xlu0 %800
      %802 = vrot.lane.b32.xlu0 %v785, 8
      %v803 = vpop.permute.xlu0 %802
      %804 = vrot.lane.b32.xlu0 %v788, 8
      %v805 = vpop.permute.xlu0 %804
      %806 = vrot.lane.b32.xlu0 %v791, 8
      %v807 = vpop.permute.xlu0 %806
      %v809 = vsel %vm496, %v600, %v729
      %v811 = vsel %vm496, %v601, %v731
      %v813 = vsel %vm496, %v602, %v733
      %v815 = vsel %vm496, %v603, %v735
      %v817 = vsel %vm496, %v604, %v737
      %v819 = vsel %vm496, %v605, %v739
      %v821 = vsel %vm496, %v606, %v741
      %v823 = vsel %vm496, %v607, %v743
      %v825 = vsel %vm513, %v809, %v793
      %v827 = vsel %vm513, %v811, %v795
      %v829 = vsel %vm513, %v813, %v797
      %v831 = vsel %vm513, %v815, %v799
      %v833 = vsel %vm513, %v817, %v801
      %v835 = vsel %vm513, %v819, %v803
      %v837 = vsel %vm513, %v821, %v805
      %v839 = vsel %vm513, %v823, %v807
      %s840 = scalar_lea.vmem %s1, 8
      %v841 = vld [vmem:[%s840] sm:$0xf]
      %v842 = vld [vmem:[%s840 + $0x4] sm:$0x3]
      %v845 = vunpack.c.l.b16 %v841
      %v846 = vunpack.c.l.b16 %v842
      %v847 = vpack.c.b16 %v846, %v845
      %vm848 = vcmask 97280
      %v849 = vsel %vm848, %v825, 0
      %v851 = vsel %vm848, %v827, 0
      %v853 = vsel %vm848, %v829, 0
      %v855 = vsel %vm848, %v831, 0
      %v857 = vsel %vm848, %v833, 0
      %v859 = vsel %vm848, %v835, 0
      %v861 = vsel %vm848, %v837, 0
      %v863 = vsel %vm848, %v839, 0
      %vm865 = vcmask 1045504
      %v867 = vsel %vm865, %v847, 0
      %869 = vmatprep.subr.bf16.mxu0 0
      %870 = vmatpush1.bf16.msra.mxu0 %v867
      %871 = vmatprep.subr.bf16.mxu0 0
      %872 = vmatpush1.bf16.msra.mxu0 0
      %873 = vmatprep.subr.bf16.mxu0 0
      %874 = vmatpush1.bf16.msra.mxu0 0
      %875 = vmatprep.subr.bf16.mxu0 0
      %876 = vmatpush1.bf16.msra.mxu0 0
      %877 = vmatprep.subr.bf16.mxu0 0
      %878 = vmatpush1.bf16.msra.mxu0 0
      %879 = vmatprep.subr.bf16.mxu0 0
      %880 = vmatpush1.bf16.msra.mxu0 0
      %881 = vmatprep.subr.bf16.mxu0 0
      %882 = vmatpush1.bf16.msra.mxu0 0
      %883 = vmatprep.subr.bf16.mxu0 0
      %884 = vmatpush1.bf16.msra.mxu0 0
      %885 = vmatprep.subr.bf16.mxu0 0
      %886 = vmatpush1.bf16.msra.mxu0 0
      %887 = vmatprep.subr.bf16.mxu0 0
      %888 = vmatpush1.bf16.msra.mxu0 0
      %889 = vmatprep.subr.bf16.mxu0 0
      %890 = vmatpush1.bf16.msra.mxu0 0
      %891 = vmatprep.subr.bf16.mxu0 0
      %892 = vmatpush1.bf16.msra.mxu0 0
      %893 = vmatprep.subr.bf16.mxu0 0
      %894 = vmatpush1.bf16.msra.mxu0 0
      %895 = vmatprep.subr.bf16.mxu0 0
      %896 = vmatpush1.bf16.msra.mxu0 0
      %897 = vmatprep.subr.bf16.mxu0 0
      %898 = vmatpush1.bf16.msra.mxu0 0
      %899 = vmatprep.subr.bf16.mxu0 0
      %900 = vmatpush1.bf16.msra.mxu0 0
      %901 = vmatprep.mubr.bf16.mxu0 0
      %902 = vmatmul.mubr.bf16.gmra.mrb[0].mxu0 %v849
      %v903 = vpop.f32.mrb[0].mxu0
      %v904 = vadd.f32 0.0, %v903
      %v905 = vpop.f32.mrb[0].mxu0
      %v906 = vpop.f32.mrb[0].mxu0
      %v907 = vadd.f32 0.0, %v906
      %v908 = vpop.f32.mrb[0].mxu0
      %909 = vmatprep.mubr.bf16.mxu0 0
      %910 = vmatmul.mubr.bf16.gmra.mrb[0].mxu0 %v851
      %v911 = vpop.f32.mrb[0].mxu0
      %v912 = vadd.f32 0.0, %v911
      %v913 = vpop.f32.mrb[0].mxu0
      %v914 = vpop.f32.mrb[0].mxu0
      %v915 = vadd.f32 0.0, %v914
      %v916 = vpop.f32.mrb[0].mxu0
      %917 = vmatprep.mubr.bf16.mxu0 0
      %918 = vmatmul.mubr.bf16.gmra.mrb[0].mxu0 %v853
      %v919 = vpop.f32.mrb[0].mxu0
      %v920 = vadd.f32 0.0, %v919
      %v921 = vpop.f32.mrb[0].mxu0
      %v922 = vpop.f32.mrb[0].mxu0
      %v923 = vadd.f32 0.0, %v922
      %v924 = vpop.f32.mrb[0].mxu0
      %925 = vmatprep.mubr.bf16.mxu0 0
      %926 = vmatmul.mubr.bf16.gmra.mrb[0].mxu0 %v855
      %v927 = vpop.f32.mrb[0].mxu0
      %v928 = vadd.f32 0.0, %v927
      %v929 = vpop.f32.mrb[0].mxu0
      %v930 = vpop.f32.mrb[0].mxu0
      %v931 = vadd.f32 0.0, %v930
      %v932 = vpop.f32.mrb[0].mxu0
      %933 = vmatprep.mubr.bf16.mxu0 0
      %934 = vmatmul.mubr.bf16.gmra.mrb[0].mxu0 %v857
      %v935 = vpop.f32.mrb[0].mxu0
      %v936 = vadd.f32 0.0, %v935
      %v937 = vpop.f32.mrb[0].mxu0
      %v938 = vpop.f32.mrb[0].mxu0
      %v939 = vadd.f32 0.0, %v938
      %v940 = vpop.f32.mrb[0].mxu0
      %941 = vmatprep.mubr.bf16.mxu0 0
      %942 = vmatmul.mubr.bf16.gmra.mrb[0].mxu0 %v859
      %v943 = vpop.f32.mrb[0].mxu0
      %v944 = vadd.f32 0.0, %v943
      %v945 = vpop.f32.mrb[0].mxu0
      %v946 = vpop.f32.mrb[0].mxu0
      %v947 = vadd.f32 0.0, %v946
      %v948 = vpop.f32.mrb[0].mxu0
      %949 = vmatprep.mubr.bf16.mxu0 0
      %950 = vmatmul.mubr.bf16.gmra.mrb[0].mxu0 %v861
      %v951 = vpop.f32.mrb[0].mxu0
      %v952 = vadd.f32 0.0, %v951
      %v953 = vpop.f32.mrb[0].mxu0
      %v954 = vpop.f32.mrb[0].mxu0
      %v955 = vadd.f32 0.0, %v954
      %v956 = vpop.f32.mrb[0].mxu0
      %957 = vmatprep.mubr.bf16.mxu0 0
      %958 = vmatmul.mubr.bf16.gmra.mrb[0].mxu0 %v863
      %v959 = vpop.f32.mrb[0].mxu0
      %v960 = vadd.f32 0.0, %v959
      %v961 = vpop.f32.mrb[0].mxu0
      %v962 = vpop.f32.mrb[0].mxu0
      %v963 = vadd.f32 0.0, %v962
      %v964 = vpop.f32.mrb[0].mxu0
      %965 = vdwg.mxu0
      %v968 = vunpack.c.l.b16 %v530
      %v969 = vunpack.c.l.b16 %v531
      %v970 = vpack.c.b16 %v969, %v968
      %v971 = vsel %vm848, %v515, 0
      %v973 = vsel %vm848, %v517, 0
      %v975 = vsel %vm848, %v519, 0
      %v977 = vsel %vm848, %v521, 0
      %v979 = vsel %vm848, %v523, 0
      %v981 = vsel %vm848, %v525, 0
      %v983 = vsel %vm848, %v527, 0
      %v985 = vsel %vm848, %v529, 0
      %v988 = vsel %vm865, %v970, 0
      %990 = vmatprep.subr.bf16.mxu0 0
      %991 = vmatpush1.bf16.msra.mxu0 %v988
      %992 = vmatprep.subr.bf16.mxu0 0
      %993 = vmatpush1.bf16.msra.mxu0 0
      %994 = vmatprep.subr.bf16.mxu0 0
      %995 = vmatpush1.bf16.msra.mxu0 0
      %996 = vmatprep.subr.bf16.mxu0 0
      %997 = vmatpush1.bf16.msra.mxu0 0
      %998 = vmatprep.subr.bf16.mxu0 0
      %999 = vmatpush1.bf16.msra.mxu0 0
      %1000 = vmatprep.subr.bf16.mxu0 0
      %1001 = vmatpush1.bf16.msra.mxu0 0
      %1002 = vmatprep.subr.bf16.mxu0 0
      %1003 = vmatpush1.bf16.msra.mxu0 0
      %1004 = vmatprep.subr.bf16.mxu0 0
      %1005 = vmatpush1.bf16.msra.mxu0 0
      %1006 = vmatprep.subr.bf16.mxu0 0
      %1007 = vmatpush1.bf16.msra.mxu0 0
      %1008 = vmatprep.subr.bf16.mxu0 0
      %1009 = vmatpush1.bf16.msra.mxu0 0
      %1010 = vmatprep.subr.bf16.mxu0 0
      %1011 = vmatpush1.bf16.msra.mxu0 0
      %1012 = vmatprep.subr.bf16.mxu0 0
      %1013 = vmatpush1.bf16.msra.mxu0 0
      %1014 = vmatprep.subr.bf16.mxu0 0
      %1015 = vmatpush1.bf16.msra.mxu0 0
      %1016 = vmatprep.subr.bf16.mxu0 0
      %1017 = vmatpush1.bf16.msra.mxu0 0
      %1018 = vmatprep.subr.bf16.mxu0 0
      %1019 = vmatpush1.bf16.msra.mxu0 0
      %1020 = vmatprep.subr.bf16.mxu0 0
      %1021 = vmatpush1.bf16.msra.mxu0 0
      %1022 = vmatprep.mubr.bf16.mxu0 0
      %1023 = vmatmul.mubr.bf16.gmra.mrb[0].mxu0 %v971
      %v1024 = vpop.f32.mrb[0].mxu0
      %v1025 = vadd.f32 %v904, %v1024
      %v1026 = vpop.f32.mrb[0].mxu0
      %v1027 = vpop.f32.mrb[0].mxu0
      %v1028 = vadd.f32 %v907, %v1027
      %v1029 = vpop.f32.mrb[0].mxu0
      %1030 = vmatprep.mubr.bf16.mxu0 0
      %1031 = vmatmul.mubr.bf16.gmra.mrb[0].mxu0 %v973
      %v1032 = vpop.f32.mrb[0].mxu0
      %v1033 = vadd.f32 %v912, %v1032
      %v1034 = vpop.f32.mrb[0].mxu0
      %v1035 = vpop.f32.mrb[0].mxu0
      %v1036 = vadd.f32 %v915, %v1035
      %v1037 = vpop.f32.mrb[0].mxu0
      %1038 = vmatprep.mubr.bf16.mxu0 0
      %1039 = vmatmul.mubr.bf16.gmra.mrb[0].mxu0 %v975
      %v1040 = vpop.f32.mrb[0].mxu0
      %v1041 = vadd.f32 %v920, %v1040
      %v1042 = vpop.f32.mrb[0].mxu0
      %v1043 = vpop.f32.mrb[0].mxu0
      %v1044 = vadd.f32 %v923, %v1043
      %v1045 = vpop.f32.mrb[0].mxu0
      %1046 = vmatprep.mubr.bf16.mxu0 0
      %1047 = vmatmul.mubr.bf16.gmra.mrb[0].mxu0 %v977
      %v1048 = vpop.f32.mrb[0].mxu0
      %v1049 = vadd.f32 %v928, %v1048
      %v1050 = vpop.f32.mrb[0].mxu0
      %v1051 = vpop.f32.mrb[0].mxu0
      %v1052 = vadd.f32 %v931, %v1051
      %v1053 = vpop.f32.mrb[0].mxu0
      %1054 = vmatprep.mubr.bf16.mxu0 0
      %1055 = vmatmul.mubr.bf16.gmra.mrb[0].mxu0 %v979
      %v1056 = vpop.f32.mrb[0].mxu0
      %v1057 = vadd.f32 %v936, %v1056
      %v1058 = vpop.f32.mrb[0].mxu0
      %v1059 = vpop.f32.mrb[0].mxu0
      %v1060 = vadd.f32 %v939, %v1059
      %v1061 = vpop.f32.mrb[0].mxu0
      %1062 = vmatprep.mubr.bf16.mxu0 0
      %1063 = vmatmul.mubr.bf16.gmra.mrb[0].mxu0 %v981
      %v1064 = vpop.f32.mrb[0].mxu0
      %v1065 = vadd.f32 %v944, %v1064
      %v1066 = vpop.f32.mrb[0].mxu0
      %v1067 = vpop.f32.mrb[0].mxu0
      %v1068 = vadd.f32 %v947, %v1067
      %v1069 = vpop.f32.mrb[0].mxu0
      %1070 = vmatprep.mubr.bf16.mxu0 0
      %1071 = vmatmul.mubr.bf16.gmra.mrb[0].mxu0 %v983
      %v1072 = vpop.f32.mrb[0].mxu0
      %v1073 = vadd.f32 %v952, %v1072
      %v1074 = vpop.f32.mrb[0].mxu0
      %v1075 = vpop.f32.mrb[0].mxu0
      %v1076 = vadd.f32 %v955, %v1075
      %v1077 = vpop.f32.mrb[0].mxu0
      %1078 = vmatprep.mubr.bf16.mxu0 0
      %1079 = vmatmul.mubr.bf16.gmra.mrb[0].mxu0 %v985
      %v1080 = vpop.f32.mrb[0].mxu0
      %v1081 = vadd.f32 %v960, %v1080
      %v1082 = vpop.f32.mrb[0].mxu0
      %v1083 = vpop.f32.mrb[0].mxu0
      %v1084 = vadd.f32 %v963, %v1083
      %v1085 = vpop.f32.mrb[0].mxu0
      %1086 = vdwg.mxu0
      %s1087 = sadd.s32 %s218, 2
      %s1088 = smul.u32 %s1087, 3
      %s1089 = smul.addr %s1088, 4
      %s1090 = scalar_lea.vmem %s197, %s1089
      %v1091 = vld [vmem:[%s1090] sm:$0xf]
      %v1092 = vld [vmem:[%s1090 + $0x4] sm:$0xf]
      %v1093 = vld [vmem:[%s1090 + $0xc] sm:$0xf]
      %v1094 = vld [vmem:[%s1090 + $0x10] sm:$0xf]
      %v1095 = vld [vmem:[%s1090 + $0x18] sm:$0xf]
      %v1096 = vld [vmem:[%s1090 + $0x1c] sm:$0xf]
      %v1097 = vld [vmem:[%s1090 + $0x24] sm:$0xf]
      %v1098 = vld [vmem:[%s1090 + $0x28] sm:$0xf]
      %v1099 = vld [vmem:[%s1090 + $0x30] sm:$0xf]
      %v1100 = vld [vmem:[%s1090 + $0x34] sm:$0xf]
      %v1101 = vld [vmem:[%s1090 + $0x3c] sm:$0xf]
      %v1102 = vld [vmem:[%s1090 + $0x40] sm:$0xf]
      %v1103 = vld [vmem:[%s1090 + $0x48] sm:$0xf]
      %v1104 = vld [vmem:[%s1090 + $0x4c] sm:$0xf]
      %v1105 = vld [vmem:[%s1090 + $0x54] sm:$0xf]
      %v1106 = vld [vmem:[%s1090 + $0x58] sm:$0xf]
      %v1107 = vld [vmem:[%s1090 + $0x8] sm:$0x1]
      %v1108 = vld [vmem:[%s1090 + $0x14] sm:$0x1]
      %v1109 = vld [vmem:[%s1090 + $0x20] sm:$0x1]
      %v1110 = vld [vmem:[%s1090 + $0x2c] sm:$0x1]
      %v1111 = vld [vmem:[%s1090 + $0x38] sm:$0x1]
      %v1112 = vld [vmem:[%s1090 + $0x44] sm:$0x1]
      %v1113 = vld [vmem:[%s1090 + $0x50] sm:$0x1]
      %v1114 = vld [vmem:[%s1090 + $0x5c] sm:$0x1]
      %v1115 = vld [vmem:[%s1090] sm:$0xe]
      %v1116 = vld [vmem:[%s1090 + $0xc] sm:$0xe]
      %v1117 = vld [vmem:[%s1090 + $0x18] sm:$0xe]
      %v1118 = vld [vmem:[%s1090 + $0x24] sm:$0xe]
      %v1119 = vld [vmem:[%s1090 + $0x30] sm:$0xe]
      %v1120 = vld [vmem:[%s1090 + $0x3c] sm:$0xe]
      %v1121 = vld [vmem:[%s1090 + $0x48] sm:$0xe]
      %v1122 = vld [vmem:[%s1090 + $0x54] sm:$0xe]
      %v1139 = vunpack.c.l.b16 %v1091
      %v1140 = vunpack.c.l.b16 %v1092
      %v1141 = vunpack.c.l.b16 %v1093
      %v1142 = vunpack.c.l.b16 %v1094
      %v1143 = vunpack.c.l.b16 %v1095
      %v1144 = vunpack.c.l.b16 %v1096
      %v1145 = vunpack.c.l.b16 %v1097
      %v1146 = vunpack.c.l.b16 %v1098
      %v1147 = vunpack.c.l.b16 %v1099
      %v1148 = vunpack.c.l.b16 %v1100
      %v1149 = vunpack.c.l.b16 %v1101
      %v1150 = vunpack.c.l.b16 %v1102
      %v1151 = vunpack.c.l.b16 %v1103
      %v1152 = vunpack.c.l.b16 %v1104
      %v1153 = vunpack.c.l.b16 %v1105
      %v1154 = vunpack.c.l.b16 %v1106
      %v1155 = vpack.c.b16 %v1140, %v1139
      %v1156 = vpack.c.b16 %v1142, %v1141
      %v1157 = vpack.c.b16 %v1144, %v1143
      %v1158 = vpack.c.b16 %v1146, %v1145
      %v1159 = vpack.c.b16 %v1148, %v1147
      %v1160 = vpack.c.b16 %v1150, %v1149
      %v1161 = vpack.c.b16 %v1152, %v1151
      %v1162 = vpack.c.b16 %v1154, %v1153
      %v1171 = vunpack.c.l.b16 %v1107
      %v1172 = vunpack.c.l.b16 %v1108
      %v1173 = vunpack.c.l.b16 %v1109
      %v1174 = vunpack.c.l.b16 %v1110
      %v1175 = vunpack.c.l.b16 %v1111
      %v1176 = vunpack.c.l.b16 %v1112
      %v1177 = vunpack.c.l.b16 %v1113
      %v1178 = vunpack.c.l.b16 %v1114
      %v1179 = vpack.c.b16 %v1171, %v1171
      %v1180 = vpack.c.b16 %v1172, %v1172
      %v1181 = vpack.c.b16 %v1173, %v1173
      %v1182 = vpack.c.b16 %v1174, %v1174
      %v1183 = vpack.c.b16 %v1175, %v1175
      %v1184 = vpack.c.b16 %v1176, %v1176
      %v1185 = vpack.c.b16 %v1177, %v1177
      %v1186 = vpack.c.b16 %v1178, %v1178
      %v1188 = vshrl.u32 %v1155, 16
      %v1190 = vshll.u32 %v1155, 16
      %v1192 = vrot.slane %v1190, 1
      %v1193 = vor.u32 %v1188, %v1192
      %v1195 = vshll.u32 %v1179, 16
      %v1197 = vrot.slane %v1195, 1
      %v1198 = vsel %vm318, %v1193, %v1197
      %v1200 = vshrl.u32 %v1156, 16
      %v1202 = vshll.u32 %v1156, 16
      %v1204 = vrot.slane %v1202, 1
      %v1205 = vor.u32 %v1200, %v1204
      %v1207 = vshll.u32 %v1180, 16
      %v1209 = vrot.slane %v1207, 1
      %v1210 = vsel %vm318, %v1205, %v1209
      %v1212 = vshrl.u32 %v1157, 16
      %v1214 = vshll.u32 %v1157, 16
      %v1216 = vrot.slane %v1214, 1
      %v1217 = vor.u32 %v1212, %v1216
      %v1219 = vshll.u32 %v1181, 16
      %v1221 = vrot.slane %v1219, 1
      %v1222 = vsel %vm318, %v1217, %v1221
      %v1224 = vshrl.u32 %v1158, 16
      %v1226 = vshll.u32 %v1158, 16
      %v1228 = vrot.slane %v1226, 1
      %v1229 = vor.u32 %v1224, %v1228
      %v1231 = vshll.u32 %v1182, 16
      %v1233 = vrot.slane %v1231, 1
      %v1234 = vsel %vm318, %v1229, %v1233
      %v1236 = vshrl.u32 %v1159, 16
      %v1238 = vshll.u32 %v1159, 16
      %v1240 = vrot.slane %v1238, 1
      %v1241 = vor.u32 %v1236, %v1240
      %v1243 = vshll.u32 %v1183, 16
      %v1245 = vrot.slane %v1243, 1
      %v1246 = vsel %vm318, %v1241, %v1245
      %v1248 = vshrl.u32 %v1160, 16
      %v1250 = vshll.u32 %v1160, 16
      %v1252 = vrot.slane %v1250, 1
      %v1253 = vor.u32 %v1248, %v1252
      %v1255 = vshll.u32 %v1184, 16
      %v1257 = vrot.slane %v1255, 1
      %v1258 = vsel %vm318, %v1253, %v1257
      %v1260 = vshrl.u32 %v1161, 16
      %v1262 = vshll.u32 %v1161, 16
      %v1264 = vrot.slane %v1262, 1
      %v1265 = vor.u32 %v1260, %v1264
      %v1267 = vshll.u32 %v1185, 16
      %v1269 = vrot.slane %v1267, 1
      %v1270 = vsel %vm318, %v1265, %v1269
      %v1272 = vshrl.u32 %v1162, 16
      %v1274 = vshll.u32 %v1162, 16
      %v1276 = vrot.slane %v1274, 1
      %v1277 = vor.u32 %v1272, %v1276
      %v1279 = vshll.u32 %v1186, 16
      %v1281 = vrot.slane %v1279, 1
      %v1282 = vsel %vm318, %v1277, %v1281
      %1283 = vrot.lane.b32.xlu0 %v1198, 4
      %v1284 = vpop.permute.xlu0 %1283
      %1285 = vrot.lane.b32.xlu0 %v1210, 4
      %v1286 = vpop.permute.xlu0 %1285
      %1287 = vrot.lane.b32.xlu0 %v1222, 4
      %v1288 = vpop.permute.xlu0 %1287
      %1289 = vrot.lane.b32.xlu0 %v1234, 4
      %v1290 = vpop.permute.xlu0 %1289
      %1291 = vrot.lane.b32.xlu0 %v1246, 4
      %v1292 = vpop.permute.xlu0 %1291
      %1293 = vrot.lane.b32.xlu0 %v1258, 4
      %v1294 = vpop.permute.xlu0 %1293
      %1295 = vrot.lane.b32.xlu0 %v1270, 4
      %v1296 = vpop.permute.xlu0 %1295
      %1297 = vrot.lane.b32.xlu0 %v1282, 4
      %v1298 = vpop.permute.xlu0 %1297
      %v1307 = vunpack.c.l.b16 %v1115
      %v1308 = vunpack.c.l.b16 %v1116
      %v1309 = vunpack.c.l.b16 %v1117
      %v1310 = vunpack.c.l.b16 %v1118
      %v1311 = vunpack.c.l.b16 %v1119
      %v1312 = vunpack.c.l.b16 %v1120
      %v1313 = vunpack.c.l.b16 %v1121
      %v1314 = vunpack.c.l.b16 %v1122
      %v1315 = vpack.c.b16 %v1140, %v1307
      %v1316 = vpack.c.b16 %v1142, %v1308
      %v1317 = vpack.c.b16 %v1144, %v1309
      %v1318 = vpack.c.b16 %v1146, %v1310
      %v1319 = vpack.c.b16 %v1148, %v1311
      %v1320 = vpack.c.b16 %v1150, %v1312
      %v1321 = vpack.c.b16 %v1152, %v1313
      %v1322 = vpack.c.b16 %v1154, %v1314
      %v1323 = vrot.slane %v1315, 1
      %v1324 = vrot.slane %v1179, 1
      %v1325 = vsel %vm455, %v1323, %v1324
      %v1326 = vrot.slane %v1316, 1
      %v1327 = vrot.slane %v1180, 1
      %v1328 = vsel %vm455, %v1326, %v1327
      %v1329 = vrot.slane %v1317, 1
      %v1330 = vrot.slane %v1181, 1
      %v1331 = vsel %vm455, %v1329, %v1330
      %v1332 = vrot.slane %v1318, 1
      %v1333 = vrot.slane %v1182, 1
      %v1334 = vsel %vm455, %v1332, %v1333
      %v1335 = vrot.slane %v1319, 1
      %v1336 = vrot.slane %v1183, 1
      %v1337 = vsel %vm455, %v1335, %v1336
      %v1338 = vrot.slane %v1320, 1
      %v1339 = vrot.slane %v1184, 1
      %v1340 = vsel %vm455, %v1338, %v1339
      %v1341 = vrot.slane %v1321, 1
      %v1342 = vrot.slane %v1185, 1
      %v1343 = vsel %vm455, %v1341, %v1342
      %v1344 = vrot.slane %v1322, 1
      %v1345 = vrot.slane %v1186, 1
      %v1346 = vsel %vm455, %v1344, %v1345
      %1347 = vrot.lane.b32.xlu0 %v1325, 8
      %v1348 = vpop.permute.xlu0 %1347
      %1349 = vrot.lane.b32.xlu0 %v1328, 8
      %v1350 = vpop.permute.xlu0 %1349
      %1351 = vrot.lane.b32.xlu0 %v1331, 8
      %v1352 = vpop.permute.xlu0 %1351
      %1353 = vrot.lane.b32.xlu0 %v1334, 8
      %v1354 = vpop.permute.xlu0 %1353
      %1355 = vrot.lane.b32.xlu0 %v1337, 8
      %v1356 = vpop.permute.xlu0 %1355
      %1357 = vrot.lane.b32.xlu0 %v1340, 8
      %v1358 = vpop.permute.xlu0 %1357
      %1359 = vrot.lane.b32.xlu0 %v1343, 8
      %v1360 = vpop.permute.xlu0 %1359
      %1361 = vrot.lane.b32.xlu0 %v1346, 8
      %v1362 = vpop.permute.xlu0 %1361
      %v1364 = vsel %vm496, %v1155, %v1284
      %v1366 = vsel %vm496, %v1156, %v1286
      %v1368 = vsel %vm496, %v1157, %v1288
      %v1370 = vsel %vm496, %v1158, %v1290
      %v1372 = vsel %vm496, %v1159, %v1292
      %v1374 = vsel %vm496, %v1160, %v1294
      %v1376 = vsel %vm496, %v1161, %v1296
      %v1378 = vsel %vm496, %v1162, %v1298
      %v1380 = vsel %vm513, %v1364, %v1348
      %v1382 = vsel %vm513, %v1366, %v1350
      %v1384 = vsel %vm513, %v1368, %v1352
      %v1386 = vsel %vm513, %v1370, %v1354
      %v1388 = vsel %vm513, %v1372, %v1356
      %v1390 = vsel %vm513, %v1374, %v1358
      %v1392 = vsel %vm513, %v1376, %v1360
      %v1394 = vsel %vm513, %v1378, %v1362
      %s1395 = scalar_lea.vmem %s1, 16
      %v1396 = vld [vmem:[%s1395] sm:$0xf]
      %v1397 = vld [vmem:[%s1395 + $0x4] sm:$0x3]
      %v1400 = vunpack.c.l.b16 %v1396
      %v1401 = vunpack.c.l.b16 %v1397
      %v1402 = vpack.c.b16 %v1401, %v1400
      %v1403 = vsel %vm848, %v1380, 0
      %v1405 = vsel %vm848, %v1382, 0
      %v1407 = vsel %vm848, %v1384, 0
      %v1409 = vsel %vm848, %v1386, 0
      %v1411 = vsel %vm848, %v1388, 0
      %v1413 = vsel %vm848, %v1390, 0
      %v1415 = vsel %vm848, %v1392, 0
      %v1417 = vsel %vm848, %v1394, 0
      %v1420 = vsel %vm865, %v1402, 0
      %1422 = vmatprep.subr.bf16.mxu0 0
      %1423 = vmatpush1.bf16.msra.mxu0 %v1420
      %1424 = vmatprep.subr.bf16.mxu0 0
      %1425 = vmatpush1.bf16.msra.mxu0 0
      %1426 = vmatprep.subr.bf16.mxu0 0
      %1427 = vmatpush1.bf16.msra.mxu0 0
      %1428 = vmatprep.subr.bf16.mxu0 0
      %1429 = vmatpush1.bf16.msra.mxu0 0
      %1430 = vmatprep.subr.bf16.mxu0 0
      %1431 = vmatpush1.bf16.msra.mxu0 0
      %1432 = vmatprep.subr.bf16.mxu0 0
      %1433 = vmatpush1.bf16.msra.mxu0 0
      %1434 = vmatprep.subr.bf16.mxu0 0
      %1435 = vmatpush1.bf16.msra.mxu0 0
      %1436 = vmatprep.subr.bf16.mxu0 0
      %1437 = vmatpush1.bf16.msra.mxu0 0
      %1438 = vmatprep.subr.bf16.mxu0 0
      %1439 = vmatpush1.bf16.msra.mxu0 0
      %1440 = vmatprep.subr.bf16.mxu0 0
      %1441 = vmatpush1.bf16.msra.mxu0 0
      %1442 = vmatprep.subr.bf16.mxu0 0
      %1443 = vmatpush1.bf16.msra.mxu0 0
      %1444 = vmatprep.subr.bf16.mxu0 0
      %1445 = vmatpush1.bf16.msra.mxu0 0
      %1446 = vmatprep.subr.bf16.mxu0 0
      %1447 = vmatpush1.bf16.msra.mxu0 0
      %1448 = vmatprep.subr.bf16.mxu0 0
      %1449 = vmatpush1.bf16.msra.mxu0 0
      %1450 = vmatprep.subr.bf16.mxu0 0
      %1451 = vmatpush1.bf16.msra.mxu0 0
      %1452 = vmatprep.subr.bf16.mxu0 0
      %1453 = vmatpush1.bf16.msra.mxu0 0
      %1454 = vmatprep.mubr.bf16.mxu0 0
      %1455 = vmatmul.mubr.bf16.gmra.mrb[0].mxu0 %v1403
      %v1456 = vpop.f32.mrb[0].mxu0
      %v1457 = vadd.f32 0.0, %v1456
      %v1458 = vpop.f32.mrb[0].mxu0
      %v1459 = vpop.f32.mrb[0].mxu0
      %v1460 = vadd.f32 0.0, %v1459
      %v1461 = vpop.f32.mrb[0].mxu0
      %1462 = vmatprep.mubr.bf16.mxu0 0
      %1463 = vmatmul.mubr.bf16.gmra.mrb[0].mxu0 %v1405
      %v1464 = vpop.f32.mrb[0].mxu0
      %v1465 = vadd.f32 0.0, %v1464
      %v1466 = vpop.f32.mrb[0].mxu0
      %v1467 = vpop.f32.mrb[0].mxu0
      %v1468 = vadd.f32 0.0, %v1467
      %v1469 = vpop.f32.mrb[0].mxu0
      %1470 = vmatprep.mubr.bf16.mxu0 0
      %1471 = vmatmul.mubr.bf16.gmra.mrb[0].mxu0 %v1407
      %v1472 = vpop.f32.mrb[0].mxu0
      %v1473 = vadd.f32 0.0, %v1472
      %v1474 = vpop.f32.mrb[0].mxu0
      %v1475 = vpop.f32.mrb[0].mxu0
      %v1476 = vadd.f32 0.0, %v1475
      %v1477 = vpop.f32.mrb[0].mxu0
      %1478 = vmatprep.mubr.bf16.mxu0 0
      %1479 = vmatmul.mubr.bf16.gmra.mrb[0].mxu0 %v1409
      %v1480 = vpop.f32.mrb[0].mxu0
      %v1481 = vadd.f32 0.0, %v1480
      %v1482 = vpop.f32.mrb[0].mxu0
      %v1483 = vpop.f32.mrb[0].mxu0
      %v1484 = vadd.f32 0.0, %v1483
      %v1485 = vpop.f32.mrb[0].mxu0
      %1486 = vmatprep.mubr.bf16.mxu0 0
      %1487 = vmatmul.mubr.bf16.gmra.mrb[0].mxu0 %v1411
      %v1488 = vpop.f32.mrb[0].mxu0
      %v1489 = vadd.f32 0.0, %v1488
      %v1490 = vpop.f32.mrb[0].mxu0
      %v1491 = vpop.f32.mrb[0].mxu0
      %v1492 = vadd.f32 0.0, %v1491
      %v1493 = vpop.f32.mrb[0].mxu0
      %1494 = vmatprep.mubr.bf16.mxu0 0
      %1495 = vmatmul.mubr.bf16.gmra.mrb[0].mxu0 %v1413
      %v1496 = vpop.f32.mrb[0].mxu0
      %v1497 = vadd.f32 0.0, %v1496
      %v1498 = vpop.f32.mrb[0].mxu0
      %v1499 = vpop.f32.mrb[0].mxu0
      %v1500 = vadd.f32 0.0, %v1499
      %v1501 = vpop.f32.mrb[0].mxu0
      %1502 = vmatprep.mubr.bf16.mxu0 0
      %1503 = vmatmul.mubr.bf16.gmra.mrb[0].mxu0 %v1415
      %v1504 = vpop.f32.mrb[0].mxu0
      %v1505 = vadd.f32 0.0, %v1504
      %v1506 = vpop.f32.mrb[0].mxu0
      %v1507 = vpop.f32.mrb[0].mxu0
      %v1508 = vadd.f32 0.0, %v1507
      %v1509 = vpop.f32.mrb[0].mxu0
      %1510 = vmatprep.mubr.bf16.mxu0 0
      %1511 = vmatmul.mubr.bf16.gmra.mrb[0].mxu0 %v1417
      %v1512 = vpop.f32.mrb[0].mxu0
      %v1513 = vadd.f32 0.0, %v1512
      %v1514 = vpop.f32.mrb[0].mxu0
      %v1515 = vpop.f32.mrb[0].mxu0
      %v1516 = vadd.f32 0.0, %v1515
      %v1517 = vpop.f32.mrb[0].mxu0
      %1518 = vdwg.mxu0
      %v1519 = vadd.f32 %v1025, %v1457
      %v1520 = vadd.f32 %v1028, %v1460
      %v1521 = vadd.f32 %v1033, %v1465
      %v1522 = vadd.f32 %v1036, %v1468
      %v1523 = vadd.f32 %v1041, %v1473
      %v1524 = vadd.f32 %v1044, %v1476
      %v1525 = vadd.f32 %v1049, %v1481
      %v1526 = vadd.f32 %v1052, %v1484
      %v1527 = vadd.f32 %v1057, %v1489
      %v1528 = vadd.f32 %v1060, %v1492
      %v1529 = vadd.f32 %v1065, %v1497
      %v1530 = vadd.f32 %v1068, %v1500
      %v1531 = vadd.f32 %v1073, %v1505
      %v1532 = vadd.f32 %v1076, %v1508
      %v1533 = vadd.f32 %v1081, %v1513
      %v1534 = vadd.f32 %v1084, %v1516
      %v1535 = vpack.c.bf16 %v1520, %v1519
      %v1536 = vpack.c.bf16 %v1522, %v1521
      %v1537 = vpack.c.bf16 %v1524, %v1523
      %v1538 = vpack.c.bf16 %v1526, %v1525
      %v1539 = vpack.c.bf16 %v1528, %v1527
      %v1540 = vpack.c.bf16 %v1530, %v1529
      %v1541 = vpack.c.bf16 %v1532, %v1531
      %v1542 = vpack.c.bf16 %v1534, %v1533
      %v1551 = vunpack.c.l.b16 %v1535
      %v1552 = vunpack.c.h.b16 %v1535
      %v1553 = vunpack.c.l.b16 %v1536
      %v1554 = vunpack.c.h.b16 %v1536
      %v1555 = vunpack.c.l.b16 %v1537
      %v1556 = vunpack.c.h.b16 %v1537
      %v1557 = vunpack.c.l.b16 %v1538
      %v1558 = vunpack.c.h.b16 %v1538
      %v1559 = vunpack.c.l.b16 %v1539
      %v1560 = vunpack.c.h.b16 %v1539
      %v1561 = vunpack.c.l.b16 %v1540
      %v1562 = vunpack.c.h.b16 %v1540
      %v1563 = vunpack.c.l.b16 %v1541
      %v1564 = vunpack.c.h.b16 %v1541
      %v1565 = vunpack.c.l.b16 %v1542
      %v1566 = vunpack.c.h.b16 %v1542
      %v1567 = vpack.c.b16 %v1551, %v1551
      %v1568 = vpack.c.b16 %v1552, %v1552
      %v1569 = vpack.c.b16 %v1553, %v1553
      %v1570 = vpack.c.b16 %v1554, %v1554
      %v1571 = vpack.c.b16 %v1555, %v1555
      %v1572 = vpack.c.b16 %v1556, %v1556
      %v1573 = vpack.c.b16 %v1557, %v1557
      %v1574 = vpack.c.b16 %v1558, %v1558
      %v1575 = vpack.c.b16 %v1559, %v1559
      %v1576 = vpack.c.b16 %v1560, %v1560
      %v1577 = vpack.c.b16 %v1561, %v1561
      %v1578 = vpack.c.b16 %v1562, %v1562
      %v1579 = vpack.c.b16 %v1563, %v1563
      %v1580 = vpack.c.b16 %v1564, %v1564
      %v1581 = vpack.c.b16 %v1565, %v1565
      %v1582 = vpack.c.b16 %v1566, %v1566
      %vm1599 = vcmask 60416
      %1600 = vst.msk [vmem:[%s207] sm:$0xf] %vm1599, %v1567
      %1601 = vst.msk [vmem:[%s207 + $0x4] sm:$0xf] %vm1599, %v1568
      %1602 = vst.msk [vmem:[%s207 + $0x8] sm:$0xf] %vm1599, %v1569
      %1603 = vst.msk [vmem:[%s207 + $0xc] sm:$0xf] %vm1599, %v1570
      %1604 = vst.msk [vmem:[%s207 + $0x10] sm:$0xf] %vm1599, %v1571
      %1605 = vst.msk [vmem:[%s207 + $0x14] sm:$0xf] %vm1599, %v1572
      %1606 = vst.msk [vmem:[%s207 + $0x18] sm:$0xf] %vm1599, %v1573
      %1607 = vst.msk [vmem:[%s207 + $0x1c] sm:$0xf] %vm1599, %v1574
      %1608 = vst.msk [vmem:[%s207 + $0x20] sm:$0xf] %vm1599, %v1575
      %1609 = vst.msk [vmem:[%s207 + $0x24] sm:$0xf] %vm1599, %v1576
      %1610 = vst.msk [vmem:[%s207 + $0x28] sm:$0xf] %vm1599, %v1577
      %1611 = vst.msk [vmem:[%s207 + $0x2c] sm:$0xf] %vm1599, %v1578
      %1612 = vst.msk [vmem:[%s207 + $0x30] sm:$0xf] %vm1599, %v1579
      %1613 = vst.msk [vmem:[%s207 + $0x34] sm:$0xf] %vm1599, %v1580
      %1614 = vst.msk [vmem:[%s207 + $0x38] sm:$0xf] %vm1599, %v1581
      %1615 = vst.msk [vmem:[%s207 + $0x3c] sm:$0xf] %vm1599, %v1582
      %v1616 = vsel %vm513, %v1519, 0.0
      %v1617 = vsel %vm513, %v1520, 0.0
      %v1618 = vadd.f32 %v1616, %v1617
      %v1619 = vsel %vm513, %v1521, 0.0
      %v1620 = vadd.f32 %v1618, %v1619
      %v1621 = vsel %vm513, %v1522, 0.0
      %v1622 = vadd.f32 %v1620, %v1621
      %v1623 = vsel %vm513, %v1523, 0.0
      %v1624 = vadd.f32 %v1622, %v1623
      %v1625 = vsel %vm513, %v1524, 0.0
      %v1626 = vadd.f32 %v1624, %v1625
      %v1627 = vsel %vm513, %v1525, 0.0
      %v1628 = vadd.f32 %v1626, %v1627
      %v1629 = vsel %vm513, %v1526, 0.0
      %v1630 = vadd.f32 %v1628, %v1629
      %v1631 = vsel %vm513, %v1527, 0.0
      %v1632 = vadd.f32 %v1630, %v1631
      %v1633 = vsel %vm513, %v1528, 0.0
      %v1634 = vadd.f32 %v1632, %v1633
      %v1635 = vsel %vm513, %v1529, 0.0
      %v1636 = vadd.f32 %v1634, %v1635
      %v1637 = vsel %vm513, %v1530, 0.0
      %v1638 = vadd.f32 %v1636, %v1637
      %v1639 = vsel %vm513, %v1531, 0.0
      %v1640 = vadd.f32 %v1638, %v1639
      %v1641 = vsel %vm513, %v1532, 0.0
      %v1642 = vadd.f32 %v1640, %v1641
      %v1643 = vsel %vm513, %v1533, 0.0
      %v1644 = vadd.f32 %v1642, %v1643
      %v1645 = vsel %vm513, %v1534, 0.0
      %v1646 = vadd.f32 %v1644, %v1645
      %v1647 = vrot.slane %v1646, 4
      %v1648 = vadd.f32 %v1646, %v1647
      %v1649 = vrot.slane %v1648, 2
      %v1650 = vadd.f32 %v1648, %v1649
      %v1651 = vrot.slane %v1650, 1
      %v1652 = vadd.f32 %v1650, %v1651
      %vm1653 = vcmask 57344
      %1654 = vst.msk [vmem:[%s216] sm:$0x1] %vm1653, %v1652
      %v1655 = vmul.f32 %v1519, %v1519
      %v1656 = vmul.f32 %v1520, %v1520
      %v1657 = vmul.f32 %v1521, %v1521
      %v1658 = vmul.f32 %v1522, %v1522
      %v1659 = vmul.f32 %v1523, %v1523
      %v1660 = vmul.f32 %v1524, %v1524
      %v1661 = vmul.f32 %v1525, %v1525
      %v1662 = vmul.f32 %v1526, %v1526
      %v1663 = vmul.f32 %v1527, %v1527
      %v1664 = vmul.f32 %v1528, %v1528
      %v1665 = vmul.f32 %v1529, %v1529
      %v1666 = vmul.f32 %v1530, %v1530
      %v1667 = vmul.f32 %v1531, %v1531
      %v1668 = vmul.f32 %v1532, %v1532
      %v1669 = vmul.f32 %v1533, %v1533
      %v1670 = vmul.f32 %v1534, %v1534
      %v1671 = vsel %vm513, %v1655, 0.0
      %v1672 = vsel %vm513, %v1656, 0.0
      %v1673 = vadd.f32 %v1671, %v1672
      %v1674 = vsel %vm513, %v1657, 0.0
      %v1675 = vadd.f32 %v1673, %v1674
      %v1676 = vsel %vm513, %v1658, 0.0
      %v1677 = vadd.f32 %v1675, %v1676
      %v1678 = vsel %vm513, %v1659, 0.0
      %v1679 = vadd.f32 %v1677, %v1678
      %v1680 = vsel %vm513, %v1660, 0.0
      %v1681 = vadd.f32 %v1679, %v1680
      %v1682 = vsel %vm513, %v1661, 0.0
      %v1683 = vadd.f32 %v1681, %v1682
      %v1684 = vsel %vm513, %v1662, 0.0
      %v1685 = vadd.f32 %v1683, %v1684
      %v1686 = vsel %vm513, %v1663, 0.0
      %v1687 = vadd.f32 %v1685, %v1686
      %v1688 = vsel %vm513, %v1664, 0.0
      %v1689 = vadd.f32 %v1687, %v1688
      %v1690 = vsel %vm513, %v1665, 0.0
      %v1691 = vadd.f32 %v1689, %v1690
      %v1692 = vsel %vm513, %v1666, 0.0
      %v1693 = vadd.f32 %v1691, %v1692
      %v1694 = vsel %vm513, %v1667, 0.0
      %v1695 = vadd.f32 %v1693, %v1694
      %v1696 = vsel %vm513, %v1668, 0.0
      %v1697 = vadd.f32 %v1695, %v1696
      %v1698 = vsel %vm513, %v1669, 0.0
      %v1699 = vadd.f32 %v1697, %v1698
      %v1700 = vsel %vm513, %v1670, 0.0
      %v1701 = vadd.f32 %v1699, %v1700
      %v1702 = vrot.slane %v1701, 4
      %v1703 = vadd.f32 %v1701, %v1702
      %v1704 = vrot.slane %v1703, 2
      %v1705 = vadd.f32 %v1703, %v1704
      %v1706 = vrot.slane %v1705, 1
      %v1707 = vadd.f32 %v1705, %v1706
      %1708 = vst.msk [vmem:[%s216 + $0x1] sm:$0x1] %vm1653, %v1707
      %s1709 = smul.u32 8, %s20
      %p1710 = scmp.lt.s32.totalorder %s19, 1
      %s1711 = scalar_select %p1710, %s19, 1
      %p1712 = scmp.lt.s32.totalorder %s1709, 15
      %s1713 = scalar_select %p1712, %s1709, 15
      %s1714 = smul.addr %s1713, 2
      %s1715 = smul.addr %s1711, 32
      %s1716 = sadd.s32 %s1714, %s1715
      %s1717 = smul.addr %s1716, 4
      %s1718 = scalar_lea.vmem %s2, %s1717
      %p1719 = scmp.lt.s32.totalorder %s19, 1
      %s1720 = scalar_select %p1719, %s19, 1
      %p1721 = scmp.lt.s32.totalorder %s20, 1
      %s1722 = scalar_select %p1721, %s20, 1
      %s1723 = smul.addr %s1720, 2
      %s1724 = sadd.s32 %s1722, %s1723
      %s1725 = smul.addr %s1724, 2
      %s1726 = scalar_lea.vmem %s3, %s1725
      // Predicated region
      $region29: #{inception_forward.8} parent=27 // pred_check
        %p1727 = pneg %p94
      $region30: #{inception_forward.8} parent=27 // pred_check_branch
        %1729 = sbr.rel (%p1727) target = $region32
      $region31: #{inception_forward.8} parent=27 // pred_region
        %s1730 = smul.u32 8, %s20
      $region32: #{inception_forward.8} parent=27 // pred_fallthru
        _
      // Predicated region
      $region33: #{inception_forward.8} parent=27 // pred_check
        %p1731 = pneg %p122
      $region34: #{inception_forward.8} parent=27 // pred_check_branch
        %1733 = sbr.rel (%p1731) target = $region36
      $region35: #{inception_forward.8} parent=27 // pred_region
        _
      $region36: #{inception_forward.8} parent=27 // pred_fallthru
        _
    $region28: #{inception_forward.8} parent=5 // pred_fallthru
      _
    %p1734 = scmp.le.s32.totalorder 2, %s10
    // Predicated region
    $region37: #{inception_forward.8} parent=5 // pred_check
      %p1735 = pneg %p1734
    $region38: #{inception_forward.8} parent=5 // pred_check_branch
      %1737 = sbr.rel (%p1735) target = $region40
    $region39: #{inception_forward.8} parent=5 // pred_region
      %s1738 = ssub.s32 %s10, 2
      // Predicated region
      $region41: #{inception_forward.8} parent=39 // pred_check
        %p1739 = pneg %p100
      $region42: #{inception_forward.8} parent=39 // pred_check_branch
        %1741 = sbr.rel (%p1739) target = $region44
      $region43: #{inception_forward.8} parent=39 // pred_region
        %s1742 = smul.u32 8, %s22
        %p1743 = scmp.lt.s32.totalorder %s21, 1
        %s1744 = scalar_select %p1743, %s21, 1
        %p1745 = scmp.lt.s32.totalorder %s1742, 15
        %s1746 = scalar_select %p1745, %s1742, 15
        %s1747 = smul.addr %s1746, 2
        %s1748 = smul.addr %s1744, 32
        %s1749 = sadd.s32 %s1747, %s1748
        %s1750 = smul.addr %s1749, 4
        %s1751 = scalar_lea.vmem %s2, %s1750
      $region44: #{inception_forward.8} parent=39 // pred_fallthru
        _
      // Predicated region
      $region45: #{inception_forward.8} parent=39 // pred_check
        %p1752 = pneg %p128
      $region46: #{inception_forward.8} parent=39 // pred_check_branch
        %1754 = sbr.rel (%p1752) target = $region48
      $region47: #{inception_forward.8} parent=39 // pred_region
        %p1755 = scmp.lt.s32.totalorder %s21, 1
        %s1756 = scalar_select %p1755, %s21, 1
        %p1757 = scmp.lt.s32.totalorder %s22, 1
        %s1758 = scalar_select %p1757, %s22, 1
        %s1759 = smul.addr %s1756, 2
        %s1760 = sadd.s32 %s1758, %s1759
        %s1761 = smul.addr %s1760, 2
        %s1762 = scalar_lea.vmem %s3, %s1761
      $region48: #{inception_forward.8} parent=39 // pred_fallthru
        _
    $region40: #{inception_forward.8} parent=5 // pred_fallthru
      _
  $region6: #{inception_forward.8} parent=0 // loop_footer
    %s14 = sadd.s32 1, %s10
  $region7: #{inception_forward.8} parent=0 // loop_footer_branch
    %9 = sbr.rel target = $region3
  $region8: #{inception_forward.8} parent=0 // loop_exit
    _

// kernel: inception_forward.10
$region0: #{inception_forward.10}
  #allocation0 [shape = 'u32[]', space=smem, size = 0x4, offset = 0x4, fixed_abs, tag = 'smem constant byte address 0x4 - core index']
  #allocation1 [shape = 'u32[144,128]{1,0:T(1,128)}', space=vmem, size = 0x12000, scoped, tag = 'internal scratch']
  %s0 = inlined_call_operand.vmem [shape: bf16[2,18,18,4], index: 0, kind: input, shape index: {}]
  %s1 = inlined_call_operand.vmem [shape: bf16[4,8], index: 1, kind: input, shape index: {}]
  %s2 = inlined_call_operand.vmem [shape: bf16[2,16,16,8], index: 2, kind: output, shape index: {0}]
  %s3 = inlined_call_operand.vmem [shape: f32[2,2,2,8], index: 3, kind: output, shape index: {1}]
  %4 = xla_tuple %s2, %s3
  %s5 = sld [smem:[#allocation0]]
  $region49: #{inception_forward.10} parent=0
    _
  %s7 = ssub.s32 1, %s5
  %s8 = scalar_select 0, %s7, %s5
  loop: start=0, step=1, limit=6
  $region2: #{inception_forward.10} parent=0 // loop_pre_header
    _
  $region3: #{inception_forward.10} parent=0 // loop_header
    %s10 = sphi 0, %s14
    %p11 = scmp.ge.s32.totalorder %s10, 6
    %s17 = sphi 0, %s29
    %s18 = sphi 0, %s25
    %s19 = sphi 0, %s17
    %s20 = sphi 0, %s18
    %s21 = sphi 0, %s19
    %s22 = sphi 0, %s20
    %s32 = sphi 0, %s34
    %s35 = sphi 0, %s32
    %s36 = sphi 0, %s35
    %s52 = sphi 0, %s36
    %s56 = sphi 0, %s56
    %s58 = sphi 0, %s56
    %s59 = sphi 0, %s58
    %s73 = sphi 0, %s59
    %s81 = sphi 0, %s83
    %s84 = sphi 0, %s81
    %s85 = sphi 0, %s84
    %s101 = sphi 0, %s85
    %s109 = sphi 0, %s111
    %s112 = sphi 0, %s109
    %s113 = sphi 0, %s112
    %s129 = sphi 0, %s113
  $region4: #{inception_forward.10} parent=0 // loop_header_branch
    %13 = sbr.rel (%p11) target = $region8
  $region5: #{inception_forward.10} parent=0 // loop_body
    %s15 = ssub.s32 %s10, 1
    %s16 = ssub.s32 %s10, 2
    %s23 = sadd.s32 1, %s18
    %p24 = scmp.ge.s32.totalorder %s23, 2
    %s25 = scalar_select %p24, 0, %s23
    %s26 = sadd.s32 1, %s17
    %s27 = scalar_select %p24, %s26, %s17
    %p28 = scmp.ge.s32.totalorder %s27, 2
    %s29 = scalar_select %p28, 0, %s27
    %s30 = ssub.s32 %s17, %s29
    %p31 = scmp.eq.s32.totalorder %s30, 0
    %s33 = sadd.s32 %s32, 1
    %s34 = scalar_select %p31, %s32, %s33
    %p37 = pneg %p31
    %p38 = scmp.eq.s32.totalorder %s10, 3
    %p39 = por %p37, %p38
    %p40 = scmp.ne.s32.totalorder %s32, %s35
    %p41 = scmp.eq.s32.totalorder %s10, 0
    %p42 = por %p40, %p41
    %p43 = scmp.ne.s32.totalorder %s32, %s35
    %p44 = scmp.eq.s32.totalorder %s15, 3
    %p45 = por %p43, %p44
    %p46 = scmp.ne.s32.totalorder %s35, %s36
    %p47 = scmp.eq.s32.totalorder %s15, 0
    %p48 = por %p46, %p47
    %p49 = scmp.ne.s32.totalorder %s35, %s36
    %p50 = scmp.eq.s32.totalorder %s16, 3
    %p51 = por %p49, %p50
    %p53 = scmp.ne.s32.totalorder %s36, %s52
    %p54 = scmp.eq.s32.totalorder %s16, 0
    %p55 = por %p53, %p54
    %s57 = sadd.s32 %s56, 1
    %p60 = scmp.eq.s32.totalorder %s10, 3
    %p61 = scmp.ne.s32.totalorder %s56, %s58
    %p62 = scmp.eq.s32.totalorder %s10, 0
    %p63 = por %p61, %p62
    %p64 = scmp.ne.s32.totalorder %s56, %s58
    %p65 = scmp.eq.s32.totalorder %s15, 3
    %p66 = por %p64, %p65
    %p67 = scmp.ne.s32.totalorder %s58, %s59
    %p68 = scmp.eq.s32.totalorder %s15, 0
    %p69 = por %p67, %p68
    %p70 = scmp.ne.s32.totalorder %s58, %s59
    %p71 = scmp.eq.s32.totalorder %s16, 3
    %p72 = por %p70, %p71
    %p74 = scmp.ne.s32.totalorder %s59, %s73
    %p75 = scmp.eq.s32.totalorder %s16, 0
    %p76 = por %p74, %p75
    %s77 = ssub.s32 %s17, %s29
    %s78 = ssub.s32 %s18, %s25
    %s79 = sor.u32 %s77, %s78
    %p80 = scmp.eq.s32.totalorder %s79, 0
    %s82 = sadd.s32 %s81, 1
    %s83 = scalar_select %p80, %s81, %s82
    %p86 = pneg %p80
    %p87 = scmp.eq.s32.totalorder %s10, 3
    %p88 = por %p86, %p87
    %p89 = scmp.ne.s32.totalorder %s81, %s84
    %p90 = scmp.eq.s32.totalorder %s10, 0
    %p91 = por %p89, %p90
    %p92 = scmp.ne.s32.totalorder %s81, %s84
    %p93 = scmp.eq.s32.totalorder %s15, 3
    %p94 = por %p92, %p93
    %p95 = scmp.ne.s32.totalorder %s84, %s85
    %p96 = scmp.eq.s32.totalorder %s15, 0
    %p97 = por %p95, %p96
    %p98 = scmp.ne.s32.totalorder %s84, %s85
    %p99 = scmp.eq.s32.totalorder %s16, 3
    %p100 = por %p98, %p99
    %p102 = scmp.ne.s32.totalorder %s85, %s101
    %p103 = scmp.eq.s32.totalorder %s16, 0
    %p104 = por %p102, %p103
    %s105 = ssub.s32 %s17, %s29
    %s106 = ssub.s32 %s18, %s25
    %s107 = sor.u32 %s105, %s106
    %p108 = scmp.eq.s32.totalorder %s107, 0
    %s110 = sadd.s32 %s109, 1
    %s111 = scalar_select %p108, %s109, %s110
    %p114 = pneg %p108
    %p115 = scmp.eq.s32.totalorder %s10, 3
    %p116 = por %p114, %p115
    %p117 = scmp.ne.s32.totalorder %s109, %s112
    %p118 = scmp.eq.s32.totalorder %s10, 0
    %p119 = por %p117, %p118
    %p120 = scmp.ne.s32.totalorder %s109, %s112
    %p121 = scmp.eq.s32.totalorder %s15, 3
    %p122 = por %p120, %p121
    %p123 = scmp.ne.s32.totalorder %s112, %s113
    %p124 = scmp.eq.s32.totalorder %s15, 0
    %p125 = por %p123, %p124
    %p126 = scmp.ne.s32.totalorder %s112, %s113
    %p127 = scmp.eq.s32.totalorder %s16, 3
    %p128 = por %p126, %p127
    %p130 = scmp.ne.s32.totalorder %s113, %s129
    %p131 = scmp.eq.s32.totalorder %s16, 0
    %p132 = por %p130, %p131
    %p133 = scmp.le.s32.totalorder 1, %s10
    %p134 = scmp.lt.s32.totalorder %s10, 5
    %p135 = pnand %p133, %p134
    %p136 = pneg %p135
    // Predicated region
    $region9: #{inception_forward.10} parent=5 // pred_check
      _
    $region10: #{inception_forward.10} parent=5 // pred_check_branch
      %138 = sbr.rel (%p135) target = $region12
    $region11: #{inception_forward.10} parent=5 // pred_region
      %s139 = ssub.s32 %s10, 1
      // Predicated region
      $region13: #{inception_forward.10} parent=11 // pred_check
        %p140 = pneg %p69
      $region14: #{inception_forward.10} parent=11 // pred_check_branch
        %142 = sbr.rel (%p140) target = $region16
      $region15: #{inception_forward.10} parent=11 // pred_region
        _
      $region16: #{inception_forward.10} parent=11 // pred_fallthru
        _
    $region12: #{inception_forward.10} parent=5 // pred_fallthru
      _
    %p143 = scmp.lt.s32.totalorder %s10, 4
    // Predicated region
    $region17: #{inception_forward.10} parent=5 // pred_check
      %p144 = pneg %p143
    $region18: #{inception_forward.10} parent=5 // pred_check_branch
      %146 = sbr.rel (%p144) target = $region20
    $region19: #{inception_forward.10} parent=5 // pred_region
      // Predicated region
      $region21: #{inception_forward.10} parent=19 // pred_check
        %p147 = pneg %p42
      $region22: #{inception_forward.10} parent=19 // pred_check_branch
        %149 = sbr.rel (%p147) target = $region24
      $region23: #{inception_forward.10} parent=19 // pred_region
        %p150 = scmp.lt.s32.totalorder %s17, 1
        %s151 = scalar_select %p150, %s17, 1
        %s152 = smul.addr %s151, 54
        %s153 = smul.addr %s152, 4
        %s154 = scalar_lea.vmem %s0, %s153
      $region24: #{inception_forward.10} parent=19 // pred_fallthru
        _
    $region20: #{inception_forward.10} parent=5 // pred_fallthru
      _
    %p155 = scmp.le.s32.totalorder 1, %s10
    %p156 = scmp.lt.s32.totalorder %s10, 5
    %p157 = pnand %p155, %p156
    %p158 = pneg %p157
    // Predicated region
    $region25: #{inception_forward.10} parent=5 // pred_check
      _
    $region26: #{inception_forward.10} parent=5 // pred_check_branch
      %160 = sbr.rel (%p157) target = $region28
    $region27: #{inception_forward.10} parent=5 // pred_region
      %s161 = ssub.s32 %s10, 1
      %p162 = scmp.lt.s32.totalorder %s19, 1
      %s163 = scalar_select %p162, %s19, 1
      %s164 = smul.addr %s163, 54
      %s165 = smul.addr %s164, 4
      %s166 = scalar_lea.vmem %s0, %s165
      %p167 = pneg %p48
      %p168 = pneg %p45
      %p169 = pneg %p69
      %p170 = pneg %p66
      %p171 = pneg %p97
      %p172 = pneg %p94
      %s173 = smul.u32 8, %s20
      %p174 = scmp.lt.s32.totalorder %s19, 1
      %s175 = scalar_select %p174, %s19, 1
      %p176 = scmp.lt.s32.totalorder %s173, 15
      %s177 = scalar_select %p176, %s173, 15
      %s178 = smul.addr %s177, 2
      %s179 = smul.addr %s175, 32
      %s180 = sadd.s32 %s178, %s179
      %s181 = smul.addr %s180, 4
      %s182 = scalar_lea.vmem %s2, %s181
      %p183 = pneg %p125
      %p184 = pneg %p122
      %p185 = scmp.lt.s32.totalorder %s19, 1
      %s186 = scalar_select %p185, %s19, 1
      %p187 = scmp.lt.s32.totalorder %s20, 1
      %s188 = scalar_select %p187, %s20, 1
      %s189 = smul.addr %s186, 2
      %s190 = sadd.s32 %s188, %s189
      %s191 = smul.addr %s190, 2
      %s192 = scalar_lea.vmem %s3, %s191
      %p193 = scmp.lt.s32.totalorder %s19, 1
      %s194 = scalar_select %p193, %s19, 1
      %s195 = smul.addr %s194, 54
      %s196 = smul.addr %s195, 4
      %s197 = scalar_lea.vmem %s0, %s196
      %s198 = smul.u32 8, %s20
      %p199 = scmp.lt.s32.totalorder %s19, 1
      %s200 = scalar_select %p199, %s19, 1
      %p201 = scmp.lt.s32.totalorder %s198, 15
      %s202 = scalar_select %p201, %s198, 15
      %s203 = smul.addr %s202, 2
      %s204 = smul.addr %s200, 32
      %s205 = sadd.s32 %s203, %s204
      %s206 = smul.addr %s205, 4
      %s207 = scalar_lea.vmem %s2, %s206
      %s208 = smul.u32 8, %s20
      %p209 = scmp.lt.s32.totalorder %s19, 1
      %s210 = scalar_select %p209, %s19, 1
      %p211 = scmp.lt.s32.totalorder %s20, 1
      %s212 = scalar_select %p211, %s20, 1
      %s213 = smul.addr %s210, 2
      %s214 = sadd.s32 %s212, %s213
      %s215 = smul.addr %s214, 2
      %s216 = scalar_lea.vmem %s3, %s215
      %s218 = smul.u32 %s20, 8
      %s219 = smul.u32 %s218, 3
      %s220 = smul.addr %s219, 4
      %s221 = scalar_lea.vmem %s197, %s220
      %v222 = vld [vmem:[%s221] sm:$0xf]
      %v223 = vld [vmem:[%s221 + $0x4] sm:$0xf]
      %v224 = vld [vmem:[%s221 + $0xc] sm:$0xf]
      %v225 = vld [vmem:[%s221 + $0x10] sm:$0xf]
      %v226 = vld [vmem:[%s221 + $0x18] sm:$0xf]
      %v227 = vld [vmem:[%s221 + $0x1c] sm:$0xf]
      %v228 = vld [vmem:[%s221 + $0x24] sm:$0xf]
      %v229 = vld [vmem:[%s221 + $0x28] sm:$0xf]
      %v230 = vld [vmem:[%s221 + $0x30] sm:$0xf]
      %v231 = vld [vmem:[%s221 + $0x34] sm:$0xf]
      %v232 = vld [vmem:[%s221 + $0x3c] sm:$0xf]
      %v233 = vld [vmem:[%s221 + $0x40] sm:$0xf]
      %v234 = vld [vmem:[%s221 + $0x48] sm:$0xf]
      %v235 = vld [vmem:[%s221 + $0x4c] sm:$0xf]
      %v236 = vld [vmem:[%s221 + $0x54] sm:$0xf]
      %v237 = vld [vmem:[%s221 + $0x58] sm:$0xf]
      %v238 = vld [vmem:[%s221 + $0x8] sm:$0x1]
      %v239 = vld [vmem:[%s221 + $0x14] sm:$0x1]
      %v240 = vld [vmem:[%s221 + $0x20] sm:$0x1]
      %v241 = vld [vmem:[%s221 + $0x2c] sm:$0x1]
      %v242 = vld [vmem:[%s221 + $0x38] sm:$0x1]
      %v243 = vld [vmem:[%s221 + $0x44] sm:$0x1]
      %v244 = vld [vmem:[%s221 + $0x50] sm:$0x1]
      %v245 = vld [vmem:[%s221 + $0x5c] sm:$0x1]
      %vm246 = vsmask.f32 3328
      %vm247 = vsmask.f32 7440
      %vm248 = vmor %vm246, %vm247
      %v250 = vshrl.u32 %v222, 16
      %v252 = vrot.slane %v250, 4
      %v253 = vshll.u32 %v222, 16
      %v255 = vrot.slane %v253, 5
      %v256 = vor.u32 %v252, %v255
      %v257 = vrot.slane %v256, 4
      %v259 = vshll.u32 %v223, 16
      %v261 = vrot.slane %v259, 5
      %v262 = vsel %vm248, %v257, %v261
      %v263 = vshrl.u32 %v223, 16
      %v265 = vrot.slane %v263, 4
      %v266 = vor.u32 %v265, %v261
      %v267 = vrot.slane %v266, 4
      %v269 = vshll.u32 %v238, 16
      %v271 = vrot.slane %v269, 5
      %v272 = vsel %vm248, %v267, %v271
      %v274 = vshrl.u32 %v224, 16
      %v276 = vrot.slane %v274, 4
      %v277 = vshll.u32 %v224, 16
      %v279 = vrot.slane %v277, 5
      %v280 = vor.u32 %v276, %v279
      %v281 = vrot.slane %v280, 4
      %v283 = vshll.u32 %v225, 16
      %v285 = vrot.slane %v283, 5
      %v286 = vsel %vm248, %v281, %v285
      %v287 = vshrl.u32 %v225, 16
      %v289 = vrot.slane %v287, 4
      %v290 = vor.u32 %v289, %v285
      %v291 = vrot.slane %v290, 4
      %v293 = vshll.u32 %v239, 16
      %v295 = vrot.slane %v293, 5
      %v296 = vsel %vm248, %v291, %v295
      %v298 = vshrl.u32 %v226, 16
      %v300 = vrot.slane %v298, 4
      %v301 = vshll.u32 %v226, 16
      %v303 = vrot.slane %v301, 5
      %v304 = vor.u32 %v300, %v303
      %v305 = vrot.slane %v304, 4
      %v307 = vshll.u32 %v227, 16
      %v309 = vrot.slane %v307, 5
      %v310 = vsel %vm248, %v305, %v309
      %v311 = vshrl.u32 %v227, 16
      %v313 = vrot.slane %v311, 4
      %v314 = vor.u32 %v313, %v309
      %v315 = vrot.slane %v314, 4
      %v317 = vshll.u32 %v240, 16
      %v319 = vrot.slane %v317, 5
      %v320 = vsel %vm248, %v315, %v319
      %v322 = vshrl.u32 %v228, 16
      %v324 = vrot.slane %v322, 4
      %v325 = vshll.u32 %v228, 16
      %v327 = vrot.slane %v325, 5
      %v328 = vor.u32 %v324, %v327
      %v329 = vrot.slane %v328, 4
      %v331 = vshll.u32 %v229, 16
      %v333 = vrot.slane %v331, 5
      %v334 = vsel %vm248, %v329, %v333
      %v335 = vshrl.u32 %v229, 16
      %v337 = vrot.slane %v335, 4
      %v338 = vor.u32 %v337, %v333
      %v339 = vrot.slane %v338, 4
      %v341 = vshll.u32 %v241, 16
      %v343 = vrot.slane %v341, 5
      %v344 = vsel %vm248, %v339, %v343
      %v346 = vshrl.u32 %v230, 16
      %v348 = vrot.slane %v346, 4
      %v349 = vshll.u32 %v230, 16
      %v351 = vrot.slane %v349, 5
      %v352 = vor.u32 %v348, %v351
      %v353 = vrot.slane %v352, 4
      %v355 = vshll.u32 %v231, 16
      %v357 = vrot.slane %v355, 5
      %v358 = vsel %vm248, %v353, %v357
      %v359 = vshrl.u32 %v231, 16
      %v361 = vrot.slane %v359, 4
      %v362 = vor.u32 %v361, %v357
      %v363 = vrot.slane %v362, 4
      %v365 = vshll.u32 %v242, 16
      %v367 = vrot.slane %v365, 5
      %v368 = vsel %vm248, %v363, %v367
      %v370 = vshrl.u32 %v232, 16
      %v372 = vrot.slane %v370, 4
      %v373 = vshll.u32 %v232, 16
      %v375 = vrot.slane %v373, 5
      %v376 = vor.u32 %v372, %v375
      %v377 = vrot.slane %v376, 4
      %v379 = vshll.u32 %v233, 16
      %v381 = vrot.slane %v379, 5
      %v382 = vsel %vm248, %v377, %v381
      %v383 = vshrl.u32 %v233, 16
      %v385 = vrot.slane %v383, 4
      %v386 = vor.u32 %v385, %v381
      %v387 = vrot.slane %v386, 4
      %v389 = vshll.u32 %v243, 16
      %v391 = vrot.slane %v389, 5
      %v392 = vsel %vm248, %v387, %v391
      %v394 = vshrl.u32 %v234, 16
      %v396 = vrot.slane %v394, 4
      %v397 = vshll.u32 %v234, 16
      %v399 = vrot.slane %v397, 5
      %v400 = vor.u32 %v396, %v399
      %v401 = vrot.slane %v400, 4
      %v403 = vshll.u32 %v235, 16
      %v405 = vrot.slane %v403, 5
      %v406 = vsel %vm248, %v401, %v405
      %v407 = vshrl.u32 %v235, 16
      %v409 = vrot.slane %v407, 4
      %v410 = vor.u32 %v409, %v405
      %v411 = vrot.slane %v410, 4
      %v413 = vshll.u32 %v244, 16
      %v415 = vrot.slane %v413, 5
      %v416 = vsel %vm248, %v411, %v415
      %v418 = vshrl.u32 %v236, 16
      %v420 = vrot.slane %v418, 4
      %v421 = vshll.u32 %v236, 16
      %v423 = vrot.slane %v421, 5
      %v424 = vor.u32 %v420, %v423
      %v425 = vrot.slane %v424, 4
      %v427 = vshll.u32 %v237, 16
      %v429 = vrot.slane %v427, 5
      %v430 = vsel %vm248, %v425, %v429
      %v431 = vshrl.u32 %v237, 16
      %v433 = vrot.slane %v431, 4
      %v434 = vor.u32 %v433, %v429
      %v435 = vrot.slane %v434, 4
      %v437 = vshll.u32 %v245, 16
      %v439 = vrot.slane %v437, 5
      %v440 = vsel %vm248, %v435, %v439
      %v457 = vmax.bf16 %v222, %v262
      %v458 = vmax.bf16 %v223, %v272
      %v459 = vmax.bf16 %v224, %v286
      %v460 = vmax.bf16 %v225, %v296
      %v461 = vmax.bf16 %v226, %v310
      %v462 = vmax.bf16 %v227, %v320
      %v463 = vmax.bf16 %v228, %v334
      %v464 = vmax.bf16 %v229, %v344
      %v465 = vmax.bf16 %v230, %v358
      %v466 = vmax.bf16 %v231, %v368
      %v467 = vmax.bf16 %v232, %v382
      %v468 = vmax.bf16 %v233, %v392
      %v469 = vmax.bf16 %v234, %v406
      %v470 = vmax.bf16 %v235, %v416
      %v471 = vmax.bf16 %v236, %v430
      %v472 = vmax.bf16 %v237, %v440
      %v473 = vld [vmem:[%s221] sm:$0xe]
      %v474 = vld [vmem:[%s221 + $0xc] sm:$0xe]
      %v475 = vld [vmem:[%s221 + $0x18] sm:$0xe]
      %v476 = vld [vmem:[%s221 + $0x24] sm:$0xe]
      %v477 = vld [vmem:[%s221 + $0x30] sm:$0xe]
      %v478 = vld [vmem:[%s221 + $0x3c] sm:$0xe]
      %v479 = vld [vmem:[%s221 + $0x48] sm:$0xe]
      %v480 = vld [vmem:[%s221 + $0x54] sm:$0xe]
      %vm505 = vcmask 1042432
      %vm506 = vcmask 1046532
      %vm507 = vmor %vm505, %vm506
      %v508 = vrot.slane %v473, 5
      %v509 = vrot.slane %v508, 4
      %v510 = vrot.slane %v223, 5
      %v511 = vsel %vm507, %v509, %v510
      %v512 = vrot.slane %v510, 4
      %v513 = vrot.slane %v238, 5
      %v514 = vsel %vm507, %v512, %v513
      %v515 = vrot.slane %v474, 5
      %v516 = vrot.slane %v515, 4
      %v517 = vrot.slane %v225, 5
      %v518 = vsel %vm507, %v516, %v517
      %v519 = vrot.slane %v517, 4
      %v520 = vrot.slane %v239, 5
      %v521 = vsel %vm507, %v519, %v520
      %v522 = vrot.slane %v475, 5
      %v523 = vrot.slane %v522, 4
      %v524 = vrot.slane %v227, 5
      %v525 = vsel %vm507, %v523, %v524
      %v526 = vrot.slane %v524, 4
      %v527 = vrot.slane %v240, 5
      %v528 = vsel %vm507, %v526, %v527
      %v529 = vrot.slane %v476, 5
      %v530 = vrot.slane %v529, 4
      %v531 = vrot.slane %v229, 5
      %v532 = vsel %vm507, %v530, %v531
      %v533 = vrot.slane %v531, 4
      %v534 = vrot.slane %v241, 5
      %v535 = vsel %vm507, %v533, %v534
      %v536 = vrot.slane %v477, 5
      %v537 = vrot.slane %v536, 4
      %v538 = vrot.slane %v231, 5
      %v539 = vsel %vm507, %v537, %v538
      %v540 = vrot.slane %v538, 4
      %v541 = vrot.slane %v242, 5
      %v542 = vsel %vm507, %v540, %v541
      %v543 = vrot.slane %v478, 5
      %v544 = vrot.slane %v543, 4
      %v545 = vrot.slane %v233, 5
      %v546 = vsel %vm507, %v544, %v545
      %v547 = vrot.slane %v545, 4
      %v548 = vrot.slane %v243, 5
      %v549 = vsel %vm507, %v547, %v548
      %v550 = vrot.slane %v479, 5
      %v551 = vrot.slane %v550, 4
      %v552 = vrot.slane %v235, 5
      %v553 = vsel %vm507, %v551, %v552
      %v554 = vrot.slane %v552, 4
      %v555 = vrot.slane %v244, 5
      %v556 = vsel %vm507, %v554, %v555
      %v557 = vrot.slane %v480, 5
      %v558 = vrot.slane %v557, 4
      %v559 = vrot.slane %v237, 5
      %v560 = vsel %vm507, %v558, %v559
      %v561 = vrot.slane %v559, 4
      %v562 = vrot.slane %v245, 5
      %v563 = vsel %vm507, %v561, %v562
      %v580 = vmax.bf16 %v457, %v511
      %v581 = vmax.bf16 %v458, %v514
      %v582 = vmax.bf16 %v459, %v518
      %v583 = vmax.bf16 %v460, %v521
      %v584 = vmax.bf16 %v461, %v525
      %v585 = vmax.bf16 %v462, %v528
      %v586 = vmax.bf16 %v463, %v532
      %v587 = vmax.bf16 %v464, %v535
      %v588 = vmax.bf16 %v465, %v539
      %v589 = vmax.bf16 %v466, %v542
      %v590 = vmax.bf16 %v467, %v546
      %v591 = vmax.bf16 %v468, %v549
      %v592 = vmax.bf16 %v469, %v553
      %v593 = vmax.bf16 %v470, %v556
      %v594 = vmax.bf16 %v471, %v560
      %v595 = vmax.bf16 %v472, %v563
      %s596 = sadd.s32 %s218, 1
      %s597 = smul.u32 %s596, 3
      %s598 = smul.addr %s597, 4
      %s599 = scalar_lea.vmem %s197, %s598
      %v600 = vld [vmem:[%s599] sm:$0xf]
      %v601 = vld [vmem:[%s599 + $0x4] sm:$0xf]
      %v602 = vld [vmem:[%s599 + $0xc] sm:$0xf]
      %v603 = vld [vmem:[%s599 + $0x10] sm:$0xf]
      %v604 = vld [vmem:[%s599 + $0x18] sm:$0xf]
      %v605 = vld [vmem:[%s599 + $0x1c] sm:$0xf]
      %v606 = vld [vmem:[%s599 + $0x24] sm:$0xf]
      %v607 = vld [vmem:[%s599 + $0x28] sm:$0xf]
      %v608 = vld [vmem:[%s599 + $0x30] sm:$0xf]
      %v609 = vld [vmem:[%s599 + $0x34] sm:$0xf]
      %v610 = vld [vmem:[%s599 + $0x3c] sm:$0xf]
      %v611 = vld [vmem:[%s599 + $0x40] sm:$0xf]
      %v612 = vld [vmem:[%s599 + $0x48] sm:$0xf]
      %v613 = vld [vmem:[%s599 + $0x4c] sm:$0xf]
      %v614 = vld [vmem:[%s599 + $0x54] sm:$0xf]
      %v615 = vld [vmem:[%s599 + $0x58] sm:$0xf]
      %v616 = vmax.bf16 %v580, %v600
      %v617 = vmax.bf16 %v581, %v601
      %v618 = vmax.bf16 %v582, %v602
      %v619 = vmax.bf16 %v583, %v603
      %v620 = vmax.bf16 %v584, %v604
      %v621 = vmax.bf16 %v585, %v605
      %v622 = vmax.bf16 %v586, %v606
      %v623 = vmax.bf16 %v587, %v607
      %v624 = vmax.bf16 %v588, %v608
      %v625 = vmax.bf16 %v589, %v609
      %v626 = vmax.bf16 %v590, %v610
      %v627 = vmax.bf16 %v591, %v611
      %v628 = vmax.bf16 %v592, %v612
      %v629 = vmax.bf16 %v593, %v613
      %v630 = vmax.bf16 %v594, %v614
      %v631 = vmax.bf16 %v595, %v615
      %v632 = vld [vmem:[%s599 + $0x8] sm:$0x1]
      %v633 = vld [vmem:[%s599 + $0x14] sm:$0x1]
      %v634 = vld [vmem:[%s599 + $0x20] sm:$0x1]
      %v635 = vld [vmem:[%s599 + $0x2c] sm:$0x1]
      %v636 = vld [vmem:[%s599 + $0x38] sm:$0x1]
      %v637 = vld [vmem:[%s599 + $0x44] sm:$0x1]
      %v638 = vld [vmem:[%s599 + $0x50] sm:$0x1]
      %v639 = vld [vmem:[%s599 + $0x5c] sm:$0x1]
      %v641 = vshrl.u32 %v600, 16
      %v643 = vrot.slane %v641, 4
      %v644 = vshll.u32 %v600, 16
      %v646 = vrot.slane %v644, 5
      %v647 = vor.u32 %v643, %v646
      %v648 = vrot.slane %v647, 4
      %v650 = vshll.u32 %v601, 16
      %v652 = vrot.slane %v650, 5
      %v653 = vsel %vm248, %v648, %v652
      %v654 = vshrl.u32 %v601, 16
      %v656 = vrot.slane %v654, 4
      %v657 = vor.u32 %v656, %v652
      %v658 = vrot.slane %v657, 4
      %v660 = vshll.u32 %v632, 16
      %v662 = vrot.slane %v660, 5
      %v663 = vsel %vm248, %v658, %v662
      %v665 = vshrl.u32 %v602, 16
      %v667 = vrot.slane %v665, 4
      %v668 = vshll.u32 %v602, 16
      %v670 = vrot.slane %v668, 5
      %v671 = vor.u32 %v667, %v670
      %v672 = vrot.slane %v671, 4
      %v674 = vshll.u32 %v603, 16
      %v676 = vrot.slane %v674, 5
      %v677 = vsel %vm248, %v672, %v676
      %v678 = vshrl.u32 %v603, 16
      %v680 = vrot.slane %v678, 4
      %v681 = vor.u32 %v680, %v676
      %v682 = vrot.slane %v681, 4
      %v684 = vshll.u32 %v633, 16
      %v686 = vrot.slane %v684, 5
      %v687 = vsel %vm248, %v682, %v686
      %v689 = vshrl.u32 %v604, 16
      %v691 = vrot.slane %v689, 4
      %v692 = vshll.u32 %v604, 16
      %v694 = vrot.slane %v692, 5
      %v695 = vor.u32 %v691, %v694
      %v696 = vrot.slane %v695, 4
      %v698 = vshll.u32 %v605, 16
      %v700 = vrot.slane %v698, 5
      %v701 = vsel %vm248, %v696, %v700
      %v702 = vshrl.u32 %v605, 16
      %v704 = vrot.slane %v702, 4
      %v705 = vor.u32 %v704, %v700
      %v706 = vrot.slane %v705, 4
      %v708 = vshll.u32 %v634, 16
      %v710 = vrot.slane %v708, 5
      %v711 = vsel %vm248, %v706, %v710
      %v713 = vshrl.u32 %v606, 16
      %v715 = vrot.slane %v713, 4
      %v716 = vshll.u32 %v606, 16
      %v718 = vrot.slane %v716, 5
      %v719 = vor.u32 %v715, %v718
      %v720 = vrot.slane %v719, 4
      %v722 = vshll.u32 %v607, 16
      %v724 = vrot.slane %v722, 5
      %v725 = vsel %vm248, %v720, %v724
      %v726 = vshrl.u32 %v607, 16
      %v728 = vrot.slane %v726, 4
      %v729 = vor.u32 %v728, %v724
      %v730 = vrot.slane %v729, 4
      %v732 = vshll.u32 %v635, 16
      %v734 = vrot.slane %v732, 5
      %v735 = vsel %vm248, %v730, %v734
      %v737 = vshrl.u32 %v608, 16
      %v739 = vrot.slane %v737, 4
      %v740 = vshll.u32 %v608, 16
      %v742 = vrot.slane %v740, 5
      %v743 = vor.u32 %v739, %v742
      %v744 = vrot.slane %v743, 4
      %v746 = vshll.u32 %v609, 16
      %v748 = vrot.slane %v746, 5
      %v749 = vsel %vm248, %v744, %v748
      %v750 = vshrl.u32 %v609, 16
      %v752 = vrot.slane %v750, 4
      %v753 = vor.u32 %v752, %v748
      %v754 = vrot.slane %v753, 4
      %v756 = vshll.u32 %v636, 16
      %v758 = vrot.slane %v756, 5
      %v759 = vsel %vm248, %v754, %v758
      %v761 = vshrl.u32 %v610, 16
      %v763 = vrot.slane %v761, 4
      %v764 = vshll.u32 %v610, 16
      %v766 = vrot.slane %v764, 5
      %v767 = vor.u32 %v763, %v766
      %v768 = vrot.slane %v767, 4
      %v770 = vshll.u32 %v611, 16
      %v772 = vrot.slane %v770, 5
      %v773 = vsel %vm248, %v768, %v772
      %v774 = vshrl.u32 %v611, 16
      %v776 = vrot.slane %v774, 4
      %v777 = vor.u32 %v776, %v772
      %v778 = vrot.slane %v777, 4
      %v780 = vshll.u32 %v637, 16
      %v782 = vrot.slane %v780, 5
      %v783 = vsel %vm248, %v778, %v782
      %v785 = vshrl.u32 %v612, 16
      %v787 = vrot.slane %v785, 4
      %v788 = vshll.u32 %v612, 16
      %v790 = vrot.slane %v788, 5
      %v791 = vor.u32 %v787, %v790
      %v792 = vrot.slane %v791, 4
      %v794 = vshll.u32 %v613, 16
      %v796 = vrot.slane %v794, 5
      %v797 = vsel %vm248, %v792, %v796
      %v798 = vshrl.u32 %v613, 16
      %v800 = vrot.slane %v798, 4
      %v801 = vor.u32 %v800, %v796
      %v802 = vrot.slane %v801, 4
      %v804 = vshll.u32 %v638, 16
      %v806 = vrot.slane %v804, 5
      %v807 = vsel %vm248, %v802, %v806
      %v809 = vshrl.u32 %v614, 16
      %v811 = vrot.slane %v809, 4
      %v812 = vshll.u32 %v614, 16
      %v814 = vrot.slane %v812, 5
      %v815 = vor.u32 %v811, %v814
      %v816 = vrot.slane %v815, 4
      %v818 = vshll.u32 %v615, 16
      %v820 = vrot.slane %v818, 5
      %v821 = vsel %vm248, %v816, %v820
      %v822 = vshrl.u32 %v615, 16
      %v824 = vrot.slane %v822, 4
      %v825 = vor.u32 %v824, %v820
      %v826 = vrot.slane %v825, 4
      %v828 = vshll.u32 %v639, 16
      %v830 = vrot.slane %v828, 5
      %v831 = vsel %vm248, %v826, %v830
      %v848 = vmax.bf16 %v616, %v653
      %v849 = vmax.bf16 %v617, %v663
      %v850 = vmax.bf16 %v618, %v677
      %v851 = vmax.bf16 %v619, %v687
      %v852 = vmax.bf16 %v620, %v701
      %v853 = vmax.bf16 %v621, %v711
      %v854 = vmax.bf16 %v622, %v725
      %v855 = vmax.bf16 %v623, %v735
      %v856 = vmax.bf16 %v624, %v749
      %v857 = vmax.bf16 %v625, %v759
      %v858 = vmax.bf16 %v626, %v773
      %v859 = vmax.bf16 %v627, %v783
      %v860 = vmax.bf16 %v628, %v797
      %v861 = vmax.bf16 %v629, %v807
      %v862 = vmax.bf16 %v630, %v821
      %v863 = vmax.bf16 %v631, %v831
      %v864 = vld [vmem:[%s599] sm:$0xe]
      %v865 = vld [vmem:[%s599 + $0xc] sm:$0xe]
      %v866 = vld [vmem:[%s599 + $0x18] sm:$0xe]
      %v867 = vld [vmem:[%s599 + $0x24] sm:$0xe]
      %v868 = vld [vmem:[%s599 + $0x30] sm:$0xe]
      %v869 = vld [vmem:[%s599 + $0x3c] sm:$0xe]
      %v870 = vld [vmem:[%s599 + $0x48] sm:$0xe]
      %v871 = vld [vmem:[%s599 + $0x54] sm:$0xe]
      %v896 = vrot.slane %v864, 5
      %v897 = vrot.slane %v896, 4
      %v898 = vrot.slane %v601, 5
      %v899 = vsel %vm507, %v897, %v898
      %v900 = vrot.slane %v898, 4
      %v901 = vrot.slane %v632, 5
      %v902 = vsel %vm507, %v900, %v901
      %v903 = vrot.slane %v865, 5
      %v904 = vrot.slane %v903, 4
      %v905 = vrot.slane %v603, 5
      %v906 = vsel %vm507, %v904, %v905
      %v907 = vrot.slane %v905, 4
      %v908 = vrot.slane %v633, 5
      %v909 = vsel %vm507, %v907, %v908
      %v910 = vrot.slane %v866, 5
      %v911 = vrot.slane %v910, 4
      %v912 = vrot.slane %v605, 5
      %v913 = vsel %vm507, %v911, %v912
      %v914 = vrot.slane %v912, 4
      %v915 = vrot.slane %v634, 5
      %v916 = vsel %vm507, %v914, %v915
      %v917 = vrot.slane %v867, 5
      %v918 = vrot.slane %v917, 4
      %v919 = vrot.slane %v607, 5
      %v920 = vsel %vm507, %v918, %v919
      %v921 = vrot.slane %v919, 4
      %v922 = vrot.slane %v635, 5
      %v923 = vsel %vm507, %v921, %v922
      %v924 = vrot.slane %v868, 5
      %v925 = vrot.slane %v924, 4
      %v926 = vrot.slane %v609, 5
      %v927 = vsel %vm507, %v925, %v926
      %v928 = vrot.slane %v926, 4
      %v929 = vrot.slane %v636, 5
      %v930 = vsel %vm507, %v928, %v929
      %v931 = vrot.slane %v869, 5
      %v932 = vrot.slane %v931, 4
      %v933 = vrot.slane %v611, 5
      %v934 = vsel %vm507, %v932, %v933
      %v935 = vrot.slane %v933, 4
      %v936 = vrot.slane %v637, 5
      %v937 = vsel %vm507, %v935, %v936
      %v938 = vrot.slane %v870, 5
      %v939 = vrot.slane %v938, 4
      %v940 = vrot.slane %v613, 5
      %v941 = vsel %vm507, %v939, %v940
      %v942 = vrot.slane %v940, 4
      %v943 = vrot.slane %v638, 5
      %v944 = vsel %vm507, %v942, %v943
      %v945 = vrot.slane %v871, 5
      %v946 = vrot.slane %v945, 4
      %v947 = vrot.slane %v615, 5
      %v948 = vsel %vm507, %v946, %v947
      %v949 = vrot.slane %v947, 4
      %v950 = vrot.slane %v639, 5
      %v951 = vsel %vm507, %v949, %v950
      %v968 = vmax.bf16 %v848, %v899
      %v969 = vmax.bf16 %v849, %v902
      %v970 = vmax.bf16 %v850, %v906
      %v971 = vmax.bf16 %v851, %v909
      %v972 = vmax.bf16 %v852, %v913
      %v973 = vmax.bf16 %v853, %v916
      %v974 = vmax.bf16 %v854, %v920
      %v975 = vmax.bf16 %v855, %v923
      %v976 = vmax.bf16 %v856, %v927
      %v977 = vmax.bf16 %v857, %v930
      %v978 = vmax.bf16 %v858, %v934
      %v979 = vmax.bf16 %v859, %v937
      %v980 = vmax.bf16 %v860, %v941
      %v981 = vmax.bf16 %v861, %v944
      %v982 = vmax.bf16 %v862, %v948
      %v983 = vmax.bf16 %v863, %v951
      %s984 = sadd.s32 %s218, 2
      %s985 = smul.u32 %s984, 3
      %s986 = smul.addr %s985, 4
      %s987 = scalar_lea.vmem %s197, %s986
      %v988 = vld [vmem:[%s987] sm:$0xf]
      %v989 = vld [vmem:[%s987 + $0x4] sm:$0xf]
      %v990 = vld [vmem:[%s987 + $0xc] sm:$0xf]
      %v991 = vld [vmem:[%s987 + $0x10] sm:$0xf]
      %v992 = vld [vmem:[%s987 + $0x18] sm:$0xf]
      %v993 = vld [vmem:[%s987 + $0x1c] sm:$0xf]
      %v994 = vld [vmem:[%s987 + $0x24] sm:$0xf]
      %v995 = vld [vmem:[%s987 + $0x28] sm:$0xf]
      %v996 = vld [vmem:[%s987 + $0x30] sm:$0xf]
      %v997 = vld [vmem:[%s987 + $0x34] sm:$0xf]
      %v998 = vld [vmem:[%s987 + $0x3c] sm:$0xf]
      %v999 = vld [vmem:[%s987 + $0x40] sm:$0xf]
      %v1000 = vld [vmem:[%s987 + $0x48] sm:$0xf]
      %v1001 = vld [vmem:[%s987 + $0x4c] sm:$0xf]
      %v1002 = vld [vmem:[%s987 + $0x54] sm:$0xf]
      %v1003 = vld [vmem:[%s987 + $0x58] sm:$0xf]
      %v1004 = vmax.bf16 %v968, %v988
      %v1005 = vmax.bf16 %v969, %v989
      %v1006 = vmax.bf16 %v970, %v990
      %v1007 = vmax.bf16 %v971, %v991
      %v1008 = vmax.bf16 %v972, %v992
      %v1009 = vmax.bf16 %v973, %v993
      %v1010 = vmax.bf16 %v974, %v994
      %v1011 = vmax.bf16 %v975, %v995
      %v1012 = vmax.bf16 %v976, %v996
      %v1013 = vmax.bf16 %v977, %v997
      %v1014 = vmax.bf16 %v978, %v998
      %v1015 = vmax.bf16 %v979, %v999
      %v1016 = vmax.bf16 %v980, %v1000
      %v1017 = vmax.bf16 %v981, %v1001
      %v1018 = vmax.bf16 %v982, %v1002
      %v1019 = vmax.bf16 %v983, %v1003
      %v1020 = vld [vmem:[%s987 + $0x8] sm:$0x1]
      %v1021 = vld [vmem:[%s987 + $0x14] sm:$0x1]
      %v1022 = vld [vmem:[%s987 + $0x20] sm:$0x1]
      %v1023 = vld [vmem:[%s987 + $0x2c] sm:$0x1]
      %v1024 = vld [vmem:[%s987 + $0x38] sm:$0x1]
      %v1025 = vld [vmem:[%s987 + $0x44] sm:$0x1]
      %v1026 = vld [vmem:[%s987 + $0x50] sm:$0x1]
      %v1027 = vld [vmem:[%s987 + $0x5c] sm:$0x1]
      %v1029 = vshrl.u32 %v988, 16
      %v1031 = vrot.slane %v1029, 4
      %v1032 = vshll.u32 %v988, 16
      %v1034 = vrot.slane %v1032, 5
      %v1035 = vor.u32 %v1031, %v1034
      %v1036 = vrot.slane %v1035, 4
      %v1038 = vshll.u32 %v989, 16
      %v1040 = vrot.slane %v1038, 5
      %v1041 = vsel %vm248, %v1036, %v1040
      %v1042 = vshrl.u32 %v989, 16
      %v1044 = vrot.slane %v1042, 4
      %v1045 = vor.u32 %v1044, %v1040
      %v1046 = vrot.slane %v1045, 4
      %v1048 = vshll.u32 %v1020, 16
      %v1050 = vrot.slane %v1048, 5
      %v1051 = vsel %vm248, %v1046, %v1050
      %v1053 = vshrl.u32 %v990, 16
      %v1055 = vrot.slane %v1053, 4
      %v1056 = vshll.u32 %v990, 16
      %v1058 = vrot.slane %v1056, 5
      %v1059 = vor.u32 %v1055, %v1058
      %v1060 = vrot.slane %v1059, 4
      %v1062 = vshll.u32 %v991, 16
      %v1064 = vrot.slane %v1062, 5
      %v1065 = vsel %vm248, %v1060, %v1064
      %v1066 = vshrl.u32 %v991, 16
      %v1068 = vrot.slane %v1066, 4
      %v1069 = vor.u32 %v1068, %v1064
      %v1070 = vrot.slane %v1069, 4
      %v1072 = vshll.u32 %v1021, 16
      %v1074 = vrot.slane %v1072, 5
      %v1075 = vsel %vm248, %v1070, %v1074
      %v1077 = vshrl.u32 %v992, 16
      %v1079 = vrot.slane %v1077, 4
      %v1080 = vshll.u32 %v992, 16
      %v1082 = vrot.slane %v1080, 5
      %v1083 = vor.u32 %v1079, %v1082
      %v1084 = vrot.slane %v1083, 4
      %v1086 = vshll.u32 %v993, 16
      %v1088 = vrot.slane %v1086, 5
      %v1089 = vsel %vm248, %v1084, %v1088
      %v1090 = vshrl.u32 %v993, 16
      %v1092 = vrot.slane %v1090, 4
      %v1093 = vor.u32 %v1092, %v1088
      %v1094 = vrot.slane %v1093, 4
      %v1096 = vshll.u32 %v1022, 16
      %v1098 = vrot.slane %v1096, 5
      %v1099 = vsel %vm248, %v1094, %v1098
      %v1101 = vshrl.u32 %v994, 16
      %v1103 = vrot.slane %v1101, 4
      %v1104 = vshll.u32 %v994, 16
      %v1106 = vrot.slane %v1104, 5
      %v1107 = vor.u32 %v1103, %v1106
      %v1108 = vrot.slane %v1107, 4
      %v1110 = vshll.u32 %v995, 16
      %v1112 = vrot.slane %v1110, 5
      %v1113 = vsel %vm248, %v1108, %v1112
      %v1114 = vshrl.u32 %v995, 16
      %v1116 = vrot.slane %v1114, 4
      %v1117 = vor.u32 %v1116, %v1112
      %v1118 = vrot.slane %v1117, 4
      %v1120 = vshll.u32 %v1023, 16
      %v1122 = vrot.slane %v1120, 5
      %v1123 = vsel %vm248, %v1118, %v1122
      %v1125 = vshrl.u32 %v996, 16
      %v1127 = vrot.slane %v1125, 4
      %v1128 = vshll.u32 %v996, 16
      %v1130 = vrot.slane %v1128, 5
      %v1131 = vor.u32 %v1127, %v1130
      %v1132 = vrot.slane %v1131, 4
      %v1134 = vshll.u32 %v997, 16
      %v1136 = vrot.slane %v1134, 5
      %v1137 = vsel %vm248, %v1132, %v1136
      %v1138 = vshrl.u32 %v997, 16
      %v1140 = vrot.slane %v1138, 4
      %v1141 = vor.u32 %v1140, %v1136
      %v1142 = vrot.slane %v1141, 4
      %v1144 = vshll.u32 %v1024, 16
      %v1146 = vrot.slane %v1144, 5
      %v1147 = vsel %vm248, %v1142, %v1146
      %v1149 = vshrl.u32 %v998, 16
      %v1151 = vrot.slane %v1149, 4
      %v1152 = vshll.u32 %v998, 16
      %v1154 = vrot.slane %v1152, 5
      %v1155 = vor.u32 %v1151, %v1154
      %v1156 = vrot.slane %v1155, 4
      %v1158 = vshll.u32 %v999, 16
      %v1160 = vrot.slane %v1158, 5
      %v1161 = vsel %vm248, %v1156, %v1160
      %v1162 = vshrl.u32 %v999, 16
      %v1164 = vrot.slane %v1162, 4
      %v1165 = vor.u32 %v1164, %v1160
      %v1166 = vrot.slane %v1165, 4
      %v1168 = vshll.u32 %v1025, 16
      %v1170 = vrot.slane %v1168, 5
      %v1171 = vsel %vm248, %v1166, %v1170
      %v1173 = vshrl.u32 %v1000, 16
      %v1175 = vrot.slane %v1173, 4
      %v1176 = vshll.u32 %v1000, 16
      %v1178 = vrot.slane %v1176, 5
      %v1179 = vor.u32 %v1175, %v1178
      %v1180 = vrot.slane %v1179, 4
      %v1182 = vshll.u32 %v1001, 16
      %v1184 = vrot.slane %v1182, 5
      %v1185 = vsel %vm248, %v1180, %v1184
      %v1186 = vshrl.u32 %v1001, 16
      %v1188 = vrot.slane %v1186, 4
      %v1189 = vor.u32 %v1188, %v1184
      %v1190 = vrot.slane %v1189, 4
      %v1192 = vshll.u32 %v1026, 16
      %v1194 = vrot.slane %v1192, 5
      %v1195 = vsel %vm248, %v1190, %v1194
      %v1197 = vshrl.u32 %v1002, 16
      %v1199 = vrot.slane %v1197, 4
      %v1200 = vshll.u32 %v1002, 16
      %v1202 = vrot.slane %v1200, 5
      %v1203 = vor.u32 %v1199, %v1202
      %v1204 = vrot.slane %v1203, 4
      %v1206 = vshll.u32 %v1003, 16
      %v1208 = vrot.slane %v1206, 5
      %v1209 = vsel %vm248, %v1204, %v1208
      %v1210 = vshrl.u32 %v1003, 16
      %v1212 = vrot.slane %v1210, 4
      %v1213 = vor.u32 %v1212, %v1208
      %v1214 = vrot.slane %v1213, 4
      %v1216 = vshll.u32 %v1027, 16
      %v1218 = vrot.slane %v1216, 5
      %v1219 = vsel %vm248, %v1214, %v1218
      %v1236 = vmax.bf16 %v1004, %v1041
      %v1237 = vmax.bf16 %v1005, %v1051
      %v1238 = vmax.bf16 %v1006, %v1065
      %v1239 = vmax.bf16 %v1007, %v1075
      %v1240 = vmax.bf16 %v1008, %v1089
      %v1241 = vmax.bf16 %v1009, %v1099
      %v1242 = vmax.bf16 %v1010, %v1113
      %v1243 = vmax.bf16 %v1011, %v1123
      %v1244 = vmax.bf16 %v1012, %v1137
      %v1245 = vmax.bf16 %v1013, %v1147
      %v1246 = vmax.bf16 %v1014, %v1161
      %v1247 = vmax.bf16 %v1015, %v1171
      %v1248 = vmax.bf16 %v1016, %v1185
      %v1249 = vmax.bf16 %v1017, %v1195
      %v1250 = vmax.bf16 %v1018, %v1209
      %v1251 = vmax.bf16 %v1019, %v1219
      %v1252 = vld [vmem:[%s987] sm:$0xe]
      %v1253 = vld [vmem:[%s987 + $0xc] sm:$0xe]
      %v1254 = vld [vmem:[%s987 + $0x18] sm:$0xe]
      %v1255 = vld [vmem:[%s987 + $0x24] sm:$0xe]
      %v1256 = vld [vmem:[%s987 + $0x30] sm:$0xe]
      %v1257 = vld [vmem:[%s987 + $0x3c] sm:$0xe]
      %v1258 = vld [vmem:[%s987 + $0x48] sm:$0xe]
      %v1259 = vld [vmem:[%s987 + $0x54] sm:$0xe]
      %v1284 = vrot.slane %v1252, 5
      %v1285 = vrot.slane %v1284, 4
      %v1286 = vrot.slane %v989, 5
      %v1287 = vsel %vm507, %v1285, %v1286
      %v1288 = vrot.slane %v1286, 4
      %v1289 = vrot.slane %v1020, 5
      %v1290 = vsel %vm507, %v1288, %v1289
      %v1291 = vrot.slane %v1253, 5
      %v1292 = vrot.slane %v1291, 4
      %v1293 = vrot.slane %v991, 5
      %v1294 = vsel %vm507, %v1292, %v1293
      %v1295 = vrot.slane %v1293, 4
      %v1296 = vrot.slane %v1021, 5
      %v1297 = vsel %vm507, %v1295, %v1296
      %v1298 = vrot.slane %v1254, 5
      %v1299 = vrot.slane %v1298, 4
      %v1300 = vrot.slane %v993, 5
      %v1301 = vsel %vm507, %v1299, %v1300
      %v1302 = vrot.slane %v1300, 4
      %v1303 = vrot.slane %v1022, 5
      %v1304 = vsel %vm507, %v1302, %v1303
      %v1305 = vrot.slane %v1255, 5
      %v1306 = vrot.slane %v1305, 4
      %v1307 = vrot.slane %v995, 5
      %v1308 = vsel %vm507, %v1306, %v1307
      %v1309 = vrot.slane %v1307, 4
      %v1310 = vrot.slane %v1023, 5
      %v1311 = vsel %vm507, %v1309, %v1310
      %v1312 = vrot.slane %v1256, 5
      %v1313 = vrot.slane %v1312, 4
      %v1314 = vrot.slane %v997, 5
      %v1315 = vsel %vm507, %v1313, %v1314
      %v1316 = vrot.slane %v1314, 4
      %v1317 = vrot.slane %v1024, 5
      %v1318 = vsel %vm507, %v1316, %v1317
      %v1319 = vrot.slane %v1257, 5
      %v1320 = vrot.slane %v1319, 4
      %v1321 = vrot.slane %v999, 5
      %v1322 = vsel %vm507, %v1320, %v1321
      %v1323 = vrot.slane %v1321, 4
      %v1324 = vrot.slane %v1025, 5
      %v1325 = vsel %vm507, %v1323, %v1324
      %v1326 = vrot.slane %v1258, 5
      %v1327 = vrot.slane %v1326, 4
      %v1328 = vrot.slane %v1001, 5
      %v1329 = vsel %vm507, %v1327, %v1328
      %v1330 = vrot.slane %v1328, 4
      %v1331 = vrot.slane %v1026, 5
      %v1332 = vsel %vm507, %v1330, %v1331
      %v1333 = vrot.slane %v1259, 5
      %v1334 = vrot.slane %v1333, 4
      %v1335 = vrot.slane %v1003, 5
      %v1336 = vsel %vm507, %v1334, %v1335
      %v1337 = vrot.slane %v1335, 4
      %v1338 = vrot.slane %v1027, 5
      %v1339 = vsel %vm507, %v1337, %v1338
      %v1356 = vmax.bf16 %v1236, %v1287
      %v1357 = vmax.bf16 %v1237, %v1290
      %v1358 = vmax.bf16 %v1238, %v1294
      %v1359 = vmax.bf16 %v1239, %v1297
      %v1360 = vmax.bf16 %v1240, %v1301
      %v1361 = vmax.bf16 %v1241, %v1304
      %v1362 = vmax.bf16 %v1242, %v1308
      %v1363 = vmax.bf16 %v1243, %v1311
      %v1364 = vmax.bf16 %v1244, %v1315
      %v1365 = vmax.bf16 %v1245, %v1318
      %v1366 = vmax.bf16 %v1246, %v1322
      %v1367 = vmax.bf16 %v1247, %v1325
      %v1368 = vmax.bf16 %v1248, %v1329
      %v1369 = vmax.bf16 %v1249, %v1332
      %v1370 = vmax.bf16 %v1250, %v1336
      %v1371 = vmax.bf16 %v1251, %v1339
      %v1372 = vld [vmem:[%s1] sm:$0x3]
      %v1389 = vunpack.c.l.b16 %v1356
      %v1390 = vunpack.c.l.b16 %v1357
      %v1391 = vunpack.c.l.b16 %v1358
      %v1392 = vunpack.c.l.b16 %v1359
      %v1393 = vunpack.c.l.b16 %v1360
      %v1394 = vunpack.c.l.b16 %v1361
      %v1395 = vunpack.c.l.b16 %v1362
      %v1396 = vunpack.c.l.b16 %v1363
      %v1397 = vunpack.c.l.b16 %v1364
      %v1398 = vunpack.c.l.b16 %v1365
      %v1399 = vunpack.c.l.b16 %v1366
      %v1400 = vunpack.c.l.b16 %v1367
      %v1401 = vunpack.c.l.b16 %v1368
      %v1402 = vunpack.c.l.b16 %v1369
      %v1403 = vunpack.c.l.b16 %v1370
      %v1404 = vunpack.c.l.b16 %v1371
      %v1405 = vpack.c.b16 %v1390, %v1389
      %v1406 = vpack.c.b16 %v1392, %v1391
      %v1407 = vpack.c.b16 %v1394, %v1393
      %v1408 = vpack.c.b16 %v1396, %v1395
      %v1409 = vpack.c.b16 %v1398, %v1397
      %v1410 = vpack.c.b16 %v1400, %v1399
      %v1411 = vpack.c.b16 %v1402, %v1401
      %v1412 = vpack.c.b16 %v1404, %v1403
      %vm1413 = vcmask 31744
      %v1415 = vsel %vm1413, %v1405, 0
      %v1418 = vsel %vm1413, %v1406, 0
      %v1421 = vsel %vm1413, %v1407, 0
      %v1424 = vsel %vm1413, %v1408, 0
      %v1427 = vsel %vm1413, %v1409, 0
      %v1430 = vsel %vm1413, %v1410, 0
      %v1433 = vsel %vm1413, %v1411, 0
      %v1436 = vsel %vm1413, %v1412, 0
      %vm1438 = vcmask 1041408
      %v1440 = vsel %vm1438, %v1372, 0
      %1442 = vmatprep.subr.bf16.mxu0 0
      %1443 = vmatpush1.bf16.msra.mxu0 %v1440
      %1444 = vmatprep.subr.bf16.mxu0 0
      %1445 = vmatpush1.bf16.msra.mxu0 0
      %1446 = vmatprep.subr.bf16.mxu0 0
      %1447 = vmatpush1.bf16.msra.mxu0 0
      %1448 = vmatprep.subr.bf16.mxu0 0
      %1449 = vmatpush1.bf16.msra.mxu0 0
      %1450 = vmatprep.subr.bf16.mxu0 0
      %1451 = vmatpush1.bf16.msra.mxu0 0
      %1452 = vmatprep.subr.bf16.mxu0 0
      %1453 = vmatpush1.bf16.msra.mxu0 0
      %1454 = vmatprep.subr.bf16.mxu0 0
      %1455 = vmatpush1.bf16.msra.mxu0 0
      %1456 = vmatprep.subr.bf16.mxu0 0
      %1457 = vmatpush1.bf16.msra.mxu0 0
      %1458 = vmatprep.subr.bf16.mxu0 0
      %1459 = vmatpush1.bf16.msra.mxu0 0
      %1460 = vmatprep.subr.bf16.mxu0 0
      %1461 = vmatpush1.bf16.msra.mxu0 0
      %1462 = vmatprep.subr.bf16.mxu0 0
      %1463 = vmatpush1.bf16.msra.mxu0 0
      %1464 = vmatprep.subr.bf16.mxu0 0
      %1465 = vmatpush1.bf16.msra.mxu0 0
      %1466 = vmatprep.subr.bf16.mxu0 0
      %1467 = vmatpush1.bf16.msra.mxu0 0
      %1468 = vmatprep.subr.bf16.mxu0 0
      %1469 = vmatpush1.bf16.msra.mxu0 0
      %1470 = vmatprep.subr.bf16.mxu0 0
      %1471 = vmatpush1.bf16.msra.mxu0 0
      %1472 = vmatprep.subr.bf16.mxu0 0
      %1473 = vmatpush1.bf16.msra.mxu0 0
      %1474 = vmatprep.mubr.bf16.mxu0 0
      %1475 = vmatmul.mubr.bf16.gmra.mrb[0].mxu0 %v1415
      %v1476 = vpop.f32.mrb[0].mxu0
      %v1477 = vadd.f32 0.0, %v1476
      %v1478 = vpop.f32.mrb[0].mxu0
      %v1479 = vpop.f32.mrb[0].mxu0
      %v1480 = vadd.f32 0.0, %v1479
      %v1481 = vpop.f32.mrb[0].mxu0
      %1482 = vmatprep.mubr.bf16.mxu0 0
      %1483 = vmatmul.mubr.bf16.gmra.mrb[0].mxu0 %v1418
      %v1484 = vpop.f32.mrb[0].mxu0
      %v1485 = vadd.f32 0.0, %v1484
      %v1486 = vpop.f32.mrb[0].mxu0
      %v1487 = vpop.f32.mrb[0].mxu0
      %v1488 = vadd.f32 0.0, %v1487
      %v1489 = vpop.f32.mrb[0].mxu0
      %1490 = vmatprep.mubr.bf16.mxu0 0
      %1491 = vmatmul.mubr.bf16.gmra.mrb[0].mxu0 %v1421
      %v1492 = vpop.f32.mrb[0].mxu0
      %v1493 = vadd.f32 0.0, %v1492
      %v1494 = vpop.f32.mrb[0].mxu0
      %v1495 = vpop.f32.mrb[0].mxu0
      %v1496 = vadd.f32 0.0, %v1495
      %v1497 = vpop.f32.mrb[0].mxu0
      %1498 = vmatprep.mubr.bf16.mxu0 0
      %1499 = vmatmul.mubr.bf16.gmra.mrb[0].mxu0 %v1424
      %v1500 = vpop.f32.mrb[0].mxu0
      %v1501 = vadd.f32 0.0, %v1500
      %v1502 = vpop.f32.mrb[0].mxu0
      %v1503 = vpop.f32.mrb[0].mxu0
      %v1504 = vadd.f32 0.0, %v1503
      %v1505 = vpop.f32.mrb[0].mxu0
      %1506 = vmatprep.mubr.bf16.mxu0 0
      %1507 = vmatmul.mubr.bf16.gmra.mrb[0].mxu0 %v1427
      %v1508 = vpop.f32.mrb[0].mxu0
      %v1509 = vadd.f32 0.0, %v1508
      %v1510 = vpop.f32.mrb[0].mxu0
      %v1511 = vpop.f32.mrb[0].mxu0
      %v1512 = vadd.f32 0.0, %v1511
      %v1513 = vpop.f32.mrb[0].mxu0
      %1514 = vmatprep.mubr.bf16.mxu0 0
      %1515 = vmatmul.mubr.bf16.gmra.mrb[0].mxu0 %v1430
      %v1516 = vpop.f32.mrb[0].mxu0
      %v1517 = vadd.f32 0.0, %v1516
      %v1518 = vpop.f32.mrb[0].mxu0
      %v1519 = vpop.f32.mrb[0].mxu0
      %v1520 = vadd.f32 0.0, %v1519
      %v1521 = vpop.f32.mrb[0].mxu0
      %1522 = vmatprep.mubr.bf16.mxu0 0
      %1523 = vmatmul.mubr.bf16.gmra.mrb[0].mxu0 %v1433
      %v1524 = vpop.f32.mrb[0].mxu0
      %v1525 = vadd.f32 0.0, %v1524
      %v1526 = vpop.f32.mrb[0].mxu0
      %v1527 = vpop.f32.mrb[0].mxu0
      %v1528 = vadd.f32 0.0, %v1527
      %v1529 = vpop.f32.mrb[0].mxu0
      %1530 = vmatprep.mubr.bf16.mxu0 0
      %1531 = vmatmul.mubr.bf16.gmra.mrb[0].mxu0 %v1436
      %v1532 = vpop.f32.mrb[0].mxu0
      %v1533 = vadd.f32 0.0, %v1532
      %v1534 = vpop.f32.mrb[0].mxu0
      %v1535 = vpop.f32.mrb[0].mxu0
      %v1536 = vadd.f32 0.0, %v1535
      %v1537 = vpop.f32.mrb[0].mxu0
      %1538 = vdwg.mxu0
      %v1539 = vpack.c.bf16 %v1480, %v1477
      %v1540 = vpack.c.bf16 %v1488, %v1485
      %v1541 = vpack.c.bf16 %v1496, %v1493
      %v1542 = vpack.c.bf16 %v1504, %v1501
      %v1543 = vpack.c.bf16 %v1512, %v1509
      %v1544 = vpack.c.bf16 %v1520, %v1517
      %v1545 = vpack.c.bf16 %v1528, %v1525
      %v1546 = vpack.c.bf16 %v1536, %v1533
      %v1555 = vunpack.c.l.b16 %v1539
      %v1556 = vunpack.c.h.b16 %v1539
      %v1557 = vunpack.c.l.b16 %v1540
      %v1558 = vunpack.c.h.b16 %v1540
      %v1559 = vunpack.c.l.b16 %v1541
      %v1560 = vunpack.c.h.b16 %v1541
      %v1561 = vunpack.c.l.b16 %v1542
      %v1562 = vunpack.c.h.b16 %v1542
      %v1563 = vunpack.c.l.b16 %v1543
      %v1564 = vunpack.c.h.b16 %v1543
      %v1565 = vunpack.c.l.b16 %v1544
      %v1566 = vunpack.c.h.b16 %v1544
      %v1567 = vunpack.c.l.b16 %v1545
      %v1568 = vunpack.c.h.b16 %v1545
      %v1569 = vunpack.c.l.b16 %v1546
      %v1570 = vunpack.c.h.b16 %v1546
      %v1571 = vpack.c.b16 %v1555, %v1555
      %v1572 = vpack.c.b16 %v1556, %v1556
      %v1573 = vpack.c.b16 %v1557, %v1557
      %v1574 = vpack.c.b16 %v1558, %v1558
      %v1575 = vpack.c.b16 %v1559, %v1559
      %v1576 = vpack.c.b16 %v1560, %v1560
      %v1577 = vpack.c.b16 %v1561, %v1561
      %v1578 = vpack.c.b16 %v1562, %v1562
      %v1579 = vpack.c.b16 %v1563, %v1563
      %v1580 = vpack.c.b16 %v1564, %v1564
      %v1581 = vpack.c.b16 %v1565, %v1565
      %v1582 = vpack.c.b16 %v1566, %v1566
      %v1583 = vpack.c.b16 %v1567, %v1567
      %v1584 = vpack.c.b16 %v1568, %v1568
      %v1585 = vpack.c.b16 %v1569, %v1569
      %v1586 = vpack.c.b16 %v1570, %v1570
      %vm1603 = vcmask 60416
      %1604 = vst.msk [vmem:[%s207] sm:$0xf] %vm1603, %v1571
      %1605 = vst.msk [vmem:[%s207 + $0x4] sm:$0xf] %vm1603, %v1572
      %1606 = vst.msk [vmem:[%s207 + $0x8] sm:$0xf] %vm1603, %v1573
      %1607 = vst.msk [vmem:[%s207 + $0xc] sm:$0xf] %vm1603, %v1574
      %1608 = vst.msk [vmem:[%s207 + $0x10] sm:$0xf] %vm1603, %v1575
      %1609 = vst.msk [vmem:[%s207 + $0x14] sm:$0xf] %vm1603, %v1576
      %1610 = vst.msk [vmem:[%s207 + $0x18] sm:$0xf] %vm1603, %v1577
      %1611 = vst.msk [vmem:[%s207 + $0x1c] sm:$0xf] %vm1603, %v1578
      %1612 = vst.msk [vmem:[%s207 + $0x20] sm:$0xf] %vm1603, %v1579
      %1613 = vst.msk [vmem:[%s207 + $0x24] sm:$0xf] %vm1603, %v1580
      %1614 = vst.msk [vmem:[%s207 + $0x28] sm:$0xf] %vm1603, %v1581
      %1615 = vst.msk [vmem:[%s207 + $0x2c] sm:$0xf] %vm1603, %v1582
      %1616 = vst.msk [vmem:[%s207 + $0x30] sm:$0xf] %vm1603, %v1583
      %1617 = vst.msk [vmem:[%s207 + $0x34] sm:$0xf] %vm1603, %v1584
      %1618 = vst.msk [vmem:[%s207 + $0x38] sm:$0xf] %vm1603, %v1585
      %1619 = vst.msk [vmem:[%s207 + $0x3c] sm:$0xf] %vm1603, %v1586
      %vm1620 = vcmask 64512
      %v1621 = vsel %vm1620, %v1477, 0.0
      %v1622 = vsel %vm1620, %v1480, 0.0
      %v1623 = vadd.f32 %v1621, %v1622
      %v1624 = vsel %vm1620, %v1485, 0.0
      %v1625 = vadd.f32 %v1623, %v1624
      %v1626 = vsel %vm1620, %v1488, 0.0
      %v1627 = vadd.f32 %v1625, %v1626
      %v1628 = vsel %vm1620, %v1493, 0.0
      %v1629 = vadd.f32 %v1627, %v1628
      %v1630 = vsel %vm1620, %v1496, 0.0
      %v1631 = vadd.f32 %v1629, %v1630
      %v1632 = vsel %vm1620, %v1501, 0.0
      %v1633 = vadd.f32 %v1631, %v1632
      %v1634 = vsel %vm1620, %v1504, 0.0
      %v1635 = vadd.f32 %v1633, %v1634
      %v1636 = vsel %vm1620, %v1509, 0.0
      %v1637 = vadd.f32 %v1635, %v1636
      %v1638 = vsel %vm1620, %v1512, 0.0
      %v1639 = vadd.f32 %v1637, %v1638
      %v1640 = vsel %vm1620, %v1517, 0.0
      %v1641 = vadd.f32 %v1639, %v1640
      %v1642 = vsel %vm1620, %v1520, 0.0
      %v1643 = vadd.f32 %v1641, %v1642
      %v1644 = vsel %vm1620, %v1525, 0.0
      %v1645 = vadd.f32 %v1643, %v1644
      %v1646 = vsel %vm1620, %v1528, 0.0
      %v1647 = vadd.f32 %v1645, %v1646
      %v1648 = vsel %vm1620, %v1533, 0.0
      %v1649 = vadd.f32 %v1647, %v1648
      %v1650 = vsel %vm1620, %v1536, 0.0
      %v1651 = vadd.f32 %v1649, %v1650
      %v1652 = vrot.slane %v1651, 4
      %v1653 = vadd.f32 %v1651, %v1652
      %v1654 = vrot.slane %v1653, 2
      %v1655 = vadd.f32 %v1653, %v1654
      %v1656 = vrot.slane %v1655, 1
      %v1657 = vadd.f32 %v1655, %v1656
      %vm1658 = vcmask 57344
      %1659 = vst.msk [vmem:[%s216] sm:$0x1] %vm1658, %v1657
      %v1660 = vmul.f32 %v1477, %v1477
      %v1661 = vmul.f32 %v1480, %v1480
      %v1662 = vmul.f32 %v1485, %v1485
      %v1663 = vmul.f32 %v1488, %v1488
      %v1664 = vmul.f32 %v1493, %v1493
      %v1665 = vmul.f32 %v1496, %v1496
      %v1666 = vmul.f32 %v1501, %v1501
      %v1667 = vmul.f32 %v1504, %v1504
      %v1668 = vmul.f32 %v1509, %v1509
      %v1669 = vmul.f32 %v1512, %v1512
      %v1670 = vmul.f32 %v1517, %v1517
      %v1671 = vmul.f32 %v1520, %v1520
      %v1672 = vmul.f32 %v1525, %v1525
      %v1673 = vmul.f32 %v1528, %v1528
      %v1674 = vmul.f32 %v1533, %v1533
      %v1675 = vmul.f32 %v1536, %v1536
      %v1676 = vsel %vm1620, %v1660, 0.0
      %v1677 = vsel %vm1620, %v1661, 0.0
      %v1678 = vadd.f32 %v1676, %v1677
      %v1679 = vsel %vm1620, %v1662, 0.0
      %v1680 = vadd.f32 %v1678, %v1679
      %v1681 = vsel %vm1620, %v1663, 0.0
      %v1682 = vadd.f32 %v1680, %v1681
      %v1683 = vsel %vm1620, %v1664, 0.0
      %v1684 = vadd.f32 %v1682, %v1683
      %v1685 = vsel %vm1620, %v1665, 0.0
      %v1686 = vadd.f32 %v1684, %v1685
      %v1687 = vsel %vm1620, %v1666, 0.0
      %v1688 = vadd.f32 %v1686, %v1687
      %v1689 = vsel %vm1620, %v1667, 0.0
      %v1690 = vadd.f32 %v1688, %v1689
      %v1691 = vsel %vm1620, %v1668, 0.0
      %v1692 = vadd.f32 %v1690, %v1691
      %v1693 = vsel %vm1620, %v1669, 0.0
      %v1694 = vadd.f32 %v1692, %v1693
      %v1695 = vsel %vm1620, %v1670, 0.0
      %v1696 = vadd.f32 %v1694, %v1695
      %v1697 = vsel %vm1620, %v1671, 0.0
      %v1698 = vadd.f32 %v1696, %v1697
      %v1699 = vsel %vm1620, %v1672, 0.0
      %v1700 = vadd.f32 %v1698, %v1699
      %v1701 = vsel %vm1620, %v1673, 0.0
      %v1702 = vadd.f32 %v1700, %v1701
      %v1703 = vsel %vm1620, %v1674, 0.0
      %v1704 = vadd.f32 %v1702, %v1703
      %v1705 = vsel %vm1620, %v1675, 0.0
      %v1706 = vadd.f32 %v1704, %v1705
      %v1707 = vrot.slane %v1706, 4
      %v1708 = vadd.f32 %v1706, %v1707
      %v1709 = vrot.slane %v1708, 2
      %v1710 = vadd.f32 %v1708, %v1709
      %v1711 = vrot.slane %v1710, 1
      %v1712 = vadd.f32 %v1710, %v1711
      %1713 = vst.msk [vmem:[%s216 + $0x1] sm:$0x1] %vm1658, %v1712
      %s1714 = smul.u32 8, %s20
      %p1715 = scmp.lt.s32.totalorder %s19, 1
      %s1716 = scalar_select %p1715, %s19, 1
      %p1717 = scmp.lt.s32.totalorder %s1714, 15
      %s1718 = scalar_select %p1717, %s1714, 15
      %s1719 = smul.addr %s1718, 2
      %s1720 = smul.addr %s1716, 32
      %s1721 = sadd.s32 %s1719, %s1720
      %s1722 = smul.addr %s1721, 4
      %s1723 = scalar_lea.vmem %s2, %s1722
      %p1724 = scmp.lt.s32.totalorder %s19, 1
      %s1725 = scalar_select %p1724, %s19, 1
      %p1726 = scmp.lt.s32.totalorder %s20, 1
      %s1727 = scalar_select %p1726, %s20, 1
      %s1728 = smul.addr %s1725, 2
      %s1729 = sadd.s32 %s1727, %s1728
      %s1730 = smul.addr %s1729, 2
      %s1731 = scalar_lea.vmem %s3, %s1730
      // Predicated region
      $region29: #{inception_forward.10} parent=27 // pred_check
        %p1732 = pneg %p94
      $region30: #{inception_forward.10} parent=27 // pred_check_branch
        %1734 = sbr.rel (%p1732) target = $region32
      $region31: #{inception_forward.10} parent=27 // pred_region
        %s1735 = smul.u32 8, %s20
      $region32: #{inception_forward.10} parent=27 // pred_fallthru
        _
      // Predicated region
      $region33: #{inception_forward.10} parent=27 // pred_check
        %p1736 = pneg %p122
      $region34: #{inception_forward.10} parent=27 // pred_check_branch
        %1738 = sbr.rel (%p1736) target = $region36
      $region35: #{inception_forward.10} parent=27 // pred_region
        _
      $region36: #{inception_forward.10} parent=27 // pred_fallthru
        _
    $region28: #{inception_forward.10} parent=5 // pred_fallthru
      _
    %p1739 = scmp.le.s32.totalorder 2, %s10
    // Predicated region
    $region37: #{inception_forward.10} parent=5 // pred_check
      %p1740 = pneg %p1739
    $region38: #{inception_forward.10} parent=5 // pred_check_branch
      %1742 = sbr.rel (%p1740) target = $region40
    $region39: #{inception_forward.10} parent=5 // pred_region
      %s1743 = ssub.s32 %s10, 2
      // Predicated region
      $region41: #{inception_forward.10} parent=39 // pred_check
        %p1744 = pneg %p100
      $region42: #{inception_forward.10} parent=39 // pred_check_branch
        %1746 = sbr.rel (%p1744) target = $region44
      $region43: #{inception_forward.10} parent=39 // pred_region
        %s1747 = smul.u32 8, %s22
        %p1748 = scmp.lt.s32.totalorder %s21, 1
        %s1749 = scalar_select %p1748, %s21, 1
        %p1750 = scmp.lt.s32.totalorder %s1747, 15
        %s1751 = scalar_select %p1750, %s1747, 15
        %s1752 = smul.addr %s1751, 2
        %s1753 = smul.addr %s1749, 32
        %s1754 = sadd.s32 %s1752, %s1753
        %s1755 = smul.addr %s1754, 4
        %s1756 = scalar_lea.vmem %s2, %s1755
      $region44: #{inception_forward.10} parent=39 // pred_fallthru
        _
      // Predicated region
      $region45: #{inception_forward.10} parent=39 // pred_check
        %p1757 = pneg %p128
      $region46: #{inception_forward.10} parent=39 // pred_check_branch
        %1759 = sbr.rel (%p1757) target = $region48
      $region47: #{inception_forward.10} parent=39 // pred_region
        %p1760 = scmp.lt.s32.totalorder %s21, 1
        %s1761 = scalar_select %p1760, %s21, 1
        %p1762 = scmp.lt.s32.totalorder %s22, 1
        %s1763 = scalar_select %p1762, %s22, 1
        %s1764 = smul.addr %s1761, 2
        %s1765 = sadd.s32 %s1763, %s1764
        %s1766 = smul.addr %s1765, 2
        %s1767 = scalar_lea.vmem %s3, %s1766
      $region48: #{inception_forward.10} parent=39 // pred_fallthru
        _
    $region40: #{inception_forward.10} parent=5 // pred_fallthru
      _
  $region6: #{inception_forward.10} parent=0 // loop_footer
    %s14 = sadd.s32 1, %s10
  $region7: #{inception_forward.10} parent=0 // loop_footer_branch
    %9 = sbr.rel target = $region3
  $region8: #{inception_forward.10} parent=0 // loop_exit
    _

// kernel: inception_forward.9
$region0: #{inception_forward.9}
  #allocation0 [shape = 'u32[]', space=smem, size = 0x4, offset = 0x4, fixed_abs, tag = 'smem constant byte address 0x4 - core index']
  #allocation1 [shape = 'u32[144,128]{1,0:T(1,128)}', space=vmem, size = 0x12000, scoped, tag = 'internal scratch']
  %s0 = inlined_call_operand.vmem [shape: bf16[2,20,20,4], index: 0, kind: input, shape index: {}]
  %s1 = inlined_call_operand.vmem [shape: bf16[5,20,8], index: 1, kind: input, shape index: {}]
  %s2 = inlined_call_operand.vmem [shape: bf16[2,16,16,8], index: 2, kind: output, shape index: {0}]
  %s3 = inlined_call_operand.vmem [shape: f32[2,2,2,8], index: 3, kind: output, shape index: {1}]
  %4 = xla_tuple %s2, %s3
  %s5 = sld [smem:[#allocation0]]
  $region49: #{inception_forward.9} parent=0
    _
  %s7 = ssub.s32 1, %s5
  %s8 = scalar_select 0, %s7, %s5
  loop: start=0, step=1, limit=6
  $region2: #{inception_forward.9} parent=0 // loop_pre_header
    _
  $region3: #{inception_forward.9} parent=0 // loop_header
    %s10 = sphi 0, %s14
    %p11 = scmp.ge.s32.totalorder %s10, 6
    %s17 = sphi 0, %s29
    %s18 = sphi 0, %s25
    %s19 = sphi 0, %s17
    %s20 = sphi 0, %s18
    %s21 = sphi 0, %s19
    %s22 = sphi 0, %s20
    %s32 = sphi 0, %s34
    %s35 = sphi 0, %s32
    %s36 = sphi 0, %s35
    %s52 = sphi 0, %s36
    %s56 = sphi 0, %s56
    %s58 = sphi 0, %s56
    %s59 = sphi 0, %s58
    %s73 = sphi 0, %s59
    %s81 = sphi 0, %s83
    %s84 = sphi 0, %s81
    %s85 = sphi 0, %s84
    %s101 = sphi 0, %s85
    %s109 = sphi 0, %s111
    %s112 = sphi 0, %s109
    %s113 = sphi 0, %s112
    %s129 = sphi 0, %s113
  $region4: #{inception_forward.9} parent=0 // loop_header_branch
    %13 = sbr.rel (%p11) target = $region8
  $region5: #{inception_forward.9} parent=0 // loop_body
    %s15 = ssub.s32 %s10, 1
    %s16 = ssub.s32 %s10, 2
    %s23 = sadd.s32 1, %s18
    %p24 = scmp.ge.s32.totalorder %s23, 2
    %s25 = scalar_select %p24, 0, %s23
    %s26 = sadd.s32 1, %s17
    %s27 = scalar_select %p24, %s26, %s17
    %p28 = scmp.ge.s32.totalorder %s27, 2
    %s29 = scalar_select %p28, 0, %s27
    %s30 = ssub.s32 %s17, %s29
    %p31 = scmp.eq.s32.totalorder %s30, 0
    %s33 = sadd.s32 %s32, 1
    %s34 = scalar_select %p31, %s32, %s33
    %p37 = pneg %p31
    %p38 = scmp.eq.s32.totalorder %s10, 3
    %p39 = por %p37, %p38
    %p40 = scmp.ne.s32.totalorder %s32, %s35
    %p41 = scmp.eq.s32.totalorder %s10, 0
    %p42 = por %p40, %p41
    %p43 = scmp.ne.s32.totalorder %s32, %s35
    %p44 = scmp.eq.s32.totalorder %s15, 3
    %p45 = por %p43, %p44
    %p46 = scmp.ne.s32.totalorder %s35, %s36
    %p47 = scmp.eq.s32.totalorder %s15, 0
    %p48 = por %p46, %p47
    %p49 = scmp.ne.s32.totalorder %s35, %s36
    %p50 = scmp.eq.s32.totalorder %s16, 3
    %p51 = por %p49, %p50
    %p53 = scmp.ne.s32.totalorder %s36, %s52
    %p54 = scmp.eq.s32.totalorder %s16, 0
    %p55 = por %p53, %p54
    %s57 = sadd.s32 %s56, 1
    %p60 = scmp.eq.s32.totalorder %s10, 3
    %p61 = scmp.ne.s32.totalorder %s56, %s58
    %p62 = scmp.eq.s32.totalorder %s10, 0
    %p63 = por %p61, %p62
    %p64 = scmp.ne.s32.totalorder %s56, %s58
    %p65 = scmp.eq.s32.totalorder %s15, 3
    %p66 = por %p64, %p65
    %p67 = scmp.ne.s32.totalorder %s58, %s59
    %p68 = scmp.eq.s32.totalorder %s15, 0
    %p69 = por %p67, %p68
    %p70 = scmp.ne.s32.totalorder %s58, %s59
    %p71 = scmp.eq.s32.totalorder %s16, 3
    %p72 = por %p70, %p71
    %p74 = scmp.ne.s32.totalorder %s59, %s73
    %p75 = scmp.eq.s32.totalorder %s16, 0
    %p76 = por %p74, %p75
    %s77 = ssub.s32 %s17, %s29
    %s78 = ssub.s32 %s18, %s25
    %s79 = sor.u32 %s77, %s78
    %p80 = scmp.eq.s32.totalorder %s79, 0
    %s82 = sadd.s32 %s81, 1
    %s83 = scalar_select %p80, %s81, %s82
    %p86 = pneg %p80
    %p87 = scmp.eq.s32.totalorder %s10, 3
    %p88 = por %p86, %p87
    %p89 = scmp.ne.s32.totalorder %s81, %s84
    %p90 = scmp.eq.s32.totalorder %s10, 0
    %p91 = por %p89, %p90
    %p92 = scmp.ne.s32.totalorder %s81, %s84
    %p93 = scmp.eq.s32.totalorder %s15, 3
    %p94 = por %p92, %p93
    %p95 = scmp.ne.s32.totalorder %s84, %s85
    %p96 = scmp.eq.s32.totalorder %s15, 0
    %p97 = por %p95, %p96
    %p98 = scmp.ne.s32.totalorder %s84, %s85
    %p99 = scmp.eq.s32.totalorder %s16, 3
    %p100 = por %p98, %p99
    %p102 = scmp.ne.s32.totalorder %s85, %s101
    %p103 = scmp.eq.s32.totalorder %s16, 0
    %p104 = por %p102, %p103
    %s105 = ssub.s32 %s17, %s29
    %s106 = ssub.s32 %s18, %s25
    %s107 = sor.u32 %s105, %s106
    %p108 = scmp.eq.s32.totalorder %s107, 0
    %s110 = sadd.s32 %s109, 1
    %s111 = scalar_select %p108, %s109, %s110
    %p114 = pneg %p108
    %p115 = scmp.eq.s32.totalorder %s10, 3
    %p116 = por %p114, %p115
    %p117 = scmp.ne.s32.totalorder %s109, %s112
    %p118 = scmp.eq.s32.totalorder %s10, 0
    %p119 = por %p117, %p118
    %p120 = scmp.ne.s32.totalorder %s109, %s112
    %p121 = scmp.eq.s32.totalorder %s15, 3
    %p122 = por %p120, %p121
    %p123 = scmp.ne.s32.totalorder %s112, %s113
    %p124 = scmp.eq.s32.totalorder %s15, 0
    %p125 = por %p123, %p124
    %p126 = scmp.ne.s32.totalorder %s112, %s113
    %p127 = scmp.eq.s32.totalorder %s16, 3
    %p128 = por %p126, %p127
    %p130 = scmp.ne.s32.totalorder %s113, %s129
    %p131 = scmp.eq.s32.totalorder %s16, 0
    %p132 = por %p130, %p131
    %p133 = scmp.le.s32.totalorder 1, %s10
    %p134 = scmp.lt.s32.totalorder %s10, 5
    %p135 = pnand %p133, %p134
    %p136 = pneg %p135
    // Predicated region
    $region9: #{inception_forward.9} parent=5 // pred_check
      _
    $region10: #{inception_forward.9} parent=5 // pred_check_branch
      %138 = sbr.rel (%p135) target = $region12
    $region11: #{inception_forward.9} parent=5 // pred_region
      %s139 = ssub.s32 %s10, 1
      // Predicated region
      $region13: #{inception_forward.9} parent=11 // pred_check
        %p140 = pneg %p69
      $region14: #{inception_forward.9} parent=11 // pred_check_branch
        %142 = sbr.rel (%p140) target = $region16
      $region15: #{inception_forward.9} parent=11 // pred_region
        _
      $region16: #{inception_forward.9} parent=11 // pred_fallthru
        _
    $region12: #{inception_forward.9} parent=5 // pred_fallthru
      _
    %p143 = scmp.lt.s32.totalorder %s10, 4
    // Predicated region
    $region17: #{inception_forward.9} parent=5 // pred_check
      %p144 = pneg %p143
    $region18: #{inception_forward.9} parent=5 // pred_check_branch
      %146 = sbr.rel (%p144) target = $region20
    $region19: #{inception_forward.9} parent=5 // pred_region
      // Predicated region
      $region21: #{inception_forward.9} parent=19 // pred_check
        %p147 = pneg %p42
      $region22: #{inception_forward.9} parent=19 // pred_check_branch
        %149 = sbr.rel (%p147) target = $region24
      $region23: #{inception_forward.9} parent=19 // pred_region
        %p150 = scmp.lt.s32.totalorder %s17, 1
        %s151 = scalar_select %p150, %s17, 1
        %s152 = smul.addr %s151, 60
        %s153 = smul.addr %s152, 4
        %s154 = scalar_lea.vmem %s0, %s153
      $region24: #{inception_forward.9} parent=19 // pred_fallthru
        _
    $region20: #{inception_forward.9} parent=5 // pred_fallthru
      _
    %p155 = scmp.le.s32.totalorder 1, %s10
    %p156 = scmp.lt.s32.totalorder %s10, 5
    %p157 = pnand %p155, %p156
    %p158 = pneg %p157
    // Predicated region
    $region25: #{inception_forward.9} parent=5 // pred_check
      _
    $region26: #{inception_forward.9} parent=5 // pred_check_branch
      %160 = sbr.rel (%p157) target = $region28
    $region27: #{inception_forward.9} parent=5 // pred_region
      %s161 = ssub.s32 %s10, 1
      %p162 = scmp.lt.s32.totalorder %s19, 1
      %s163 = scalar_select %p162, %s19, 1
      %s164 = smul.addr %s163, 60
      %s165 = smul.addr %s164, 4
      %s166 = scalar_lea.vmem %s0, %s165
      %p167 = pneg %p48
      %p168 = pneg %p45
      %p169 = pneg %p69
      %p170 = pneg %p66
      %p171 = pneg %p97
      %p172 = pneg %p94
      %s173 = smul.u32 8, %s20
      %p174 = scmp.lt.s32.totalorder %s19, 1
      %s175 = scalar_select %p174, %s19, 1
      %p176 = scmp.lt.s32.totalorder %s173, 15
      %s177 = scalar_select %p176, %s173, 15
      %s178 = smul.addr %s177, 2
      %s179 = smul.addr %s175, 32
      %s180 = sadd.s32 %s178, %s179
      %s181 = smul.addr %s180, 4
      %s182 = scalar_lea.vmem %s2, %s181
      %p183 = pneg %p125
      %p184 = pneg %p122
      %p185 = scmp.lt.s32.totalorder %s19, 1
      %s186 = scalar_select %p185, %s19, 1
      %p187 = scmp.lt.s32.totalorder %s20, 1
      %s188 = scalar_select %p187, %s20, 1
      %s189 = smul.addr %s186, 2
      %s190 = sadd.s32 %s188, %s189
      %s191 = smul.addr %s190, 2
      %s192 = scalar_lea.vmem %s3, %s191
      %p193 = scmp.lt.s32.totalorder %s19, 1
      %s194 = scalar_select %p193, %s19, 1
      %s195 = smul.addr %s194, 60
      %s196 = smul.addr %s195, 4
      %s197 = scalar_lea.vmem %s0, %s196
      %s198 = smul.u32 8, %s20
      %p199 = scmp.lt.s32.totalorder %s19, 1
      %s200 = scalar_select %p199, %s19, 1
      %p201 = scmp.lt.s32.totalorder %s198, 15
      %s202 = scalar_select %p201, %s198, 15
      %s203 = smul.addr %s202, 2
      %s204 = smul.addr %s200, 32
      %s205 = sadd.s32 %s203, %s204
      %s206 = smul.addr %s205, 4
      %s207 = scalar_lea.vmem %s2, %s206
      %s208 = smul.u32 8, %s20
      %p209 = scmp.lt.s32.totalorder %s19, 1
      %s210 = scalar_select %p209, %s19, 1
      %p211 = scmp.lt.s32.totalorder %s20, 1
      %s212 = scalar_select %p211, %s20, 1
      %s213 = smul.addr %s210, 2
      %s214 = sadd.s32 %s212, %s213
      %s215 = smul.addr %s214, 2
      %s216 = scalar_lea.vmem %s3, %s215
      %s218 = smul.u32 %s20, 8
      %s219 = smul.u32 %s218, 3
      %s220 = smul.addr %s219, 4
      %s221 = scalar_lea.vmem %s197, %s220
      %v222 = vld [vmem:[%s221] sm:$0xf]
      %v223 = vld [vmem:[%s221 + $0x4] sm:$0xf]
      %v224 = vld [vmem:[%s221 + $0xc] sm:$0xf]
      %v225 = vld [vmem:[%s221 + $0x10] sm:$0xf]
      %v226 = vld [vmem:[%s221 + $0x18] sm:$0xf]
      %v227 = vld [vmem:[%s221 + $0x1c] sm:$0xf]
      %v228 = vld [vmem:[%s221 + $0x24] sm:$0xf]
      %v229 = vld [vmem:[%s221 + $0x28] sm:$0xf]
      %v230 = vld [vmem:[%s221 + $0x30] sm:$0xf]
      %v231 = vld [vmem:[%s221 + $0x34] sm:$0xf]
      %v232 = vld [vmem:[%s221 + $0x3c] sm:$0xf]
      %v233 = vld [vmem:[%s221 + $0x40] sm:$0xf]
      %v234 = vld [vmem:[%s221 + $0x48] sm:$0xf]
      %v235 = vld [vmem:[%s221 + $0x4c] sm:$0xf]
      %v236 = vld [vmem:[%s221 + $0x54] sm:$0xf]
      %v237 = vld [vmem:[%s221 + $0x58] sm:$0xf]
      %v238 = vld [vmem:[%s221 + $0x8] sm:$0x1]
      %v239 = vld [vmem:[%s221 + $0x14] sm:$0x1]
      %v240 = vld [vmem:[%s221 + $0x20] sm:$0x1]
      %v241 = vld [vmem:[%s221 + $0x2c] sm:$0x1]
      %v242 = vld [vmem:[%s221 + $0x38] sm:$0x1]
      %v243 = vld [vmem:[%s221 + $0x44] sm:$0x1]
      %v244 = vld [vmem:[%s221 + $0x50] sm:$0x1]
      %v245 = vld [vmem:[%s221 + $0x5c] sm:$0x1]
      %v246 = vld [vmem:[%s221] sm:$0xe]
      %v247 = vld [vmem:[%s221 + $0xc] sm:$0xe]
      %v248 = vld [vmem:[%s221 + $0x18] sm:$0xe]
      %v249 = vld [vmem:[%s221 + $0x24] sm:$0xe]
      %v250 = vld [vmem:[%s221 + $0x30] sm:$0xe]
      %v251 = vld [vmem:[%s221 + $0x3c] sm:$0xe]
      %v252 = vld [vmem:[%s221 + $0x48] sm:$0xe]
      %v253 = vld [vmem:[%s221 + $0x54] sm:$0xe]
      %v254 = vld [vmem:[%s221 + $0x8] sm:$0x3]
      %v255 = vld [vmem:[%s221 + $0x14] sm:$0x3]
      %v256 = vld [vmem:[%s221 + $0x20] sm:$0x3]
      %v257 = vld [vmem:[%s221 + $0x2c] sm:$0x3]
      %v258 = vld [vmem:[%s221 + $0x38] sm:$0x3]
      %v259 = vld [vmem:[%s221 + $0x44] sm:$0x3]
      %v260 = vld [vmem:[%s221 + $0x50] sm:$0x3]
      %v261 = vld [vmem:[%s221 + $0x5c] sm:$0x3]
      %v262 = vld [vmem:[%s221] sm:$0xc]
      %v263 = vld [vmem:[%s221 + $0xc] sm:$0xc]
      %v264 = vld [vmem:[%s221 + $0x18] sm:$0xc]
      %v265 = vld [vmem:[%s221 + $0x24] sm:$0xc]
      %v266 = vld [vmem:[%s221 + $0x30] sm:$0xc]
      %v267 = vld [vmem:[%s221 + $0x3c] sm:$0xc]
      %v268 = vld [vmem:[%s221 + $0x48] sm:$0xc]
      %v269 = vld [vmem:[%s221 + $0x54] sm:$0xc]
      %v286 = vunpack.c.l.b16 %v222
      %v287 = vunpack.c.l.b16 %v223
      %v288 = vunpack.c.l.b16 %v224
      %v289 = vunpack.c.l.b16 %v225
      %v290 = vunpack.c.l.b16 %v226
      %v291 = vunpack.c.l.b16 %v227
      %v292 = vunpack.c.l.b16 %v228
      %v293 = vunpack.c.l.b16 %v229
      %v294 = vunpack.c.l.b16 %v230
      %v295 = vunpack.c.l.b16 %v231
      %v296 = vunpack.c.l.b16 %v232
      %v297 = vunpack.c.l.b16 %v233
      %v298 = vunpack.c.l.b16 %v234
      %v299 = vunpack.c.l.b16 %v235
      %v300 = vunpack.c.l.b16 %v236
      %v301 = vunpack.c.l.b16 %v237
      %v302 = vpack.c.b16 %v287, %v286
      %v303 = vpack.c.b16 %v289, %v288
      %v304 = vpack.c.b16 %v291, %v290
      %v305 = vpack.c.b16 %v293, %v292
      %v306 = vpack.c.b16 %v295, %v294
      %v307 = vpack.c.b16 %v297, %v296
      %v308 = vpack.c.b16 %v299, %v298
      %v309 = vpack.c.b16 %v301, %v300
      %v318 = vunpack.c.l.b16 %v238
      %v319 = vunpack.c.l.b16 %v239
      %v320 = vunpack.c.l.b16 %v240
      %v321 = vunpack.c.l.b16 %v241
      %v322 = vunpack.c.l.b16 %v242
      %v323 = vunpack.c.l.b16 %v243
      %v324 = vunpack.c.l.b16 %v244
      %v325 = vunpack.c.l.b16 %v245
      %v326 = vpack.c.b16 %v318, %v318
      %v327 = vpack.c.b16 %v319, %v319
      %v328 = vpack.c.b16 %v320, %v320
      %v329 = vpack.c.b16 %v321, %v321
      %v330 = vpack.c.b16 %v322, %v322
      %v331 = vpack.c.b16 %v323, %v323
      %v332 = vpack.c.b16 %v324, %v324
      %v333 = vpack.c.b16 %v325, %v325
      %vm334 = vsmask.f32 7424
      %v336 = vshrl.u32 %v302, 16
      %v338 = vshll.u32 %v302, 16
      %v340 = vrot.slane %v338, 1
      %v341 = vor.u32 %v336, %v340
      %v343 = vshll.u32 %v326, 16
      %v345 = vrot.slane %v343, 1
      %v346 = vsel %vm334, %v341, %v345
      %v348 = vshrl.u32 %v303, 16
      %v350 = vshll.u32 %v303, 16
      %v352 = vrot.slane %v350, 1
      %v353 = vor.u32 %v348, %v352
      %v355 = vshll.u32 %v327, 16
      %v357 = vrot.slane %v355, 1
      %v358 = vsel %vm334, %v353, %v357
      %v360 = vshrl.u32 %v304, 16
      %v362 = vshll.u32 %v304, 16
      %v364 = vrot.slane %v362, 1
      %v365 = vor.u32 %v360, %v364
      %v367 = vshll.u32 %v328, 16
      %v369 = vrot.slane %v367, 1
      %v370 = vsel %vm334, %v365, %v369
      %v372 = vshrl.u32 %v305, 16
      %v374 = vshll.u32 %v305, 16
      %v376 = vrot.slane %v374, 1
      %v377 = vor.u32 %v372, %v376
      %v379 = vshll.u32 %v329, 16
      %v381 = vrot.slane %v379, 1
      %v382 = vsel %vm334, %v377, %v381
      %v384 = vshrl.u32 %v306, 16
      %v386 = vshll.u32 %v306, 16
      %v388 = vrot.slane %v386, 1
      %v389 = vor.u32 %v384, %v388
      %v391 = vshll.u32 %v330, 16
      %v393 = vrot.slane %v391, 1
      %v394 = vsel %vm334, %v389, %v393
      %v396 = vshrl.u32 %v307, 16
      %v398 = vshll.u32 %v307, 16
      %v400 = vrot.slane %v398, 1
      %v401 = vor.u32 %v396, %v400
      %v403 = vshll.u32 %v331, 16
      %v405 = vrot.slane %v403, 1
      %v406 = vsel %vm334, %v401, %v405
      %v408 = vshrl.u32 %v308, 16
      %v410 = vshll.u32 %v308, 16
      %v412 = vrot.slane %v410, 1
      %v413 = vor.u32 %v408, %v412
      %v415 = vshll.u32 %v332, 16
      %v417 = vrot.slane %v415, 1
      %v418 = vsel %vm334, %v413, %v417
      %v420 = vshrl.u32 %v309, 16
      %v422 = vshll.u32 %v309, 16
      %v424 = vrot.slane %v422, 1
      %v425 = vor.u32 %v420, %v424
      %v427 = vshll.u32 %v333, 16
      %v429 = vrot.slane %v427, 1
      %v430 = vsel %vm334, %v425, %v429
      %431 = vrot.lane.b32.xlu0 %v346, 4
      %v432 = vpop.permute.xlu0 %431
      %433 = vrot.lane.b32.xlu0 %v358, 4
      %v434 = vpop.permute.xlu0 %433
      %435 = vrot.lane.b32.xlu0 %v370, 4
      %v436 = vpop.permute.xlu0 %435
      %437 = vrot.lane.b32.xlu0 %v382, 4
      %v438 = vpop.permute.xlu0 %437
      %439 = vrot.lane.b32.xlu0 %v394, 4
      %v440 = vpop.permute.xlu0 %439
      %441 = vrot.lane.b32.xlu0 %v406, 4
      %v442 = vpop.permute.xlu0 %441
      %443 = vrot.lane.b32.xlu0 %v418, 4
      %v444 = vpop.permute.xlu0 %443
      %445 = vrot.lane.b32.xlu0 %v430, 4
      %v446 = vpop.permute.xlu0 %445
      %v455 = vunpack.c.l.b16 %v246
      %v456 = vunpack.c.l.b16 %v247
      %v457 = vunpack.c.l.b16 %v248
      %v458 = vunpack.c.l.b16 %v249
      %v459 = vunpack.c.l.b16 %v250
      %v460 = vunpack.c.l.b16 %v251
      %v461 = vunpack.c.l.b16 %v252
      %v462 = vunpack.c.l.b16 %v253
      %v463 = vpack.c.b16 %v287, %v455
      %v464 = vpack.c.b16 %v289, %v456
      %v465 = vpack.c.b16 %v291, %v457
      %v466 = vpack.c.b16 %v293, %v458
      %v467 = vpack.c.b16 %v295, %v459
      %v468 = vpack.c.b16 %v297, %v460
      %v469 = vpack.c.b16 %v299, %v461
      %v470 = vpack.c.b16 %v301, %v462
      %vm471 = vcmask 1046528
      %v472 = vrot.slane %v463, 1
      %v473 = vrot.slane %v326, 1
      %v474 = vsel %vm471, %v472, %v473
      %v475 = vrot.slane %v464, 1
      %v476 = vrot.slane %v327, 1
      %v477 = vsel %vm471, %v475, %v476
      %v478 = vrot.slane %v465, 1
      %v479 = vrot.slane %v328, 1
      %v480 = vsel %vm471, %v478, %v479
      %v481 = vrot.slane %v466, 1
      %v482 = vrot.slane %v329, 1
      %v483 = vsel %vm471, %v481, %v482
      %v484 = vrot.slane %v467, 1
      %v485 = vrot.slane %v330, 1
      %v486 = vsel %vm471, %v484, %v485
      %v487 = vrot.slane %v468, 1
      %v488 = vrot.slane %v331, 1
      %v489 = vsel %vm471, %v487, %v488
      %v490 = vrot.slane %v469, 1
      %v491 = vrot.slane %v332, 1
      %v492 = vsel %vm471, %v490, %v491
      %v493 = vrot.slane %v470, 1
      %v494 = vrot.slane %v333, 1
      %v495 = vsel %vm471, %v493, %v494
      %496 = vrot.lane.b32.xlu0 %v474, 8
      %v497 = vpop.permute.xlu0 %496
      %498 = vrot.lane.b32.xlu0 %v477, 8
      %v499 = vpop.permute.xlu0 %498
      %500 = vrot.lane.b32.xlu0 %v480, 8
      %v501 = vpop.permute.xlu0 %500
      %502 = vrot.lane.b32.xlu0 %v483, 8
      %v503 = vpop.permute.xlu0 %502
      %504 = vrot.lane.b32.xlu0 %v486, 8
      %v505 = vpop.permute.xlu0 %504
      %506 = vrot.lane.b32.xlu0 %v489, 8
      %v507 = vpop.permute.xlu0 %506
      %508 = vrot.lane.b32.xlu0 %v492, 8
      %v509 = vpop.permute.xlu0 %508
      %510 = vrot.lane.b32.xlu0 %v495, 8
      %v511 = vpop.permute.xlu0 %510
      %v520 = vunpack.c.l.b16 %v254
      %v521 = vunpack.c.l.b16 %v255
      %v522 = vunpack.c.l.b16 %v256
      %v523 = vunpack.c.l.b16 %v257
      %v524 = vunpack.c.l.b16 %v258
      %v525 = vunpack.c.l.b16 %v259
      %v526 = vunpack.c.l.b16 %v260
      %v527 = vunpack.c.l.b16 %v261
      %v528 = vpack.c.b16 %v520, %v520
      %v529 = vpack.c.b16 %v521, %v521
      %v530 = vpack.c.b16 %v522, %v522
      %v531 = vpack.c.b16 %v523, %v523
      %v532 = vpack.c.b16 %v524, %v524
      %v533 = vpack.c.b16 %v525, %v525
      %v534 = vpack.c.b16 %v526, %v526
      %v535 = vpack.c.b16 %v527, %v527
      %vm536 = vsmask.f32 6400
      %v538 = vshrl.u32 %v463, 16
      %v540 = vrot.slane %v538, 1
      %v541 = vshll.u32 %v463, 16
      %v543 = vrot.slane %v541, 2
      %v544 = vor.u32 %v540, %v543
      %v546 = vshrl.u32 %v528, 16
      %v548 = vrot.slane %v546, 1
      %v549 = vshll.u32 %v528, 16
      %v551 = vrot.slane %v549, 2
      %v552 = vor.u32 %v548, %v551
      %v553 = vsel %vm536, %v544, %v552
      %v555 = vshrl.u32 %v464, 16
      %v557 = vrot.slane %v555, 1
      %v558 = vshll.u32 %v464, 16
      %v560 = vrot.slane %v558, 2
      %v561 = vor.u32 %v557, %v560
      %v563 = vshrl.u32 %v529, 16
      %v565 = vrot.slane %v563, 1
      %v566 = vshll.u32 %v529, 16
      %v568 = vrot.slane %v566, 2
      %v569 = vor.u32 %v565, %v568
      %v570 = vsel %vm536, %v561, %v569
      %v572 = vshrl.u32 %v465, 16
      %v574 = vrot.slane %v572, 1
      %v575 = vshll.u32 %v465, 16
      %v577 = vrot.slane %v575, 2
      %v578 = vor.u32 %v574, %v577
      %v580 = vshrl.u32 %v530, 16
      %v582 = vrot.slane %v580, 1
      %v583 = vshll.u32 %v530, 16
      %v585 = vrot.slane %v583, 2
      %v586 = vor.u32 %v582, %v585
      %v587 = vsel %vm536, %v578, %v586
      %v589 = vshrl.u32 %v466, 16
      %v591 = vrot.slane %v589, 1
      %v592 = vshll.u32 %v466, 16
      %v594 = vrot.slane %v592, 2
      %v595 = vor.u32 %v591, %v594
      %v597 = vshrl.u32 %v531, 16
      %v599 = vrot.slane %v597, 1
      %v600 = vshll.u32 %v531, 16
      %v602 = vrot.slane %v600, 2
      %v603 = vor.u32 %v599, %v602
      %v604 = vsel %vm536, %v595, %v603
      %v606 = vshrl.u32 %v467, 16
      %v608 = vrot.slane %v606, 1
      %v609 = vshll.u32 %v467, 16
      %v611 = vrot.slane %v609, 2
      %v612 = vor.u32 %v608, %v611
      %v614 = vshrl.u32 %v532, 16
      %v616 = vrot.slane %v614, 1
      %v617 = vshll.u32 %v532, 16
      %v619 = vrot.slane %v617, 2
      %v620 = vor.u32 %v616, %v619
      %v621 = vsel %vm536, %v612, %v620
      %v623 = vshrl.u32 %v468, 16
      %v625 = vrot.slane %v623, 1
      %v626 = vshll.u32 %v468, 16
      %v628 = vrot.slane %v626, 2
      %v629 = vor.u32 %v625, %v628
      %v631 = vshrl.u32 %v533, 16
      %v633 = vrot.slane %v631, 1
      %v634 = vshll.u32 %v533, 16
      %v636 = vrot.slane %v634, 2
      %v637 = vor.u32 %v633, %v636
      %v638 = vsel %vm536, %v629, %v637
      %v640 = vshrl.u32 %v469, 16
      %v642 = vrot.slane %v640, 1
      %v643 = vshll.u32 %v469, 16
      %v645 = vrot.slane %v643, 2
      %v646 = vor.u32 %v642, %v645
      %v648 = vshrl.u32 %v534, 16
      %v650 = vrot.slane %v648, 1
      %v651 = vshll.u32 %v534, 16
      %v653 = vrot.slane %v651, 2
      %v654 = vor.u32 %v650, %v653
      %v655 = vsel %vm536, %v646, %v654
      %v657 = vshrl.u32 %v470, 16
      %v659 = vrot.slane %v657, 1
      %v660 = vshll.u32 %v470, 16
      %v662 = vrot.slane %v660, 2
      %v663 = vor.u32 %v659, %v662
      %v665 = vshrl.u32 %v535, 16
      %v667 = vrot.slane %v665, 1
      %v668 = vshll.u32 %v535, 16
      %v670 = vrot.slane %v668, 2
      %v671 = vor.u32 %v667, %v670
      %v672 = vsel %vm536, %v663, %v671
      %673 = vrot.lane.b32.xlu0 %v553, 12
      %v674 = vpop.permute.xlu0 %673
      %675 = vrot.lane.b32.xlu0 %v570, 12
      %v676 = vpop.permute.xlu0 %675
      %677 = vrot.lane.b32.xlu0 %v587, 12
      %v678 = vpop.permute.xlu0 %677
      %679 = vrot.lane.b32.xlu0 %v604, 12
      %v680 = vpop.permute.xlu0 %679
      %681 = vrot.lane.b32.xlu0 %v621, 12
      %v682 = vpop.permute.xlu0 %681
      %683 = vrot.lane.b32.xlu0 %v638, 12
      %v684 = vpop.permute.xlu0 %683
      %685 = vrot.lane.b32.xlu0 %v655, 12
      %v686 = vpop.permute.xlu0 %685
      %687 = vrot.lane.b32.xlu0 %v672, 12
      %v688 = vpop.permute.xlu0 %687
      %v697 = vunpack.c.l.b16 %v262
      %v698 = vunpack.c.l.b16 %v263
      %v699 = vunpack.c.l.b16 %v264
      %v700 = vunpack.c.l.b16 %v265
      %v701 = vunpack.c.l.b16 %v266
      %v702 = vunpack.c.l.b16 %v267
      %v703 = vunpack.c.l.b16 %v268
      %v704 = vunpack.c.l.b16 %v269
      %v705 = vpack.c.b16 %v287, %v697
      %v706 = vpack.c.b16 %v289, %v698
      %v707 = vpack.c.b16 %v291, %v699
      %v708 = vpack.c.b16 %v293, %v700
      %v709 = vpack.c.b16 %v295, %v701
      %v710 = vpack.c.b16 %v297, %v702
      %v711 = vpack.c.b16 %v299, %v703
      %v712 = vpack.c.b16 %v301, %v704
      %vm713 = vcmask 1045504
      %v714 = vrot.slane %v705, 2
      %v715 = vrot.slane %v528, 2
      %v716 = vsel %vm713, %v714, %v715
      %v717 = vrot.slane %v706, 2
      %v718 = vrot.slane %v529, 2
      %v719 = vsel %vm713, %v717, %v718
      %v720 = vrot.slane %v707, 2
      %v721 = vrot.slane %v530, 2
      %v722 = vsel %vm713, %v720, %v721
      %v723 = vrot.slane %v708, 2
      %v724 = vrot.slane %v531, 2
      %v725 = vsel %vm713, %v723, %v724
      %v726 = vrot.slane %v709, 2
      %v727 = vrot.slane %v532, 2
      %v728 = vsel %vm713, %v726, %v727
      %v729 = vrot.slane %v710, 2
      %v730 = vrot.slane %v533, 2
      %v731 = vsel %vm713, %v729, %v730
      %v732 = vrot.slane %v711, 2
      %v733 = vrot.slane %v534, 2
      %v734 = vsel %vm713, %v732, %v733
      %v735 = vrot.slane %v712, 2
      %v736 = vrot.slane %v535, 2
      %v737 = vsel %vm713, %v735, %v736
      %738 = vrot.lane.b32.xlu0 %v716, 16
      %v739 = vpop.permute.xlu0 %738
      %740 = vrot.lane.b32.xlu0 %v719, 16
      %v741 = vpop.permute.xlu0 %740
      %742 = vrot.lane.b32.xlu0 %v722, 16
      %v743 = vpop.permute.xlu0 %742
      %744 = vrot.lane.b32.xlu0 %v725, 16
      %v745 = vpop.permute.xlu0 %744
      %746 = vrot.lane.b32.xlu0 %v728, 16
      %v747 = vpop.permute.xlu0 %746
      %748 = vrot.lane.b32.xlu0 %v731, 16
      %v749 = vpop.permute.xlu0 %748
      %750 = vrot.lane.b32.xlu0 %v734, 16
      %v751 = vpop.permute.xlu0 %750
      %752 = vrot.lane.b32.xlu0 %v737, 16
      %v753 = vpop.permute.xlu0 %752
      %vm754 = vcmask 31744
      %v756 = vsel %vm754, %v302, %v432
      %v758 = vsel %vm754, %v303, %v434
      %v760 = vsel %vm754, %v304, %v436
      %v762 = vsel %vm754, %v305, %v438
      %v764 = vsel %vm754, %v306, %v440
      %v766 = vsel %vm754, %v307, %v442
      %v768 = vsel %vm754, %v308, %v444
      %v770 = vsel %vm754, %v309, %v446
      %vm771 = vcmask 64512
      %v773 = vsel %vm771, %v756, %v497
      %v775 = vsel %vm771, %v758, %v499
      %v777 = vsel %vm771, %v760, %v501
      %v779 = vsel %vm771, %v762, %v503
      %v781 = vsel %vm771, %v764, %v505
      %v783 = vsel %vm771, %v766, %v507
      %v785 = vsel %vm771, %v768, %v509
      %v787 = vsel %vm771, %v770, %v511
      %vm788 = vcmask 97280
      %v790 = vsel %vm788, %v773, %v674
      %v792 = vsel %vm788, %v775, %v676
      %v794 = vsel %vm788, %v777, %v678
      %v796 = vsel %vm788, %v779, %v680
      %v798 = vsel %vm788, %v781, %v682
      %v800 = vsel %vm788, %v783, %v684
      %v802 = vsel %vm788, %v785, %v686
      %v804 = vsel %vm788, %v787, %v688
      %vm805 = vcmask 130048
      %v807 = vsel %vm805, %v790, %v739
      %v809 = vsel %vm805, %v792, %v741
      %v811 = vsel %vm805, %v794, %v743
      %v813 = vsel %vm805, %v796, %v745
      %v815 = vsel %vm805, %v798, %v747
      %v817 = vsel %vm805, %v800, %v749
      %v819 = vsel %vm805, %v802, %v751
      %v821 = vsel %vm805, %v804, %v753
      %v822 = vld [vmem:[%s1] sm:$0xf]
      %v823 = vld [vmem:[%s1 + $0x4] sm:$0xf]
      %v824 = vld [vmem:[%s1 + $0x8] sm:$0x3]
      %s825 = sadd.s32 %s218, 1
      %s826 = smul.u32 %s825, 3
      %s827 = smul.addr %s826, 4
      %s828 = scalar_lea.vmem %s197, %s827
      %v829 = vld [vmem:[%s828] sm:$0xf]
      %v830 = vld [vmem:[%s828 + $0x4] sm:$0xf]
      %v831 = vld [vmem:[%s828 + $0xc] sm:$0xf]
      %v832 = vld [vmem:[%s828 + $0x10] sm:$0xf]
      %v833 = vld [vmem:[%s828 + $0x18] sm:$0xf]
      %v834 = vld [vmem:[%s828 + $0x1c] sm:$0xf]
      %v835 = vld [vmem:[%s828 + $0x24] sm:$0xf]
      %v836 = vld [vmem:[%s828 + $0x28] sm:$0xf]
      %v837 = vld [vmem:[%s828 + $0x30] sm:$0xf]
      %v838 = vld [vmem:[%s828 + $0x34] sm:$0xf]
      %v839 = vld [vmem:[%s828 + $0x3c] sm:$0xf]
      %v840 = vld [vmem:[%s828 + $0x40] sm:$0xf]
      %v841 = vld [vmem:[%s828 + $0x48] sm:$0xf]
      %v842 = vld [vmem:[%s828 + $0x4c] sm:$0xf]
      %v843 = vld [vmem:[%s828 + $0x54] sm:$0xf]
      %v844 = vld [vmem:[%s828 + $0x58] sm:$0xf]
      %v845 = vld [vmem:[%s828 + $0x8] sm:$0x1]
      %v846 = vld [vmem:[%s828 + $0x14] sm:$0x1]
      %v847 = vld [vmem:[%s828 + $0x20] sm:$0x1]
      %v848 = vld [vmem:[%s828 + $0x2c] sm:$0x1]
      %v849 = vld [vmem:[%s828 + $0x38] sm:$0x1]
      %v850 = vld [vmem:[%s828 + $0x44] sm:$0x1]
      %v851 = vld [vmem:[%s828 + $0x50] sm:$0x1]
      %v852 = vld [vmem:[%s828 + $0x5c] sm:$0x1]
      %v853 = vld [vmem:[%s828] sm:$0xe]
      %v854 = vld [vmem:[%s828 + $0xc] sm:$0xe]
      %v855 = vld [vmem:[%s828 + $0x18] sm:$0xe]
      %v856 = vld [vmem:[%s828 + $0x24] sm:$0xe]
      %v857 = vld [vmem:[%s828 + $0x30] sm:$0xe]
      %v858 = vld [vmem:[%s828 + $0x3c] sm:$0xe]
      %v859 = vld [vmem:[%s828 + $0x48] sm:$0xe]
      %v860 = vld [vmem:[%s828 + $0x54] sm:$0xe]
      %v861 = vld [vmem:[%s828 + $0x8] sm:$0x3]
      %v862 = vld [vmem:[%s828 + $0x14] sm:$0x3]
      %v863 = vld [vmem:[%s828 + $0x20] sm:$0x3]
      %v864 = vld [vmem:[%s828 + $0x2c] sm:$0x3]
      %v865 = vld [vmem:[%s828 + $0x38] sm:$0x3]
      %v866 = vld [vmem:[%s828 + $0x44] sm:$0x3]
      %v867 = vld [vmem:[%s828 + $0x50] sm:$0x3]
      %v868 = vld [vmem:[%s828 + $0x5c] sm:$0x3]
      %v869 = vld [vmem:[%s828] sm:$0xc]
      %v870 = vld [vmem:[%s828 + $0xc] sm:$0xc]
      %v871 = vld [vmem:[%s828 + $0x18] sm:$0xc]
      %v872 = vld [vmem:[%s828 + $0x24] sm:$0xc]
      %v873 = vld [vmem:[%s828 + $0x30] sm:$0xc]
      %v874 = vld [vmem:[%s828 + $0x3c] sm:$0xc]
      %v875 = vld [vmem:[%s828 + $0x48] sm:$0xc]
      %v876 = vld [vmem:[%s828 + $0x54] sm:$0xc]
      %v893 = vunpack.c.l.b16 %v829
      %v894 = vunpack.c.l.b16 %v830
      %v895 = vunpack.c.l.b16 %v831
      %v896 = vunpack.c.l.b16 %v832
      %v897 = vunpack.c.l.b16 %v833
      %v898 = vunpack.c.l.b16 %v834
      %v899 = vunpack.c.l.b16 %v835
      %v900 = vunpack.c.l.b16 %v836
      %v901 = vunpack.c.l.b16 %v837
      %v902 = vunpack.c.l.b16 %v838
      %v903 = vunpack.c.l.b16 %v839
      %v904 = vunpack.c.l.b16 %v840
      %v905 = vunpack.c.l.b16 %v841
      %v906 = vunpack.c.l.b16 %v842
      %v907 = vunpack.c.l.b16 %v843
      %v908 = vunpack.c.l.b16 %v844
      %v909 = vpack.c.b16 %v894, %v893
      %v910 = vpack.c.b16 %v896, %v895
      %v911 = vpack.c.b16 %v898, %v897
      %v912 = vpack.c.b16 %v900, %v899
      %v913 = vpack.c.b16 %v902, %v901
      %v914 = vpack.c.b16 %v904, %v903
      %v915 = vpack.c.b16 %v906, %v905
      %v916 = vpack.c.b16 %v908, %v907
      %v925 = vunpack.c.l.b16 %v845
      %v926 = vunpack.c.l.b16 %v846
      %v927 = vunpack.c.l.b16 %v847
      %v928 = vunpack.c.l.b16 %v848
      %v929 = vunpack.c.l.b16 %v849
      %v930 = vunpack.c.l.b16 %v850
      %v931 = vunpack.c.l.b16 %v851
      %v932 = vunpack.c.l.b16 %v852
      %v933 = vpack.c.b16 %v925, %v925
      %v934 = vpack.c.b16 %v926, %v926
      %v935 = vpack.c.b16 %v927, %v927
      %v936 = vpack.c.b16 %v928, %v928
      %v937 = vpack.c.b16 %v929, %v929
      %v938 = vpack.c.b16 %v930, %v930
      %v939 = vpack.c.b16 %v931, %v931
      %v940 = vpack.c.b16 %v932, %v932
      %v942 = vshrl.u32 %v909, 16
      %v944 = vshll.u32 %v909, 16
      %v946 = vrot.slane %v944, 1
      %v947 = vor.u32 %v942, %v946
      %v949 = vshll.u32 %v933, 16
      %v951 = vrot.slane %v949, 1
      %v952 = vsel %vm334, %v947, %v951
      %v954 = vshrl.u32 %v910, 16
      %v956 = vshll.u32 %v910, 16
      %v958 = vrot.slane %v956, 1
      %v959 = vor.u32 %v954, %v958
      %v961 = vshll.u32 %v934, 16
      %v963 = vrot.slane %v961, 1
      %v964 = vsel %vm334, %v959, %v963
      %v966 = vshrl.u32 %v911, 16
      %v968 = vshll.u32 %v911, 16
      %v970 = vrot.slane %v968, 1
      %v971 = vor.u32 %v966, %v970
      %v973 = vshll.u32 %v935, 16
      %v975 = vrot.slane %v973, 1
      %v976 = vsel %vm334, %v971, %v975
      %v978 = vshrl.u32 %v912, 16
      %v980 = vshll.u32 %v912, 16
      %v982 = vrot.slane %v980, 1
      %v983 = vor.u32 %v978, %v982
      %v985 = vshll.u32 %v936, 16
      %v987 = vrot.slane %v985, 1
      %v988 = vsel %vm334, %v983, %v987
      %v990 = vshrl.u32 %v913, 16
      %v992 = vshll.u32 %v913, 16
      %v994 = vrot.slane %v992, 1
      %v995 = vor.u32 %v990, %v994
      %v997 = vshll.u32 %v937, 16
      %v999 = vrot.slane %v997, 1
      %v1000 = vsel %vm334, %v995, %v999
      %v1002 = vshrl.u32 %v914, 16
      %v1004 = vshll.u32 %v914, 16
      %v1006 = vrot.slane %v1004, 1
      %v1007 = vor.u32 %v1002, %v1006
      %v1009 = vshll.u32 %v938, 16
      %v1011 = vrot.slane %v1009, 1
      %v1012 = vsel %vm334, %v1007, %v1011
      %v1014 = vshrl.u32 %v915, 16
      %v1016 = vshll.u32 %v915, 16
      %v1018 = vrot.slane %v1016, 1
      %v1019 = vor.u32 %v1014, %v1018
      %v1021 = vshll.u32 %v939, 16
      %v1023 = vrot.slane %v1021, 1
      %v1024 = vsel %vm334, %v1019, %v1023
      %v1026 = vshrl.u32 %v916, 16
      %v1028 = vshll.u32 %v916, 16
      %v1030 = vrot.slane %v1028, 1
      %v1031 = vor.u32 %v1026, %v1030
      %v1033 = vshll.u32 %v940, 16
      %v1035 = vrot.slane %v1033, 1
      %v1036 = vsel %vm334, %v1031, %v1035
      %1037 = vrot.lane.b32.xlu0 %v952, 4
      %v1038 = vpop.permute.xlu0 %1037
      %1039 = vrot.lane.b32.xlu0 %v964, 4
      %v1040 = vpop.permute.xlu0 %1039
      %1041 = vrot.lane.b32.xlu0 %v976, 4
      %v1042 = vpop.permute.xlu0 %1041
      %1043 = vrot.lane.b32.xlu0 %v988, 4
      %v1044 = vpop.permute.xlu0 %1043
      %1045 = vrot.lane.b32.xlu0 %v1000, 4
      %v1046 = vpop.permute.xlu0 %1045
      %1047 = vrot.lane.b32.xlu0 %v1012, 4
      %v1048 = vpop.permute.xlu0 %1047
      %1049 = vrot.lane.b32.xlu0 %v1024, 4
      %v1050 = vpop.permute.xlu0 %1049
      %1051 = vrot.lane.b32.xlu0 %v1036, 4
      %v1052 = vpop.permute.xlu0 %1051
      %v1061 = vunpack.c.l.b16 %v853
      %v1062 = vunpack.c.l.b16 %v854
      %v1063 = vunpack.c.l.b16 %v855
      %v1064 = vunpack.c.l.b16 %v856
      %v1065 = vunpack.c.l.b16 %v857
      %v1066 = vunpack.c.l.b16 %v858
      %v1067 = vunpack.c.l.b16 %v859
      %v1068 = vunpack.c.l.b16 %v860
      %v1069 = vpack.c.b16 %v894, %v1061
      %v1070 = vpack.c.b16 %v896, %v1062
      %v1071 = vpack.c.b16 %v898, %v1063
      %v1072 = vpack.c.b16 %v900, %v1064
      %v1073 = vpack.c.b16 %v902, %v1065
      %v1074 = vpack.c.b16 %v904, %v1066
      %v1075 = vpack.c.b16 %v906, %v1067
      %v1076 = vpack.c.b16 %v908, %v1068
      %v1077 = vrot.slane %v1069, 1
      %v1078 = vrot.slane %v933, 1
      %v1079 = vsel %vm471, %v1077, %v1078
      %v1080 = vrot.slane %v1070, 1
      %v1081 = vrot.slane %v934, 1
      %v1082 = vsel %vm471, %v1080, %v1081
      %v1083 = vrot.slane %v1071, 1
      %v1084 = vrot.slane %v935, 1
      %v1085 = vsel %vm471, %v1083, %v1084
      %v1086 = vrot.slane %v1072, 1
      %v1087 = vrot.slane %v936, 1
      %v1088 = vsel %vm471, %v1086, %v1087
      %v1089 = vrot.slane %v1073, 1
      %v1090 = vrot.slane %v937, 1
      %v1091 = vsel %vm471, %v1089, %v1090
      %v1092 = vrot.slane %v1074, 1
      %v1093 = vrot.slane %v938, 1
      %v1094 = vsel %vm471, %v1092, %v1093
      %v1095 = vrot.slane %v1075, 1
      %v1096 = vrot.slane %v939, 1
      %v1097 = vsel %vm471, %v1095, %v1096
      %v1098 = vrot.slane %v1076, 1
      %v1099 = vrot.slane %v940, 1
      %v1100 = vsel %vm471, %v1098, %v1099
      %1101 = vrot.lane.b32.xlu0 %v1079, 8
      %v1102 = vpop.permute.xlu0 %1101
      %1103 = vrot.lane.b32.xlu0 %v1082, 8
      %v1104 = vpop.permute.xlu0 %1103
      %1105 = vrot.lane.b32.xlu0 %v1085, 8
      %v1106 = vpop.permute.xlu0 %1105
      %1107 = vrot.lane.b32.xlu0 %v1088, 8
      %v1108 = vpop.permute.xlu0 %1107
      %1109 = vrot.lane.b32.xlu0 %v1091, 8
      %v1110 = vpop.permute.xlu0 %1109
      %1111 = vrot.lane.b32.xlu0 %v1094, 8
      %v1112 = vpop.permute.xlu0 %1111
      %1113 = vrot.lane.b32.xlu0 %v1097, 8
      %v1114 = vpop.permute.xlu0 %1113
      %1115 = vrot.lane.b32.xlu0 %v1100, 8
      %v1116 = vpop.permute.xlu0 %1115
      %v1125 = vunpack.c.l.b16 %v861
      %v1126 = vunpack.c.l.b16 %v862
      %v1127 = vunpack.c.l.b16 %v863
      %v1128 = vunpack.c.l.b16 %v864
      %v1129 = vunpack.c.l.b16 %v865
      %v1130 = vunpack.c.l.b16 %v866
      %v1131 = vunpack.c.l.b16 %v867
      %v1132 = vunpack.c.l.b16 %v868
      %v1133 = vpack.c.b16 %v1125, %v1125
      %v1134 = vpack.c.b16 %v1126, %v1126
      %v1135 = vpack.c.b16 %v1127, %v1127
      %v1136 = vpack.c.b16 %v1128, %v1128
      %v1137 = vpack.c.b16 %v1129, %v1129
      %v1138 = vpack.c.b16 %v1130, %v1130
      %v1139 = vpack.c.b16 %v1131, %v1131
      %v1140 = vpack.c.b16 %v1132, %v1132
      %v1142 = vshrl.u32 %v1069, 16
      %v1144 = vrot.slane %v1142, 1
      %v1145 = vshll.u32 %v1069, 16
      %v1147 = vrot.slane %v1145, 2
      %v1148 = vor.u32 %v1144, %v1147
      %v1150 = vshrl.u32 %v1133, 16
      %v1152 = vrot.slane %v1150, 1
      %v1153 = vshll.u32 %v1133, 16
      %v1155 = vrot.slane %v1153, 2
      %v1156 = vor.u32 %v1152, %v1155
      %v1157 = vsel %vm536, %v1148, %v1156
      %v1159 = vshrl.u32 %v1070, 16
      %v1161 = vrot.slane %v1159, 1
      %v1162 = vshll.u32 %v1070, 16
      %v1164 = vrot.slane %v1162, 2
      %v1165 = vor.u32 %v1161, %v1164
      %v1167 = vshrl.u32 %v1134, 16
      %v1169 = vrot.slane %v1167, 1
      %v1170 = vshll.u32 %v1134, 16
      %v1172 = vrot.slane %v1170, 2
      %v1173 = vor.u32 %v1169, %v1172
      %v1174 = vsel %vm536, %v1165, %v1173
      %v1176 = vshrl.u32 %v1071, 16
      %v1178 = vrot.slane %v1176, 1
      %v1179 = vshll.u32 %v1071, 16
      %v1181 = vrot.slane %v1179, 2
      %v1182 = vor.u32 %v1178, %v1181
      %v1184 = vshrl.u32 %v1135, 16
      %v1186 = vrot.slane %v1184, 1
      %v1187 = vshll.u32 %v1135, 16
      %v1189 = vrot.slane %v1187, 2
      %v1190 = vor.u32 %v1186, %v1189
      %v1191 = vsel %vm536, %v1182, %v1190
      %v1193 = vshrl.u32 %v1072, 16
      %v1195 = vrot.slane %v1193, 1
      %v1196 = vshll.u32 %v1072, 16
      %v1198 = vrot.slane %v1196, 2
      %v1199 = vor.u32 %v1195, %v1198
      %v1201 = vshrl.u32 %v1136, 16
      %v1203 = vrot.slane %v1201, 1
      %v1204 = vshll.u32 %v1136, 16
      %v1206 = vrot.slane %v1204, 2
      %v1207 = vor.u32 %v1203, %v1206
      %v1208 = vsel %vm536, %v1199, %v1207
      %v1210 = vshrl.u32 %v1073, 16
      %v1212 = vrot.slane %v1210, 1
      %v1213 = vshll.u32 %v1073, 16
      %v1215 = vrot.slane %v1213, 2
      %v1216 = vor.u32 %v1212, %v1215
      %v1218 = vshrl.u32 %v1137, 16
      %v1220 = vrot.slane %v1218, 1
      %v1221 = vshll.u32 %v1137, 16
      %v1223 = vrot.slane %v1221, 2
      %v1224 = vor.u32 %v1220, %v1223
      %v1225 = vsel %vm536, %v1216, %v1224
      %v1227 = vshrl.u32 %v1074, 16
      %v1229 = vrot.slane %v1227, 1
      %v1230 = vshll.u32 %v1074, 16
      %v1232 = vrot.slane %v1230, 2
      %v1233 = vor.u32 %v1229, %v1232
      %v1235 = vshrl.u32 %v1138, 16
      %v1237 = vrot.slane %v1235, 1
      %v1238 = vshll.u32 %v1138, 16
      %v1240 = vrot.slane %v1238, 2
      %v1241 = vor.u32 %v1237, %v1240
      %v1242 = vsel %vm536, %v1233, %v1241
      %v1244 = vshrl.u32 %v1075, 16
      %v1246 = vrot.slane %v1244, 1
      %v1247 = vshll.u32 %v1075, 16
      %v1249 = vrot.slane %v1247, 2
      %v1250 = vor.u32 %v1246, %v1249
      %v1252 = vshrl.u32 %v1139, 16
      %v1254 = vrot.slane %v1252, 1
      %v1255 = vshll.u32 %v1139, 16
      %v1257 = vrot.slane %v1255, 2
      %v1258 = vor.u32 %v1254, %v1257
      %v1259 = vsel %vm536, %v1250, %v1258
      %v1261 = vshrl.u32 %v1076, 16
      %v1263 = vrot.slane %v1261, 1
      %v1264 = vshll.u32 %v1076, 16
      %v1266 = vrot.slane %v1264, 2
      %v1267 = vor.u32 %v1263, %v1266
      %v1269 = vshrl.u32 %v1140, 16
      %v1271 = vrot.slane %v1269, 1
      %v1272 = vshll.u32 %v1140, 16
      %v1274 = vrot.slane %v1272, 2
      %v1275 = vor.u32 %v1271, %v1274
      %v1276 = vsel %vm536, %v1267, %v1275
      %1277 = vrot.lane.b32.xlu0 %v1157, 12
      %v1278 = vpop.permute.xlu0 %1277
      %1279 = vrot.lane.b32.xlu0 %v1174, 12
      %v1280 = vpop.permute.xlu0 %1279
      %1281 = vrot.lane.b32.xlu0 %v1191, 12
      %v1282 = vpop.permute.xlu0 %1281
      %1283 = vrot.lane.b32.xlu0 %v1208, 12
      %v1284 = vpop.permute.xlu0 %1283
      %1285 = vrot.lane.b32.xlu0 %v1225, 12
      %v1286 = vpop.permute.xlu0 %1285
      %1287 = vrot.lane.b32.xlu0 %v1242, 12
      %v1288 = vpop.permute.xlu0 %1287
      %1289 = vrot.lane.b32.xlu0 %v1259, 12
      %v1290 = vpop.permute.xlu0 %1289
      %1291 = vrot.lane.b32.xlu0 %v1276, 12
      %v1292 = vpop.permute.xlu0 %1291
      %v1301 = vunpack.c.l.b16 %v869
      %v1302 = vunpack.c.l.b16 %v870
      %v1303 = vunpack.c.l.b16 %v871
      %v1304 = vunpack.c.l.b16 %v872
      %v1305 = vunpack.c.l.b16 %v873
      %v1306 = vunpack.c.l.b16 %v874
      %v1307 = vunpack.c.l.b16 %v875
      %v1308 = vunpack.c.l.b16 %v876
      %v1309 = vpack.c.b16 %v894, %v1301
      %v1310 = vpack.c.b16 %v896, %v1302
      %v1311 = vpack.c.b16 %v898, %v1303
      %v1312 = vpack.c.b16 %v900, %v1304
      %v1313 = vpack.c.b16 %v902, %v1305
      %v1314 = vpack.c.b16 %v904, %v1306
      %v1315 = vpack.c.b16 %v906, %v1307
      %v1316 = vpack.c.b16 %v908, %v1308
      %v1317 = vrot.slane %v1309, 2
      %v1318 = vrot.slane %v1133, 2
      %v1319 = vsel %vm713, %v1317, %v1318
      %v1320 = vrot.slane %v1310, 2
      %v1321 = vrot.slane %v1134, 2
      %v1322 = vsel %vm713, %v1320, %v1321
      %v1323 = vrot.slane %v1311, 2
      %v1324 = vrot.slane %v1135, 2
      %v1325 = vsel %vm713, %v1323, %v1324
      %v1326 = vrot.slane %v1312, 2
      %v1327 = vrot.slane %v1136, 2
      %v1328 = vsel %vm713, %v1326, %v1327
      %v1329 = vrot.slane %v1313, 2
      %v1330 = vrot.slane %v1137, 2
      %v1331 = vsel %vm713, %v1329, %v1330
      %v1332 = vrot.slane %v1314, 2
      %v1333 = vrot.slane %v1138, 2
      %v1334 = vsel %vm713, %v1332, %v1333
      %v1335 = vrot.slane %v1315, 2
      %v1336 = vrot.slane %v1139, 2
      %v1337 = vsel %vm713, %v1335, %v1336
      %v1338 = vrot.slane %v1316, 2
      %v1339 = vrot.slane %v1140, 2
      %v1340 = vsel %vm713, %v1338, %v1339
      %1341 = vrot.lane.b32.xlu0 %v1319, 16
      %v1342 = vpop.permute.xlu0 %1341
      %1343 = vrot.lane.b32.xlu0 %v1322, 16
      %v1344 = vpop.permute.xlu0 %1343
      %1345 = vrot.lane.b32.xlu0 %v1325, 16
      %v1346 = vpop.permute.xlu0 %1345
      %1347 = vrot.lane.b32.xlu0 %v1328, 16
      %v1348 = vpop.permute.xlu0 %1347
      %1349 = vrot.lane.b32.xlu0 %v1331, 16
      %v1350 = vpop.permute.xlu0 %1349
      %1351 = vrot.lane.b32.xlu0 %v1334, 16
      %v1352 = vpop.permute.xlu0 %1351
      %1353 = vrot.lane.b32.xlu0 %v1337, 16
      %v1354 = vpop.permute.xlu0 %1353
      %1355 = vrot.lane.b32.xlu0 %v1340, 16
      %v1356 = vpop.permute.xlu0 %1355
      %v1358 = vsel %vm754, %v909, %v1038
      %v1360 = vsel %vm754, %v910, %v1040
      %v1362 = vsel %vm754, %v911, %v1042
      %v1364 = vsel %vm754, %v912, %v1044
      %v1366 = vsel %vm754, %v913, %v1046
      %v1368 = vsel %vm754, %v914, %v1048
      %v1370 = vsel %vm754, %v915, %v1050
      %v1372 = vsel %vm754, %v916, %v1052
      %v1374 = vsel %vm771, %v1358, %v1102
      %v1376 = vsel %vm771, %v1360, %v1104
      %v1378 = vsel %vm771, %v1362, %v1106
      %v1380 = vsel %vm771, %v1364, %v1108
      %v1382 = vsel %vm771, %v1366, %v1110
      %v1384 = vsel %vm771, %v1368, %v1112
      %v1386 = vsel %vm771, %v1370, %v1114
      %v1388 = vsel %vm771, %v1372, %v1116
      %v1390 = vsel %vm788, %v1374, %v1278
      %v1392 = vsel %vm788, %v1376, %v1280
      %v1394 = vsel %vm788, %v1378, %v1282
      %v1396 = vsel %vm788, %v1380, %v1284
      %v1398 = vsel %vm788, %v1382, %v1286
      %v1400 = vsel %vm788, %v1384, %v1288
      %v1402 = vsel %vm788, %v1386, %v1290
      %v1404 = vsel %vm788, %v1388, %v1292
      %v1406 = vsel %vm805, %v1390, %v1342
      %v1408 = vsel %vm805, %v1392, %v1344
      %v1410 = vsel %vm805, %v1394, %v1346
      %v1412 = vsel %vm805, %v1396, %v1348
      %v1414 = vsel %vm805, %v1398, %v1350
      %v1416 = vsel %vm805, %v1400, %v1352
      %v1418 = vsel %vm805, %v1402, %v1354
      %v1420 = vsel %vm805, %v1404, %v1356
      %s1421 = scalar_lea.vmem %s1, 12
      %v1422 = vld [vmem:[%s1421] sm:$0xf]
      %v1423 = vld [vmem:[%s1421 + $0x4] sm:$0xf]
      %v1424 = vld [vmem:[%s1421 + $0x8] sm:$0x3]
      %v1428 = vunpack.c.l.b16 %v1422
      %v1429 = vunpack.c.l.b16 %v1423
      %v1430 = vunpack.c.l.b16 %v1424
      %v1431 = vpack.c.b16 %v1429, %v1428
      %v1432 = vpack.c.b16 %v1430, %v1430
      %vm1434 = vcmask 162816
      %v1435 = vsel %vm1434, %v1406, 0
      %v1437 = vsel %vm1434, %v1408, 0
      %v1439 = vsel %vm1434, %v1410, 0
      %v1441 = vsel %vm1434, %v1412, 0
      %v1443 = vsel %vm1434, %v1414, 0
      %v1445 = vsel %vm1434, %v1416, 0
      %v1447 = vsel %vm1434, %v1418, 0
      %v1449 = vsel %vm1434, %v1420, 0
      %vm1451 = vcmask 1041408
      %v1453 = vsel %vm1451, %v1432, 0
      %1455 = vmatprep.subr.bf16.mxu0 0
      %1456 = vmatpush1.bf16.msra.mxu0 %v1431
      %1457 = vmatprep.subr.bf16.mxu0 0
      %1458 = vmatpush1.bf16.msra.mxu0 %v1453
      %1459 = vmatprep.subr.bf16.mxu0 0
      %1460 = vmatpush1.bf16.msra.mxu0 0
      %1461 = vmatprep.subr.bf16.mxu0 0
      %1462 = vmatpush1.bf16.msra.mxu0 0
      %1463 = vmatprep.subr.bf16.mxu0 0
      %1464 = vmatpush1.bf16.msra.mxu0 0
      %1465 = vmatprep.subr.bf16.mxu0 0
      %1466 = vmatpush1.bf16.msra.mxu0 0
      %1467 = vmatprep.subr.bf16.mxu0 0
      %1468 = vmatpush1.bf16.msra.mxu0 0
      %1469 = vmatprep.subr.bf16.mxu0 0
      %1470 = vmatpush1.bf16.msra.mxu0 0
      %1471 = vmatprep.subr.bf16.mxu0 0
      %1472 = vmatpush1.bf16.msra.mxu0 0
      %1473 = vmatprep.subr.bf16.mxu0 0
      %1474 = vmatpush1.bf16.msra.mxu0 0
      %1475 = vmatprep.subr.bf16.mxu0 0
      %1476 = vmatpush1.bf16.msra.mxu0 0
      %1477 = vmatprep.subr.bf16.mxu0 0
      %1478 = vmatpush1.bf16.msra.mxu0 0
      %1479 = vmatprep.subr.bf16.mxu0 0
      %1480 = vmatpush1.bf16.msra.mxu0 0
      %1481 = vmatprep.subr.bf16.mxu0 0
      %1482 = vmatpush1.bf16.msra.mxu0 0
      %1483 = vmatprep.subr.bf16.mxu0 0
      %1484 = vmatpush1.bf16.msra.mxu0 0
      %1485 = vmatprep.subr.bf16.mxu0 0
      %1486 = vmatpush1.bf16.msra.mxu0 0
      %1487 = vmatprep.mubr.bf16.mxu0 0
      %1488 = vmatmul.mubr.bf16.gmra.mrb[0].mxu0 %v1435
      %v1489 = vpop.f32.mrb[0].mxu0
      %v1490 = vadd.f32 0.0, %v1489
      %v1491 = vpop.f32.mrb[0].mxu0
      %v1492 = vpop.f32.mrb[0].mxu0
      %v1493 = vadd.f32 0.0, %v1492
      %v1494 = vpop.f32.mrb[0].mxu0
      %1495 = vmatprep.mubr.bf16.mxu0 0
      %1496 = vmatmul.mubr.bf16.gmra.mrb[0].mxu0 %v1437
      %v1497 = vpop.f32.mrb[0].mxu0
      %v1498 = vadd.f32 0.0, %v1497
      %v1499 = vpop.f32.mrb[0].mxu0
      %v1500 = vpop.f32.mrb[0].mxu0
      %v1501 = vadd.f32 0.0, %v1500
      %v1502 = vpop.f32.mrb[0].mxu0
      %1503 = vmatprep.mubr.bf16.mxu0 0
      %1504 = vmatmul.mubr.bf16.gmra.mrb[0].mxu0 %v1439
      %v1505 = vpop.f32.mrb[0].mxu0
      %v1506 = vadd.f32 0.0, %v1505
      %v1507 = vpop.f32.mrb[0].mxu0
      %v1508 = vpop.f32.mrb[0].mxu0
      %v1509 = vadd.f32 0.0, %v1508
      %v1510 = vpop.f32.mrb[0].mxu0
      %1511 = vmatprep.mubr.bf16.mxu0 0
      %1512 = vmatmul.mubr.bf16.gmra.mrb[0].mxu0 %v1441
      %v1513 = vpop.f32.mrb[0].mxu0
      %v1514 = vadd.f32 0.0, %v1513
      %v1515 = vpop.f32.mrb[0].mxu0
      %v1516 = vpop.f32.mrb[0].mxu0
      %v1517 = vadd.f32 0.0, %v1516
      %v1518 = vpop.f32.mrb[0].mxu0
      %1519 = vmatprep.mubr.bf16.mxu0 0
      %1520 = vmatmul.mubr.bf16.gmra.mrb[0].mxu0 %v1443
      %v1521 = vpop.f32.mrb[0].mxu0
      %v1522 = vadd.f32 0.0, %v1521
      %v1523 = vpop.f32.mrb[0].mxu0
      %v1524 = vpop.f32.mrb[0].mxu0
      %v1525 = vadd.f32 0.0, %v1524
      %v1526 = vpop.f32.mrb[0].mxu0
      %1527 = vmatprep.mubr.bf16.mxu0 0
      %1528 = vmatmul.mubr.bf16.gmra.mrb[0].mxu0 %v1445
      %v1529 = vpop.f32.mrb[0].mxu0
      %v1530 = vadd.f32 0.0, %v1529
      %v1531 = vpop.f32.mrb[0].mxu0
      %v1532 = vpop.f32.mrb[0].mxu0
      %v1533 = vadd.f32 0.0, %v1532
      %v1534 = vpop.f32.mrb[0].mxu0
      %1535 = vmatprep.mubr.bf16.mxu0 0
      %1536 = vmatmul.mubr.bf16.gmra.mrb[0].mxu0 %v1447
      %v1537 = vpop.f32.mrb[0].mxu0
      %v1538 = vadd.f32 0.0, %v1537
      %v1539 = vpop.f32.mrb[0].mxu0
      %v1540 = vpop.f32.mrb[0].mxu0
      %v1541 = vadd.f32 0.0, %v1540
      %v1542 = vpop.f32.mrb[0].mxu0
      %1543 = vmatprep.mubr.bf16.mxu0 0
      %1544 = vmatmul.mubr.bf16.gmra.mrb[0].mxu0 %v1449
      %v1545 = vpop.f32.mrb[0].mxu0
      %v1546 = vadd.f32 0.0, %v1545
      %v1547 = vpop.f32.mrb[0].mxu0
      %v1548 = vpop.f32.mrb[0].mxu0
      %v1549 = vadd.f32 0.0, %v1548
      %v1550 = vpop.f32.mrb[0].mxu0
      %1551 = vdwg.mxu0
      %v1555 = vunpack.c.l.b16 %v822
      %v1556 = vunpack.c.l.b16 %v823
      %v1557 = vunpack.c.l.b16 %v824
      %v1558 = vpack.c.b16 %v1556, %v1555
      %v1559 = vpack.c.b16 %v1557, %v1557
      %v1561 = vsel %vm1434, %v807, 0
      %v1563 = vsel %vm1434, %v809, 0
      %v1565 = vsel %vm1434, %v811, 0
      %v1567 = vsel %vm1434, %v813, 0
      %v1569 = vsel %vm1434, %v815, 0
      %v1571 = vsel %vm1434, %v817, 0
      %v1573 = vsel %vm1434, %v819, 0
      %v1575 = vsel %vm1434, %v821, 0
      %v1578 = vsel %vm1451, %v1559, 0
      %1580 = vmatprep.subr.bf16.mxu0 0
      %1581 = vmatpush1.bf16.msra.mxu0 %v1558
      %1582 = vmatprep.subr.bf16.mxu0 0
      %1583 = vmatpush1.bf16.msra.mxu0 %v1578
      %1584 = vmatprep.subr.bf16.mxu0 0
      %1585 = vmatpush1.bf16.msra.mxu0 0
      %1586 = vmatprep.subr.bf16.mxu0 0
      %1587 = vmatpush1.bf16.msra.mxu0 0
      %1588 = vmatprep.subr.bf16.mxu0 0
      %1589 = vmatpush1.bf16.msra.mxu0 0
      %1590 = vmatprep.subr.bf16.mxu0 0
      %1591 = vmatpush1.bf16.msra.mxu0 0
      %1592 = vmatprep.subr.bf16.mxu0 0
      %1593 = vmatpush1.bf16.msra.mxu0 0
      %1594 = vmatprep.subr.bf16.mxu0 0
      %1595 = vmatpush1.bf16.msra.mxu0 0
      %1596 = vmatprep.subr.bf16.mxu0 0
      %1597 = vmatpush1.bf16.msra.mxu0 0
      %1598 = vmatprep.subr.bf16.mxu0 0
      %1599 = vmatpush1.bf16.msra.mxu0 0
      %1600 = vmatprep.subr.bf16.mxu0 0
      %1601 = vmatpush1.bf16.msra.mxu0 0
      %1602 = vmatprep.subr.bf16.mxu0 0
      %1603 = vmatpush1.bf16.msra.mxu0 0
      %1604 = vmatprep.subr.bf16.mxu0 0
      %1605 = vmatpush1.bf16.msra.mxu0 0
      %1606 = vmatprep.subr.bf16.mxu0 0
      %1607 = vmatpush1.bf16.msra.mxu0 0
      %1608 = vmatprep.subr.bf16.mxu0 0
      %1609 = vmatpush1.bf16.msra.mxu0 0
      %1610 = vmatprep.subr.bf16.mxu0 0
      %1611 = vmatpush1.bf16.msra.mxu0 0
      %1612 = vmatprep.mubr.bf16.mxu0 0
      %1613 = vmatmul.mubr.bf16.gmra.mrb[0].mxu0 %v1561
      %v1614 = vpop.f32.mrb[0].mxu0
      %v1615 = vadd.f32 %v1490, %v1614
      %v1616 = vpop.f32.mrb[0].mxu0
      %v1617 = vpop.f32.mrb[0].mxu0
      %v1618 = vadd.f32 %v1493, %v1617
      %v1619 = vpop.f32.mrb[0].mxu0
      %1620 = vmatprep.mubr.bf16.mxu0 0
      %1621 = vmatmul.mubr.bf16.gmra.mrb[0].mxu0 %v1563
      %v1622 = vpop.f32.mrb[0].mxu0
      %v1623 = vadd.f32 %v1498, %v1622
      %v1624 = vpop.f32.mrb[0].mxu0
      %v1625 = vpop.f32.mrb[0].mxu0
      %v1626 = vadd.f32 %v1501, %v1625
      %v1627 = vpop.f32.mrb[0].mxu0
      %1628 = vmatprep.mubr.bf16.mxu0 0
      %1629 = vmatmul.mubr.bf16.gmra.mrb[0].mxu0 %v1565
      %v1630 = vpop.f32.mrb[0].mxu0
      %v1631 = vadd.f32 %v1506, %v1630
      %v1632 = vpop.f32.mrb[0].mxu0
      %v1633 = vpop.f32.mrb[0].mxu0
      %v1634 = vadd.f32 %v1509, %v1633
      %v1635 = vpop.f32.mrb[0].mxu0
      %1636 = vmatprep.mubr.bf16.mxu0 0
      %1637 = vmatmul.mubr.bf16.gmra.mrb[0].mxu0 %v1567
      %v1638 = vpop.f32.mrb[0].mxu0
      %v1639 = vadd.f32 %v1514, %v1638
      %v1640 = vpop.f32.mrb[0].mxu0
      %v1641 = vpop.f32.mrb[0].mxu0
      %v1642 = vadd.f32 %v1517, %v1641
      %v1643 = vpop.f32.mrb[0].mxu0
      %1644 = vmatprep.mubr.bf16.mxu0 0
      %1645 = vmatmul.mubr.bf16.gmra.mrb[0].mxu0 %v1569
      %v1646 = vpop.f32.mrb[0].mxu0
      %v1647 = vadd.f32 %v1522, %v1646
      %v1648 = vpop.f32.mrb[0].mxu0
      %v1649 = vpop.f32.mrb[0].mxu0
      %v1650 = vadd.f32 %v1525, %v1649
      %v1651 = vpop.f32.mrb[0].mxu0
      %1652 = vmatprep.mubr.bf16.mxu0 0
      %1653 = vmatmul.mubr.bf16.gmra.mrb[0].mxu0 %v1571
      %v1654 = vpop.f32.mrb[0].mxu0
      %v1655 = vadd.f32 %v1530, %v1654
      %v1656 = vpop.f32.mrb[0].mxu0
      %v1657 = vpop.f32.mrb[0].mxu0
      %v1658 = vadd.f32 %v1533, %v1657
      %v1659 = vpop.f32.mrb[0].mxu0
      %1660 = vmatprep.mubr.bf16.mxu0 0
      %1661 = vmatmul.mubr.bf16.gmra.mrb[0].mxu0 %v1573
      %v1662 = vpop.f32.mrb[0].mxu0
      %v1663 = vadd.f32 %v1538, %v1662
      %v1664 = vpop.f32.mrb[0].mxu0
      %v1665 = vpop.f32.mrb[0].mxu0
      %v1666 = vadd.f32 %v1541, %v1665
      %v1667 = vpop.f32.mrb[0].mxu0
      %1668 = vmatprep.mubr.bf16.mxu0 0
      %1669 = vmatmul.mubr.bf16.gmra.mrb[0].mxu0 %v1575
      %v1670 = vpop.f32.mrb[0].mxu0
      %v1671 = vadd.f32 %v1546, %v1670
      %v1672 = vpop.f32.mrb[0].mxu0
      %v1673 = vpop.f32.mrb[0].mxu0
      %v1674 = vadd.f32 %v1549, %v1673
      %v1675 = vpop.f32.mrb[0].mxu0
      %1676 = vdwg.mxu0
      %s1677 = sadd.s32 %s218, 2
      %s1678 = smul.u32 %s1677, 3
      %s1679 = smul.addr %s1678, 4
      %s1680 = scalar_lea.vmem %s197, %s1679
      %v1681 = vld [vmem:[%s1680] sm:$0xf]
      %v1682 = vld [vmem:[%s1680 + $0x4] sm:$0xf]
      %v1683 = vld [vmem:[%s1680 + $0xc] sm:$0xf]
      %v1684 = vld [vmem:[%s1680 + $0x10] sm:$0xf]
      %v1685 = vld [vmem:[%s1680 + $0x18] sm:$0xf]
      %v1686 = vld [vmem:[%s1680 + $0x1c] sm:$0xf]
      %v1687 = vld [vmem:[%s1680 + $0x24] sm:$0xf]
      %v1688 = vld [vmem:[%s1680 + $0x28] sm:$0xf]
      %v1689 = vld [vmem:[%s1680 + $0x30] sm:$0xf]
      %v1690 = vld [vmem:[%s1680 + $0x34] sm:$0xf]
      %v1691 = vld [vmem:[%s1680 + $0x3c] sm:$0xf]
      %v1692 = vld [vmem:[%s1680 + $0x40] sm:$0xf]
      %v1693 = vld [vmem:[%s1680 + $0x48] sm:$0xf]
      %v1694 = vld [vmem:[%s1680 + $0x4c] sm:$0xf]
      %v1695 = vld [vmem:[%s1680 + $0x54] sm:$0xf]
      %v1696 = vld [vmem:[%s1680 + $0x58] sm:$0xf]
      %v1697 = vld [vmem:[%s1680 + $0x8] sm:$0x1]
      %v1698 = vld [vmem:[%s1680 + $0x14] sm:$0x1]
      %v1699 = vld [vmem:[%s1680 + $0x20] sm:$0x1]
      %v1700 = vld [vmem:[%s1680 + $0x2c] sm:$0x1]
      %v1701 = vld [vmem:[%s1680 + $0x38] sm:$0x1]
      %v1702 = vld [vmem:[%s1680 + $0x44] sm:$0x1]
      %v1703 = vld [vmem:[%s1680 + $0x50] sm:$0x1]
      %v1704 = vld [vmem:[%s1680 + $0x5c] sm:$0x1]
      %v1705 = vld [vmem:[%s1680] sm:$0xe]
      %v1706 = vld [vmem:[%s1680 + $0xc] sm:$0xe]
      %v1707 = vld [vmem:[%s1680 + $0x18] sm:$0xe]
      %v1708 = vld [vmem:[%s1680 + $0x24] sm:$0xe]
      %v1709 = vld [vmem:[%s1680 + $0x30] sm:$0xe]
      %v1710 = vld [vmem:[%s1680 + $0x3c] sm:$0xe]
      %v1711 = vld [vmem:[%s1680 + $0x48] sm:$0xe]
      %v1712 = vld [vmem:[%s1680 + $0x54] sm:$0xe]
      %v1713 = vld [vmem:[%s1680 + $0x8] sm:$0x3]
      %v1714 = vld [vmem:[%s1680 + $0x14] sm:$0x3]
      %v1715 = vld [vmem:[%s1680 + $0x20] sm:$0x3]
      %v1716 = vld [vmem:[%s1680 + $0x2c] sm:$0x3]
      %v1717 = vld [vmem:[%s1680 + $0x38] sm:$0x3]
      %v1718 = vld [vmem:[%s1680 + $0x44] sm:$0x3]
      %v1719 = vld [vmem:[%s1680 + $0x50] sm:$0x3]
      %v1720 = vld [vmem:[%s1680 + $0x5c] sm:$0x3]
      %v1721 = vld [vmem:[%s1680] sm:$0xc]
      %v1722 = vld [vmem:[%s1680 + $0xc] sm:$0xc]
      %v1723 = vld [vmem:[%s1680 + $0x18] sm:$0xc]
      %v1724 = vld [vmem:[%s1680 + $0x24] sm:$0xc]
      %v1725 = vld [vmem:[%s1680 + $0x30] sm:$0xc]
      %v1726 = vld [vmem:[%s1680 + $0x3c] sm:$0xc]
      %v1727 = vld [vmem:[%s1680 + $0x48] sm:$0xc]
      %v1728 = vld [vmem:[%s1680 + $0x54] sm:$0xc]
      %v1745 = vunpack.c.l.b16 %v1681
      %v1746 = vunpack.c.l.b16 %v1682
      %v1747 = vunpack.c.l.b16 %v1683
      %v1748 = vunpack.c.l.b16 %v1684
      %v1749 = vunpack.c.l.b16 %v1685
      %v1750 = vunpack.c.l.b16 %v1686
      %v1751 = vunpack.c.l.b16 %v1687
      %v1752 = vunpack.c.l.b16 %v1688
      %v1753 = vunpack.c.l.b16 %v1689
      %v1754 = vunpack.c.l.b16 %v1690
      %v1755 = vunpack.c.l.b16 %v1691
      %v1756 = vunpack.c.l.b16 %v1692
      %v1757 = vunpack.c.l.b16 %v1693
      %v1758 = vunpack.c.l.b16 %v1694
      %v1759 = vunpack.c.l.b16 %v1695
      %v1760 = vunpack.c.l.b16 %v1696
      %v1761 = vpack.c.b16 %v1746, %v1745
      %v1762 = vpack.c.b16 %v1748, %v1747
      %v1763 = vpack.c.b16 %v1750, %v1749
      %v1764 = vpack.c.b16 %v1752, %v1751
      %v1765 = vpack.c.b16 %v1754, %v1753
      %v1766 = vpack.c.b16 %v1756, %v1755
      %v1767 = vpack.c.b16 %v1758, %v1757
      %v1768 = vpack.c.b16 %v1760, %v1759
      %v1777 = vunpack.c.l.b16 %v1697
      %v1778 = vunpack.c.l.b16 %v1698
      %v1779 = vunpack.c.l.b16 %v1699
      %v1780 = vunpack.c.l.b16 %v1700
      %v1781 = vunpack.c.l.b16 %v1701
      %v1782 = vunpack.c.l.b16 %v1702
      %v1783 = vunpack.c.l.b16 %v1703
      %v1784 = vunpack.c.l.b16 %v1704
      %v1785 = vpack.c.b16 %v1777, %v1777
      %v1786 = vpack.c.b16 %v1778, %v1778
      %v1787 = vpack.c.b16 %v1779, %v1779
      %v1788 = vpack.c.b16 %v1780, %v1780
      %v1789 = vpack.c.b16 %v1781, %v1781
      %v1790 = vpack.c.b16 %v1782, %v1782
      %v1791 = vpack.c.b16 %v1783, %v1783
      %v1792 = vpack.c.b16 %v1784, %v1784
      %v1794 = vshrl.u32 %v1761, 16
      %v1796 = vshll.u32 %v1761, 16
      %v1798 = vrot.slane %v1796, 1
      %v1799 = vor.u32 %v1794, %v1798
      %v1801 = vshll.u32 %v1785, 16
      %v1803 = vrot.slane %v1801, 1
      %v1804 = vsel %vm334, %v1799, %v1803
      %v1806 = vshrl.u32 %v1762, 16
      %v1808 = vshll.u32 %v1762, 16
      %v1810 = vrot.slane %v1808, 1
      %v1811 = vor.u32 %v1806, %v1810
      %v1813 = vshll.u32 %v1786, 16
      %v1815 = vrot.slane %v1813, 1
      %v1816 = vsel %vm334, %v1811, %v1815
      %v1818 = vshrl.u32 %v1763, 16
      %v1820 = vshll.u32 %v1763, 16
      %v1822 = vrot.slane %v1820, 1
      %v1823 = vor.u32 %v1818, %v1822
      %v1825 = vshll.u32 %v1787, 16
      %v1827 = vrot.slane %v1825, 1
      %v1828 = vsel %vm334, %v1823, %v1827
      %v1830 = vshrl.u32 %v1764, 16
      %v1832 = vshll.u32 %v1764, 16
      %v1834 = vrot.slane %v1832, 1
      %v1835 = vor.u32 %v1830, %v1834
      %v1837 = vshll.u32 %v1788, 16
      %v1839 = vrot.slane %v1837, 1
      %v1840 = vsel %vm334, %v1835, %v1839
      %v1842 = vshrl.u32 %v1765, 16
      %v1844 = vshll.u32 %v1765, 16
      %v1846 = vrot.slane %v1844, 1
      %v1847 = vor.u32 %v1842, %v1846
      %v1849 = vshll.u32 %v1789, 16
      %v1851 = vrot.slane %v1849, 1
      %v1852 = vsel %vm334, %v1847, %v1851
      %v1854 = vshrl.u32 %v1766, 16
      %v1856 = vshll.u32 %v1766, 16
      %v1858 = vrot.slane %v1856, 1
      %v1859 = vor.u32 %v1854, %v1858
      %v1861 = vshll.u32 %v1790, 16
      %v1863 = vrot.slane %v1861, 1
      %v1864 = vsel %vm334, %v1859, %v1863
      %v1866 = vshrl.u32 %v1767, 16
      %v1868 = vshll.u32 %v1767, 16
      %v1870 = vrot.slane %v1868, 1
      %v1871 = vor.u32 %v1866, %v1870
      %v1873 = vshll.u32 %v1791, 16
      %v1875 = vrot.slane %v1873, 1
      %v1876 = vsel %vm334, %v1871, %v1875
      %v1878 = vshrl.u32 %v1768, 16
      %v1880 = vshll.u32 %v1768, 16
      %v1882 = vrot.slane %v1880, 1
      %v1883 = vor.u32 %v1878, %v1882
      %v1885 = vshll.u32 %v1792, 16
      %v1887 = vrot.slane %v1885, 1
      %v1888 = vsel %vm334, %v1883, %v1887
      %1889 = vrot.lane.b32.xlu0 %v1804, 4
      %v1890 = vpop.permute.xlu0 %1889
      %1891 = vrot.lane.b32.xlu0 %v1816, 4
      %v1892 = vpop.permute.xlu0 %1891
      %1893 = vrot.lane.b32.xlu0 %v1828, 4
      %v1894 = vpop.permute.xlu0 %1893
      %1895 = vrot.lane.b32.xlu0 %v1840, 4
      %v1896 = vpop.permute.xlu0 %1895
      %1897 = vrot.lane.b32.xlu0 %v1852, 4
      %v1898 = vpop.permute.xlu0 %1897
      %1899 = vrot.lane.b32.xlu0 %v1864, 4
      %v1900 = vpop.permute.xlu0 %1899
      %1901 = vrot.lane.b32.xlu0 %v1876, 4
      %v1902 = vpop.permute.xlu0 %1901
      %1903 = vrot.lane.b32.xlu0 %v1888, 4
      %v1904 = vpop.permute.xlu0 %1903
      %v1913 = vunpack.c.l.b16 %v1705
      %v1914 = vunpack.c.l.b16 %v1706
      %v1915 = vunpack.c.l.b16 %v1707
      %v1916 = vunpack.c.l.b16 %v1708
      %v1917 = vunpack.c.l.b16 %v1709
      %v1918 = vunpack.c.l.b16 %v1710
      %v1919 = vunpack.c.l.b16 %v1711
      %v1920 = vunpack.c.l.b16 %v1712
      %v1921 = vpack.c.b16 %v1746, %v1913
      %v1922 = vpack.c.b16 %v1748, %v1914
      %v1923 = vpack.c.b16 %v1750, %v1915
      %v1924 = vpack.c.b16 %v1752, %v1916
      %v1925 = vpack.c.b16 %v1754, %v1917
      %v1926 = vpack.c.b16 %v1756, %v1918
      %v1927 = vpack.c.b16 %v1758, %v1919
      %v1928 = vpack.c.b16 %v1760, %v1920
      %v1929 = vrot.slane %v1921, 1
      %v1930 = vrot.slane %v1785, 1
      %v1931 = vsel %vm471, %v1929, %v1930
      %v1932 = vrot.slane %v1922, 1
      %v1933 = vrot.slane %v1786, 1
      %v1934 = vsel %vm471, %v1932, %v1933
      %v1935 = vrot.slane %v1923, 1
      %v1936 = vrot.slane %v1787, 1
      %v1937 = vsel %vm471, %v1935, %v1936
      %v1938 = vrot.slane %v1924, 1
      %v1939 = vrot.slane %v1788, 1
      %v1940 = vsel %vm471, %v1938, %v1939
      %v1941 = vrot.slane %v1925, 1
      %v1942 = vrot.slane %v1789, 1
      %v1943 = vsel %vm471, %v1941, %v1942
      %v1944 = vrot.slane %v1926, 1
      %v1945 = vrot.slane %v1790, 1
      %v1946 = vsel %vm471, %v1944, %v1945
      %v1947 = vrot.slane %v1927, 1
      %v1948 = vrot.slane %v1791, 1
      %v1949 = vsel %vm471, %v1947, %v1948
      %v1950 = vrot.slane %v1928, 1
      %v1951 = vrot.slane %v1792, 1
      %v1952 = vsel %vm471, %v1950, %v1951
      %1953 = vrot.lane.b32.xlu0 %v1931, 8
      %v1954 = vpop.permute.xlu0 %1953
      %1955 = vrot.lane.b32.xlu0 %v1934, 8
      %v1956 = vpop.permute.xlu0 %1955
      %1957 = vrot.lane.b32.xlu0 %v1937, 8
      %v1958 = vpop.permute.xlu0 %1957
      %1959 = vrot.lane.b32.xlu0 %v1940, 8
      %v1960 = vpop.permute.xlu0 %1959
      %1961 = vrot.lane.b32.xlu0 %v1943, 8
      %v1962 = vpop.permute.xlu0 %1961
      %1963 = vrot.lane.b32.xlu0 %v1946, 8
      %v1964 = vpop.permute.xlu0 %1963
      %1965 = vrot.lane.b32.xlu0 %v1949, 8
      %v1966 = vpop.permute.xlu0 %1965
      %1967 = vrot.lane.b32.xlu0 %v1952, 8
      %v1968 = vpop.permute.xlu0 %1967
      %v1977 = vunpack.c.l.b16 %v1713
      %v1978 = vunpack.c.l.b16 %v1714
      %v1979 = vunpack.c.l.b16 %v1715
      %v1980 = vunpack.c.l.b16 %v1716
      %v1981 = vunpack.c.l.b16 %v1717
      %v1982 = vunpack.c.l.b16 %v1718
      %v1983 = vunpack.c.l.b16 %v1719
      %v1984 = vunpack.c.l.b16 %v1720
      %v1985 = vpack.c.b16 %v1977, %v1977
      %v1986 = vpack.c.b16 %v1978, %v1978
      %v1987 = vpack.c.b16 %v1979, %v1979
      %v1988 = vpack.c.b16 %v1980, %v1980
      %v1989 = vpack.c.b16 %v1981, %v1981
      %v1990 = vpack.c.b16 %v1982, %v1982
      %v1991 = vpack.c.b16 %v1983, %v1983
      %v1992 = vpack.c.b16 %v1984, %v1984
      %v1994 = vshrl.u32 %v1921, 16
      %v1996 = vrot.slane %v1994, 1
      %v1997 = vshll.u32 %v1921, 16
      %v1999 = vrot.slane %v1997, 2
      %v2000 = vor.u32 %v1996, %v1999
      %v2002 = vshrl.u32 %v1985, 16
      %v2004 = vrot.slane %v2002, 1
      %v2005 = vshll.u32 %v1985, 16
      %v2007 = vrot.slane %v2005, 2
      %v2008 = vor.u32 %v2004, %v2007
      %v2009 = vsel %vm536, %v2000, %v2008
      %v2011 = vshrl.u32 %v1922, 16
      %v2013 = vrot.slane %v2011, 1
      %v2014 = vshll.u32 %v1922, 16
      %v2016 = vrot.slane %v2014, 2
      %v2017 = vor.u32 %v2013, %v2016
      %v2019 = vshrl.u32 %v1986, 16
      %v2021 = vrot.slane %v2019, 1
      %v2022 = vshll.u32 %v1986, 16
      %v2024 = vrot.slane %v2022, 2
      %v2025 = vor.u32 %v2021, %v2024
      %v2026 = vsel %vm536, %v2017, %v2025
      %v2028 = vshrl.u32 %v1923, 16
      %v2030 = vrot.slane %v2028, 1
      %v2031 = vshll.u32 %v1923, 16
      %v2033 = vrot.slane %v2031, 2
      %v2034 = vor.u32 %v2030, %v2033
      %v2036 = vshrl.u32 %v1987, 16
      %v2038 = vrot.slane %v2036, 1
      %v2039 = vshll.u32 %v1987, 16
      %v2041 = vrot.slane %v2039, 2
      %v2042 = vor.u32 %v2038, %v2041
      %v2043 = vsel %vm536, %v2034, %v2042
      %v2045 = vshrl.u32 %v1924, 16
      %v2047 = vrot.slane %v2045, 1
      %v2048 = vshll.u32 %v1924, 16
      %v2050 = vrot.slane %v2048, 2
      %v2051 = vor.u32 %v2047, %v2050
      %v2053 = vshrl.u32 %v1988, 16
      %v2055 = vrot.slane %v2053, 1
      %v2056 = vshll.u32 %v1988, 16
      %v2058 = vrot.slane %v2056, 2
      %v2059 = vor.u32 %v2055, %v2058
      %v2060 = vsel %vm536, %v2051, %v2059
      %v2062 = vshrl.u32 %v1925, 16
      %v2064 = vrot.slane %v2062, 1
      %v2065 = vshll.u32 %v1925, 16
      %v2067 = vrot.slane %v2065, 2
      %v2068 = vor.u32 %v2064, %v2067
      %v2070 = vshrl.u32 %v1989, 16
      %v2072 = vrot.slane %v2070, 1
      %v2073 = vshll.u32 %v1989, 16
      %v2075 = vrot.slane %v2073, 2
      %v2076 = vor.u32 %v2072, %v2075
      %v2077 = vsel %vm536, %v2068, %v2076
      %v2079 = vshrl.u32 %v1926, 16
      %v2081 = vrot.slane %v2079, 1
      %v2082 = vshll.u32 %v1926, 16
      %v2084 = vrot.slane %v2082, 2
      %v2085 = vor.u32 %v2081, %v2084
      %v2087 = vshrl.u32 %v1990, 16
      %v2089 = vrot.slane %v2087, 1
      %v2090 = vshll.u32 %v1990, 16
      %v2092 = vrot.slane %v2090, 2
      %v2093 = vor.u32 %v2089, %v2092
      %v2094 = vsel %vm536, %v2085, %v2093
      %v2096 = vshrl.u32 %v1927, 16
      %v2098 = vrot.slane %v2096, 1
      %v2099 = vshll.u32 %v1927, 16
      %v2101 = vrot.slane %v2099, 2
      %v2102 = vor.u32 %v2098, %v2101
      %v2104 = vshrl.u32 %v1991, 16
      %v2106 = vrot.slane %v2104, 1
      %v2107 = vshll.u32 %v1991, 16
      %v2109 = vrot.slane %v2107, 2
      %v2110 = vor.u32 %v2106, %v2109
      %v2111 = vsel %vm536, %v2102, %v2110
      %v2113 = vshrl.u32 %v1928, 16
      %v2115 = vrot.slane %v2113, 1
      %v2116 = vshll.u32 %v1928, 16
      %v2118 = vrot.slane %v2116, 2
      %v2119 = vor.u32 %v2115, %v2118
      %v2121 = vshrl.u32 %v1992, 16
      %v2123 = vrot.slane %v2121, 1
      %v2124 = vshll.u32 %v1992, 16
      %v2126 = vrot.slane %v2124, 2
      %v2127 = vor.u32 %v2123, %v2126
      %v2128 = vsel %vm536, %v2119, %v2127
      %2129 = vrot.lane.b32.xlu0 %v2009, 12
      %v2130 = vpop.permute.xlu0 %2129
      %2131 = vrot.lane.b32.xlu0 %v2026, 12
      %v2132 = vpop.permute.xlu0 %2131
      %2133 = vrot.lane.b32.xlu0 %v2043, 12
      %v2134 = vpop.permute.xlu0 %2133
      %2135 = vrot.lane.b32.xlu0 %v2060, 12
      %v2136 = vpop.permute.xlu0 %2135
      %2137 = vrot.lane.b32.xlu0 %v2077, 12
      %v2138 = vpop.permute.xlu0 %2137
      %2139 = vrot.lane.b32.xlu0 %v2094, 12
      %v2140 = vpop.permute.xlu0 %2139
      %2141 = vrot.lane.b32.xlu0 %v2111, 12
      %v2142 = vpop.permute.xlu0 %2141
      %2143 = vrot.lane.b32.xlu0 %v2128, 12
      %v2144 = vpop.permute.xlu0 %2143
      %v2153 = vunpack.c.l.b16 %v1721
      %v2154 = vunpack.c.l.b16 %v1722
      %v2155 = vunpack.c.l.b16 %v1723
      %v2156 = vunpack.c.l.b16 %v1724
      %v2157 = vunpack.c.l.b16 %v1725
      %v2158 = vunpack.c.l.b16 %v1726
      %v2159 = vunpack.c.l.b16 %v1727
      %v2160 = vunpack.c.l.b16 %v1728
      %v2161 = vpack.c.b16 %v1746, %v2153
      %v2162 = vpack.c.b16 %v1748, %v2154
      %v2163 = vpack.c.b16 %v1750, %v2155
      %v2164 = vpack.c.b16 %v1752, %v2156
      %v2165 = vpack.c.b16 %v1754, %v2157
      %v2166 = vpack.c.b16 %v1756, %v2158
      %v2167 = vpack.c.b16 %v1758, %v2159
      %v2168 = vpack.c.b16 %v1760, %v2160
      %v2169 = vrot.slane %v2161, 2
      %v2170 = vrot.slane %v1985, 2
      %v2171 = vsel %vm713, %v2169, %v2170
      %v2172 = vrot.slane %v2162, 2
      %v2173 = vrot.slane %v1986, 2
      %v2174 = vsel %vm713, %v2172, %v2173
      %v2175 = vrot.slane %v2163, 2
      %v2176 = vrot.slane %v1987, 2
      %v2177 = vsel %vm713, %v2175, %v2176
      %v2178 = vrot.slane %v2164, 2
      %v2179 = vrot.slane %v1988, 2
      %v2180 = vsel %vm713, %v2178, %v2179
      %v2181 = vrot.slane %v2165, 2
      %v2182 = vrot.slane %v1989, 2
      %v2183 = vsel %vm713, %v2181, %v2182
      %v2184 = vrot.slane %v2166, 2
      %v2185 = vrot.slane %v1990, 2
      %v2186 = vsel %vm713, %v2184, %v2185
      %v2187 = vrot.slane %v2167, 2
      %v2188 = vrot.slane %v1991, 2
      %v2189 = vsel %vm713, %v2187, %v2188
      %v2190 = vrot.slane %v2168, 2
      %v2191 = vrot.slane %v1992, 2
      %v2192 = vsel %vm713, %v2190, %v2191
      %2193 = vrot.lane.b32.xlu0 %v2171, 16
      %v2194 = vpop.permute.xlu0 %2193
      %2195 = vrot.lane.b32.xlu0 %v2174, 16
      %v2196 = vpop.permute.xlu0 %2195
      %2197 = vrot.lane.b32.xlu0 %v2177, 16
      %v2198 = vpop.permute.xlu0 %2197
      %2199 = vrot.lane.b32.xlu0 %v2180, 16
      %v2200 = vpop.permute.xlu0 %2199
      %2201 = vrot.lane.b32.xlu0 %v2183, 16
      %v2202 = vpop.permute.xlu0 %2201
      %2203 = vrot.lane.b32.xlu0 %v2186, 16
      %v2204 = vpop.permute.xlu0 %2203
      %2205 = vrot.lane.b32.xlu0 %v2189, 16
      %v2206 = vpop.permute.xlu0 %2205
      %2207 = vrot.lane.b32.xlu0 %v2192, 16
      %v2208 = vpop.permute.xlu0 %2207
      %v2210 = vsel %vm754, %v1761, %v1890
      %v2212 = vsel %vm754, %v1762, %v1892
      %v2214 = vsel %vm754, %v1763, %v1894
      %v2216 = vsel %vm754, %v1764, %v1896
      %v2218 = vsel %vm754, %v1765, %v1898
      %v2220 = vsel %vm754, %v1766, %v1900
      %v2222 = vsel %vm754, %v1767, %v1902
      %v2224 = vsel %vm754, %v1768, %v1904
      %v2226 = vsel %vm771, %v2210, %v1954
      %v2228 = vsel %vm771, %v2212, %v1956
      %v2230 = vsel %vm771, %v2214, %v1958
      %v2232 = vsel %vm771, %v2216, %v1960
      %v2234 = vsel %vm771, %v2218, %v1962
      %v2236 = vsel %vm771, %v2220, %v1964
      %v2238 = vsel %vm771, %v2222, %v1966
      %v2240 = vsel %vm771, %v2224, %v1968
      %v2242 = vsel %vm788, %v2226, %v2130
      %v2244 = vsel %vm788, %v2228, %v2132
      %v2246 = vsel %vm788, %v2230, %v2134
      %v2248 = vsel %vm788, %v2232, %v2136
      %v2250 = vsel %vm788, %v2234, %v2138
      %v2252 = vsel %vm788, %v2236, %v2140
      %v2254 = vsel %vm788, %v2238, %v2142
      %v2256 = vsel %vm788, %v2240, %v2144
      %v2258 = vsel %vm805, %v2242, %v2194
      %v2260 = vsel %vm805, %v2244, %v2196
      %v2262 = vsel %vm805, %v2246, %v2198
      %v2264 = vsel %vm805, %v2248, %v2200
      %v2266 = vsel %vm805, %v2250, %v2202
      %v2268 = vsel %vm805, %v2252, %v2204
      %v2270 = vsel %vm805, %v2254, %v2206
      %v2272 = vsel %vm805, %v2256, %v2208
      %s2273 = scalar_lea.vmem %s1, 24
      %v2274 = vld [vmem:[%s2273] sm:$0xf]
      %v2275 = vld [vmem:[%s2273 + $0x4] sm:$0xf]
      %v2276 = vld [vmem:[%s2273 + $0x8] sm:$0x3]
      %v2280 = vunpack.c.l.b16 %v2274
      %v2281 = vunpack.c.l.b16 %v2275
      %v2282 = vunpack.c.l.b16 %v2276
      %v2283 = vpack.c.b16 %v2281, %v2280
      %v2284 = vpack.c.b16 %v2282, %v2282
      %v2286 = vsel %vm1434, %v2258, 0
      %v2288 = vsel %vm1434, %v2260, 0
      %v2290 = vsel %vm1434, %v2262, 0
      %v2292 = vsel %vm1434, %v2264, 0
      %v2294 = vsel %vm1434, %v2266, 0
      %v2296 = vsel %vm1434, %v2268, 0
      %v2298 = vsel %vm1434, %v2270, 0
      %v2300 = vsel %vm1434, %v2272, 0
      %v2303 = vsel %vm1451, %v2284, 0
      %2305 = vmatprep.subr.bf16.mxu0 0
      %2306 = vmatpush1.bf16.msra.mxu0 %v2283
      %2307 = vmatprep.subr.bf16.mxu0 0
      %2308 = vmatpush1.bf16.msra.mxu0 %v2303
      %2309 = vmatprep.subr.bf16.mxu0 0
      %2310 = vmatpush1.bf16.msra.mxu0 0
      %2311 = vmatprep.subr.bf16.mxu0 0
      %2312 = vmatpush1.bf16.msra.mxu0 0
      %2313 = vmatprep.subr.bf16.mxu0 0
      %2314 = vmatpush1.bf16.msra.mxu0 0
      %2315 = vmatprep.subr.bf16.mxu0 0
      %2316 = vmatpush1.bf16.msra.mxu0 0
      %2317 = vmatprep.subr.bf16.mxu0 0
      %2318 = vmatpush1.bf16.msra.mxu0 0
      %2319 = vmatprep.subr.bf16.mxu0 0
      %2320 = vmatpush1.bf16.msra.mxu0 0
      %2321 = vmatprep.subr.bf16.mxu0 0
      %2322 = vmatpush1.bf16.msra.mxu0 0
      %2323 = vmatprep.subr.bf16.mxu0 0
      %2324 = vmatpush1.bf16.msra.mxu0 0
      %2325 = vmatprep.subr.bf16.mxu0 0
      %2326 = vmatpush1.bf16.msra.mxu0 0
      %2327 = vmatprep.subr.bf16.mxu0 0
      %2328 = vmatpush1.bf16.msra.mxu0 0
      %2329 = vmatprep.subr.bf16.mxu0 0
      %2330 = vmatpush1.bf16.msra.mxu0 0
      %2331 = vmatprep.subr.bf16.mxu0 0
      %2332 = vmatpush1.bf16.msra.mxu0 0
      %2333 = vmatprep.subr.bf16.mxu0 0
      %2334 = vmatpush1.bf16.msra.mxu0 0
      %2335 = vmatprep.subr.bf16.mxu0 0
      %2336 = vmatpush1.bf16.msra.mxu0 0
      %2337 = vmatprep.mubr.bf16.mxu0 0
      %2338 = vmatmul.mubr.bf16.gmra.mrb[0].mxu0 %v2286
      %v2339 = vpop.f32.mrb[0].mxu0
      %v2340 = vadd.f32 0.0, %v2339
      %v2341 = vpop.f32.mrb[0].mxu0
      %v2342 = vpop.f32.mrb[0].mxu0
      %v2343 = vadd.f32 0.0, %v2342
      %v2344 = vpop.f32.mrb[0].mxu0
      %2345 = vmatprep.mubr.bf16.mxu0 0
      %2346 = vmatmul.mubr.bf16.gmra.mrb[0].mxu0 %v2288
      %v2347 = vpop.f32.mrb[0].mxu0
      %v2348 = vadd.f32 0.0, %v2347
      %v2349 = vpop.f32.mrb[0].mxu0
      %v2350 = vpop.f32.mrb[0].mxu0
      %v2351 = vadd.f32 0.0, %v2350
      %v2352 = vpop.f32.mrb[0].mxu0
      %2353 = vmatprep.mubr.bf16.mxu0 0
      %2354 = vmatmul.mubr.bf16.gmra.mrb[0].mxu0 %v2290
      %v2355 = vpop.f32.mrb[0].mxu0
      %v2356 = vadd.f32 0.0, %v2355
      %v2357 = vpop.f32.mrb[0].mxu0
      %v2358 = vpop.f32.mrb[0].mxu0
      %v2359 = vadd.f32 0.0, %v2358
      %v2360 = vpop.f32.mrb[0].mxu0
      %2361 = vmatprep.mubr.bf16.mxu0 0
      %2362 = vmatmul.mubr.bf16.gmra.mrb[0].mxu0 %v2292
      %v2363 = vpop.f32.mrb[0].mxu0
      %v2364 = vadd.f32 0.0, %v2363
      %v2365 = vpop.f32.mrb[0].mxu0
      %v2366 = vpop.f32.mrb[0].mxu0
      %v2367 = vadd.f32 0.0, %v2366
      %v2368 = vpop.f32.mrb[0].mxu0
      %2369 = vmatprep.mubr.bf16.mxu0 0
      %2370 = vmatmul.mubr.bf16.gmra.mrb[0].mxu0 %v2294
      %v2371 = vpop.f32.mrb[0].mxu0
      %v2372 = vadd.f32 0.0, %v2371
      %v2373 = vpop.f32.mrb[0].mxu0
      %v2374 = vpop.f32.mrb[0].mxu0
      %v2375 = vadd.f32 0.0, %v2374
      %v2376 = vpop.f32.mrb[0].mxu0
      %2377 = vmatprep.mubr.bf16.mxu0 0
      %2378 = vmatmul.mubr.bf16.gmra.mrb[0].mxu0 %v2296
      %v2379 = vpop.f32.mrb[0].mxu0
      %v2380 = vadd.f32 0.0, %v2379
      %v2381 = vpop.f32.mrb[0].mxu0
      %v2382 = vpop.f32.mrb[0].mxu0
      %v2383 = vadd.f32 0.0, %v2382
      %v2384 = vpop.f32.mrb[0].mxu0
      %2385 = vmatprep.mubr.bf16.mxu0 0
      %2386 = vmatmul.mubr.bf16.gmra.mrb[0].mxu0 %v2298
      %v2387 = vpop.f32.mrb[0].mxu0
      %v2388 = vadd.f32 0.0, %v2387
      %v2389 = vpop.f32.mrb[0].mxu0
      %v2390 = vpop.f32.mrb[0].mxu0
      %v2391 = vadd.f32 0.0, %v2390
      %v2392 = vpop.f32.mrb[0].mxu0
      %2393 = vmatprep.mubr.bf16.mxu0 0
      %2394 = vmatmul.mubr.bf16.gmra.mrb[0].mxu0 %v2300
      %v2395 = vpop.f32.mrb[0].mxu0
      %v2396 = vadd.f32 0.0, %v2395
      %v2397 = vpop.f32.mrb[0].mxu0
      %v2398 = vpop.f32.mrb[0].mxu0
      %v2399 = vadd.f32 0.0, %v2398
      %v2400 = vpop.f32.mrb[0].mxu0
      %2401 = vdwg.mxu0
      %v2402 = vadd.f32 %v1615, %v2340
      %v2403 = vadd.f32 %v1618, %v2343
      %v2404 = vadd.f32 %v1623, %v2348
      %v2405 = vadd.f32 %v1626, %v2351
      %v2406 = vadd.f32 %v1631, %v2356
      %v2407 = vadd.f32 %v1634, %v2359
      %v2408 = vadd.f32 %v1639, %v2364
      %v2409 = vadd.f32 %v1642, %v2367
      %v2410 = vadd.f32 %v1647, %v2372
      %v2411 = vadd.f32 %v1650, %v2375
      %v2412 = vadd.f32 %v1655, %v2380
      %v2413 = vadd.f32 %v1658, %v2383
      %v2414 = vadd.f32 %v1663, %v2388
      %v2415 = vadd.f32 %v1666, %v2391
      %v2416 = vadd.f32 %v1671, %v2396
      %v2417 = vadd.f32 %v1674, %v2399
      %s2418 = sadd.s32 %s218, 3
      %s2419 = smul.u32 %s2418, 3
      %s2420 = smul.addr %s2419, 4
      %s2421 = scalar_lea.vmem %s197, %s2420
      %v2422 = vld [vmem:[%s2421] sm:$0xf]
      %v2423 = vld [vmem:[%s2421 + $0x4] sm:$0xf]
      %v2424 = vld [vmem:[%s2421 + $0xc] sm:$0xf]
      %v2425 = vld [vmem:[%s2421 + $0x10] sm:$0xf]
      %v2426 = vld [vmem:[%s2421 + $0x18] sm:$0xf]
      %v2427 = vld [vmem:[%s2421 + $0x1c] sm:$0xf]
      %v2428 = vld [vmem:[%s2421 + $0x24] sm:$0xf]
      %v2429 = vld [vmem:[%s2421 + $0x28] sm:$0xf]
      %v2430 = vld [vmem:[%s2421 + $0x30] sm:$0xf]
      %v2431 = vld [vmem:[%s2421 + $0x34] sm:$0xf]
      %v2432 = vld [vmem:[%s2421 + $0x3c] sm:$0xf]
      %v2433 = vld [vmem:[%s2421 + $0x40] sm:$0xf]
      %v2434 = vld [vmem:[%s2421 + $0x48] sm:$0xf]
      %v2435 = vld [vmem:[%s2421 + $0x4c] sm:$0xf]
      %v2436 = vld [vmem:[%s2421 + $0x54] sm:$0xf]
      %v2437 = vld [vmem:[%s2421 + $0x58] sm:$0xf]
      %v2438 = vld [vmem:[%s2421 + $0x8] sm:$0x1]
      %v2439 = vld [vmem:[%s2421 + $0x14] sm:$0x1]
      %v2440 = vld [vmem:[%s2421 + $0x20] sm:$0x1]
      %v2441 = vld [vmem:[%s2421 + $0x2c] sm:$0x1]
      %v2442 = vld [vmem:[%s2421 + $0x38] sm:$0x1]
      %v2443 = vld [vmem:[%s2421 + $0x44] sm:$0x1]
      %v2444 = vld [vmem:[%s2421 + $0x50] sm:$0x1]
      %v2445 = vld [vmem:[%s2421 + $0x5c] sm:$0x1]
      %v2446 = vld [vmem:[%s2421] sm:$0xe]
      %v2447 = vld [vmem:[%s2421 + $0xc] sm:$0xe]
      %v2448 = vld [vmem:[%s2421 + $0x18] sm:$0xe]
      %v2449 = vld [vmem:[%s2421 + $0x24] sm:$0xe]
      %v2450 = vld [vmem:[%s2421 + $0x30] sm:$0xe]
      %v2451 = vld [vmem:[%s2421 + $0x3c] sm:$0xe]
      %v2452 = vld [vmem:[%s2421 + $0x48] sm:$0xe]
      %v2453 = vld [vmem:[%s2421 + $0x54] sm:$0xe]
      %v2454 = vld [vmem:[%s2421 + $0x8] sm:$0x3]
      %v2455 = vld [vmem:[%s2421 + $0x14] sm:$0x3]
      %v2456 = vld [vmem:[%s2421 + $0x20] sm:$0x3]
      %v2457 = vld [vmem:[%s2421 + $0x2c] sm:$0x3]
      %v2458 = vld [vmem:[%s2421 + $0x38] sm:$0x3]
      %v2459 = vld [vmem:[%s2421 + $0x44] sm:$0x3]
      %v2460 = vld [vmem:[%s2421 + $0x50] sm:$0x3]
      %v2461 = vld [vmem:[%s2421 + $0x5c] sm:$0x3]
      %v2462 = vld [vmem:[%s2421] sm:$0xc]
      %v2463 = vld [vmem:[%s2421 + $0xc] sm:$0xc]
      %v2464 = vld [vmem:[%s2421 + $0x18] sm:$0xc]
      %v2465 = vld [vmem:[%s2421 + $0x24] sm:$0xc]
      %v2466 = vld [vmem:[%s2421 + $0x30] sm:$0xc]
      %v2467 = vld [vmem:[%s2421 + $0x3c] sm:$0xc]
      %v2468 = vld [vmem:[%s2421 + $0x48] sm:$0xc]
      %v2469 = vld [vmem:[%s2421 + $0x54] sm:$0xc]
      %v2486 = vunpack.c.l.b16 %v2422
      %v2487 = vunpack.c.l.b16 %v2423
      %v2488 = vunpack.c.l.b16 %v2424
      %v2489 = vunpack.c.l.b16 %v2425
      %v2490 = vunpack.c.l.b16 %v2426
      %v2491 = vunpack.c.l.b16 %v2427
      %v2492 = vunpack.c.l.b16 %v2428
      %v2493 = vunpack.c.l.b16 %v2429
      %v2494 = vunpack.c.l.b16 %v2430
      %v2495 = vunpack.c.l.b16 %v2431
      %v2496 = vunpack.c.l.b16 %v2432
      %v2497 = vunpack.c.l.b16 %v2433
      %v2498 = vunpack.c.l.b16 %v2434
      %v2499 = vunpack.c.l.b16 %v2435
      %v2500 = vunpack.c.l.b16 %v2436
      %v2501 = vunpack.c.l.b16 %v2437
      %v2502 = vpack.c.b16 %v2487, %v2486
      %v2503 = vpack.c.b16 %v2489, %v2488
      %v2504 = vpack.c.b16 %v2491, %v2490
      %v2505 = vpack.c.b16 %v2493, %v2492
      %v2506 = vpack.c.b16 %v2495, %v2494
      %v2507 = vpack.c.b16 %v2497, %v2496
      %v2508 = vpack.c.b16 %v2499, %v2498
      %v2509 = vpack.c.b16 %v2501, %v2500
      %v2518 = vunpack.c.l.b16 %v2438
      %v2519 = vunpack.c.l.b16 %v2439
      %v2520 = vunpack.c.l.b16 %v2440
      %v2521 = vunpack.c.l.b16 %v2441
      %v2522 = vunpack.c.l.b16 %v2442
      %v2523 = vunpack.c.l.b16 %v2443
      %v2524 = vunpack.c.l.b16 %v2444
      %v2525 = vunpack.c.l.b16 %v2445
      %v2526 = vpack.c.b16 %v2518, %v2518
      %v2527 = vpack.c.b16 %v2519, %v2519
      %v2528 = vpack.c.b16 %v2520, %v2520
      %v2529 = vpack.c.b16 %v2521, %v2521
      %v2530 = vpack.c.b16 %v2522, %v2522
      %v2531 = vpack.c.b16 %v2523, %v2523
      %v2532 = vpack.c.b16 %v2524, %v2524
      %v2533 = vpack.c.b16 %v2525, %v2525
      %v2535 = vshrl.u32 %v2502, 16
      %v2537 = vshll.u32 %v2502, 16
      %v2539 = vrot.slane %v2537, 1
      %v2540 = vor.u32 %v2535, %v2539
      %v2542 = vshll.u32 %v2526, 16
      %v2544 = vrot.slane %v2542, 1
      %v2545 = vsel %vm334, %v2540, %v2544
      %v2547 = vshrl.u32 %v2503, 16
      %v2549 = vshll.u32 %v2503, 16
      %v2551 = vrot.slane %v2549, 1
      %v2552 = vor.u32 %v2547, %v2551
      %v2554 = vshll.u32 %v2527, 16
      %v2556 = vrot.slane %v2554, 1
      %v2557 = vsel %vm334, %v2552, %v2556
      %v2559 = vshrl.u32 %v2504, 16
      %v2561 = vshll.u32 %v2504, 16
      %v2563 = vrot.slane %v2561, 1
      %v2564 = vor.u32 %v2559, %v2563
      %v2566 = vshll.u32 %v2528, 16
      %v2568 = vrot.slane %v2566, 1
      %v2569 = vsel %vm334, %v2564, %v2568
      %v2571 = vshrl.u32 %v2505, 16
      %v2573 = vshll.u32 %v2505, 16
      %v2575 = vrot.slane %v2573, 1
      %v2576 = vor.u32 %v2571, %v2575
      %v2578 = vshll.u32 %v2529, 16
      %v2580 = vrot.slane %v2578, 1
      %v2581 = vsel %vm334, %v2576, %v2580
      %v2583 = vshrl.u32 %v2506, 16
      %v2585 = vshll.u32 %v2506, 16
      %v2587 = vrot.slane %v2585, 1
      %v2588 = vor.u32 %v2583, %v2587
      %v2590 = vshll.u32 %v2530, 16
      %v2592 = vrot.slane %v2590, 1
      %v2593 = vsel %vm334, %v2588, %v2592
      %v2595 = vshrl.u32 %v2507, 16
      %v2597 = vshll.u32 %v2507, 16
      %v2599 = vrot.slane %v2597, 1
      %v2600 = vor.u32 %v2595, %v2599
      %v2602 = vshll.u32 %v2531, 16
      %v2604 = vrot.slane %v2602, 1
      %v2605 = vsel %vm334, %v2600, %v2604
      %v2607 = vshrl.u32 %v2508, 16
      %v2609 = vshll.u32 %v2508, 16
      %v2611 = vrot.slane %v2609, 1
      %v2612 = vor.u32 %v2607, %v2611
      %v2614 = vshll.u32 %v2532, 16
      %v2616 = vrot.slane %v2614, 1
      %v2617 = vsel %vm334, %v2612, %v2616
      %v2619 = vshrl.u32 %v2509, 16
      %v2621 = vshll.u32 %v2509, 16
      %v2623 = vrot.slane %v2621, 1
      %v2624 = vor.u32 %v2619, %v2623
      %v2626 = vshll.u32 %v2533, 16
      %v2628 = vrot.slane %v2626, 1
      %v2629 = vsel %vm334, %v2624, %v2628
      %2630 = vrot.lane.b32.xlu0 %v2545, 4
      %v2631 = vpop.permute.xlu0 %2630
      %2632 = vrot.lane.b32.xlu0 %v2557, 4
      %v2633 = vpop.permute.xlu0 %2632
      %2634 = vrot.lane.b32.xlu0 %v2569, 4
      %v2635 = vpop.permute.xlu0 %2634
      %2636 = vrot.lane.b32.xlu0 %v2581, 4
      %v2637 = vpop.permute.xlu0 %2636
      %2638 = vrot.lane.b32.xlu0 %v2593, 4
      %v2639 = vpop.permute.xlu0 %2638
      %2640 = vrot.lane.b32.xlu0 %v2605, 4
      %v2641 = vpop.permute.xlu0 %2640
      %2642 = vrot.lane.b32.xlu0 %v2617, 4
      %v2643 = vpop.permute.xlu0 %2642
      %2644 = vrot.lane.b32.xlu0 %v2629, 4
      %v2645 = vpop.permute.xlu0 %2644
      %v2654 = vunpack.c.l.b16 %v2446
      %v2655 = vunpack.c.l.b16 %v2447
      %v2656 = vunpack.c.l.b16 %v2448
      %v2657 = vunpack.c.l.b16 %v2449
      %v2658 = vunpack.c.l.b16 %v2450
      %v2659 = vunpack.c.l.b16 %v2451
      %v2660 = vunpack.c.l.b16 %v2452
      %v2661 = vunpack.c.l.b16 %v2453
      %v2662 = vpack.c.b16 %v2487, %v2654
      %v2663 = vpack.c.b16 %v2489, %v2655
      %v2664 = vpack.c.b16 %v2491, %v2656
      %v2665 = vpack.c.b16 %v2493, %v2657
      %v2666 = vpack.c.b16 %v2495, %v2658
      %v2667 = vpack.c.b16 %v2497, %v2659
      %v2668 = vpack.c.b16 %v2499, %v2660
      %v2669 = vpack.c.b16 %v2501, %v2661
      %v2670 = vrot.slane %v2662, 1
      %v2671 = vrot.slane %v2526, 1
      %v2672 = vsel %vm471, %v2670, %v2671
      %v2673 = vrot.slane %v2663, 1
      %v2674 = vrot.slane %v2527, 1
      %v2675 = vsel %vm471, %v2673, %v2674
      %v2676 = vrot.slane %v2664, 1
      %v2677 = vrot.slane %v2528, 1
      %v2678 = vsel %vm471, %v2676, %v2677
      %v2679 = vrot.slane %v2665, 1
      %v2680 = vrot.slane %v2529, 1
      %v2681 = vsel %vm471, %v2679, %v2680
      %v2682 = vrot.slane %v2666, 1
      %v2683 = vrot.slane %v2530, 1
      %v2684 = vsel %vm471, %v2682, %v2683
      %v2685 = vrot.slane %v2667, 1
      %v2686 = vrot.slane %v2531, 1
      %v2687 = vsel %vm471, %v2685, %v2686
      %v2688 = vrot.slane %v2668, 1
      %v2689 = vrot.slane %v2532, 1
      %v2690 = vsel %vm471, %v2688, %v2689
      %v2691 = vrot.slane %v2669, 1
      %v2692 = vrot.slane %v2533, 1
      %v2693 = vsel %vm471, %v2691, %v2692
      %2694 = vrot.lane.b32.xlu0 %v2672, 8
      %v2695 = vpop.permute.xlu0 %2694
      %2696 = vrot.lane.b32.xlu0 %v2675, 8
      %v2697 = vpop.permute.xlu0 %2696
      %2698 = vrot.lane.b32.xlu0 %v2678, 8
      %v2699 = vpop.permute.xlu0 %2698
      %2700 = vrot.lane.b32.xlu0 %v2681, 8
      %v2701 = vpop.permute.xlu0 %2700
      %2702 = vrot.lane.b32.xlu0 %v2684, 8
      %v2703 = vpop.permute.xlu0 %2702
      %2704 = vrot.lane.b32.xlu0 %v2687, 8
      %v2705 = vpop.permute.xlu0 %2704
      %2706 = vrot.lane.b32.xlu0 %v2690, 8
      %v2707 = vpop.permute.xlu0 %2706
      %2708 = vrot.lane.b32.xlu0 %v2693, 8
      %v2709 = vpop.permute.xlu0 %2708
      %v2718 = vunpack.c.l.b16 %v2454
      %v2719 = vunpack.c.l.b16 %v2455
      %v2720 = vunpack.c.l.b16 %v2456
      %v2721 = vunpack.c.l.b16 %v2457
      %v2722 = vunpack.c.l.b16 %v2458
      %v2723 = vunpack.c.l.b16 %v2459
      %v2724 = vunpack.c.l.b16 %v2460
      %v2725 = vunpack.c.l.b16 %v2461
      %v2726 = vpack.c.b16 %v2718, %v2718
      %v2727 = vpack.c.b16 %v2719, %v2719
      %v2728 = vpack.c.b16 %v2720, %v2720
      %v2729 = vpack.c.b16 %v2721, %v2721
      %v2730 = vpack.c.b16 %v2722, %v2722
      %v2731 = vpack.c.b16 %v2723, %v2723
      %v2732 = vpack.c.b16 %v2724, %v2724
      %v2733 = vpack.c.b16 %v2725, %v2725
      %v2735 = vshrl.u32 %v2662, 16
      %v2737 = vrot.slane %v2735, 1
      %v2738 = vshll.u32 %v2662, 16
      %v2740 = vrot.slane %v2738, 2
      %v2741 = vor.u32 %v2737, %v2740
      %v2743 = vshrl.u32 %v2726, 16
      %v2745 = vrot.slane %v2743, 1
      %v2746 = vshll.u32 %v2726, 16
      %v2748 = vrot.slane %v2746, 2
      %v2749 = vor.u32 %v2745, %v2748
      %v2750 = vsel %vm536, %v2741, %v2749
      %v2752 = vshrl.u32 %v2663, 16
      %v2754 = vrot.slane %v2752, 1
      %v2755 = vshll.u32 %v2663, 16
      %v2757 = vrot.slane %v2755, 2
      %v2758 = vor.u32 %v2754, %v2757
      %v2760 = vshrl.u32 %v2727, 16
      %v2762 = vrot.slane %v2760, 1
      %v2763 = vshll.u32 %v2727, 16
      %v2765 = vrot.slane %v2763, 2
      %v2766 = vor.u32 %v2762, %v2765
      %v2767 = vsel %vm536, %v2758, %v2766
      %v2769 = vshrl.u32 %v2664, 16
      %v2771 = vrot.slane %v2769, 1
      %v2772 = vshll.u32 %v2664, 16
      %v2774 = vrot.slane %v2772, 2
      %v2775 = vor.u32 %v2771, %v2774
      %v2777 = vshrl.u32 %v2728, 16
      %v2779 = vrot.slane %v2777, 1
      %v2780 = vshll.u32 %v2728, 16
      %v2782 = vrot.slane %v2780, 2
      %v2783 = vor.u32 %v2779, %v2782
      %v2784 = vsel %vm536, %v2775, %v2783
      %v2786 = vshrl.u32 %v2665, 16
      %v2788 = vrot.slane %v2786, 1
      %v2789 = vshll.u32 %v2665, 16
      %v2791 = vrot.slane %v2789, 2
      %v2792 = vor.u32 %v2788, %v2791
      %v2794 = vshrl.u32 %v2729, 16
      %v2796 = vrot.slane %v2794, 1
      %v2797 = vshll.u32 %v2729, 16
      %v2799 = vrot.slane %v2797, 2
      %v2800 = vor.u32 %v2796, %v2799
      %v2801 = vsel %vm536, %v2792, %v2800
      %v2803 = vshrl.u32 %v2666, 16
      %v2805 = vrot.slane %v2803, 1
      %v2806 = vshll.u32 %v2666, 16
      %v2808 = vrot.slane %v2806, 2
      %v2809 = vor.u32 %v2805, %v2808
      %v2811 = vshrl.u32 %v2730, 16
      %v2813 = vrot.slane %v2811, 1
      %v2814 = vshll.u32 %v2730, 16
      %v2816 = vrot.slane %v2814, 2
      %v2817 = vor.u32 %v2813, %v2816
      %v2818 = vsel %vm536, %v2809, %v2817
      %v2820 = vshrl.u32 %v2667, 16
      %v2822 = vrot.slane %v2820, 1
      %v2823 = vshll.u32 %v2667, 16
      %v2825 = vrot.slane %v2823, 2
      %v2826 = vor.u32 %v2822, %v2825
      %v2828 = vshrl.u32 %v2731, 16
      %v2830 = vrot.slane %v2828, 1
      %v2831 = vshll.u32 %v2731, 16
      %v2833 = vrot.slane %v2831, 2
      %v2834 = vor.u32 %v2830, %v2833
      %v2835 = vsel %vm536, %v2826, %v2834
      %v2837 = vshrl.u32 %v2668, 16
      %v2839 = vrot.slane %v2837, 1
      %v2840 = vshll.u32 %v2668, 16
      %v2842 = vrot.slane %v2840, 2
      %v2843 = vor.u32 %v2839, %v2842
      %v2845 = vshrl.u32 %v2732, 16
      %v2847 = vrot.slane %v2845, 1
      %v2848 = vshll.u32 %v2732, 16
      %v2850 = vrot.slane %v2848, 2
      %v2851 = vor.u32 %v2847, %v2850
      %v2852 = vsel %vm536, %v2843, %v2851
      %v2854 = vshrl.u32 %v2669, 16
      %v2856 = vrot.slane %v2854, 1
      %v2857 = vshll.u32 %v2669, 16
      %v2859 = vrot.slane %v2857, 2
      %v2860 = vor.u32 %v2856, %v2859
      %v2862 = vshrl.u32 %v2733, 16
      %v2864 = vrot.slane %v2862, 1
      %v2865 = vshll.u32 %v2733, 16
      %v2867 = vrot.slane %v2865, 2
      %v2868 = vor.u32 %v2864, %v2867
      %v2869 = vsel %vm536, %v2860, %v2868
      %2870 = vrot.lane.b32.xlu0 %v2750, 12
      %v2871 = vpop.permute.xlu0 %2870
      %2872 = vrot.lane.b32.xlu0 %v2767, 12
      %v2873 = vpop.permute.xlu0 %2872
      %2874 = vrot.lane.b32.xlu0 %v2784, 12
      %v2875 = vpop.permute.xlu0 %2874
      %2876 = vrot.lane.b32.xlu0 %v2801, 12
      %v2877 = vpop.permute.xlu0 %2876
      %2878 = vrot.lane.b32.xlu0 %v2818, 12
      %v2879 = vpop.permute.xlu0 %2878
      %2880 = vrot.lane.b32.xlu0 %v2835, 12
      %v2881 = vpop.permute.xlu0 %2880
      %2882 = vrot.lane.b32.xlu0 %v2852, 12
      %v2883 = vpop.permute.xlu0 %2882
      %2884 = vrot.lane.b32.xlu0 %v2869, 12
      %v2885 = vpop.permute.xlu0 %2884
      %v2894 = vunpack.c.l.b16 %v2462
      %v2895 = vunpack.c.l.b16 %v2463
      %v2896 = vunpack.c.l.b16 %v2464
      %v2897 = vunpack.c.l.b16 %v2465
      %v2898 = vunpack.c.l.b16 %v2466
      %v2899 = vunpack.c.l.b16 %v2467
      %v2900 = vunpack.c.l.b16 %v2468
      %v2901 = vunpack.c.l.b16 %v2469
      %v2902 = vpack.c.b16 %v2487, %v2894
      %v2903 = vpack.c.b16 %v2489, %v2895
      %v2904 = vpack.c.b16 %v2491, %v2896
      %v2905 = vpack.c.b16 %v2493, %v2897
      %v2906 = vpack.c.b16 %v2495, %v2898
      %v2907 = vpack.c.b16 %v2497, %v2899
      %v2908 = vpack.c.b16 %v2499, %v2900
      %v2909 = vpack.c.b16 %v2501, %v2901
      %v2910 = vrot.slane %v2902, 2
      %v2911 = vrot.slane %v2726, 2
      %v2912 = vsel %vm713, %v2910, %v2911
      %v2913 = vrot.slane %v2903, 2
      %v2914 = vrot.slane %v2727, 2
      %v2915 = vsel %vm713, %v2913, %v2914
      %v2916 = vrot.slane %v2904, 2
      %v2917 = vrot.slane %v2728, 2
      %v2918 = vsel %vm713, %v2916, %v2917
      %v2919 = vrot.slane %v2905, 2
      %v2920 = vrot.slane %v2729, 2
      %v2921 = vsel %vm713, %v2919, %v2920
      %v2922 = vrot.slane %v2906, 2
      %v2923 = vrot.slane %v2730, 2
      %v2924 = vsel %vm713, %v2922, %v2923
      %v2925 = vrot.slane %v2907, 2
      %v2926 = vrot.slane %v2731, 2
      %v2927 = vsel %vm713, %v2925, %v2926
      %v2928 = vrot.slane %v2908, 2
      %v2929 = vrot.slane %v2732, 2
      %v2930 = vsel %vm713, %v2928, %v2929
      %v2931 = vrot.slane %v2909, 2
      %v2932 = vrot.slane %v2733, 2
      %v2933 = vsel %vm713, %v2931, %v2932
      %2934 = vrot.lane.b32.xlu0 %v2912, 16
      %v2935 = vpop.permute.xlu0 %2934
      %2936 = vrot.lane.b32.xlu0 %v2915, 16
      %v2937 = vpop.permute.xlu0 %2936
      %2938 = vrot.lane.b32.xlu0 %v2918, 16
      %v2939 = vpop.permute.xlu0 %2938
      %2940 = vrot.lane.b32.xlu0 %v2921, 16
      %v2941 = vpop.permute.xlu0 %2940
      %2942 = vrot.lane.b32.xlu0 %v2924, 16
      %v2943 = vpop.permute.xlu0 %2942
      %2944 = vrot.lane.b32.xlu0 %v2927, 16
      %v2945 = vpop.permute.xlu0 %2944
      %2946 = vrot.lane.b32.xlu0 %v2930, 16
      %v2947 = vpop.permute.xlu0 %2946
      %2948 = vrot.lane.b32.xlu0 %v2933, 16
      %v2949 = vpop.permute.xlu0 %2948
      %v2951 = vsel %vm754, %v2502, %v2631
      %v2953 = vsel %vm754, %v2503, %v2633
      %v2955 = vsel %vm754, %v2504, %v2635
      %v2957 = vsel %vm754, %v2505, %v2637
      %v2959 = vsel %vm754, %v2506, %v2639
      %v2961 = vsel %vm754, %v2507, %v2641
      %v2963 = vsel %vm754, %v2508, %v2643
      %v2965 = vsel %vm754, %v2509, %v2645
      %v2967 = vsel %vm771, %v2951, %v2695
      %v2969 = vsel %vm771, %v2953, %v2697
      %v2971 = vsel %vm771, %v2955, %v2699
      %v2973 = vsel %vm771, %v2957, %v2701
      %v2975 = vsel %vm771, %v2959, %v2703
      %v2977 = vsel %vm771, %v2961, %v2705
      %v2979 = vsel %vm771, %v2963, %v2707
      %v2981 = vsel %vm771, %v2965, %v2709
      %v2983 = vsel %vm788, %v2967, %v2871
      %v2985 = vsel %vm788, %v2969, %v2873
      %v2987 = vsel %vm788, %v2971, %v2875
      %v2989 = vsel %vm788, %v2973, %v2877
      %v2991 = vsel %vm788, %v2975, %v2879
      %v2993 = vsel %vm788, %v2977, %v2881
      %v2995 = vsel %vm788, %v2979, %v2883
      %v2997 = vsel %vm788, %v2981, %v2885
      %v2999 = vsel %vm805, %v2983, %v2935
      %v3001 = vsel %vm805, %v2985, %v2937
      %v3003 = vsel %vm805, %v2987, %v2939
      %v3005 = vsel %vm805, %v2989, %v2941
      %v3007 = vsel %vm805, %v2991, %v2943
      %v3009 = vsel %vm805, %v2993, %v2945
      %v3011 = vsel %vm805, %v2995, %v2947
      %v3013 = vsel %vm805, %v2997, %v2949
      %s3014 = scalar_lea.vmem %s1, 36
      %v3015 = vld [vmem:[%s3014] sm:$0xf]
      %v3016 = vld [vmem:[%s3014 + $0x4] sm:$0xf]
      %v3017 = vld [vmem:[%s3014 + $0x8] sm:$0x3]
      %v3021 = vunpack.c.l.b16 %v3015
      %v3022 = vunpack.c.l.b16 %v3016
      %v3023 = vunpack.c.l.b16 %v3017
      %v3024 = vpack.c.b16 %v3022, %v3021
      %v3025 = vpack.c.b16 %v3023, %v3023
      %v3027 = vsel %vm1434, %v2999, 0
      %v3029 = vsel %vm1434, %v3001, 0
      %v3031 = vsel %vm1434, %v3003, 0
      %v3033 = vsel %vm1434, %v3005, 0
      %v3035 = vsel %vm1434, %v3007, 0
      %v3037 = vsel %vm1434, %v3009, 0
      %v3039 = vsel %vm1434, %v3011, 0
      %v3041 = vsel %vm1434, %v3013, 0
      %v3044 = vsel %vm1451, %v3025, 0
      %3046 = vmatprep.subr.bf16.mxu0 0
      %3047 = vmatpush1.bf16.msra.mxu0 %v3024
      %3048 = vmatprep.subr.bf16.mxu0 0
      %3049 = vmatpush1.bf16.msra.mxu0 %v3044
      %3050 = vmatprep.subr.bf16.mxu0 0
      %3051 = vmatpush1.bf16.msra.mxu0 0
      %3052 = vmatprep.subr.bf16.mxu0 0
      %3053 = vmatpush1.bf16.msra.mxu0 0
      %3054 = vmatprep.subr.bf16.mxu0 0
      %3055 = vmatpush1.bf16.msra.mxu0 0
      %3056 = vmatprep.subr.bf16.mxu0 0
      %3057 = vmatpush1.bf16.msra.mxu0 0
      %3058 = vmatprep.subr.bf16.mxu0 0
      %3059 = vmatpush1.bf16.msra.mxu0 0
      %3060 = vmatprep.subr.bf16.mxu0 0
      %3061 = vmatpush1.bf16.msra.mxu0 0
      %3062 = vmatprep.subr.bf16.mxu0 0
      %3063 = vmatpush1.bf16.msra.mxu0 0
      %3064 = vmatprep.subr.bf16.mxu0 0
      %3065 = vmatpush1.bf16.msra.mxu0 0
      %3066 = vmatprep.subr.bf16.mxu0 0
      %3067 = vmatpush1.bf16.msra.mxu0 0
      %3068 = vmatprep.subr.bf16.mxu0 0
      %3069 = vmatpush1.bf16.msra.mxu0 0
      %3070 = vmatprep.subr.bf16.mxu0 0
      %3071 = vmatpush1.bf16.msra.mxu0 0
      %3072 = vmatprep.subr.bf16.mxu0 0
      %3073 = vmatpush1.bf16.msra.mxu0 0
      %3074 = vmatprep.subr.bf16.mxu0 0
      %3075 = vmatpush1.bf16.msra.mxu0 0
      %3076 = vmatprep.subr.bf16.mxu0 0
      %3077 = vmatpush1.bf16.msra.mxu0 0
      %3078 = vmatprep.mubr.bf16.mxu0 0
      %3079 = vmatmul.mubr.bf16.gmra.mrb[0].mxu0 %v3027
      %v3080 = vpop.f32.mrb[0].mxu0
      %v3081 = vadd.f32 0.0, %v3080
      %v3082 = vpop.f32.mrb[0].mxu0
      %v3083 = vpop.f32.mrb[0].mxu0
      %v3084 = vadd.f32 0.0, %v3083
      %v3085 = vpop.f32.mrb[0].mxu0
      %3086 = vmatprep.mubr.bf16.mxu0 0
      %3087 = vmatmul.mubr.bf16.gmra.mrb[0].mxu0 %v3029
      %v3088 = vpop.f32.mrb[0].mxu0
      %v3089 = vadd.f32 0.0, %v3088
      %v3090 = vpop.f32.mrb[0].mxu0
      %v3091 = vpop.f32.mrb[0].mxu0
      %v3092 = vadd.f32 0.0, %v3091
      %v3093 = vpop.f32.mrb[0].mxu0
      %3094 = vmatprep.mubr.bf16.mxu0 0
      %3095 = vmatmul.mubr.bf16.gmra.mrb[0].mxu0 %v3031
      %v3096 = vpop.f32.mrb[0].mxu0
      %v3097 = vadd.f32 0.0, %v3096
      %v3098 = vpop.f32.mrb[0].mxu0
      %v3099 = vpop.f32.mrb[0].mxu0
      %v3100 = vadd.f32 0.0, %v3099
      %v3101 = vpop.f32.mrb[0].mxu0
      %3102 = vmatprep.mubr.bf16.mxu0 0
      %3103 = vmatmul.mubr.bf16.gmra.mrb[0].mxu0 %v3033
      %v3104 = vpop.f32.mrb[0].mxu0
      %v3105 = vadd.f32 0.0, %v3104
      %v3106 = vpop.f32.mrb[0].mxu0
      %v3107 = vpop.f32.mrb[0].mxu0
      %v3108 = vadd.f32 0.0, %v3107
      %v3109 = vpop.f32.mrb[0].mxu0
      %3110 = vmatprep.mubr.bf16.mxu0 0
      %3111 = vmatmul.mubr.bf16.gmra.mrb[0].mxu0 %v3035
      %v3112 = vpop.f32.mrb[0].mxu0
      %v3113 = vadd.f32 0.0, %v3112
      %v3114 = vpop.f32.mrb[0].mxu0
      %v3115 = vpop.f32.mrb[0].mxu0
      %v3116 = vadd.f32 0.0, %v3115
      %v3117 = vpop.f32.mrb[0].mxu0
      %3118 = vmatprep.mubr.bf16.mxu0 0
      %3119 = vmatmul.mubr.bf16.gmra.mrb[0].mxu0 %v3037
      %v3120 = vpop.f32.mrb[0].mxu0
      %v3121 = vadd.f32 0.0, %v3120
      %v3122 = vpop.f32.mrb[0].mxu0
      %v3123 = vpop.f32.mrb[0].mxu0
      %v3124 = vadd.f32 0.0, %v3123
      %v3125 = vpop.f32.mrb[0].mxu0
      %3126 = vmatprep.mubr.bf16.mxu0 0
      %3127 = vmatmul.mubr.bf16.gmra.mrb[0].mxu0 %v3039
      %v3128 = vpop.f32.mrb[0].mxu0
      %v3129 = vadd.f32 0.0, %v3128
      %v3130 = vpop.f32.mrb[0].mxu0
      %v3131 = vpop.f32.mrb[0].mxu0
      %v3132 = vadd.f32 0.0, %v3131
      %v3133 = vpop.f32.mrb[0].mxu0
      %3134 = vmatprep.mubr.bf16.mxu0 0
      %3135 = vmatmul.mubr.bf16.gmra.mrb[0].mxu0 %v3041
      %v3136 = vpop.f32.mrb[0].mxu0
      %v3137 = vadd.f32 0.0, %v3136
      %v3138 = vpop.f32.mrb[0].mxu0
      %v3139 = vpop.f32.mrb[0].mxu0
      %v3140 = vadd.f32 0.0, %v3139
      %v3141 = vpop.f32.mrb[0].mxu0
      %3142 = vdwg.mxu0
      %v3143 = vadd.f32 %v2402, %v3081
      %v3144 = vadd.f32 %v2403, %v3084
      %v3145 = vadd.f32 %v2404, %v3089
      %v3146 = vadd.f32 %v2405, %v3092
      %v3147 = vadd.f32 %v2406, %v3097
      %v3148 = vadd.f32 %v2407, %v3100
      %v3149 = vadd.f32 %v2408, %v3105
      %v3150 = vadd.f32 %v2409, %v3108
      %v3151 = vadd.f32 %v2410, %v3113
      %v3152 = vadd.f32 %v2411, %v3116
      %v3153 = vadd.f32 %v2412, %v3121
      %v3154 = vadd.f32 %v2413, %v3124
      %v3155 = vadd.f32 %v2414, %v3129
      %v3156 = vadd.f32 %v2415, %v3132
      %v3157 = vadd.f32 %v2416, %v3137
      %v3158 = vadd.f32 %v2417, %v3140
      %s3159 = sadd.s32 %s218, 4
      %s3160 = smul.u32 %s3159, 3
      %s3161 = smul.addr %s3160, 4
      %s3162 = scalar_lea.vmem %s197, %s3161
      %v3163 = vld [vmem:[%s3162] sm:$0xf]
      %v3164 = vld [vmem:[%s3162 + $0x4] sm:$0xf]
      %v3165 = vld [vmem:[%s3162 + $0xc] sm:$0xf]
      %v3166 = vld [vmem:[%s3162 + $0x10] sm:$0xf]
      %v3167 = vld [vmem:[%s3162 + $0x18] sm:$0xf]
      %v3168 = vld [vmem:[%s3162 + $0x1c] sm:$0xf]
      %v3169 = vld [vmem:[%s3162 + $0x24] sm:$0xf]
      %v3170 = vld [vmem:[%s3162 + $0x28] sm:$0xf]
      %v3171 = vld [vmem:[%s3162 + $0x30] sm:$0xf]
      %v3172 = vld [vmem:[%s3162 + $0x34] sm:$0xf]
      %v3173 = vld [vmem:[%s3162 + $0x3c] sm:$0xf]
      %v3174 = vld [vmem:[%s3162 + $0x40] sm:$0xf]
      %v3175 = vld [vmem:[%s3162 + $0x48] sm:$0xf]
      %v3176 = vld [vmem:[%s3162 + $0x4c] sm:$0xf]
      %v3177 = vld [vmem:[%s3162 + $0x54] sm:$0xf]
      %v3178 = vld [vmem:[%s3162 + $0x58] sm:$0xf]
      %v3179 = vld [vmem:[%s3162 + $0x8] sm:$0x1]
      %v3180 = vld [vmem:[%s3162 + $0x14] sm:$0x1]
      %v3181 = vld [vmem:[%s3162 + $0x20] sm:$0x1]
      %v3182 = vld [vmem:[%s3162 + $0x2c] sm:$0x1]
      %v3183 = vld [vmem:[%s3162 + $0x38] sm:$0x1]
      %v3184 = vld [vmem:[%s3162 + $0x44] sm:$0x1]
      %v3185 = vld [vmem:[%s3162 + $0x50] sm:$0x1]
      %v3186 = vld [vmem:[%s3162 + $0x5c] sm:$0x1]
      %v3187 = vld [vmem:[%s3162] sm:$0xe]
      %v3188 = vld [vmem:[%s3162 + $0xc] sm:$0xe]
      %v3189 = vld [vmem:[%s3162 + $0x18] sm:$0xe]
      %v3190 = vld [vmem:[%s3162 + $0x24] sm:$0xe]
      %v3191 = vld [vmem:[%s3162 + $0x30] sm:$0xe]
      %v3192 = vld [vmem:[%s3162 + $0x3c] sm:$0xe]
      %v3193 = vld [vmem:[%s3162 + $0x48] sm:$0xe]
      %v3194 = vld [vmem:[%s3162 + $0x54] sm:$0xe]
      %v3195 = vld [vmem:[%s3162 + $0x8] sm:$0x3]
      %v3196 = vld [vmem:[%s3162 + $0x14] sm:$0x3]
      %v3197 = vld [vmem:[%s3162 + $0x20] sm:$0x3]
      %v3198 = vld [vmem:[%s3162 + $0x2c] sm:$0x3]
      %v3199 = vld [vmem:[%s3162 + $0x38] sm:$0x3]
      %v3200 = vld [vmem:[%s3162 + $0x44] sm:$0x3]
      %v3201 = vld [vmem:[%s3162 + $0x50] sm:$0x3]
      %v3202 = vld [vmem:[%s3162 + $0x5c] sm:$0x3]
      %v3203 = vld [vmem:[%s3162] sm:$0xc]
      %v3204 = vld [vmem:[%s3162 + $0xc] sm:$0xc]
      %v3205 = vld [vmem:[%s3162 + $0x18] sm:$0xc]
      %v3206 = vld [vmem:[%s3162 + $0x24] sm:$0xc]
      %v3207 = vld [vmem:[%s3162 + $0x30] sm:$0xc]
      %v3208 = vld [vmem:[%s3162 + $0x3c] sm:$0xc]
      %v3209 = vld [vmem:[%s3162 + $0x48] sm:$0xc]
      %v3210 = vld [vmem:[%s3162 + $0x54] sm:$0xc]
      %v3227 = vunpack.c.l.b16 %v3163
      %v3228 = vunpack.c.l.b16 %v3164
      %v3229 = vunpack.c.l.b16 %v3165
      %v3230 = vunpack.c.l.b16 %v3166
      %v3231 = vunpack.c.l.b16 %v3167
      %v3232 = vunpack.c.l.b16 %v3168
      %v3233 = vunpack.c.l.b16 %v3169
      %v3234 = vunpack.c.l.b16 %v3170
      %v3235 = vunpack.c.l.b16 %v3171
      %v3236 = vunpack.c.l.b16 %v3172
      %v3237 = vunpack.c.l.b16 %v3173
      %v3238 = vunpack.c.l.b16 %v3174
      %v3239 = vunpack.c.l.b16 %v3175
      %v3240 = vunpack.c.l.b16 %v3176
      %v3241 = vunpack.c.l.b16 %v3177
      %v3242 = vunpack.c.l.b16 %v3178
      %v3243 = vpack.c.b16 %v3228, %v3227
      %v3244 = vpack.c.b16 %v3230, %v3229
      %v3245 = vpack.c.b16 %v3232, %v3231
      %v3246 = vpack.c.b16 %v3234, %v3233
      %v3247 = vpack.c.b16 %v3236, %v3235
      %v3248 = vpack.c.b16 %v3238, %v3237
      %v3249 = vpack.c.b16 %v3240, %v3239
      %v3250 = vpack.c.b16 %v3242, %v3241
      %v3259 = vunpack.c.l.b16 %v3179
      %v3260 = vunpack.c.l.b16 %v3180
      %v3261 = vunpack.c.l.b16 %v3181
      %v3262 = vunpack.c.l.b16 %v3182
      %v3263 = vunpack.c.l.b16 %v3183
      %v3264 = vunpack.c.l.b16 %v3184
      %v3265 = vunpack.c.l.b16 %v3185
      %v3266 = vunpack.c.l.b16 %v3186
      %v3267 = vpack.c.b16 %v3259, %v3259
      %v3268 = vpack.c.b16 %v3260, %v3260
      %v3269 = vpack.c.b16 %v3261, %v3261
      %v3270 = vpack.c.b16 %v3262, %v3262
      %v3271 = vpack.c.b16 %v3263, %v3263
      %v3272 = vpack.c.b16 %v3264, %v3264
      %v3273 = vpack.c.b16 %v3265, %v3265
      %v3274 = vpack.c.b16 %v3266, %v3266
      %v3276 = vshrl.u32 %v3243, 16
      %v3278 = vshll.u32 %v3243, 16
      %v3280 = vrot.slane %v3278, 1
      %v3281 = vor.u32 %v3276, %v3280
      %v3283 = vshll.u32 %v3267, 16
      %v3285 = vrot.slane %v3283, 1
      %v3286 = vsel %vm334, %v3281, %v3285
      %v3288 = vshrl.u32 %v3244, 16
      %v3290 = vshll.u32 %v3244, 16
      %v3292 = vrot.slane %v3290, 1
      %v3293 = vor.u32 %v3288, %v3292
      %v3295 = vshll.u32 %v3268, 16
      %v3297 = vrot.slane %v3295, 1
      %v3298 = vsel %vm334, %v3293, %v3297
      %v3300 = vshrl.u32 %v3245, 16
      %v3302 = vshll.u32 %v3245, 16
      %v3304 = vrot.slane %v3302, 1
      %v3305 = vor.u32 %v3300, %v3304
      %v3307 = vshll.u32 %v3269, 16
      %v3309 = vrot.slane %v3307, 1
      %v3310 = vsel %vm334, %v3305, %v3309
      %v3312 = vshrl.u32 %v3246, 16
      %v3314 = vshll.u32 %v3246, 16
      %v3316 = vrot.slane %v3314, 1
      %v3317 = vor.u32 %v3312, %v3316
      %v3319 = vshll.u32 %v3270, 16
      %v3321 = vrot.slane %v3319, 1
      %v3322 = vsel %vm334, %v3317, %v3321
      %v3324 = vshrl.u32 %v3247, 16
      %v3326 = vshll.u32 %v3247, 16
      %v3328 = vrot.slane %v3326, 1
      %v3329 = vor.u32 %v3324, %v3328
      %v3331 = vshll.u32 %v3271, 16
      %v3333 = vrot.slane %v3331, 1
      %v3334 = vsel %vm334, %v3329, %v3333
      %v3336 = vshrl.u32 %v3248, 16
      %v3338 = vshll.u32 %v3248, 16
      %v3340 = vrot.slane %v3338, 1
      %v3341 = vor.u32 %v3336, %v3340
      %v3343 = vshll.u32 %v3272, 16
      %v3345 = vrot.slane %v3343, 1
      %v3346 = vsel %vm334, %v3341, %v3345
      %v3348 = vshrl.u32 %v3249, 16
      %v3350 = vshll.u32 %v3249, 16
      %v3352 = vrot.slane %v3350, 1
      %v3353 = vor.u32 %v3348, %v3352
      %v3355 = vshll.u32 %v3273, 16
      %v3357 = vrot.slane %v3355, 1
      %v3358 = vsel %vm334, %v3353, %v3357
      %v3360 = vshrl.u32 %v3250, 16
      %v3362 = vshll.u32 %v3250, 16
      %v3364 = vrot.slane %v3362, 1
      %v3365 = vor.u32 %v3360, %v3364
      %v3367 = vshll.u32 %v3274, 16
      %v3369 = vrot.slane %v3367, 1
      %v3370 = vsel %vm334, %v3365, %v3369
      %3371 = vrot.lane.b32.xlu0 %v3286, 4
      %v3372 = vpop.permute.xlu0 %3371
      %3373 = vrot.lane.b32.xlu0 %v3298, 4
      %v3374 = vpop.permute.xlu0 %3373
      %3375 = vrot.lane.b32.xlu0 %v3310, 4
      %v3376 = vpop.permute.xlu0 %3375
      %3377 = vrot.lane.b32.xlu0 %v3322, 4
      %v3378 = vpop.permute.xlu0 %3377
      %3379 = vrot.lane.b32.xlu0 %v3334, 4
      %v3380 = vpop.permute.xlu0 %3379
      %3381 = vrot.lane.b32.xlu0 %v3346, 4
      %v3382 = vpop.permute.xlu0 %3381
      %3383 = vrot.lane.b32.xlu0 %v3358, 4
      %v3384 = vpop.permute.xlu0 %3383
      %3385 = vrot.lane.b32.xlu0 %v3370, 4
      %v3386 = vpop.permute.xlu0 %3385
      %v3395 = vunpack.c.l.b16 %v3187
      %v3396 = vunpack.c.l.b16 %v3188
      %v3397 = vunpack.c.l.b16 %v3189
      %v3398 = vunpack.c.l.b16 %v3190
      %v3399 = vunpack.c.l.b16 %v3191
      %v3400 = vunpack.c.l.b16 %v3192
      %v3401 = vunpack.c.l.b16 %v3193
      %v3402 = vunpack.c.l.b16 %v3194
      %v3403 = vpack.c.b16 %v3228, %v3395
      %v3404 = vpack.c.b16 %v3230, %v3396
      %v3405 = vpack.c.b16 %v3232, %v3397
      %v3406 = vpack.c.b16 %v3234, %v3398
      %v3407 = vpack.c.b16 %v3236, %v3399
      %v3408 = vpack.c.b16 %v3238, %v3400
      %v3409 = vpack.c.b16 %v3240, %v3401
      %v3410 = vpack.c.b16 %v3242, %v3402
      %v3411 = vrot.slane %v3403, 1
      %v3412 = vrot.slane %v3267, 1
      %v3413 = vsel %vm471, %v3411, %v3412
      %v3414 = vrot.slane %v3404, 1
      %v3415 = vrot.slane %v3268, 1
      %v3416 = vsel %vm471, %v3414, %v3415
      %v3417 = vrot.slane %v3405, 1
      %v3418 = vrot.slane %v3269, 1
      %v3419 = vsel %vm471, %v3417, %v3418
      %v3420 = vrot.slane %v3406, 1
      %v3421 = vrot.slane %v3270, 1
      %v3422 = vsel %vm471, %v3420, %v3421
      %v3423 = vrot.slane %v3407, 1
      %v3424 = vrot.slane %v3271, 1
      %v3425 = vsel %vm471, %v3423, %v3424
      %v3426 = vrot.slane %v3408, 1
      %v3427 = vrot.slane %v3272, 1
      %v3428 = vsel %vm471, %v3426, %v3427
      %v3429 = vrot.slane %v3409, 1
      %v3430 = vrot.slane %v3273, 1
      %v3431 = vsel %vm471, %v3429, %v3430
      %v3432 = vrot.slane %v3410, 1
      %v3433 = vrot.slane %v3274, 1
      %v3434 = vsel %vm471, %v3432, %v3433
      %3435 = vrot.lane.b32.xlu0 %v3413, 8
      %v3436 = vpop.permute.xlu0 %3435
      %3437 = vrot.lane.b32.xlu0 %v3416, 8
      %v3438 = vpop.permute.xlu0 %3437
      %3439 = vrot.lane.b32.xlu0 %v3419, 8
      %v3440 = vpop.permute.xlu0 %3439
      %3441 = vrot.lane.b32.xlu0 %v3422, 8
      %v3442 = vpop.permute.xlu0 %3441
      %3443 = vrot.lane.b32.xlu0 %v3425, 8
      %v3444 = vpop.permute.xlu0 %3443
      %3445 = vrot.lane.b32.xlu0 %v3428, 8
      %v3446 = vpop.permute.xlu0 %3445
      %3447 = vrot.lane.b32.xlu0 %v3431, 8
      %v3448 = vpop.permute.xlu0 %3447
      %3449 = vrot.lane.b32.xlu0 %v3434, 8
      %v3450 = vpop.permute.xlu0 %3449
      %v3459 = vunpack.c.l.b16 %v3195
      %v3460 = vunpack.c.l.b16 %v3196
      %v3461 = vunpack.c.l.b16 %v3197
      %v3462 = vunpack.c.l.b16 %v3198
      %v3463 = vunpack.c.l.b16 %v3199
      %v3464 = vunpack.c.l.b16 %v3200
      %v3465 = vunpack.c.l.b16 %v3201
      %v3466 = vunpack.c.l.b16 %v3202
      %v3467 = vpack.c.b16 %v3459, %v3459
      %v3468 = vpack.c.b16 %v3460, %v3460
      %v3469 = vpack.c.b16 %v3461, %v3461
      %v3470 = vpack.c.b16 %v3462, %v3462
      %v3471 = vpack.c.b16 %v3463, %v3463
      %v3472 = vpack.c.b16 %v3464, %v3464
      %v3473 = vpack.c.b16 %v3465, %v3465
      %v3474 = vpack.c.b16 %v3466, %v3466
      %v3476 = vshrl.u32 %v3403, 16
      %v3478 = vrot.slane %v3476, 1
      %v3479 = vshll.u32 %v3403, 16
      %v3481 = vrot.slane %v3479, 2
      %v3482 = vor.u32 %v3478, %v3481
      %v3484 = vshrl.u32 %v3467, 16
      %v3486 = vrot.slane %v3484, 1
      %v3487 = vshll.u32 %v3467, 16
      %v3489 = vrot.slane %v3487, 2
      %v3490 = vor.u32 %v3486, %v3489
      %v3491 = vsel %vm536, %v3482, %v3490
      %v3493 = vshrl.u32 %v3404, 16
      %v3495 = vrot.slane %v3493, 1
      %v3496 = vshll.u32 %v3404, 16
      %v3498 = vrot.slane %v3496, 2
      %v3499 = vor.u32 %v3495, %v3498
      %v3501 = vshrl.u32 %v3468, 16
      %v3503 = vrot.slane %v3501, 1
      %v3504 = vshll.u32 %v3468, 16
      %v3506 = vrot.slane %v3504, 2
      %v3507 = vor.u32 %v3503, %v3506
      %v3508 = vsel %vm536, %v3499, %v3507
      %v3510 = vshrl.u32 %v3405, 16
      %v3512 = vrot.slane %v3510, 1
      %v3513 = vshll.u32 %v3405, 16
      %v3515 = vrot.slane %v3513, 2
      %v3516 = vor.u32 %v3512, %v3515
      %v3518 = vshrl.u32 %v3469, 16
      %v3520 = vrot.slane %v3518, 1
      %v3521 = vshll.u32 %v3469, 16
      %v3523 = vrot.slane %v3521, 2
      %v3524 = vor.u32 %v3520, %v3523
      %v3525 = vsel %vm536, %v3516, %v3524
      %v3527 = vshrl.u32 %v3406, 16
      %v3529 = vrot.slane %v3527, 1
      %v3530 = vshll.u32 %v3406, 16
      %v3532 = vrot.slane %v3530, 2
      %v3533 = vor.u32 %v3529, %v3532
      %v3535 = vshrl.u32 %v3470, 16
      %v3537 = vrot.slane %v3535, 1
      %v3538 = vshll.u32 %v3470, 16
      %v3540 = vrot.slane %v3538, 2
      %v3541 = vor.u32 %v3537, %v3540
      %v3542 = vsel %vm536, %v3533, %v3541
      %v3544 = vshrl.u32 %v3407, 16
      %v3546 = vrot.slane %v3544, 1
      %v3547 = vshll.u32 %v3407, 16
      %v3549 = vrot.slane %v3547, 2
      %v3550 = vor.u32 %v3546, %v3549
      %v3552 = vshrl.u32 %v3471, 16
      %v3554 = vrot.slane %v3552, 1
      %v3555 = vshll.u32 %v3471, 16
      %v3557 = vrot.slane %v3555, 2
      %v3558 = vor.u32 %v3554, %v3557
      %v3559 = vsel %vm536, %v3550, %v3558
      %v3561 = vshrl.u32 %v3408, 16
      %v3563 = vrot.slane %v3561, 1
      %v3564 = vshll.u32 %v3408, 16
      %v3566 = vrot.slane %v3564, 2
      %v3567 = vor.u32 %v3563, %v3566
      %v3569 = vshrl.u32 %v3472, 16
      %v3571 = vrot.slane %v3569, 1
      %v3572 = vshll.u32 %v3472, 16
      %v3574 = vrot.slane %v3572, 2
      %v3575 = vor.u32 %v3571, %v3574
      %v3576 = vsel %vm536, %v3567, %v3575
      %v3578 = vshrl.u32 %v3409, 16
      %v3580 = vrot.slane %v3578, 1
      %v3581 = vshll.u32 %v3409, 16
      %v3583 = vrot.slane %v3581, 2
      %v3584 = vor.u32 %v3580, %v3583
      %v3586 = vshrl.u32 %v3473, 16
      %v3588 = vrot.slane %v3586, 1
      %v3589 = vshll.u32 %v3473, 16
      %v3591 = vrot.slane %v3589, 2
      %v3592 = vor.u32 %v3588, %v3591
      %v3593 = vsel %vm536, %v3584, %v3592
      %v3595 = vshrl.u32 %v3410, 16
      %v3597 = vrot.slane %v3595, 1
      %v3598 = vshll.u32 %v3410, 16
      %v3600 = vrot.slane %v3598, 2
      %v3601 = vor.u32 %v3597, %v3600
      %v3603 = vshrl.u32 %v3474, 16
      %v3605 = vrot.slane %v3603, 1
      %v3606 = vshll.u32 %v3474, 16
      %v3608 = vrot.slane %v3606, 2
      %v3609 = vor.u32 %v3605, %v3608
      %v3610 = vsel %vm536, %v3601, %v3609
      %3611 = vrot.lane.b32.xlu0 %v3491, 12
      %v3612 = vpop.permute.xlu0 %3611
      %3613 = vrot.lane.b32.xlu0 %v3508, 12
      %v3614 = vpop.permute.xlu0 %3613
      %3615 = vrot.lane.b32.xlu0 %v3525, 12
      %v3616 = vpop.permute.xlu0 %3615
      %3617 = vrot.lane.b32.xlu0 %v3542, 12
      %v3618 = vpop.permute.xlu0 %3617
      %3619 = vrot.lane.b32.xlu0 %v3559, 12
      %v3620 = vpop.permute.xlu0 %3619
      %3621 = vrot.lane.b32.xlu0 %v3576, 12
      %v3622 = vpop.permute.xlu0 %3621
      %3623 = vrot.lane.b32.xlu0 %v3593, 12
      %v3624 = vpop.permute.xlu0 %3623
      %3625 = vrot.lane.b32.xlu0 %v3610, 12
      %v3626 = vpop.permute.xlu0 %3625
      %v3635 = vunpack.c.l.b16 %v3203
      %v3636 = vunpack.c.l.b16 %v3204
      %v3637 = vunpack.c.l.b16 %v3205
      %v3638 = vunpack.c.l.b16 %v3206
      %v3639 = vunpack.c.l.b16 %v3207
      %v3640 = vunpack.c.l.b16 %v3208
      %v3641 = vunpack.c.l.b16 %v3209
      %v3642 = vunpack.c.l.b16 %v3210
      %v3643 = vpack.c.b16 %v3228, %v3635
      %v3644 = vpack.c.b16 %v3230, %v3636
      %v3645 = vpack.c.b16 %v3232, %v3637
      %v3646 = vpack.c.b16 %v3234, %v3638
      %v3647 = vpack.c.b16 %v3236, %v3639
      %v3648 = vpack.c.b16 %v3238, %v3640
      %v3649 = vpack.c.b16 %v3240, %v3641
      %v3650 = vpack.c.b16 %v3242, %v3642
      %v3651 = vrot.slane %v3643, 2
      %v3652 = vrot.slane %v3467, 2
      %v3653 = vsel %vm713, %v3651, %v3652
      %v3654 = vrot.slane %v3644, 2
      %v3655 = vrot.slane %v3468, 2
      %v3656 = vsel %vm713, %v3654, %v3655
      %v3657 = vrot.slane %v3645, 2
      %v3658 = vrot.slane %v3469, 2
      %v3659 = vsel %vm713, %v3657, %v3658
      %v3660 = vrot.slane %v3646, 2
      %v3661 = vrot.slane %v3470, 2
      %v3662 = vsel %vm713, %v3660, %v3661
      %v3663 = vrot.slane %v3647, 2
      %v3664 = vrot.slane %v3471, 2
      %v3665 = vsel %vm713, %v3663, %v3664
      %v3666 = vrot.slane %v3648, 2
      %v3667 = vrot.slane %v3472, 2
      %v3668 = vsel %vm713, %v3666, %v3667
      %v3669 = vrot.slane %v3649, 2
      %v3670 = vrot.slane %v3473, 2
      %v3671 = vsel %vm713, %v3669, %v3670
      %v3672 = vrot.slane %v3650, 2
      %v3673 = vrot.slane %v3474, 2
      %v3674 = vsel %vm713, %v3672, %v3673
      %3675 = vrot.lane.b32.xlu0 %v3653, 16
      %v3676 = vpop.permute.xlu0 %3675
      %3677 = vrot.lane.b32.xlu0 %v3656, 16
      %v3678 = vpop.permute.xlu0 %3677
      %3679 = vrot.lane.b32.xlu0 %v3659, 16
      %v3680 = vpop.permute.xlu0 %3679
      %3681 = vrot.lane.b32.xlu0 %v3662, 16
      %v3682 = vpop.permute.xlu0 %3681
      %3683 = vrot.lane.b32.xlu0 %v3665, 16
      %v3684 = vpop.permute.xlu0 %3683
      %3685 = vrot.lane.b32.xlu0 %v3668, 16
      %v3686 = vpop.permute.xlu0 %3685
      %3687 = vrot.lane.b32.xlu0 %v3671, 16
      %v3688 = vpop.permute.xlu0 %3687
      %3689 = vrot.lane.b32.xlu0 %v3674, 16
      %v3690 = vpop.permute.xlu0 %3689
      %v3692 = vsel %vm754, %v3243, %v3372
      %v3694 = vsel %vm754, %v3244, %v3374
      %v3696 = vsel %vm754, %v3245, %v3376
      %v3698 = vsel %vm754, %v3246, %v3378
      %v3700 = vsel %vm754, %v3247, %v3380
      %v3702 = vsel %vm754, %v3248, %v3382
      %v3704 = vsel %vm754, %v3249, %v3384
      %v3706 = vsel %vm754, %v3250, %v3386
      %v3708 = vsel %vm771, %v3692, %v3436
      %v3710 = vsel %vm771, %v3694, %v3438
      %v3712 = vsel %vm771, %v3696, %v3440
      %v3714 = vsel %vm771, %v3698, %v3442
      %v3716 = vsel %vm771, %v3700, %v3444
      %v3718 = vsel %vm771, %v3702, %v3446
      %v3720 = vsel %vm771, %v3704, %v3448
      %v3722 = vsel %vm771, %v3706, %v3450
      %v3724 = vsel %vm788, %v3708, %v3612
      %v3726 = vsel %vm788, %v3710, %v3614
      %v3728 = vsel %vm788, %v3712, %v3616
      %v3730 = vsel %vm788, %v3714, %v3618
      %v3732 = vsel %vm788, %v3716, %v3620
      %v3734 = vsel %vm788, %v3718, %v3622
      %v3736 = vsel %vm788, %v3720, %v3624
      %v3738 = vsel %vm788, %v3722, %v3626
      %v3740 = vsel %vm805, %v3724, %v3676
      %v3742 = vsel %vm805, %v3726, %v3678
      %v3744 = vsel %vm805, %v3728, %v3680
      %v3746 = vsel %vm805, %v3730, %v3682
      %v3748 = vsel %vm805, %v3732, %v3684
      %v3750 = vsel %vm805, %v3734, %v3686
      %v3752 = vsel %vm805, %v3736, %v3688
      %v3754 = vsel %vm805, %v3738, %v3690
      %s3755 = scalar_lea.vmem %s1, 48
      %v3756 = vld [vmem:[%s3755] sm:$0xf]
      %v3757 = vld [vmem:[%s3755 + $0x4] sm:$0xf]
      %v3758 = vld [vmem:[%s3755 + $0x8] sm:$0x3]
      %v3762 = vunpack.c.l.b16 %v3756
      %v3763 = vunpack.c.l.b16 %v3757
      %v3764 = vunpack.c.l.b16 %v3758
      %v3765 = vpack.c.b16 %v3763, %v3762
      %v3766 = vpack.c.b16 %v3764, %v3764
      %v3768 = vsel %vm1434, %v3740, 0
      %v3770 = vsel %vm1434, %v3742, 0
      %v3772 = vsel %vm1434, %v3744, 0
      %v3774 = vsel %vm1434, %v3746, 0
      %v3776 = vsel %vm1434, %v3748, 0
      %v3778 = vsel %vm1434, %v3750, 0
      %v3780 = vsel %vm1434, %v3752, 0
      %v3782 = vsel %vm1434, %v3754, 0
      %v3785 = vsel %vm1451, %v3766, 0
      %3787 = vmatprep.subr.bf16.mxu0 0
      %3788 = vmatpush1.bf16.msra.mxu0 %v3765
      %3789 = vmatprep.subr.bf16.mxu0 0
      %3790 = vmatpush1.bf16.msra.mxu0 %v3785
      %3791 = vmatprep.subr.bf16.mxu0 0
      %3792 = vmatpush1.bf16.msra.mxu0 0
      %3793 = vmatprep.subr.bf16.mxu0 0
      %3794 = vmatpush1.bf16.msra.mxu0 0
      %3795 = vmatprep.subr.bf16.mxu0 0
      %3796 = vmatpush1.bf16.msra.mxu0 0
      %3797 = vmatprep.subr.bf16.mxu0 0
      %3798 = vmatpush1.bf16.msra.mxu0 0
      %3799 = vmatprep.subr.bf16.mxu0 0
      %3800 = vmatpush1.bf16.msra.mxu0 0
      %3801 = vmatprep.subr.bf16.mxu0 0
      %3802 = vmatpush1.bf16.msra.mxu0 0
      %3803 = vmatprep.subr.bf16.mxu0 0
      %3804 = vmatpush1.bf16.msra.mxu0 0
      %3805 = vmatprep.subr.bf16.mxu0 0
      %3806 = vmatpush1.bf16.msra.mxu0 0
      %3807 = vmatprep.subr.bf16.mxu0 0
      %3808 = vmatpush1.bf16.msra.mxu0 0
      %3809 = vmatprep.subr.bf16.mxu0 0
      %3810 = vmatpush1.bf16.msra.mxu0 0
      %3811 = vmatprep.subr.bf16.mxu0 0
      %3812 = vmatpush1.bf16.msra.mxu0 0
      %3813 = vmatprep.subr.bf16.mxu0 0
      %3814 = vmatpush1.bf16.msra.mxu0 0
      %3815 = vmatprep.subr.bf16.mxu0 0
      %3816 = vmatpush1.bf16.msra.mxu0 0
      %3817 = vmatprep.subr.bf16.mxu0 0
      %3818 = vmatpush1.bf16.msra.mxu0 0
      %3819 = vmatprep.mubr.bf16.mxu0 0
      %3820 = vmatmul.mubr.bf16.gmra.mrb[0].mxu0 %v3768
      %v3821 = vpop.f32.mrb[0].mxu0
      %v3822 = vadd.f32 0.0, %v3821
      %v3823 = vpop.f32.mrb[0].mxu0
      %v3824 = vpop.f32.mrb[0].mxu0
      %v3825 = vadd.f32 0.0, %v3824
      %v3826 = vpop.f32.mrb[0].mxu0
      %3827 = vmatprep.mubr.bf16.mxu0 0
      %3828 = vmatmul.mubr.bf16.gmra.mrb[0].mxu0 %v3770
      %v3829 = vpop.f32.mrb[0].mxu0
      %v3830 = vadd.f32 0.0, %v3829
      %v3831 = vpop.f32.mrb[0].mxu0
      %v3832 = vpop.f32.mrb[0].mxu0
      %v3833 = vadd.f32 0.0, %v3832
      %v3834 = vpop.f32.mrb[0].mxu0
      %3835 = vmatprep.mubr.bf16.mxu0 0
      %3836 = vmatmul.mubr.bf16.gmra.mrb[0].mxu0 %v3772
      %v3837 = vpop.f32.mrb[0].mxu0
      %v3838 = vadd.f32 0.0, %v3837
      %v3839 = vpop.f32.mrb[0].mxu0
      %v3840 = vpop.f32.mrb[0].mxu0
      %v3841 = vadd.f32 0.0, %v3840
      %v3842 = vpop.f32.mrb[0].mxu0
      %3843 = vmatprep.mubr.bf16.mxu0 0
      %3844 = vmatmul.mubr.bf16.gmra.mrb[0].mxu0 %v3774
      %v3845 = vpop.f32.mrb[0].mxu0
      %v3846 = vadd.f32 0.0, %v3845
      %v3847 = vpop.f32.mrb[0].mxu0
      %v3848 = vpop.f32.mrb[0].mxu0
      %v3849 = vadd.f32 0.0, %v3848
      %v3850 = vpop.f32.mrb[0].mxu0
      %3851 = vmatprep.mubr.bf16.mxu0 0
      %3852 = vmatmul.mubr.bf16.gmra.mrb[0].mxu0 %v3776
      %v3853 = vpop.f32.mrb[0].mxu0
      %v3854 = vadd.f32 0.0, %v3853
      %v3855 = vpop.f32.mrb[0].mxu0
      %v3856 = vpop.f32.mrb[0].mxu0
      %v3857 = vadd.f32 0.0, %v3856
      %v3858 = vpop.f32.mrb[0].mxu0
      %3859 = vmatprep.mubr.bf16.mxu0 0
      %3860 = vmatmul.mubr.bf16.gmra.mrb[0].mxu0 %v3778
      %v3861 = vpop.f32.mrb[0].mxu0
      %v3862 = vadd.f32 0.0, %v3861
      %v3863 = vpop.f32.mrb[0].mxu0
      %v3864 = vpop.f32.mrb[0].mxu0
      %v3865 = vadd.f32 0.0, %v3864
      %v3866 = vpop.f32.mrb[0].mxu0
      %3867 = vmatprep.mubr.bf16.mxu0 0
      %3868 = vmatmul.mubr.bf16.gmra.mrb[0].mxu0 %v3780
      %v3869 = vpop.f32.mrb[0].mxu0
      %v3870 = vadd.f32 0.0, %v3869
      %v3871 = vpop.f32.mrb[0].mxu0
      %v3872 = vpop.f32.mrb[0].mxu0
      %v3873 = vadd.f32 0.0, %v3872
      %v3874 = vpop.f32.mrb[0].mxu0
      %3875 = vmatprep.mubr.bf16.mxu0 0
      %3876 = vmatmul.mubr.bf16.gmra.mrb[0].mxu0 %v3782
      %v3877 = vpop.f32.mrb[0].mxu0
      %v3878 = vadd.f32 0.0, %v3877
      %v3879 = vpop.f32.mrb[0].mxu0
      %v3880 = vpop.f32.mrb[0].mxu0
      %v3881 = vadd.f32 0.0, %v3880
      %v3882 = vpop.f32.mrb[0].mxu0
      %3883 = vdwg.mxu0
      %v3884 = vadd.f32 %v3143, %v3822
      %v3885 = vadd.f32 %v3144, %v3825
      %v3886 = vadd.f32 %v3145, %v3830
      %v3887 = vadd.f32 %v3146, %v3833
      %v3888 = vadd.f32 %v3147, %v3838
      %v3889 = vadd.f32 %v3148, %v3841
      %v3890 = vadd.f32 %v3149, %v3846
      %v3891 = vadd.f32 %v3150, %v3849
      %v3892 = vadd.f32 %v3151, %v3854
      %v3893 = vadd.f32 %v3152, %v3857
      %v3894 = vadd.f32 %v3153, %v3862
      %v3895 = vadd.f32 %v3154, %v3865
      %v3896 = vadd.f32 %v3155, %v3870
      %v3897 = vadd.f32 %v3156, %v3873
      %v3898 = vadd.f32 %v3157, %v3878
      %v3899 = vadd.f32 %v3158, %v3881
      %v3900 = vpack.c.bf16 %v3885, %v3884
      %v3901 = vpack.c.bf16 %v3887, %v3886
      %v3902 = vpack.c.bf16 %v3889, %v3888
      %v3903 = vpack.c.bf16 %v3891, %v3890
      %v3904 = vpack.c.bf16 %v3893, %v3892
      %v3905 = vpack.c.bf16 %v3895, %v3894
      %v3906 = vpack.c.bf16 %v3897, %v3896
      %v3907 = vpack.c.bf16 %v3899, %v3898
      %v3916 = vunpack.c.l.b16 %v3900
      %v3917 = vunpack.c.h.b16 %v3900
      %v3918 = vunpack.c.l.b16 %v3901
      %v3919 = vunpack.c.h.b16 %v3901
      %v3920 = vunpack.c.l.b16 %v3902
      %v3921 = vunpack.c.h.b16 %v3902
      %v3922 = vunpack.c.l.b16 %v3903
      %v3923 = vunpack.c.h.b16 %v3903
      %v3924 = vunpack.c.l.b16 %v3904
      %v3925 = vunpack.c.h.b16 %v3904
      %v3926 = vunpack.c.l.b16 %v3905
      %v3927 = vunpack.c.h.b16 %v3905
      %v3928 = vunpack.c.l.b16 %v3906
      %v3929 = vunpack.c.h.b16 %v3906
      %v3930 = vunpack.c.l.b16 %v3907
      %v3931 = vunpack.c.h.b16 %v3907
      %v3932 = vpack.c.b16 %v3916, %v3916
      %v3933 = vpack.c.b16 %v3917, %v3917
      %v3934 = vpack.c.b16 %v3918, %v3918
      %v3935 = vpack.c.b16 %v3919, %v3919
      %v3936 = vpack.c.b16 %v3920, %v3920
      %v3937 = vpack.c.b16 %v3921, %v3921
      %v3938 = vpack.c.b16 %v3922, %v3922
      %v3939 = vpack.c.b16 %v3923, %v3923
      %v3940 = vpack.c.b16 %v3924, %v3924
      %v3941 = vpack.c.b16 %v3925, %v3925
      %v3942 = vpack.c.b16 %v3926, %v3926
      %v3943 = vpack.c.b16 %v3927, %v3927
      %v3944 = vpack.c.b16 %v3928, %v3928
      %v3945 = vpack.c.b16 %v3929, %v3929
      %v3946 = vpack.c.b16 %v3930, %v3930
      %v3947 = vpack.c.b16 %v3931, %v3931
      %vm3964 = vcmask 60416
      %3965 = vst.msk [vmem:[%s207] sm:$0xf] %vm3964, %v3932
      %3966 = vst.msk [vmem:[%s207 + $0x4] sm:$0xf] %vm3964, %v3933
      %3967 = vst.msk [vmem:[%s207 + $0x8] sm:$0xf] %vm3964, %v3934
      %3968 = vst.msk [vmem:[%s207 + $0xc] sm:$0xf] %vm3964, %v3935
      %3969 = vst.msk [vmem:[%s207 + $0x10] sm:$0xf] %vm3964, %v3936
      %3970 = vst.msk [vmem:[%s207 + $0x14] sm:$0xf] %vm3964, %v3937
      %3971 = vst.msk [vmem:[%s207 + $0x18] sm:$0xf] %vm3964, %v3938
      %3972 = vst.msk [vmem:[%s207 + $0x1c] sm:$0xf] %vm3964, %v3939
      %3973 = vst.msk [vmem:[%s207 + $0x20] sm:$0xf] %vm3964, %v3940
      %3974 = vst.msk [vmem:[%s207 + $0x24] sm:$0xf] %vm3964, %v3941
      %3975 = vst.msk [vmem:[%s207 + $0x28] sm:$0xf] %vm3964, %v3942
      %3976 = vst.msk [vmem:[%s207 + $0x2c] sm:$0xf] %vm3964, %v3943
      %3977 = vst.msk [vmem:[%s207 + $0x30] sm:$0xf] %vm3964, %v3944
      %3978 = vst.msk [vmem:[%s207 + $0x34] sm:$0xf] %vm3964, %v3945
      %3979 = vst.msk [vmem:[%s207 + $0x38] sm:$0xf] %vm3964, %v3946
      %3980 = vst.msk [vmem:[%s207 + $0x3c] sm:$0xf] %vm3964, %v3947
      %v3981 = vsel %vm771, %v3884, 0.0
      %v3982 = vsel %vm771, %v3885, 0.0
      %v3983 = vadd.f32 %v3981, %v3982
      %v3984 = vsel %vm771, %v3886, 0.0
      %v3985 = vadd.f32 %v3983, %v3984
      %v3986 = vsel %vm771, %v3887, 0.0
      %v3987 = vadd.f32 %v3985, %v3986
      %v3988 = vsel %vm771, %v3888, 0.0
      %v3989 = vadd.f32 %v3987, %v3988
      %v3990 = vsel %vm771, %v3889, 0.0
      %v3991 = vadd.f32 %v3989, %v3990
      %v3992 = vsel %vm771, %v3890, 0.0
      %v3993 = vadd.f32 %v3991, %v3992
      %v3994 = vsel %vm771, %v3891, 0.0
      %v3995 = vadd.f32 %v3993, %v3994
      %v3996 = vsel %vm771, %v3892, 0.0
      %v3997 = vadd.f32 %v3995, %v3996
      %v3998 = vsel %vm771, %v3893, 0.0
      %v3999 = vadd.f32 %v3997, %v3998
      %v4000 = vsel %vm771, %v3894, 0.0
      %v4001 = vadd.f32 %v3999, %v4000
      %v4002 = vsel %vm771, %v3895, 0.0
      %v4003 = vadd.f32 %v4001, %v4002
      %v4004 = vsel %vm771, %v3896, 0.0
      %v4005 = vadd.f32 %v4003, %v4004
      %v4006 = vsel %vm771, %v3897, 0.0
      %v4007 = vadd.f32 %v4005, %v4006
      %v4008 = vsel %vm771, %v3898, 0.0
      %v4009 = vadd.f32 %v4007, %v4008
      %v4010 = vsel %vm771, %v3899, 0.0
      %v4011 = vadd.f32 %v4009, %v4010
      %v4012 = vrot.slane %v4011, 4
      %v4013 = vadd.f32 %v4011, %v4012
      %v4014 = vrot.slane %v4013, 2
      %v4015 = vadd.f32 %v4013, %v4014
      %v4016 = vrot.slane %v4015, 1
      %v4017 = vadd.f32 %v4015, %v4016
      %vm4018 = vcmask 57344
      %4019 = vst.msk [vmem:[%s216] sm:$0x1] %vm4018, %v4017
      %v4020 = vmul.f32 %v3884, %v3884
      %v4021 = vmul.f32 %v3885, %v3885
      %v4022 = vmul.f32 %v3886, %v3886
      %v4023 = vmul.f32 %v3887, %v3887
      %v4024 = vmul.f32 %v3888, %v3888
      %v4025 = vmul.f32 %v3889, %v3889
      %v4026 = vmul.f32 %v3890, %v3890
      %v4027 = vmul.f32 %v3891, %v3891
      %v4028 = vmul.f32 %v3892, %v3892
      %v4029 = vmul.f32 %v3893, %v3893
      %v4030 = vmul.f32 %v3894, %v3894
      %v4031 = vmul.f32 %v3895, %v3895
      %v4032 = vmul.f32 %v3896, %v3896
      %v4033 = vmul.f32 %v3897, %v3897
      %v4034 = vmul.f32 %v3898, %v3898
      %v4035 = vmul.f32 %v3899, %v3899
      %v4036 = vsel %vm771, %v4020, 0.0
      %v4037 = vsel %vm771, %v4021, 0.0
      %v4038 = vadd.f32 %v4036, %v4037
      %v4039 = vsel %vm771, %v4022, 0.0
      %v4040 = vadd.f32 %v4038, %v4039
      %v4041 = vsel %vm771, %v4023, 0.0
      %v4042 = vadd.f32 %v4040, %v4041
      %v4043 = vsel %vm771, %v4024, 0.0
      %v4044 = vadd.f32 %v4042, %v4043
      %v4045 = vsel %vm771, %v4025, 0.0
      %v4046 = vadd.f32 %v4044, %v4045
      %v4047 = vsel %vm771, %v4026, 0.0
      %v4048 = vadd.f32 %v4046, %v4047
      %v4049 = vsel %vm771, %v4027, 0.0
      %v4050 = vadd.f32 %v4048, %v4049
      %v4051 = vsel %vm771, %v4028, 0.0
      %v4052 = vadd.f32 %v4050, %v4051
      %v4053 = vsel %vm771, %v4029, 0.0
      %v4054 = vadd.f32 %v4052, %v4053
      %v4055 = vsel %vm771, %v4030, 0.0
      %v4056 = vadd.f32 %v4054, %v4055
      %v4057 = vsel %vm771, %v4031, 0.0
      %v4058 = vadd.f32 %v4056, %v4057
      %v4059 = vsel %vm771, %v4032, 0.0
      %v4060 = vadd.f32 %v4058, %v4059
      %v4061 = vsel %vm771, %v4033, 0.0
      %v4062 = vadd.f32 %v4060, %v4061
      %v4063 = vsel %vm771, %v4034, 0.0
      %v4064 = vadd.f32 %v4062, %v4063
      %v4065 = vsel %vm771, %v4035, 0.0
      %v4066 = vadd.f32 %v4064, %v4065
      %v4067 = vrot.slane %v4066, 4
      %v4068 = vadd.f32 %v4066, %v4067
      %v4069 = vrot.slane %v4068, 2
      %v4070 = vadd.f32 %v4068, %v4069
      %v4071 = vrot.slane %v4070, 1
      %v4072 = vadd.f32 %v4070, %v4071
      %4073 = vst.msk [vmem:[%s216 + $0x1] sm:$0x1] %vm4018, %v4072
      %s4074 = smul.u32 8, %s20
      %p4075 = scmp.lt.s32.totalorder %s19, 1
      %s4076 = scalar_select %p4075, %s19, 1
      %p4077 = scmp.lt.s32.totalorder %s4074, 15
      %s4078 = scalar_select %p4077, %s4074, 15
      %s4079 = smul.addr %s4078, 2
      %s4080 = smul.addr %s4076, 32
      %s4081 = sadd.s32 %s4079, %s4080
      %s4082 = smul.addr %s4081, 4
      %s4083 = scalar_lea.vmem %s2, %s4082
      %p4084 = scmp.lt.s32.totalorder %s19, 1
      %s4085 = scalar_select %p4084, %s19, 1
      %p4086 = scmp.lt.s32.totalorder %s20, 1
      %s4087 = scalar_select %p4086, %s20, 1
      %s4088 = smul.addr %s4085, 2
      %s4089 = sadd.s32 %s4087, %s4088
      %s4090 = smul.addr %s4089, 2
      %s4091 = scalar_lea.vmem %s3, %s4090
      // Predicated region
      $region29: #{inception_forward.9} parent=27 // pred_check
        %p4092 = pneg %p94
      $region30: #{inception_forward.9} parent=27 // pred_check_branch
        %4094 = sbr.rel (%p4092) target = $region32
      $region31: #{inception_forward.9} parent=27 // pred_region
        %s4095 = smul.u32 8, %s20
      $region32: #{inception_forward.9} parent=27 // pred_fallthru
        _
      // Predicated region
      $region33: #{inception_forward.9} parent=27 // pred_check
        %p4096 = pneg %p122
      $region34: #{inception_forward.9} parent=27 // pred_check_branch
        %4098 = sbr.rel (%p4096) target = $region36
      $region35: #{inception_forward.9} parent=27 // pred_region
        _
      $region36: #{inception_forward.9} parent=27 // pred_fallthru
        _
    $region28: #{inception_forward.9} parent=5 // pred_fallthru
      _
    %p4099 = scmp.le.s32.totalorder 2, %s10
    // Predicated region
    $region37: #{inception_forward.9} parent=5 // pred_check
      %p4100 = pneg %p4099
    $region38: #{inception_forward.9} parent=5 // pred_check_branch
      %4102 = sbr.rel (%p4100) target = $region40
    $region39: #{inception_forward.9} parent=5 // pred_region
      %s4103 = ssub.s32 %s10, 2
      // Predicated region
      $region41: #{inception_forward.9} parent=39 // pred_check
        %p4104 = pneg %p100
      $region42: #{inception_forward.9} parent=39 // pred_check_branch
        %4106 = sbr.rel (%p4104) target = $region44
      $region43: #{inception_forward.9} parent=39 // pred_region
        %s4107 = smul.u32 8, %s22
        %p4108 = scmp.lt.s32.totalorder %s21, 1
        %s4109 = scalar_select %p4108, %s21, 1
        %p4110 = scmp.lt.s32.totalorder %s4107, 15
        %s4111 = scalar_select %p4110, %s4107, 15
        %s4112 = smul.addr %s4111, 2
        %s4113 = smul.addr %s4109, 32
        %s4114 = sadd.s32 %s4112, %s4113
        %s4115 = smul.addr %s4114, 4
        %s4116 = scalar_lea.vmem %s2, %s4115
      $region44: #{inception_forward.9} parent=39 // pred_fallthru
        _
      // Predicated region
      $region45: #{inception_forward.9} parent=39 // pred_check
        %p4117 = pneg %p128
      $region46: #{inception_forward.9} parent=39 // pred_check_branch
        %4119 = sbr.rel (%p4117) target = $region48
      $region47: #{inception_forward.9} parent=39 // pred_region
        %p4120 = scmp.lt.s32.totalorder %s21, 1
        %s4121 = scalar_select %p4120, %s21, 1
        %p4122 = scmp.lt.s32.totalorder %s22, 1
        %s4123 = scalar_select %p4122, %s22, 1
        %s4124 = smul.addr %s4121, 2
        %s4125 = sadd.s32 %s4123, %s4124
        %s4126 = smul.addr %s4125, 2
        %s4127 = scalar_lea.vmem %s3, %s4126
      $region48: #{inception_forward.9} parent=39 // pred_fallthru
        _
    $region40: #{inception_forward.9} parent=5 // pred_fallthru
      _
  $region6: #{inception_forward.9} parent=0 // loop_footer
    %s14 = sadd.s32 1, %s10
  $region7: #{inception_forward.9} parent=0 // loop_footer_branch
    %9 = sbr.rel target = $region3
  $region8: #{inception_forward.9} parent=0 // loop_exit
    _

// kernel: inception_forward.11
$region0: #{inception_forward.11}
  #allocation0 [shape = 'u32[]', space=smem, size = 0x4, offset = 0x4, fixed_abs, tag = 'smem constant byte address 0x4 - core index']
  #allocation1 [shape = 'u32[144,128]{1,0:T(1,128)}', space=vmem, size = 0x12000, scoped, tag = 'internal scratch']
  %s0 = inlined_call_operand.vmem [shape: bf16[512,16], index: 0, kind: input, shape index: {}]
  %s1 = inlined_call_operand.vmem [shape: f32[1,8], index: 1, kind: input, shape index: {}]
  %s2 = inlined_call_operand.vmem [shape: f32[1,8], index: 2, kind: input, shape index: {}]
  %s3 = inlined_call_operand.vmem [shape: bf16[512,8], index: 3, kind: input, shape index: {}]
  %s4 = inlined_call_operand.vmem [shape: f32[1,8], index: 4, kind: input, shape index: {}]
  %s5 = inlined_call_operand.vmem [shape: f32[1,8], index: 5, kind: input, shape index: {}]
  %s6 = inlined_call_operand.vmem [shape: bf16[512,8], index: 6, kind: input, shape index: {}]
  %s7 = inlined_call_operand.vmem [shape: f32[1,8], index: 7, kind: input, shape index: {}]
  %s8 = inlined_call_operand.vmem [shape: f32[1,8], index: 8, kind: input, shape index: {}]
  %s9 = inlined_call_operand.vmem [shape: bf16[512,8], index: 9, kind: input, shape index: {}]
  %s10 = inlined_call_operand.vmem [shape: f32[1,8], index: 10, kind: input, shape index: {}]
  %s11 = inlined_call_operand.vmem [shape: f32[1,8], index: 11, kind: input, shape index: {}]
  %s12 = inlined_call_operand.hbm [shape: f32[512,32], index: 12, kind: output, shape index: {}]
  %s13 = sld [smem:[#allocation0]]
  $region58: #{inception_forward.11} parent=0
    _
  %s15 = ssub.s32 1, %s13
  %s16 = scalar_select 0, %s15, %s13
  $region1: #{inception_forward.11} parent=0
    #allocation2 [shape = 'u8[262144]{0}', space=vmem, size = 0x40000, scoped, tag = 'output window, operand 0, single buffered']
    #allocation3 [shape = 's32[1]{0}', space=sflag, size = 0x4, scoped, tag = 'scoped memory for inception_forward.11']
    %17 = vsyncpa [#allocation3], 0
    // Predicated region
    $region2: #{inception_forward.11} parent=1 // pred_check
      _
    $region3: #{inception_forward.11} parent=1 // pred_check_branch
      %19 = sbr.rel (0) target = $region5
    $region4: #{inception_forward.11} parent=1 // pred_region
      _
    $region5: #{inception_forward.11} parent=1 // pred_fallthru
      _
    // Predicated region
    $region6: #{inception_forward.11} parent=1 // pred_check
      _
    $region7: #{inception_forward.11} parent=1 // pred_check_branch
      %21 = sbr.rel (0) target = $region9
    $region8: #{inception_forward.11} parent=1 // pred_region
      _
    $region9: #{inception_forward.11} parent=1 // pred_fallthru
      _
    // Predicated region
    $region10: #{inception_forward.11} parent=1 // pred_check
      _
    $region11: #{inception_forward.11} parent=1 // pred_check_branch
      %23 = sbr.rel (0) target = $region13
    $region12: #{inception_forward.11} parent=1 // pred_region
      _
    $region13: #{inception_forward.11} parent=1 // pred_fallthru
      _
    // Predicated region
    $region14: #{inception_forward.11} parent=1 // pred_check
      _
    $region15: #{inception_forward.11} parent=1 // pred_check_branch
      %25 = sbr.rel (0) target = $region17
    $region16: #{inception_forward.11} parent=1 // pred_region
      _
    $region17: #{inception_forward.11} parent=1 // pred_fallthru
      _
    // Predicated region
    $region18: #{inception_forward.11} parent=1 // pred_check
      _
    $region19: #{inception_forward.11} parent=1 // pred_check_branch
      %27 = sbr.rel (0) target = $region21
    $region20: #{inception_forward.11} parent=1 // pred_region
      _
    $region21: #{inception_forward.11} parent=1 // pred_fallthru
      _
    // Predicated region
    $region22: #{inception_forward.11} parent=1 // pred_check
      _
    $region23: #{inception_forward.11} parent=1 // pred_check_branch
      %29 = sbr.rel (0) target = $region25
    $region24: #{inception_forward.11} parent=1 // pred_region
      _
    $region25: #{inception_forward.11} parent=1 // pred_fallthru
      _
    // Predicated region
    $region26: #{inception_forward.11} parent=1 // pred_check
      _
    $region27: #{inception_forward.11} parent=1 // pred_check_branch
      %31 = sbr.rel (0) target = $region29
    $region28: #{inception_forward.11} parent=1 // pred_region
      _
    $region29: #{inception_forward.11} parent=1 // pred_fallthru
      _
    // Predicated region
    $region30: #{inception_forward.11} parent=1 // pred_check
      _
    $region31: #{inception_forward.11} parent=1 // pred_check_branch
      %33 = sbr.rel (0) target = $region33
    $region32: #{inception_forward.11} parent=1 // pred_region
      _
    $region33: #{inception_forward.11} parent=1 // pred_fallthru
      _
    // Predicated region
    $region34: #{inception_forward.11} parent=1 // pred_check
      _
    $region35: #{inception_forward.11} parent=1 // pred_check_branch
      %35 = sbr.rel (0) target = $region37
    $region36: #{inception_forward.11} parent=1 // pred_region
      _
    $region37: #{inception_forward.11} parent=1 // pred_fallthru
      _
    // Predicated region
    $region38: #{inception_forward.11} parent=1 // pred_check
      _
    $region39: #{inception_forward.11} parent=1 // pred_check_branch
      %37 = sbr.rel (0) target = $region41
    $region40: #{inception_forward.11} parent=1 // pred_region
      _
    $region41: #{inception_forward.11} parent=1 // pred_fallthru
      _
    // Predicated region
    $region42: #{inception_forward.11} parent=1 // pred_check
      _
    $region43: #{inception_forward.11} parent=1 // pred_check_branch
      %39 = sbr.rel (0) target = $region45
    $region44: #{inception_forward.11} parent=1 // pred_region
      _
    $region45: #{inception_forward.11} parent=1 // pred_fallthru
      _
    // Predicated region
    $region46: #{inception_forward.11} parent=1 // pred_check
      _
    $region47: #{inception_forward.11} parent=1 // pred_check_branch
      %41 = sbr.rel (0) target = $region49
    $region48: #{inception_forward.11} parent=1 // pred_region
      _
    $region49: #{inception_forward.11} parent=1 // pred_fallthru
      _
    %v42 = vld [vmem:[%s0] sm:$0xf]
    %v43 = vld [vmem:[%s0 + $0x4] sm:$0xf]
    %v44 = vld [vmem:[%s0 + $0x8] sm:$0xf]
    %v45 = vld [vmem:[%s0 + $0xc] sm:$0xf]
    %v46 = vld [vmem:[%s0 + $0x10] sm:$0xf]
    %v47 = vld [vmem:[%s0 + $0x14] sm:$0xf]
    %v48 = vld [vmem:[%s0 + $0x18] sm:$0xf]
    %v49 = vld [vmem:[%s0 + $0x1c] sm:$0xf]
    %v50 = vld [vmem:[%s0 + $0x20] sm:$0xf]
    %v51 = vld [vmem:[%s0 + $0x24] sm:$0xf]
    %v52 = vld [vmem:[%s0 + $0x28] sm:$0xf]
    %v53 = vld [vmem:[%s0 + $0x2c] sm:$0xf]
    %v54 = vld [vmem:[%s0 + $0x30] sm:$0xf]
    %v55 = vld [vmem:[%s0 + $0x34] sm:$0xf]
    %v56 = vld [vmem:[%s0 + $0x38] sm:$0xf]
    %v57 = vld [vmem:[%s0 + $0x3c] sm:$0xf]
    %v58 = vld [vmem:[%s0 + $0x40] sm:$0xf]
    %v59 = vld [vmem:[%s0 + $0x44] sm:$0xf]
    %v60 = vld [vmem:[%s0 + $0x48] sm:$0xf]
    %v61 = vld [vmem:[%s0 + $0x4c] sm:$0xf]
    %v62 = vld [vmem:[%s0 + $0x50] sm:$0xf]
    %v63 = vld [vmem:[%s0 + $0x54] sm:$0xf]
    %v64 = vld [vmem:[%s0 + $0x58] sm:$0xf]
    %v65 = vld [vmem:[%s0 + $0x5c] sm:$0xf]
    %v66 = vld [vmem:[%s0 + $0x60] sm:$0xf]
    %v67 = vld [vmem:[%s0 + $0x64] sm:$0xf]
    %v68 = vld [vmem:[%s0 + $0x68] sm:$0xf]
    %v69 = vld [vmem:[%s0 + $0x6c] sm:$0xf]
    %v70 = vld [vmem:[%s0 + $0x70] sm:$0xf]
    %v71 = vld [vmem:[%s0 + $0x74] sm:$0xf]
    %v72 = vld [vmem:[%s0 + $0x78] sm:$0xf]
    %v73 = vld [vmem:[%s0 + $0x7c] sm:$0xf]
    %v74 = vld [vmem:[%s0 + $0x80] sm:$0xf]
    %v75 = vld [vmem:[%s0 + $0x84] sm:$0xf]
    %v76 = vld [vmem:[%s0 + $0x88] sm:$0xf]
    %v77 = vld [vmem:[%s0 + $0x8c] sm:$0xf]
    %v78 = vld [vmem:[%s0 + $0x90] sm:$0xf]
    %v79 = vld [vmem:[%s0 + $0x94] sm:$0xf]
    %v80 = vld [vmem:[%s0 + $0x98] sm:$0xf]
    %v81 = vld [vmem:[%s0 + $0x9c] sm:$0xf]
    %v82 = vld [vmem:[%s0 + $0xa0] sm:$0xf]
    %v83 = vld [vmem:[%s0 + $0xa4] sm:$0xf]
    %v84 = vld [vmem:[%s0 + $0xa8] sm:$0xf]
    %v85 = vld [vmem:[%s0 + $0xac] sm:$0xf]
    %v86 = vld [vmem:[%s0 + $0xb0] sm:$0xf]
    %v87 = vld [vmem:[%s0 + $0xb4] sm:$0xf]
    %v88 = vld [vmem:[%s0 + $0xb8] sm:$0xf]
    %v89 = vld [vmem:[%s0 + $0xbc] sm:$0xf]
    %v90 = vld [vmem:[%s0 + $0xc0] sm:$0xf]
    %v91 = vld [vmem:[%s0 + $0xc4] sm:$0xf]
    %v92 = vld [vmem:[%s0 + $0xc8] sm:$0xf]
    %v93 = vld [vmem:[%s0 + $0xcc] sm:$0xf]
    %v94 = vld [vmem:[%s0 + $0xd0] sm:$0xf]
    %v95 = vld [vmem:[%s0 + $0xd4] sm:$0xf]
    %v96 = vld [vmem:[%s0 + $0xd8] sm:$0xf]
    %v97 = vld [vmem:[%s0 + $0xdc] sm:$0xf]
    %v98 = vld [vmem:[%s0 + $0xe0] sm:$0xf]
    %v99 = vld [vmem:[%s0 + $0xe4] sm:$0xf]
    %v100 = vld [vmem:[%s0 + $0xe8] sm:$0xf]
    %v101 = vld [vmem:[%s0 + $0xec] sm:$0xf]
    %v102 = vld [vmem:[%s0 + $0xf0] sm:$0xf]
    %v103 = vld [vmem:[%s0 + $0xf4] sm:$0xf]
    %v104 = vld [vmem:[%s0 + $0xf8] sm:$0xf]
    %v105 = vld [vmem:[%s0 + $0xfc] sm:$0xf]
    %v106 = vunpack.c.l.bf16 %v42
    %v107 = vunpack.c.l.bf16 %v43
    %v108 = vunpack.c.l.bf16 %v44
    %v109 = vunpack.c.l.bf16 %v45
    %v110 = vunpack.c.l.bf16 %v46
    %v111 = vunpack.c.l.bf16 %v47
    %v112 = vunpack.c.l.bf16 %v48
    %v113 = vunpack.c.l.bf16 %v49
    %v114 = vunpack.c.l.bf16 %v50
    %v115 = vunpack.c.l.bf16 %v51
    %v116 = vunpack.c.l.bf16 %v52
    %v117 = vunpack.c.l.bf16 %v53
    %v118 = vunpack.c.l.bf16 %v54
    %v119 = vunpack.c.l.bf16 %v55
    %v120 = vunpack.c.l.bf16 %v56
    %v121 = vunpack.c.l.bf16 %v57
    %v122 = vunpack.c.l.bf16 %v58
    %v123 = vunpack.c.l.bf16 %v59
    %v124 = vunpack.c.l.bf16 %v60
    %v125 = vunpack.c.l.bf16 %v61
    %v126 = vunpack.c.l.bf16 %v62
    %v127 = vunpack.c.l.bf16 %v63
    %v128 = vunpack.c.l.bf16 %v64
    %v129 = vunpack.c.l.bf16 %v65
    %v130 = vunpack.c.l.bf16 %v66
    %v131 = vunpack.c.l.bf16 %v67
    %v132 = vunpack.c.l.bf16 %v68
    %v133 = vunpack.c.l.bf16 %v69
    %v134 = vunpack.c.l.bf16 %v70
    %v135 = vunpack.c.l.bf16 %v71
    %v136 = vunpack.c.l.bf16 %v72
    %v137 = vunpack.c.l.bf16 %v73
    %v138 = vunpack.c.l.bf16 %v74
    %v139 = vunpack.c.l.bf16 %v75
    %v140 = vunpack.c.l.bf16 %v76
    %v141 = vunpack.c.l.bf16 %v77
    %v142 = vunpack.c.l.bf16 %v78
    %v143 = vunpack.c.l.bf16 %v79
    %v144 = vunpack.c.l.bf16 %v80
    %v145 = vunpack.c.l.bf16 %v81
    %v146 = vunpack.c.l.bf16 %v82
    %v147 = vunpack.c.l.bf16 %v83
    %v148 = vunpack.c.l.bf16 %v84
    %v149 = vunpack.c.l.bf16 %v85
    %v150 = vunpack.c.l.bf16 %v86
    %v151 = vunpack.c.l.bf16 %v87
    %v152 = vunpack.c.l.bf16 %v88
    %v153 = vunpack.c.l.bf16 %v89
    %v154 = vunpack.c.l.bf16 %v90
    %v155 = vunpack.c.l.bf16 %v91
    %v156 = vunpack.c.l.bf16 %v92
    %v157 = vunpack.c.l.bf16 %v93
    %v158 = vunpack.c.l.bf16 %v94
    %v159 = vunpack.c.l.bf16 %v95
    %v160 = vunpack.c.l.bf16 %v96
    %v161 = vunpack.c.l.bf16 %v97
    %v162 = vunpack.c.l.bf16 %v98
    %v163 = vunpack.c.l.bf16 %v99
    %v164 = vunpack.c.l.bf16 %v100
    %v165 = vunpack.c.l.bf16 %v101
    %v166 = vunpack.c.l.bf16 %v102
    %v167 = vunpack.c.l.bf16 %v103
    %v168 = vunpack.c.l.bf16 %v104
    %v169 = vunpack.c.l.bf16 %v105
    %v170 = vld [vmem:[%s1] sm:$0x1]
    %v172 = vlaneseq
    %v173 = vshrl.u32 %v172, 7
    %v174 = vsub.s32 0, %v173
    %v175 = vrot.slane %v170, %v174
    %v177 = vmul.f32 %v106, %v175
    %v178 = vmul.f32 %v107, %v175
    %v179 = vmul.f32 %v108, %v175
    %v180 = vmul.f32 %v109, %v175
    %v181 = vmul.f32 %v110, %v175
    %v182 = vmul.f32 %v111, %v175
    %v183 = vmul.f32 %v112, %v175
    %v184 = vmul.f32 %v113, %v175
    %v185 = vmul.f32 %v114, %v175
    %v186 = vmul.f32 %v115, %v175
    %v187 = vmul.f32 %v116, %v175
    %v188 = vmul.f32 %v117, %v175
    %v189 = vmul.f32 %v118, %v175
    %v190 = vmul.f32 %v119, %v175
    %v191 = vmul.f32 %v120, %v175
    %v192 = vmul.f32 %v121, %v175
    %v193 = vmul.f32 %v122, %v175
    %v194 = vmul.f32 %v123, %v175
    %v195 = vmul.f32 %v124, %v175
    %v196 = vmul.f32 %v125, %v175
    %v197 = vmul.f32 %v126, %v175
    %v198 = vmul.f32 %v127, %v175
    %v199 = vmul.f32 %v128, %v175
    %v200 = vmul.f32 %v129, %v175
    %v201 = vmul.f32 %v130, %v175
    %v202 = vmul.f32 %v131, %v175
    %v203 = vmul.f32 %v132, %v175
    %v204 = vmul.f32 %v133, %v175
    %v205 = vmul.f32 %v134, %v175
    %v206 = vmul.f32 %v135, %v175
    %v207 = vmul.f32 %v136, %v175
    %v208 = vmul.f32 %v137, %v175
    %v209 = vmul.f32 %v138, %v175
    %v210 = vmul.f32 %v139, %v175
    %v211 = vmul.f32 %v140, %v175
    %v212 = vmul.f32 %v141, %v175
    %v213 = vmul.f32 %v142, %v175
    %v214 = vmul.f32 %v143, %v175
    %v215 = vmul.f32 %v144, %v175
    %v216 = vmul.f32 %v145, %v175
    %v217 = vmul.f32 %v146, %v175
    %v218 = vmul.f32 %v147, %v175
    %v219 = vmul.f32 %v148, %v175
    %v220 = vmul.f32 %v149, %v175
    %v221 = vmul.f32 %v150, %v175
    %v222 = vmul.f32 %v151, %v175
    %v223 = vmul.f32 %v152, %v175
    %v224 = vmul.f32 %v153, %v175
    %v225 = vmul.f32 %v154, %v175
    %v226 = vmul.f32 %v155, %v175
    %v227 = vmul.f32 %v156, %v175
    %v228 = vmul.f32 %v157, %v175
    %v229 = vmul.f32 %v158, %v175
    %v230 = vmul.f32 %v159, %v175
    %v231 = vmul.f32 %v160, %v175
    %v232 = vmul.f32 %v161, %v175
    %v233 = vmul.f32 %v162, %v175
    %v234 = vmul.f32 %v163, %v175
    %v235 = vmul.f32 %v164, %v175
    %v236 = vmul.f32 %v165, %v175
    %v237 = vmul.f32 %v166, %v175
    %v238 = vmul.f32 %v167, %v175
    %v239 = vmul.f32 %v168, %v175
    %v240 = vmul.f32 %v169, %v175
    %v241 = vld [vmem:[%s2] sm:$0x1]
    %v243 = vlaneseq
    %v244 = vshrl.u32 %v243, 7
    %v245 = vsub.s32 0, %v244
    %v246 = vrot.slane %v241, %v245
    %v248 = vadd.f32 %v177, %v246
    %v249 = vadd.f32 %v178, %v246
    %v250 = vadd.f32 %v179, %v246
    %v251 = vadd.f32 %v180, %v246
    %v252 = vadd.f32 %v181, %v246
    %v253 = vadd.f32 %v182, %v246
    %v254 = vadd.f32 %v183, %v246
    %v255 = vadd.f32 %v184, %v246
    %v256 = vadd.f32 %v185, %v246
    %v257 = vadd.f32 %v186, %v246
    %v258 = vadd.f32 %v187, %v246
    %v259 = vadd.f32 %v188, %v246
    %v260 = vadd.f32 %v189, %v246
    %v261 = vadd.f32 %v190, %v246
    %v262 = vadd.f32 %v191, %v246
    %v263 = vadd.f32 %v192, %v246
    %v264 = vadd.f32 %v193, %v246
    %v265 = vadd.f32 %v194, %v246
    %v266 = vadd.f32 %v195, %v246
    %v267 = vadd.f32 %v196, %v246
    %v268 = vadd.f32 %v197, %v246
    %v269 = vadd.f32 %v198, %v246
    %v270 = vadd.f32 %v199, %v246
    %v271 = vadd.f32 %v200, %v246
    %v272 = vadd.f32 %v201, %v246
    %v273 = vadd.f32 %v202, %v246
    %v274 = vadd.f32 %v203, %v246
    %v275 = vadd.f32 %v204, %v246
    %v276 = vadd.f32 %v205, %v246
    %v277 = vadd.f32 %v206, %v246
    %v278 = vadd.f32 %v207, %v246
    %v279 = vadd.f32 %v208, %v246
    %v280 = vadd.f32 %v209, %v246
    %v281 = vadd.f32 %v210, %v246
    %v282 = vadd.f32 %v211, %v246
    %v283 = vadd.f32 %v212, %v246
    %v284 = vadd.f32 %v213, %v246
    %v285 = vadd.f32 %v214, %v246
    %v286 = vadd.f32 %v215, %v246
    %v287 = vadd.f32 %v216, %v246
    %v288 = vadd.f32 %v217, %v246
    %v289 = vadd.f32 %v218, %v246
    %v290 = vadd.f32 %v219, %v246
    %v291 = vadd.f32 %v220, %v246
    %v292 = vadd.f32 %v221, %v246
    %v293 = vadd.f32 %v222, %v246
    %v294 = vadd.f32 %v223, %v246
    %v295 = vadd.f32 %v224, %v246
    %v296 = vadd.f32 %v225, %v246
    %v297 = vadd.f32 %v226, %v246
    %v298 = vadd.f32 %v227, %v246
    %v299 = vadd.f32 %v228, %v246
    %v300 = vadd.f32 %v229, %v246
    %v301 = vadd.f32 %v230, %v246
    %v302 = vadd.f32 %v231, %v246
    %v303 = vadd.f32 %v232, %v246
    %v304 = vadd.f32 %v233, %v246
    %v305 = vadd.f32 %v234, %v246
    %v306 = vadd.f32 %v235, %v246
    %v307 = vadd.f32 %v236, %v246
    %v308 = vadd.f32 %v237, %v246
    %v309 = vadd.f32 %v238, %v246
    %v310 = vadd.f32 %v239, %v246
    %v311 = vadd.f32 %v240, %v246
    %v312 = vmax.f32 %v248, 0.0
    %v313 = vmax.f32 %v249, 0.0
    %v314 = vmax.f32 %v250, 0.0
    %v315 = vmax.f32 %v251, 0.0
    %v316 = vmax.f32 %v252, 0.0
    %v317 = vmax.f32 %v253, 0.0
    %v318 = vmax.f32 %v254, 0.0
    %v319 = vmax.f32 %v255, 0.0
    %v320 = vmax.f32 %v256, 0.0
    %v321 = vmax.f32 %v257, 0.0
    %v322 = vmax.f32 %v258, 0.0
    %v323 = vmax.f32 %v259, 0.0
    %v324 = vmax.f32 %v260, 0.0
    %v325 = vmax.f32 %v261, 0.0
    %v326 = vmax.f32 %v262, 0.0
    %v327 = vmax.f32 %v263, 0.0
    %v328 = vmax.f32 %v264, 0.0
    %v329 = vmax.f32 %v265, 0.0
    %v330 = vmax.f32 %v266, 0.0
    %v331 = vmax.f32 %v267, 0.0
    %v332 = vmax.f32 %v268, 0.0
    %v333 = vmax.f32 %v269, 0.0
    %v334 = vmax.f32 %v270, 0.0
    %v335 = vmax.f32 %v271, 0.0
    %v336 = vmax.f32 %v272, 0.0
    %v337 = vmax.f32 %v273, 0.0
    %v338 = vmax.f32 %v274, 0.0
    %v339 = vmax.f32 %v275, 0.0
    %v340 = vmax.f32 %v276, 0.0
    %v341 = vmax.f32 %v277, 0.0
    %v342 = vmax.f32 %v278, 0.0
    %v343 = vmax.f32 %v279, 0.0
    %v344 = vmax.f32 %v280, 0.0
    %v345 = vmax.f32 %v281, 0.0
    %v346 = vmax.f32 %v282, 0.0
    %v347 = vmax.f32 %v283, 0.0
    %v348 = vmax.f32 %v284, 0.0
    %v349 = vmax.f32 %v285, 0.0
    %v350 = vmax.f32 %v286, 0.0
    %v351 = vmax.f32 %v287, 0.0
    %v352 = vmax.f32 %v288, 0.0
    %v353 = vmax.f32 %v289, 0.0
    %v354 = vmax.f32 %v290, 0.0
    %v355 = vmax.f32 %v291, 0.0
    %v356 = vmax.f32 %v292, 0.0
    %v357 = vmax.f32 %v293, 0.0
    %v358 = vmax.f32 %v294, 0.0
    %v359 = vmax.f32 %v295, 0.0
    %v360 = vmax.f32 %v296, 0.0
    %v361 = vmax.f32 %v297, 0.0
    %v362 = vmax.f32 %v298, 0.0
    %v363 = vmax.f32 %v299, 0.0
    %v364 = vmax.f32 %v300, 0.0
    %v365 = vmax.f32 %v301, 0.0
    %v366 = vmax.f32 %v302, 0.0
    %v367 = vmax.f32 %v303, 0.0
    %v368 = vmax.f32 %v304, 0.0
    %v369 = vmax.f32 %v305, 0.0
    %v370 = vmax.f32 %v306, 0.0
    %v371 = vmax.f32 %v307, 0.0
    %v372 = vmax.f32 %v308, 0.0
    %v373 = vmax.f32 %v309, 0.0
    %v374 = vmax.f32 %v310, 0.0
    %v375 = vmax.f32 %v311, 0.0
    %v376 = vld [vmem:[%s3] sm:$0xf]
    %v377 = vld [vmem:[%s3 + $0x4] sm:$0xf]
    %v378 = vld [vmem:[%s3 + $0x8] sm:$0xf]
    %v379 = vld [vmem:[%s3 + $0xc] sm:$0xf]
    %v380 = vld [vmem:[%s3 + $0x10] sm:$0xf]
    %v381 = vld [vmem:[%s3 + $0x14] sm:$0xf]
    %v382 = vld [vmem:[%s3 + $0x18] sm:$0xf]
    %v383 = vld [vmem:[%s3 + $0x1c] sm:$0xf]
    %v384 = vld [vmem:[%s3 + $0x20] sm:$0xf]
    %v385 = vld [vmem:[%s3 + $0x24] sm:$0xf]
    %v386 = vld [vmem:[%s3 + $0x28] sm:$0xf]
    %v387 = vld [vmem:[%s3 + $0x2c] sm:$0xf]
    %v388 = vld [vmem:[%s3 + $0x30] sm:$0xf]
    %v389 = vld [vmem:[%s3 + $0x34] sm:$0xf]
    %v390 = vld [vmem:[%s3 + $0x38] sm:$0xf]
    %v391 = vld [vmem:[%s3 + $0x3c] sm:$0xf]
    %v392 = vld [vmem:[%s3 + $0x40] sm:$0xf]
    %v393 = vld [vmem:[%s3 + $0x44] sm:$0xf]
    %v394 = vld [vmem:[%s3 + $0x48] sm:$0xf]
    %v395 = vld [vmem:[%s3 + $0x4c] sm:$0xf]
    %v396 = vld [vmem:[%s3 + $0x50] sm:$0xf]
    %v397 = vld [vmem:[%s3 + $0x54] sm:$0xf]
    %v398 = vld [vmem:[%s3 + $0x58] sm:$0xf]
    %v399 = vld [vmem:[%s3 + $0x5c] sm:$0xf]
    %v400 = vld [vmem:[%s3 + $0x60] sm:$0xf]
    %v401 = vld [vmem:[%s3 + $0x64] sm:$0xf]
    %v402 = vld [vmem:[%s3 + $0x68] sm:$0xf]
    %v403 = vld [vmem:[%s3 + $0x6c] sm:$0xf]
    %v404 = vld [vmem:[%s3 + $0x70] sm:$0xf]
    %v405 = vld [vmem:[%s3 + $0x74] sm:$0xf]
    %v406 = vld [vmem:[%s3 + $0x78] sm:$0xf]
    %v407 = vld [vmem:[%s3 + $0x7c] sm:$0xf]
    %v408 = vld [vmem:[%s3 + $0x80] sm:$0xf]
    %v409 = vld [vmem:[%s3 + $0x84] sm:$0xf]
    %v410 = vld [vmem:[%s3 + $0x88] sm:$0xf]
    %v411 = vld [vmem:[%s3 + $0x8c] sm:$0xf]
    %v412 = vld [vmem:[%s3 + $0x90] sm:$0xf]
    %v413 = vld [vmem:[%s3 + $0x94] sm:$0xf]
    %v414 = vld [vmem:[%s3 + $0x98] sm:$0xf]
    %v415 = vld [vmem:[%s3 + $0x9c] sm:$0xf]
    %v416 = vld [vmem:[%s3 + $0xa0] sm:$0xf]
    %v417 = vld [vmem:[%s3 + $0xa4] sm:$0xf]
    %v418 = vld [vmem:[%s3 + $0xa8] sm:$0xf]
    %v419 = vld [vmem:[%s3 + $0xac] sm:$0xf]
    %v420 = vld [vmem:[%s3 + $0xb0] sm:$0xf]
    %v421 = vld [vmem:[%s3 + $0xb4] sm:$0xf]
    %v422 = vld [vmem:[%s3 + $0xb8] sm:$0xf]
    %v423 = vld [vmem:[%s3 + $0xbc] sm:$0xf]
    %v424 = vld [vmem:[%s3 + $0xc0] sm:$0xf]
    %v425 = vld [vmem:[%s3 + $0xc4] sm:$0xf]
    %v426 = vld [vmem:[%s3 + $0xc8] sm:$0xf]
    %v427 = vld [vmem:[%s3 + $0xcc] sm:$0xf]
    %v428 = vld [vmem:[%s3 + $0xd0] sm:$0xf]
    %v429 = vld [vmem:[%s3 + $0xd4] sm:$0xf]
    %v430 = vld [vmem:[%s3 + $0xd8] sm:$0xf]
    %v431 = vld [vmem:[%s3 + $0xdc] sm:$0xf]
    %v432 = vld [vmem:[%s3 + $0xe0] sm:$0xf]
    %v433 = vld [vmem:[%s3 + $0xe4] sm:$0xf]
    %v434 = vld [vmem:[%s3 + $0xe8] sm:$0xf]
    %v435 = vld [vmem:[%s3 + $0xec] sm:$0xf]
    %v436 = vld [vmem:[%s3 + $0xf0] sm:$0xf]
    %v437 = vld [vmem:[%s3 + $0xf4] sm:$0xf]
    %v438 = vld [vmem:[%s3 + $0xf8] sm:$0xf]
    %v439 = vld [vmem:[%s3 + $0xfc] sm:$0xf]
    %v440 = vunpack.c.l.bf16 %v376
    %v441 = vunpack.c.l.bf16 %v377
    %v442 = vunpack.c.l.bf16 %v378
    %v443 = vunpack.c.l.bf16 %v379
    %v444 = vunpack.c.l.bf16 %v380
    %v445 = vunpack.c.l.bf16 %v381
    %v446 = vunpack.c.l.bf16 %v382
    %v447 = vunpack.c.l.bf16 %v383
    %v448 = vunpack.c.l.bf16 %v384
    %v449 = vunpack.c.l.bf16 %v385
    %v450 = vunpack.c.l.bf16 %v386
    %v451 = vunpack.c.l.bf16 %v387
    %v452 = vunpack.c.l.bf16 %v388
    %v453 = vunpack.c.l.bf16 %v389
    %v454 = vunpack.c.l.bf16 %v390
    %v455 = vunpack.c.l.bf16 %v391
    %v456 = vunpack.c.l.bf16 %v392
    %v457 = vunpack.c.l.bf16 %v393
    %v458 = vunpack.c.l.bf16 %v394
    %v459 = vunpack.c.l.bf16 %v395
    %v460 = vunpack.c.l.bf16 %v396
    %v461 = vunpack.c.l.bf16 %v397
    %v462 = vunpack.c.l.bf16 %v398
    %v463 = vunpack.c.l.bf16 %v399
    %v464 = vunpack.c.l.bf16 %v400
    %v465 = vunpack.c.l.bf16 %v401
    %v466 = vunpack.c.l.bf16 %v402
    %v467 = vunpack.c.l.bf16 %v403
    %v468 = vunpack.c.l.bf16 %v404
    %v469 = vunpack.c.l.bf16 %v405
    %v470 = vunpack.c.l.bf16 %v406
    %v471 = vunpack.c.l.bf16 %v407
    %v472 = vunpack.c.l.bf16 %v408
    %v473 = vunpack.c.l.bf16 %v409
    %v474 = vunpack.c.l.bf16 %v410
    %v475 = vunpack.c.l.bf16 %v411
    %v476 = vunpack.c.l.bf16 %v412
    %v477 = vunpack.c.l.bf16 %v413
    %v478 = vunpack.c.l.bf16 %v414
    %v479 = vunpack.c.l.bf16 %v415
    %v480 = vunpack.c.l.bf16 %v416
    %v481 = vunpack.c.l.bf16 %v417
    %v482 = vunpack.c.l.bf16 %v418
    %v483 = vunpack.c.l.bf16 %v419
    %v484 = vunpack.c.l.bf16 %v420
    %v485 = vunpack.c.l.bf16 %v421
    %v486 = vunpack.c.l.bf16 %v422
    %v487 = vunpack.c.l.bf16 %v423
    %v488 = vunpack.c.l.bf16 %v424
    %v489 = vunpack.c.l.bf16 %v425
    %v490 = vunpack.c.l.bf16 %v426
    %v491 = vunpack.c.l.bf16 %v427
    %v492 = vunpack.c.l.bf16 %v428
    %v493 = vunpack.c.l.bf16 %v429
    %v494 = vunpack.c.l.bf16 %v430
    %v495 = vunpack.c.l.bf16 %v431
    %v496 = vunpack.c.l.bf16 %v432
    %v497 = vunpack.c.l.bf16 %v433
    %v498 = vunpack.c.l.bf16 %v434
    %v499 = vunpack.c.l.bf16 %v435
    %v500 = vunpack.c.l.bf16 %v436
    %v501 = vunpack.c.l.bf16 %v437
    %v502 = vunpack.c.l.bf16 %v438
    %v503 = vunpack.c.l.bf16 %v439
    %v504 = vld [vmem:[%s4] sm:$0x1]
    %v506 = vlaneseq
    %v507 = vshrl.u32 %v506, 7
    %v508 = vsub.s32 0, %v507
    %v509 = vrot.slane %v504, %v508
    %v511 = vmul.f32 %v440, %v509
    %v512 = vmul.f32 %v441, %v509
    %v513 = vmul.f32 %v442, %v509
    %v514 = vmul.f32 %v443, %v509
    %v515 = vmul.f32 %v444, %v509
    %v516 = vmul.f32 %v445, %v509
    %v517 = vmul.f32 %v446, %v509
    %v518 = vmul.f32 %v447, %v509
    %v519 = vmul.f32 %v448, %v509
    %v520 = vmul.f32 %v449, %v509
    %v521 = vmul.f32 %v450, %v509
    %v522 = vmul.f32 %v451, %v509
    %v523 = vmul.f32 %v452, %v509
    %v524 = vmul.f32 %v453, %v509
    %v525 = vmul.f32 %v454, %v509
    %v526 = vmul.f32 %v455, %v509
    %v527 = vmul.f32 %v456, %v509
    %v528 = vmul.f32 %v457, %v509
    %v529 = vmul.f32 %v458, %v509
    %v530 = vmul.f32 %v459, %v509
    %v531 = vmul.f32 %v460, %v509
    %v532 = vmul.f32 %v461, %v509
    %v533 = vmul.f32 %v462, %v509
    %v534 = vmul.f32 %v463, %v509
    %v535 = vmul.f32 %v464, %v509
    %v536 = vmul.f32 %v465, %v509
    %v537 = vmul.f32 %v466, %v509
    %v538 = vmul.f32 %v467, %v509
    %v539 = vmul.f32 %v468, %v509
    %v540 = vmul.f32 %v469, %v509
    %v541 = vmul.f32 %v470, %v509
    %v542 = vmul.f32 %v471, %v509
    %v543 = vmul.f32 %v472, %v509
    %v544 = vmul.f32 %v473, %v509
    %v545 = vmul.f32 %v474, %v509
    %v546 = vmul.f32 %v475, %v509
    %v547 = vmul.f32 %v476, %v509
    %v548 = vmul.f32 %v477, %v509
    %v549 = vmul.f32 %v478, %v509
    %v550 = vmul.f32 %v479, %v509
    %v551 = vmul.f32 %v480, %v509
    %v552 = vmul.f32 %v481, %v509
    %v553 = vmul.f32 %v482, %v509
    %v554 = vmul.f32 %v483, %v509
    %v555 = vmul.f32 %v484, %v509
    %v556 = vmul.f32 %v485, %v509
    %v557 = vmul.f32 %v486, %v509
    %v558 = vmul.f32 %v487, %v509
    %v559 = vmul.f32 %v488, %v509
    %v560 = vmul.f32 %v489, %v509
    %v561 = vmul.f32 %v490, %v509
    %v562 = vmul.f32 %v491, %v509
    %v563 = vmul.f32 %v492, %v509
    %v564 = vmul.f32 %v493, %v509
    %v565 = vmul.f32 %v494, %v509
    %v566 = vmul.f32 %v495, %v509
    %v567 = vmul.f32 %v496, %v509
    %v568 = vmul.f32 %v497, %v509
    %v569 = vmul.f32 %v498, %v509
    %v570 = vmul.f32 %v499, %v509
    %v571 = vmul.f32 %v500, %v509
    %v572 = vmul.f32 %v501, %v509
    %v573 = vmul.f32 %v502, %v509
    %v574 = vmul.f32 %v503, %v509
    %v575 = vld [vmem:[%s5] sm:$0x1]
    %v577 = vlaneseq
    %v578 = vshrl.u32 %v577, 7
    %v579 = vsub.s32 0, %v578
    %v580 = vrot.slane %v575, %v579
    %v582 = vadd.f32 %v511, %v580
    %v583 = vadd.f32 %v512, %v580
    %v584 = vadd.f32 %v513, %v580
    %v585 = vadd.f32 %v514, %v580
    %v586 = vadd.f32 %v515, %v580
    %v587 = vadd.f32 %v516, %v580
    %v588 = vadd.f32 %v517, %v580
    %v589 = vadd.f32 %v518, %v580
    %v590 = vadd.f32 %v519, %v580
    %v591 = vadd.f32 %v520, %v580
    %v592 = vadd.f32 %v521, %v580
    %v593 = vadd.f32 %v522, %v580
    %v594 = vadd.f32 %v523, %v580
    %v595 = vadd.f32 %v524, %v580
    %v596 = vadd.f32 %v525, %v580
    %v597 = vadd.f32 %v526, %v580
    %v598 = vadd.f32 %v527, %v580
    %v599 = vadd.f32 %v528, %v580
    %v600 = vadd.f32 %v529, %v580
    %v601 = vadd.f32 %v530, %v580
    %v602 = vadd.f32 %v531, %v580
    %v603 = vadd.f32 %v532, %v580
    %v604 = vadd.f32 %v533, %v580
    %v605 = vadd.f32 %v534, %v580
    %v606 = vadd.f32 %v535, %v580
    %v607 = vadd.f32 %v536, %v580
    %v608 = vadd.f32 %v537, %v580
    %v609 = vadd.f32 %v538, %v580
    %v610 = vadd.f32 %v539, %v580
    %v611 = vadd.f32 %v540, %v580
    %v612 = vadd.f32 %v541, %v580
    %v613 = vadd.f32 %v542, %v580
    %v614 = vadd.f32 %v543, %v580
    %v615 = vadd.f32 %v544, %v580
    %v616 = vadd.f32 %v545, %v580
    %v617 = vadd.f32 %v546, %v580
    %v618 = vadd.f32 %v547, %v580
    %v619 = vadd.f32 %v548, %v580
    %v620 = vadd.f32 %v549, %v580
    %v621 = vadd.f32 %v550, %v580
    %v622 = vadd.f32 %v551, %v580
    %v623 = vadd.f32 %v552, %v580
    %v624 = vadd.f32 %v553, %v580
    %v625 = vadd.f32 %v554, %v580
    %v626 = vadd.f32 %v555, %v580
    %v627 = vadd.f32 %v556, %v580
    %v628 = vadd.f32 %v557, %v580
    %v629 = vadd.f32 %v558, %v580
    %v630 = vadd.f32 %v559, %v580
    %v631 = vadd.f32 %v560, %v580
    %v632 = vadd.f32 %v561, %v580
    %v633 = vadd.f32 %v562, %v580
    %v634 = vadd.f32 %v563, %v580
    %v635 = vadd.f32 %v564, %v580
    %v636 = vadd.f32 %v565, %v580
    %v637 = vadd.f32 %v566, %v580
    %v638 = vadd.f32 %v567, %v580
    %v639 = vadd.f32 %v568, %v580
    %v640 = vadd.f32 %v569, %v580
    %v641 = vadd.f32 %v570, %v580
    %v642 = vadd.f32 %v571, %v580
    %v643 = vadd.f32 %v572, %v580
    %v644 = vadd.f32 %v573, %v580
    %v645 = vadd.f32 %v574, %v580
    %v646 = vmax.f32 %v582, 0.0
    %v647 = vmax.f32 %v583, 0.0
    %v648 = vmax.f32 %v584, 0.0
    %v649 = vmax.f32 %v585, 0.0
    %v650 = vmax.f32 %v586, 0.0
    %v651 = vmax.f32 %v587, 0.0
    %v652 = vmax.f32 %v588, 0.0
    %v653 = vmax.f32 %v589, 0.0
    %v654 = vmax.f32 %v590, 0.0
    %v655 = vmax.f32 %v591, 0.0
    %v656 = vmax.f32 %v592, 0.0
    %v657 = vmax.f32 %v593, 0.0
    %v658 = vmax.f32 %v594, 0.0
    %v659 = vmax.f32 %v595, 0.0
    %v660 = vmax.f32 %v596, 0.0
    %v661 = vmax.f32 %v597, 0.0
    %v662 = vmax.f32 %v598, 0.0
    %v663 = vmax.f32 %v599, 0.0
    %v664 = vmax.f32 %v600, 0.0
    %v665 = vmax.f32 %v601, 0.0
    %v666 = vmax.f32 %v602, 0.0
    %v667 = vmax.f32 %v603, 0.0
    %v668 = vmax.f32 %v604, 0.0
    %v669 = vmax.f32 %v605, 0.0
    %v670 = vmax.f32 %v606, 0.0
    %v671 = vmax.f32 %v607, 0.0
    %v672 = vmax.f32 %v608, 0.0
    %v673 = vmax.f32 %v609, 0.0
    %v674 = vmax.f32 %v610, 0.0
    %v675 = vmax.f32 %v611, 0.0
    %v676 = vmax.f32 %v612, 0.0
    %v677 = vmax.f32 %v613, 0.0
    %v678 = vmax.f32 %v614, 0.0
    %v679 = vmax.f32 %v615, 0.0
    %v680 = vmax.f32 %v616, 0.0
    %v681 = vmax.f32 %v617, 0.0
    %v682 = vmax.f32 %v618, 0.0
    %v683 = vmax.f32 %v619, 0.0
    %v684 = vmax.f32 %v620, 0.0
    %v685 = vmax.f32 %v621, 0.0
    %v686 = vmax.f32 %v622, 0.0
    %v687 = vmax.f32 %v623, 0.0
    %v688 = vmax.f32 %v624, 0.0
    %v689 = vmax.f32 %v625, 0.0
    %v690 = vmax.f32 %v626, 0.0
    %v691 = vmax.f32 %v627, 0.0
    %v692 = vmax.f32 %v628, 0.0
    %v693 = vmax.f32 %v629, 0.0
    %v694 = vmax.f32 %v630, 0.0
    %v695 = vmax.f32 %v631, 0.0
    %v696 = vmax.f32 %v632, 0.0
    %v697 = vmax.f32 %v633, 0.0
    %v698 = vmax.f32 %v634, 0.0
    %v699 = vmax.f32 %v635, 0.0
    %v700 = vmax.f32 %v636, 0.0
    %v701 = vmax.f32 %v637, 0.0
    %v702 = vmax.f32 %v638, 0.0
    %v703 = vmax.f32 %v639, 0.0
    %v704 = vmax.f32 %v640, 0.0
    %v705 = vmax.f32 %v641, 0.0
    %v706 = vmax.f32 %v642, 0.0
    %v707 = vmax.f32 %v643, 0.0
    %v708 = vmax.f32 %v644, 0.0
    %v709 = vmax.f32 %v645, 0.0
    %v710 = vld [vmem:[%s6] sm:$0xf]
    %v711 = vld [vmem:[%s6 + $0x4] sm:$0xf]
    %v712 = vld [vmem:[%s6 + $0x8] sm:$0xf]
    %v713 = vld [vmem:[%s6 + $0xc] sm:$0xf]
    %v714 = vld [vmem:[%s6 + $0x10] sm:$0xf]
    %v715 = vld [vmem:[%s6 + $0x14] sm:$0xf]
    %v716 = vld [vmem:[%s6 + $0x18] sm:$0xf]
    %v717 = vld [vmem:[%s6 + $0x1c] sm:$0xf]
    %v718 = vld [vmem:[%s6 + $0x20] sm:$0xf]
    %v719 = vld [vmem:[%s6 + $0x24] sm:$0xf]
    %v720 = vld [vmem:[%s6 + $0x28] sm:$0xf]
    %v721 = vld [vmem:[%s6 + $0x2c] sm:$0xf]
    %v722 = vld [vmem:[%s6 + $0x30] sm:$0xf]
    %v723 = vld [vmem:[%s6 + $0x34] sm:$0xf]
    %v724 = vld [vmem:[%s6 + $0x38] sm:$0xf]
    %v725 = vld [vmem:[%s6 + $0x3c] sm:$0xf]
    %v726 = vld [vmem:[%s6 + $0x40] sm:$0xf]
    %v727 = vld [vmem:[%s6 + $0x44] sm:$0xf]
    %v728 = vld [vmem:[%s6 + $0x48] sm:$0xf]
    %v729 = vld [vmem:[%s6 + $0x4c] sm:$0xf]
    %v730 = vld [vmem:[%s6 + $0x50] sm:$0xf]
    %v731 = vld [vmem:[%s6 + $0x54] sm:$0xf]
    %v732 = vld [vmem:[%s6 + $0x58] sm:$0xf]
    %v733 = vld [vmem:[%s6 + $0x5c] sm:$0xf]
    %v734 = vld [vmem:[%s6 + $0x60] sm:$0xf]
    %v735 = vld [vmem:[%s6 + $0x64] sm:$0xf]
    %v736 = vld [vmem:[%s6 + $0x68] sm:$0xf]
    %v737 = vld [vmem:[%s6 + $0x6c] sm:$0xf]
    %v738 = vld [vmem:[%s6 + $0x70] sm:$0xf]
    %v739 = vld [vmem:[%s6 + $0x74] sm:$0xf]
    %v740 = vld [vmem:[%s6 + $0x78] sm:$0xf]
    %v741 = vld [vmem:[%s6 + $0x7c] sm:$0xf]
    %v742 = vld [vmem:[%s6 + $0x80] sm:$0xf]
    %v743 = vld [vmem:[%s6 + $0x84] sm:$0xf]
    %v744 = vld [vmem:[%s6 + $0x88] sm:$0xf]
    %v745 = vld [vmem:[%s6 + $0x8c] sm:$0xf]
    %v746 = vld [vmem:[%s6 + $0x90] sm:$0xf]
    %v747 = vld [vmem:[%s6 + $0x94] sm:$0xf]
    %v748 = vld [vmem:[%s6 + $0x98] sm:$0xf]
    %v749 = vld [vmem:[%s6 + $0x9c] sm:$0xf]
    %v750 = vld [vmem:[%s6 + $0xa0] sm:$0xf]
    %v751 = vld [vmem:[%s6 + $0xa4] sm:$0xf]
    %v752 = vld [vmem:[%s6 + $0xa8] sm:$0xf]
    %v753 = vld [vmem:[%s6 + $0xac] sm:$0xf]
    %v754 = vld [vmem:[%s6 + $0xb0] sm:$0xf]
    %v755 = vld [vmem:[%s6 + $0xb4] sm:$0xf]
    %v756 = vld [vmem:[%s6 + $0xb8] sm:$0xf]
    %v757 = vld [vmem:[%s6 + $0xbc] sm:$0xf]
    %v758 = vld [vmem:[%s6 + $0xc0] sm:$0xf]
    %v759 = vld [vmem:[%s6 + $0xc4] sm:$0xf]
    %v760 = vld [vmem:[%s6 + $0xc8] sm:$0xf]
    %v761 = vld [vmem:[%s6 + $0xcc] sm:$0xf]
    %v762 = vld [vmem:[%s6 + $0xd0] sm:$0xf]
    %v763 = vld [vmem:[%s6 + $0xd4] sm:$0xf]
    %v764 = vld [vmem:[%s6 + $0xd8] sm:$0xf]
    %v765 = vld [vmem:[%s6 + $0xdc] sm:$0xf]
    %v766 = vld [vmem:[%s6 + $0xe0] sm:$0xf]
    %v767 = vld [vmem:[%s6 + $0xe4] sm:$0xf]
    %v768 = vld [vmem:[%s6 + $0xe8] sm:$0xf]
    %v769 = vld [vmem:[%s6 + $0xec] sm:$0xf]
    %v770 = vld [vmem:[%s6 + $0xf0] sm:$0xf]
    %v771 = vld [vmem:[%s6 + $0xf4] sm:$0xf]
    %v772 = vld [vmem:[%s6 + $0xf8] sm:$0xf]
    %v773 = vld [vmem:[%s6 + $0xfc] sm:$0xf]
    %v774 = vunpack.c.l.bf16 %v710
    %v775 = vunpack.c.l.bf16 %v711
    %v776 = vunpack.c.l.bf16 %v712
    %v777 = vunpack.c.l.bf16 %v713
    %v778 = vunpack.c.l.bf16 %v714
    %v779 = vunpack.c.l.bf16 %v715
    %v780 = vunpack.c.l.bf16 %v716
    %v781 = vunpack.c.l.bf16 %v717
    %v782 = vunpack.c.l.bf16 %v718
    %v783 = vunpack.c.l.bf16 %v719
    %v784 = vunpack.c.l.bf16 %v720
    %v785 = vunpack.c.l.bf16 %v721
    %v786 = vunpack.c.l.bf16 %v722
    %v787 = vunpack.c.l.bf16 %v723
    %v788 = vunpack.c.l.bf16 %v724
    %v789 = vunpack.c.l.bf16 %v725
    %v790 = vunpack.c.l.bf16 %v726
    %v791 = vunpack.c.l.bf16 %v727
    %v792 = vunpack.c.l.bf16 %v728
    %v793 = vunpack.c.l.bf16 %v729
    %v794 = vunpack.c.l.bf16 %v730
    %v795 = vunpack.c.l.bf16 %v731
    %v796 = vunpack.c.l.bf16 %v732
    %v797 = vunpack.c.l.bf16 %v733
    %v798 = vunpack.c.l.bf16 %v734
    %v799 = vunpack.c.l.bf16 %v735
    %v800 = vunpack.c.l.bf16 %v736
    %v801 = vunpack.c.l.bf16 %v737
    %v802 = vunpack.c.l.bf16 %v738
    %v803 = vunpack.c.l.bf16 %v739
    %v804 = vunpack.c.l.bf16 %v740
    %v805 = vunpack.c.l.bf16 %v741
    %v806 = vunpack.c.l.bf16 %v742
    %v807 = vunpack.c.l.bf16 %v743
    %v808 = vunpack.c.l.bf16 %v744
    %v809 = vunpack.c.l.bf16 %v745
    %v810 = vunpack.c.l.bf16 %v746
    %v811 = vunpack.c.l.bf16 %v747
    %v812 = vunpack.c.l.bf16 %v748
    %v813 = vunpack.c.l.bf16 %v749
    %v814 = vunpack.c.l.bf16 %v750
    %v815 = vunpack.c.l.bf16 %v751
    %v816 = vunpack.c.l.bf16 %v752
    %v817 = vunpack.c.l.bf16 %v753
    %v818 = vunpack.c.l.bf16 %v754
    %v819 = vunpack.c.l.bf16 %v755
    %v820 = vunpack.c.l.bf16 %v756
    %v821 = vunpack.c.l.bf16 %v757
    %v822 = vunpack.c.l.bf16 %v758
    %v823 = vunpack.c.l.bf16 %v759
    %v824 = vunpack.c.l.bf16 %v760
    %v825 = vunpack.c.l.bf16 %v761
    %v826 = vunpack.c.l.bf16 %v762
    %v827 = vunpack.c.l.bf16 %v763
    %v828 = vunpack.c.l.bf16 %v764
    %v829 = vunpack.c.l.bf16 %v765
    %v830 = vunpack.c.l.bf16 %v766
    %v831 = vunpack.c.l.bf16 %v767
    %v832 = vunpack.c.l.bf16 %v768
    %v833 = vunpack.c.l.bf16 %v769
    %v834 = vunpack.c.l.bf16 %v770
    %v835 = vunpack.c.l.bf16 %v771
    %v836 = vunpack.c.l.bf16 %v772
    %v837 = vunpack.c.l.bf16 %v773
    %v838 = vld [vmem:[%s7] sm:$0x1]
    %v840 = vlaneseq
    %v841 = vshrl.u32 %v840, 7
    %v842 = vsub.s32 0, %v841
    %v843 = vrot.slane %v838, %v842
    %v845 = vmul.f32 %v774, %v843
    %v846 = vmul.f32 %v775, %v843
    %v847 = vmul.f32 %v776, %v843
    %v848 = vmul.f32 %v777, %v843
    %v849 = vmul.f32 %v778, %v843
    %v850 = vmul.f32 %v779, %v843
    %v851 = vmul.f32 %v780, %v843
    %v852 = vmul.f32 %v781, %v843
    %v853 = vmul.f32 %v782, %v843
    %v854 = vmul.f32 %v783, %v843
    %v855 = vmul.f32 %v784, %v843
    %v856 = vmul.f32 %v785, %v843
    %v857 = vmul.f32 %v786, %v843
    %v858 = vmul.f32 %v787, %v843
    %v859 = vmul.f32 %v788, %v843
    %v860 = vmul.f32 %v789, %v843
    %v861 = vmul.f32 %v790, %v843
    %v862 = vmul.f32 %v791, %v843
    %v863 = vmul.f32 %v792, %v843
    %v864 = vmul.f32 %v793, %v843
    %v865 = vmul.f32 %v794, %v843
    %v866 = vmul.f32 %v795, %v843
    %v867 = vmul.f32 %v796, %v843
    %v868 = vmul.f32 %v797, %v843
    %v869 = vmul.f32 %v798, %v843
    %v870 = vmul.f32 %v799, %v843
    %v871 = vmul.f32 %v800, %v843
    %v872 = vmul.f32 %v801, %v843
    %v873 = vmul.f32 %v802, %v843
    %v874 = vmul.f32 %v803, %v843
    %v875 = vmul.f32 %v804, %v843
    %v876 = vmul.f32 %v805, %v843
    %v877 = vmul.f32 %v806, %v843
    %v878 = vmul.f32 %v807, %v843
    %v879 = vmul.f32 %v808, %v843
    %v880 = vmul.f32 %v809, %v843
    %v881 = vmul.f32 %v810, %v843
    %v882 = vmul.f32 %v811, %v843
    %v883 = vmul.f32 %v812, %v843
    %v884 = vmul.f32 %v813, %v843
    %v885 = vmul.f32 %v814, %v843
    %v886 = vmul.f32 %v815, %v843
    %v887 = vmul.f32 %v816, %v843
    %v888 = vmul.f32 %v817, %v843
    %v889 = vmul.f32 %v818, %v843
    %v890 = vmul.f32 %v819, %v843
    %v891 = vmul.f32 %v820, %v843
    %v892 = vmul.f32 %v821, %v843
    %v893 = vmul.f32 %v822, %v843
    %v894 = vmul.f32 %v823, %v843
    %v895 = vmul.f32 %v824, %v843
    %v896 = vmul.f32 %v825, %v843
    %v897 = vmul.f32 %v826, %v843
    %v898 = vmul.f32 %v827, %v843
    %v899 = vmul.f32 %v828, %v843
    %v900 = vmul.f32 %v829, %v843
    %v901 = vmul.f32 %v830, %v843
    %v902 = vmul.f32 %v831, %v843
    %v903 = vmul.f32 %v832, %v843
    %v904 = vmul.f32 %v833, %v843
    %v905 = vmul.f32 %v834, %v843
    %v906 = vmul.f32 %v835, %v843
    %v907 = vmul.f32 %v836, %v843
    %v908 = vmul.f32 %v837, %v843
    %v909 = vld [vmem:[%s8] sm:$0x1]
    %v911 = vlaneseq
    %v912 = vshrl.u32 %v911, 7
    %v913 = vsub.s32 0, %v912
    %v914 = vrot.slane %v909, %v913
    %v916 = vadd.f32 %v845, %v914
    %v917 = vadd.f32 %v846, %v914
    %v918 = vadd.f32 %v847, %v914
    %v919 = vadd.f32 %v848, %v914
    %v920 = vadd.f32 %v849, %v914
    %v921 = vadd.f32 %v850, %v914
    %v922 = vadd.f32 %v851, %v914
    %v923 = vadd.f32 %v852, %v914
    %v924 = vadd.f32 %v853, %v914
    %v925 = vadd.f32 %v854, %v914
    %v926 = vadd.f32 %v855, %v914
    %v927 = vadd.f32 %v856, %v914
    %v928 = vadd.f32 %v857, %v914
    %v929 = vadd.f32 %v858, %v914
    %v930 = vadd.f32 %v859, %v914
    %v931 = vadd.f32 %v860, %v914
    %v932 = vadd.f32 %v861, %v914
    %v933 = vadd.f32 %v862, %v914
    %v934 = vadd.f32 %v863, %v914
    %v935 = vadd.f32 %v864, %v914
    %v936 = vadd.f32 %v865, %v914
    %v937 = vadd.f32 %v866, %v914
    %v938 = vadd.f32 %v867, %v914
    %v939 = vadd.f32 %v868, %v914
    %v940 = vadd.f32 %v869, %v914
    %v941 = vadd.f32 %v870, %v914
    %v942 = vadd.f32 %v871, %v914
    %v943 = vadd.f32 %v872, %v914
    %v944 = vadd.f32 %v873, %v914
    %v945 = vadd.f32 %v874, %v914
    %v946 = vadd.f32 %v875, %v914
    %v947 = vadd.f32 %v876, %v914
    %v948 = vadd.f32 %v877, %v914
    %v949 = vadd.f32 %v878, %v914
    %v950 = vadd.f32 %v879, %v914
    %v951 = vadd.f32 %v880, %v914
    %v952 = vadd.f32 %v881, %v914
    %v953 = vadd.f32 %v882, %v914
    %v954 = vadd.f32 %v883, %v914
    %v955 = vadd.f32 %v884, %v914
    %v956 = vadd.f32 %v885, %v914
    %v957 = vadd.f32 %v886, %v914
    %v958 = vadd.f32 %v887, %v914
    %v959 = vadd.f32 %v888, %v914
    %v960 = vadd.f32 %v889, %v914
    %v961 = vadd.f32 %v890, %v914
    %v962 = vadd.f32 %v891, %v914
    %v963 = vadd.f32 %v892, %v914
    %v964 = vadd.f32 %v893, %v914
    %v965 = vadd.f32 %v894, %v914
    %v966 = vadd.f32 %v895, %v914
    %v967 = vadd.f32 %v896, %v914
    %v968 = vadd.f32 %v897, %v914
    %v969 = vadd.f32 %v898, %v914
    %v970 = vadd.f32 %v899, %v914
    %v971 = vadd.f32 %v900, %v914
    %v972 = vadd.f32 %v901, %v914
    %v973 = vadd.f32 %v902, %v914
    %v974 = vadd.f32 %v903, %v914
    %v975 = vadd.f32 %v904, %v914
    %v976 = vadd.f32 %v905, %v914
    %v977 = vadd.f32 %v906, %v914
    %v978 = vadd.f32 %v907, %v914
    %v979 = vadd.f32 %v908, %v914
    %v980 = vmax.f32 %v916, 0.0
    %v981 = vmax.f32 %v917, 0.0
    %v982 = vmax.f32 %v918, 0.0
    %v983 = vmax.f32 %v919, 0.0
    %v984 = vmax.f32 %v920, 0.0
    %v985 = vmax.f32 %v921, 0.0
    %v986 = vmax.f32 %v922, 0.0
    %v987 = vmax.f32 %v923, 0.0
    %v988 = vmax.f32 %v924, 0.0
    %v989 = vmax.f32 %v925, 0.0
    %v990 = vmax.f32 %v926, 0.0
    %v991 = vmax.f32 %v927, 0.0
    %v992 = vmax.f32 %v928, 0.0
    %v993 = vmax.f32 %v929, 0.0
    %v994 = vmax.f32 %v930, 0.0
    %v995 = vmax.f32 %v931, 0.0
    %v996 = vmax.f32 %v932, 0.0
    %v997 = vmax.f32 %v933, 0.0
    %v998 = vmax.f32 %v934, 0.0
    %v999 = vmax.f32 %v935, 0.0
    %v1000 = vmax.f32 %v936, 0.0
    %v1001 = vmax.f32 %v937, 0.0
    %v1002 = vmax.f32 %v938, 0.0
    %v1003 = vmax.f32 %v939, 0.0
    %v1004 = vmax.f32 %v940, 0.0
    %v1005 = vmax.f32 %v941, 0.0
    %v1006 = vmax.f32 %v942, 0.0
    %v1007 = vmax.f32 %v943, 0.0
    %v1008 = vmax.f32 %v944, 0.0
    %v1009 = vmax.f32 %v945, 0.0
    %v1010 = vmax.f32 %v946, 0.0
    %v1011 = vmax.f32 %v947, 0.0
    %v1012 = vmax.f32 %v948, 0.0
    %v1013 = vmax.f32 %v949, 0.0
    %v1014 = vmax.f32 %v950, 0.0
    %v1015 = vmax.f32 %v951, 0.0
    %v1016 = vmax.f32 %v952, 0.0
    %v1017 = vmax.f32 %v953, 0.0
    %v1018 = vmax.f32 %v954, 0.0
    %v1019 = vmax.f32 %v955, 0.0
    %v1020 = vmax.f32 %v956, 0.0
    %v1021 = vmax.f32 %v957, 0.0
    %v1022 = vmax.f32 %v958, 0.0
    %v1023 = vmax.f32 %v959, 0.0
    %v1024 = vmax.f32 %v960, 0.0
    %v1025 = vmax.f32 %v961, 0.0
    %v1026 = vmax.f32 %v962, 0.0
    %v1027 = vmax.f32 %v963, 0.0
    %v1028 = vmax.f32 %v964, 0.0
    %v1029 = vmax.f32 %v965, 0.0
    %v1030 = vmax.f32 %v966, 0.0
    %v1031 = vmax.f32 %v967, 0.0
    %v1032 = vmax.f32 %v968, 0.0
    %v1033 = vmax.f32 %v969, 0.0
    %v1034 = vmax.f32 %v970, 0.0
    %v1035 = vmax.f32 %v971, 0.0
    %v1036 = vmax.f32 %v972, 0.0
    %v1037 = vmax.f32 %v973, 0.0
    %v1038 = vmax.f32 %v974, 0.0
    %v1039 = vmax.f32 %v975, 0.0
    %v1040 = vmax.f32 %v976, 0.0
    %v1041 = vmax.f32 %v977, 0.0
    %v1042 = vmax.f32 %v978, 0.0
    %v1043 = vmax.f32 %v979, 0.0
    %v1044 = vld [vmem:[%s9] sm:$0xf]
    %v1045 = vld [vmem:[%s9 + $0x4] sm:$0xf]
    %v1046 = vld [vmem:[%s9 + $0x8] sm:$0xf]
    %v1047 = vld [vmem:[%s9 + $0xc] sm:$0xf]
    %v1048 = vld [vmem:[%s9 + $0x10] sm:$0xf]
    %v1049 = vld [vmem:[%s9 + $0x14] sm:$0xf]
    %v1050 = vld [vmem:[%s9 + $0x18] sm:$0xf]
    %v1051 = vld [vmem:[%s9 + $0x1c] sm:$0xf]
    %v1052 = vld [vmem:[%s9 + $0x20] sm:$0xf]
    %v1053 = vld [vmem:[%s9 + $0x24] sm:$0xf]
    %v1054 = vld [vmem:[%s9 + $0x28] sm:$0xf]
    %v1055 = vld [vmem:[%s9 + $0x2c] sm:$0xf]
    %v1056 = vld [vmem:[%s9 + $0x30] sm:$0xf]
    %v1057 = vld [vmem:[%s9 + $0x34] sm:$0xf]
    %v1058 = vld [vmem:[%s9 + $0x38] sm:$0xf]
    %v1059 = vld [vmem:[%s9 + $0x3c] sm:$0xf]
    %v1060 = vld [vmem:[%s9 + $0x40] sm:$0xf]
    %v1061 = vld [vmem:[%s9 + $0x44] sm:$0xf]
    %v1062 = vld [vmem:[%s9 + $0x48] sm:$0xf]
    %v1063 = vld [vmem:[%s9 + $0x4c] sm:$0xf]
    %v1064 = vld [vmem:[%s9 + $0x50] sm:$0xf]
    %v1065 = vld [vmem:[%s9 + $0x54] sm:$0xf]
    %v1066 = vld [vmem:[%s9 + $0x58] sm:$0xf]
    %v1067 = vld [vmem:[%s9 + $0x5c] sm:$0xf]
    %v1068 = vld [vmem:[%s9 + $0x60] sm:$0xf]
    %v1069 = vld [vmem:[%s9 + $0x64] sm:$0xf]
    %v1070 = vld [vmem:[%s9 + $0x68] sm:$0xf]
    %v1071 = vld [vmem:[%s9 + $0x6c] sm:$0xf]
    %v1072 = vld [vmem:[%s9 + $0x70] sm:$0xf]
    %v1073 = vld [vmem:[%s9 + $0x74] sm:$0xf]
    %v1074 = vld [vmem:[%s9 + $0x78] sm:$0xf]
    %v1075 = vld [vmem:[%s9 + $0x7c] sm:$0xf]
    %v1076 = vld [vmem:[%s9 + $0x80] sm:$0xf]
    %v1077 = vld [vmem:[%s9 + $0x84] sm:$0xf]
    %v1078 = vld [vmem:[%s9 + $0x88] sm:$0xf]
    %v1079 = vld [vmem:[%s9 + $0x8c] sm:$0xf]
    %v1080 = vld [vmem:[%s9 + $0x90] sm:$0xf]
    %v1081 = vld [vmem:[%s9 + $0x94] sm:$0xf]
    %v1082 = vld [vmem:[%s9 + $0x98] sm:$0xf]
    %v1083 = vld [vmem:[%s9 + $0x9c] sm:$0xf]
    %v1084 = vld [vmem:[%s9 + $0xa0] sm:$0xf]
    %v1085 = vld [vmem:[%s9 + $0xa4] sm:$0xf]
    %v1086 = vld [vmem:[%s9 + $0xa8] sm:$0xf]
    %v1087 = vld [vmem:[%s9 + $0xac] sm:$0xf]
    %v1088 = vld [vmem:[%s9 + $0xb0] sm:$0xf]
    %v1089 = vld [vmem:[%s9 + $0xb4] sm:$0xf]
    %v1090 = vld [vmem:[%s9 + $0xb8] sm:$0xf]
    %v1091 = vld [vmem:[%s9 + $0xbc] sm:$0xf]
    %v1092 = vld [vmem:[%s9 + $0xc0] sm:$0xf]
    %v1093 = vld [vmem:[%s9 + $0xc4] sm:$0xf]
    %v1094 = vld [vmem:[%s9 + $0xc8] sm:$0xf]
    %v1095 = vld [vmem:[%s9 + $0xcc] sm:$0xf]
    %v1096 = vld [vmem:[%s9 + $0xd0] sm:$0xf]
    %v1097 = vld [vmem:[%s9 + $0xd4] sm:$0xf]
    %v1098 = vld [vmem:[%s9 + $0xd8] sm:$0xf]
    %v1099 = vld [vmem:[%s9 + $0xdc] sm:$0xf]
    %v1100 = vld [vmem:[%s9 + $0xe0] sm:$0xf]
    %v1101 = vld [vmem:[%s9 + $0xe4] sm:$0xf]
    %v1102 = vld [vmem:[%s9 + $0xe8] sm:$0xf]
    %v1103 = vld [vmem:[%s9 + $0xec] sm:$0xf]
    %v1104 = vld [vmem:[%s9 + $0xf0] sm:$0xf]
    %v1105 = vld [vmem:[%s9 + $0xf4] sm:$0xf]
    %v1106 = vld [vmem:[%s9 + $0xf8] sm:$0xf]
    %v1107 = vld [vmem:[%s9 + $0xfc] sm:$0xf]
    %v1108 = vunpack.c.l.bf16 %v1044
    %v1109 = vunpack.c.l.bf16 %v1045
    %v1110 = vunpack.c.l.bf16 %v1046
    %v1111 = vunpack.c.l.bf16 %v1047
    %v1112 = vunpack.c.l.bf16 %v1048
    %v1113 = vunpack.c.l.bf16 %v1049
    %v1114 = vunpack.c.l.bf16 %v1050
    %v1115 = vunpack.c.l.bf16 %v1051
    %v1116 = vunpack.c.l.bf16 %v1052
    %v1117 = vunpack.c.l.bf16 %v1053
    %v1118 = vunpack.c.l.bf16 %v1054
    %v1119 = vunpack.c.l.bf16 %v1055
    %v1120 = vunpack.c.l.bf16 %v1056
    %v1121 = vunpack.c.l.bf16 %v1057
    %v1122 = vunpack.c.l.bf16 %v1058
    %v1123 = vunpack.c.l.bf16 %v1059
    %v1124 = vunpack.c.l.bf16 %v1060
    %v1125 = vunpack.c.l.bf16 %v1061
    %v1126 = vunpack.c.l.bf16 %v1062
    %v1127 = vunpack.c.l.bf16 %v1063
    %v1128 = vunpack.c.l.bf16 %v1064
    %v1129 = vunpack.c.l.bf16 %v1065
    %v1130 = vunpack.c.l.bf16 %v1066
    %v1131 = vunpack.c.l.bf16 %v1067
    %v1132 = vunpack.c.l.bf16 %v1068
    %v1133 = vunpack.c.l.bf16 %v1069
    %v1134 = vunpack.c.l.bf16 %v1070
    %v1135 = vunpack.c.l.bf16 %v1071
    %v1136 = vunpack.c.l.bf16 %v1072
    %v1137 = vunpack.c.l.bf16 %v1073
    %v1138 = vunpack.c.l.bf16 %v1074
    %v1139 = vunpack.c.l.bf16 %v1075
    %v1140 = vunpack.c.l.bf16 %v1076
    %v1141 = vunpack.c.l.bf16 %v1077
    %v1142 = vunpack.c.l.bf16 %v1078
    %v1143 = vunpack.c.l.bf16 %v1079
    %v1144 = vunpack.c.l.bf16 %v1080
    %v1145 = vunpack.c.l.bf16 %v1081
    %v1146 = vunpack.c.l.bf16 %v1082
    %v1147 = vunpack.c.l.bf16 %v1083
    %v1148 = vunpack.c.l.bf16 %v1084
    %v1149 = vunpack.c.l.bf16 %v1085
    %v1150 = vunpack.c.l.bf16 %v1086
    %v1151 = vunpack.c.l.bf16 %v1087
    %v1152 = vunpack.c.l.bf16 %v1088
    %v1153 = vunpack.c.l.bf16 %v1089
    %v1154 = vunpack.c.l.bf16 %v1090
    %v1155 = vunpack.c.l.bf16 %v1091
    %v1156 = vunpack.c.l.bf16 %v1092
    %v1157 = vunpack.c.l.bf16 %v1093
    %v1158 = vunpack.c.l.bf16 %v1094
    %v1159 = vunpack.c.l.bf16 %v1095
    %v1160 = vunpack.c.l.bf16 %v1096
    %v1161 = vunpack.c.l.bf16 %v1097
    %v1162 = vunpack.c.l.bf16 %v1098
    %v1163 = vunpack.c.l.bf16 %v1099
    %v1164 = vunpack.c.l.bf16 %v1100
    %v1165 = vunpack.c.l.bf16 %v1101
    %v1166 = vunpack.c.l.bf16 %v1102
    %v1167 = vunpack.c.l.bf16 %v1103
    %v1168 = vunpack.c.l.bf16 %v1104
    %v1169 = vunpack.c.l.bf16 %v1105
    %v1170 = vunpack.c.l.bf16 %v1106
    %v1171 = vunpack.c.l.bf16 %v1107
    %v1172 = vld [vmem:[%s10] sm:$0x1]
    %v1174 = vlaneseq
    %v1175 = vshrl.u32 %v1174, 7
    %v1176 = vsub.s32 0, %v1175
    %v1177 = vrot.slane %v1172, %v1176
    %v1179 = vmul.f32 %v1108, %v1177
    %v1180 = vmul.f32 %v1109, %v1177
    %v1181 = vmul.f32 %v1110, %v1177
    %v1182 = vmul.f32 %v1111, %v1177
    %v1183 = vmul.f32 %v1112, %v1177
    %v1184 = vmul.f32 %v1113, %v1177
    %v1185 = vmul.f32 %v1114, %v1177
    %v1186 = vmul.f32 %v1115, %v1177
    %v1187 = vmul.f32 %v1116, %v1177
    %v1188 = vmul.f32 %v1117, %v1177
    %v1189 = vmul.f32 %v1118, %v1177
    %v1190 = vmul.f32 %v1119, %v1177
    %v1191 = vmul.f32 %v1120, %v1177
    %v1192 = vmul.f32 %v1121, %v1177
    %v1193 = vmul.f32 %v1122, %v1177
    %v1194 = vmul.f32 %v1123, %v1177
    %v1195 = vmul.f32 %v1124, %v1177
    %v1196 = vmul.f32 %v1125, %v1177
    %v1197 = vmul.f32 %v1126, %v1177
    %v1198 = vmul.f32 %v1127, %v1177
    %v1199 = vmul.f32 %v1128, %v1177
    %v1200 = vmul.f32 %v1129, %v1177
    %v1201 = vmul.f32 %v1130, %v1177
    %v1202 = vmul.f32 %v1131, %v1177
    %v1203 = vmul.f32 %v1132, %v1177
    %v1204 = vmul.f32 %v1133, %v1177
    %v1205 = vmul.f32 %v1134, %v1177
    %v1206 = vmul.f32 %v1135, %v1177
    %v1207 = vmul.f32 %v1136, %v1177
    %v1208 = vmul.f32 %v1137, %v1177
    %v1209 = vmul.f32 %v1138, %v1177
    %v1210 = vmul.f32 %v1139, %v1177
    %v1211 = vmul.f32 %v1140, %v1177
    %v1212 = vmul.f32 %v1141, %v1177
    %v1213 = vmul.f32 %v1142, %v1177
    %v1214 = vmul.f32 %v1143, %v1177
    %v1215 = vmul.f32 %v1144, %v1177
    %v1216 = vmul.f32 %v1145, %v1177
    %v1217 = vmul.f32 %v1146, %v1177
    %v1218 = vmul.f32 %v1147, %v1177
    %v1219 = vmul.f32 %v1148, %v1177
    %v1220 = vmul.f32 %v1149, %v1177
    %v1221 = vmul.f32 %v1150, %v1177
    %v1222 = vmul.f32 %v1151, %v1177
    %v1223 = vmul.f32 %v1152, %v1177
    %v1224 = vmul.f32 %v1153, %v1177
    %v1225 = vmul.f32 %v1154, %v1177
    %v1226 = vmul.f32 %v1155, %v1177
    %v1227 = vmul.f32 %v1156, %v1177
    %v1228 = vmul.f32 %v1157, %v1177
    %v1229 = vmul.f32 %v1158, %v1177
    %v1230 = vmul.f32 %v1159, %v1177
    %v1231 = vmul.f32 %v1160, %v1177
    %v1232 = vmul.f32 %v1161, %v1177
    %v1233 = vmul.f32 %v1162, %v1177
    %v1234 = vmul.f32 %v1163, %v1177
    %v1235 = vmul.f32 %v1164, %v1177
    %v1236 = vmul.f32 %v1165, %v1177
    %v1237 = vmul.f32 %v1166, %v1177
    %v1238 = vmul.f32 %v1167, %v1177
    %v1239 = vmul.f32 %v1168, %v1177
    %v1240 = vmul.f32 %v1169, %v1177
    %v1241 = vmul.f32 %v1170, %v1177
    %v1242 = vmul.f32 %v1171, %v1177
    %v1243 = vld [vmem:[%s11] sm:$0x1]
    %v1245 = vlaneseq
    %v1246 = vshrl.u32 %v1245, 7
    %v1247 = vsub.s32 0, %v1246
    %v1248 = vrot.slane %v1243, %v1247
    %v1250 = vadd.f32 %v1179, %v1248
    %v1251 = vadd.f32 %v1180, %v1248
    %v1252 = vadd.f32 %v1181, %v1248
    %v1253 = vadd.f32 %v1182, %v1248
    %v1254 = vadd.f32 %v1183, %v1248
    %v1255 = vadd.f32 %v1184, %v1248
    %v1256 = vadd.f32 %v1185, %v1248
    %v1257 = vadd.f32 %v1186, %v1248
    %v1258 = vadd.f32 %v1187, %v1248
    %v1259 = vadd.f32 %v1188, %v1248
    %v1260 = vadd.f32 %v1189, %v1248
    %v1261 = vadd.f32 %v1190, %v1248
    %v1262 = vadd.f32 %v1191, %v1248
    %v1263 = vadd.f32 %v1192, %v1248
    %v1264 = vadd.f32 %v1193, %v1248
    %v1265 = vadd.f32 %v1194, %v1248
    %v1266 = vadd.f32 %v1195, %v1248
    %v1267 = vadd.f32 %v1196, %v1248
    %v1268 = vadd.f32 %v1197, %v1248
    %v1269 = vadd.f32 %v1198, %v1248
    %v1270 = vadd.f32 %v1199, %v1248
    %v1271 = vadd.f32 %v1200, %v1248
    %v1272 = vadd.f32 %v1201, %v1248
    %v1273 = vadd.f32 %v1202, %v1248
    %v1274 = vadd.f32 %v1203, %v1248
    %v1275 = vadd.f32 %v1204, %v1248
    %v1276 = vadd.f32 %v1205, %v1248
    %v1277 = vadd.f32 %v1206, %v1248
    %v1278 = vadd.f32 %v1207, %v1248
    %v1279 = vadd.f32 %v1208, %v1248
    %v1280 = vadd.f32 %v1209, %v1248
    %v1281 = vadd.f32 %v1210, %v1248
    %v1282 = vadd.f32 %v1211, %v1248
    %v1283 = vadd.f32 %v1212, %v1248
    %v1284 = vadd.f32 %v1213, %v1248
    %v1285 = vadd.f32 %v1214, %v1248
    %v1286 = vadd.f32 %v1215, %v1248
    %v1287 = vadd.f32 %v1216, %v1248
    %v1288 = vadd.f32 %v1217, %v1248
    %v1289 = vadd.f32 %v1218, %v1248
    %v1290 = vadd.f32 %v1219, %v1248
    %v1291 = vadd.f32 %v1220, %v1248
    %v1292 = vadd.f32 %v1221, %v1248
    %v1293 = vadd.f32 %v1222, %v1248
    %v1294 = vadd.f32 %v1223, %v1248
    %v1295 = vadd.f32 %v1224, %v1248
    %v1296 = vadd.f32 %v1225, %v1248
    %v1297 = vadd.f32 %v1226, %v1248
    %v1298 = vadd.f32 %v1227, %v1248
    %v1299 = vadd.f32 %v1228, %v1248
    %v1300 = vadd.f32 %v1229, %v1248
    %v1301 = vadd.f32 %v1230, %v1248
    %v1302 = vadd.f32 %v1231, %v1248
    %v1303 = vadd.f32 %v1232, %v1248
    %v1304 = vadd.f32 %v1233, %v1248
    %v1305 = vadd.f32 %v1234, %v1248
    %v1306 = vadd.f32 %v1235, %v1248
    %v1307 = vadd.f32 %v1236, %v1248
    %v1308 = vadd.f32 %v1237, %v1248
    %v1309 = vadd.f32 %v1238, %v1248
    %v1310 = vadd.f32 %v1239, %v1248
    %v1311 = vadd.f32 %v1240, %v1248
    %v1312 = vadd.f32 %v1241, %v1248
    %v1313 = vadd.f32 %v1242, %v1248
    %v1314 = vmax.f32 %v1250, 0.0
    %v1315 = vmax.f32 %v1251, 0.0
    %v1316 = vmax.f32 %v1252, 0.0
    %v1317 = vmax.f32 %v1253, 0.0
    %v1318 = vmax.f32 %v1254, 0.0
    %v1319 = vmax.f32 %v1255, 0.0
    %v1320 = vmax.f32 %v1256, 0.0
    %v1321 = vmax.f32 %v1257, 0.0
    %v1322 = vmax.f32 %v1258, 0.0
    %v1323 = vmax.f32 %v1259, 0.0
    %v1324 = vmax.f32 %v1260, 0.0
    %v1325 = vmax.f32 %v1261, 0.0
    %v1326 = vmax.f32 %v1262, 0.0
    %v1327 = vmax.f32 %v1263, 0.0
    %v1328 = vmax.f32 %v1264, 0.0
    %v1329 = vmax.f32 %v1265, 0.0
    %v1330 = vmax.f32 %v1266, 0.0
    %v1331 = vmax.f32 %v1267, 0.0
    %v1332 = vmax.f32 %v1268, 0.0
    %v1333 = vmax.f32 %v1269, 0.0
    %v1334 = vmax.f32 %v1270, 0.0
    %v1335 = vmax.f32 %v1271, 0.0
    %v1336 = vmax.f32 %v1272, 0.0
    %v1337 = vmax.f32 %v1273, 0.0
    %v1338 = vmax.f32 %v1274, 0.0
    %v1339 = vmax.f32 %v1275, 0.0
    %v1340 = vmax.f32 %v1276, 0.0
    %v1341 = vmax.f32 %v1277, 0.0
    %v1342 = vmax.f32 %v1278, 0.0
    %v1343 = vmax.f32 %v1279, 0.0
    %v1344 = vmax.f32 %v1280, 0.0
    %v1345 = vmax.f32 %v1281, 0.0
    %v1346 = vmax.f32 %v1282, 0.0
    %v1347 = vmax.f32 %v1283, 0.0
    %v1348 = vmax.f32 %v1284, 0.0
    %v1349 = vmax.f32 %v1285, 0.0
    %v1350 = vmax.f32 %v1286, 0.0
    %v1351 = vmax.f32 %v1287, 0.0
    %v1352 = vmax.f32 %v1288, 0.0
    %v1353 = vmax.f32 %v1289, 0.0
    %v1354 = vmax.f32 %v1290, 0.0
    %v1355 = vmax.f32 %v1291, 0.0
    %v1356 = vmax.f32 %v1292, 0.0
    %v1357 = vmax.f32 %v1293, 0.0
    %v1358 = vmax.f32 %v1294, 0.0
    %v1359 = vmax.f32 %v1295, 0.0
    %v1360 = vmax.f32 %v1296, 0.0
    %v1361 = vmax.f32 %v1297, 0.0
    %v1362 = vmax.f32 %v1298, 0.0
    %v1363 = vmax.f32 %v1299, 0.0
    %v1364 = vmax.f32 %v1300, 0.0
    %v1365 = vmax.f32 %v1301, 0.0
    %v1366 = vmax.f32 %v1302, 0.0
    %v1367 = vmax.f32 %v1303, 0.0
    %v1368 = vmax.f32 %v1304, 0.0
    %v1369 = vmax.f32 %v1305, 0.0
    %v1370 = vmax.f32 %v1306, 0.0
    %v1371 = vmax.f32 %v1307, 0.0
    %v1372 = vmax.f32 %v1308, 0.0
    %v1373 = vmax.f32 %v1309, 0.0
    %v1374 = vmax.f32 %v1310, 0.0
    %v1375 = vmax.f32 %v1311, 0.0
    %v1376 = vmax.f32 %v1312, 0.0
    %v1377 = vmax.f32 %v1313, 0.0
    %1442 = vrot.lane.b32.xlu0 %v646, 8
    %v1443 = vpop.permute.xlu0 %1442
    %1444 = vrot.lane.b32.xlu0 %v647, 8
    %v1445 = vpop.permute.xlu0 %1444
    %1446 = vrot.lane.b32.xlu0 %v648, 8
    %v1447 = vpop.permute.xlu0 %1446
    %1448 = vrot.lane.b32.xlu0 %v649, 8
    %v1449 = vpop.permute.xlu0 %1448
    %1450 = vrot.lane.b32.xlu0 %v650, 8
    %v1451 = vpop.permute.xlu0 %1450
    %1452 = vrot.lane.b32.xlu0 %v651, 8
    %v1453 = vpop.permute.xlu0 %1452
    %1454 = vrot.lane.b32.xlu0 %v652, 8
    %v1455 = vpop.permute.xlu0 %1454
    %1456 = vrot.lane.b32.xlu0 %v653, 8
    %v1457 = vpop.permute.xlu0 %1456
    %1458 = vrot.lane.b32.xlu0 %v654, 8
    %v1459 = vpop.permute.xlu0 %1458
    %1460 = vrot.lane.b32.xlu0 %v655, 8
    %v1461 = vpop.permute.xlu0 %1460
    %1462 = vrot.lane.b32.xlu0 %v656, 8
    %v1463 = vpop.permute.xlu0 %1462
    %1464 = vrot.lane.b32.xlu0 %v657, 8
    %v1465 = vpop.permute.xlu0 %1464
    %1466 = vrot.lane.b32.xlu0 %v658, 8
    %v1467 = vpop.permute.xlu0 %1466
    %1468 = vrot.lane.b32.xlu0 %v659, 8
    %v1469 = vpop.permute.xlu0 %1468
    %1470 = vrot.lane.b32.xlu0 %v660, 8
    %v1471 = vpop.permute.xlu0 %1470
    %1472 = vrot.lane.b32.xlu0 %v661, 8
    %v1473 = vpop.permute.xlu0 %1472
    %1474 = vrot.lane.b32.xlu0 %v662, 8
    %v1475 = vpop.permute.xlu0 %1474
    %1476 = vrot.lane.b32.xlu0 %v663, 8
    %v1477 = vpop.permute.xlu0 %1476
    %1478 = vrot.lane.b32.xlu0 %v664, 8
    %v1479 = vpop.permute.xlu0 %1478
    %1480 = vrot.lane.b32.xlu0 %v665, 8
    %v1481 = vpop.permute.xlu0 %1480
    %1482 = vrot.lane.b32.xlu0 %v666, 8
    %v1483 = vpop.permute.xlu0 %1482
    %1484 = vrot.lane.b32.xlu0 %v667, 8
    %v1485 = vpop.permute.xlu0 %1484
    %1486 = vrot.lane.b32.xlu0 %v668, 8
    %v1487 = vpop.permute.xlu0 %1486
    %1488 = vrot.lane.b32.xlu0 %v669, 8
    %v1489 = vpop.permute.xlu0 %1488
    %1490 = vrot.lane.b32.xlu0 %v670, 8
    %v1491 = vpop.permute.xlu0 %1490
    %1492 = vrot.lane.b32.xlu0 %v671, 8
    %v1493 = vpop.permute.xlu0 %1492
    %1494 = vrot.lane.b32.xlu0 %v672, 8
    %v1495 = vpop.permute.xlu0 %1494
    %1496 = vrot.lane.b32.xlu0 %v673, 8
    %v1497 = vpop.permute.xlu0 %1496
    %1498 = vrot.lane.b32.xlu0 %v674, 8
    %v1499 = vpop.permute.xlu0 %1498
    %1500 = vrot.lane.b32.xlu0 %v675, 8
    %v1501 = vpop.permute.xlu0 %1500
    %1502 = vrot.lane.b32.xlu0 %v676, 8
    %v1503 = vpop.permute.xlu0 %1502
    %1504 = vrot.lane.b32.xlu0 %v677, 8
    %v1505 = vpop.permute.xlu0 %1504
    %1506 = vrot.lane.b32.xlu0 %v678, 8
    %v1507 = vpop.permute.xlu0 %1506
    %1508 = vrot.lane.b32.xlu0 %v679, 8
    %v1509 = vpop.permute.xlu0 %1508
    %1510 = vrot.lane.b32.xlu0 %v680, 8
    %v1511 = vpop.permute.xlu0 %1510
    %1512 = vrot.lane.b32.xlu0 %v681, 8
    %v1513 = vpop.permute.xlu0 %1512
    %1514 = vrot.lane.b32.xlu0 %v682, 8
    %v1515 = vpop.permute.xlu0 %1514
    %1516 = vrot.lane.b32.xlu0 %v683, 8
    %v1517 = vpop.permute.xlu0 %1516
    %1518 = vrot.lane.b32.xlu0 %v684, 8
    %v1519 = vpop.permute.xlu0 %1518
    %1520 = vrot.lane.b32.xlu0 %v685, 8
    %v1521 = vpop.permute.xlu0 %1520
    %1522 = vrot.lane.b32.xlu0 %v686, 8
    %v1523 = vpop.permute.xlu0 %1522
    %1524 = vrot.lane.b32.xlu0 %v687, 8
    %v1525 = vpop.permute.xlu0 %1524
    %1526 = vrot.lane.b32.xlu0 %v688, 8
    %v1527 = vpop.permute.xlu0 %1526
    %1528 = vrot.lane.b32.xlu0 %v689, 8
    %v1529 = vpop.permute.xlu0 %1528
    %1530 = vrot.lane.b32.xlu0 %v690, 8
    %v1531 = vpop.permute.xlu0 %1530
    %1532 = vrot.lane.b32.xlu0 %v691, 8
    %v1533 = vpop.permute.xlu0 %1532
    %1534 = vrot.lane.b32.xlu0 %v692, 8
    %v1535 = vpop.permute.xlu0 %1534
    %1536 = vrot.lane.b32.xlu0 %v693, 8
    %v1537 = vpop.permute.xlu0 %1536
    %1538 = vrot.lane.b32.xlu0 %v694, 8
    %v1539 = vpop.permute.xlu0 %1538
    %1540 = vrot.lane.b32.xlu0 %v695, 8
    %v1541 = vpop.permute.xlu0 %1540
    %1542 = vrot.lane.b32.xlu0 %v696, 8
    %v1543 = vpop.permute.xlu0 %1542
    %1544 = vrot.lane.b32.xlu0 %v697, 8
    %v1545 = vpop.permute.xlu0 %1544
    %1546 = vrot.lane.b32.xlu0 %v698, 8
    %v1547 = vpop.permute.xlu0 %1546
    %1548 = vrot.lane.b32.xlu0 %v699, 8
    %v1549 = vpop.permute.xlu0 %1548
    %1550 = vrot.lane.b32.xlu0 %v700, 8
    %v1551 = vpop.permute.xlu0 %1550
    %1552 = vrot.lane.b32.xlu0 %v701, 8
    %v1553 = vpop.permute.xlu0 %1552
    %1554 = vrot.lane.b32.xlu0 %v702, 8
    %v1555 = vpop.permute.xlu0 %1554
    %1556 = vrot.lane.b32.xlu0 %v703, 8
    %v1557 = vpop.permute.xlu0 %1556
    %1558 = vrot.lane.b32.xlu0 %v704, 8
    %v1559 = vpop.permute.xlu0 %1558
    %1560 = vrot.lane.b32.xlu0 %v705, 8
    %v1561 = vpop.permute.xlu0 %1560
    %1562 = vrot.lane.b32.xlu0 %v706, 8
    %v1563 = vpop.permute.xlu0 %1562
    %1564 = vrot.lane.b32.xlu0 %v707, 8
    %v1565 = vpop.permute.xlu0 %1564
    %1566 = vrot.lane.b32.xlu0 %v708, 8
    %v1567 = vpop.permute.xlu0 %1566
    %1568 = vrot.lane.b32.xlu0 %v709, 8
    %v1569 = vpop.permute.xlu0 %1568
    %1698 = vrot.lane.b32.xlu0 %v980, 16
    %v1699 = vpop.permute.xlu0 %1698
    %1700 = vrot.lane.b32.xlu0 %v981, 16
    %v1701 = vpop.permute.xlu0 %1700
    %1702 = vrot.lane.b32.xlu0 %v982, 16
    %v1703 = vpop.permute.xlu0 %1702
    %1704 = vrot.lane.b32.xlu0 %v983, 16
    %v1705 = vpop.permute.xlu0 %1704
    %1706 = vrot.lane.b32.xlu0 %v984, 16
    %v1707 = vpop.permute.xlu0 %1706
    %1708 = vrot.lane.b32.xlu0 %v985, 16
    %v1709 = vpop.permute.xlu0 %1708
    %1710 = vrot.lane.b32.xlu0 %v986, 16
    %v1711 = vpop.permute.xlu0 %1710
    %1712 = vrot.lane.b32.xlu0 %v987, 16
    %v1713 = vpop.permute.xlu0 %1712
    %1714 = vrot.lane.b32.xlu0 %v988, 16
    %v1715 = vpop.permute.xlu0 %1714
    %1716 = vrot.lane.b32.xlu0 %v989, 16
    %v1717 = vpop.permute.xlu0 %1716
    %1718 = vrot.lane.b32.xlu0 %v990, 16
    %v1719 = vpop.permute.xlu0 %1718
    %1720 = vrot.lane.b32.xlu0 %v991, 16
    %v1721 = vpop.permute.xlu0 %1720
    %1722 = vrot.lane.b32.xlu0 %v992, 16
    %v1723 = vpop.permute.xlu0 %1722
    %1724 = vrot.lane.b32.xlu0 %v993, 16
    %v1725 = vpop.permute.xlu0 %1724
    %1726 = vrot.lane.b32.xlu0 %v994, 16
    %v1727 = vpop.permute.xlu0 %1726
    %1728 = vrot.lane.b32.xlu0 %v995, 16
    %v1729 = vpop.permute.xlu0 %1728
    %1730 = vrot.lane.b32.xlu0 %v996, 16
    %v1731 = vpop.permute.xlu0 %1730
    %1732 = vrot.lane.b32.xlu0 %v997, 16
    %v1733 = vpop.permute.xlu0 %1732
    %1734 = vrot.lane.b32.xlu0 %v998, 16
    %v1735 = vpop.permute.xlu0 %1734
    %1736 = vrot.lane.b32.xlu0 %v999, 16
    %v1737 = vpop.permute.xlu0 %1736
    %1738 = vrot.lane.b32.xlu0 %v1000, 16
    %v1739 = vpop.permute.xlu0 %1738
    %1740 = vrot.lane.b32.xlu0 %v1001, 16
    %v1741 = vpop.permute.xlu0 %1740
    %1742 = vrot.lane.b32.xlu0 %v1002, 16
    %v1743 = vpop.permute.xlu0 %1742
    %1744 = vrot.lane.b32.xlu0 %v1003, 16
    %v1745 = vpop.permute.xlu0 %1744
    %1746 = vrot.lane.b32.xlu0 %v1004, 16
    %v1747 = vpop.permute.xlu0 %1746
    %1748 = vrot.lane.b32.xlu0 %v1005, 16
    %v1749 = vpop.permute.xlu0 %1748
    %1750 = vrot.lane.b32.xlu0 %v1006, 16
    %v1751 = vpop.permute.xlu0 %1750
    %1752 = vrot.lane.b32.xlu0 %v1007, 16
    %v1753 = vpop.permute.xlu0 %1752
    %1754 = vrot.lane.b32.xlu0 %v1008, 16
    %v1755 = vpop.permute.xlu0 %1754
    %1756 = vrot.lane.b32.xlu0 %v1009, 16
    %v1757 = vpop.permute.xlu0 %1756
    %1758 = vrot.lane.b32.xlu0 %v1010, 16
    %v1759 = vpop.permute.xlu0 %1758
    %1760 = vrot.lane.b32.xlu0 %v1011, 16
    %v1761 = vpop.permute.xlu0 %1760
    %1762 = vrot.lane.b32.xlu0 %v1012, 16
    %v1763 = vpop.permute.xlu0 %1762
    %1764 = vrot.lane.b32.xlu0 %v1013, 16
    %v1765 = vpop.permute.xlu0 %1764
    %1766 = vrot.lane.b32.xlu0 %v1014, 16
    %v1767 = vpop.permute.xlu0 %1766
    %1768 = vrot.lane.b32.xlu0 %v1015, 16
    %v1769 = vpop.permute.xlu0 %1768
    %1770 = vrot.lane.b32.xlu0 %v1016, 16
    %v1771 = vpop.permute.xlu0 %1770
    %1772 = vrot.lane.b32.xlu0 %v1017, 16
    %v1773 = vpop.permute.xlu0 %1772
    %1774 = vrot.lane.b32.xlu0 %v1018, 16
    %v1775 = vpop.permute.xlu0 %1774
    %1776 = vrot.lane.b32.xlu0 %v1019, 16
    %v1777 = vpop.permute.xlu0 %1776
    %1778 = vrot.lane.b32.xlu0 %v1020, 16
    %v1779 = vpop.permute.xlu0 %1778
    %1780 = vrot.lane.b32.xlu0 %v1021, 16
    %v1781 = vpop.permute.xlu0 %1780
    %1782 = vrot.lane.b32.xlu0 %v1022, 16
    %v1783 = vpop.permute.xlu0 %1782
    %1784 = vrot.lane.b32.xlu0 %v1023, 16
    %v1785 = vpop.permute.xlu0 %1784
    %1786 = vrot.lane.b32.xlu0 %v1024, 16
    %v1787 = vpop.permute.xlu0 %1786
    %1788 = vrot.lane.b32.xlu0 %v1025, 16
    %v1789 = vpop.permute.xlu0 %1788
    %1790 = vrot.lane.b32.xlu0 %v1026, 16
    %v1791 = vpop.permute.xlu0 %1790
    %1792 = vrot.lane.b32.xlu0 %v1027, 16
    %v1793 = vpop.permute.xlu0 %1792
    %1794 = vrot.lane.b32.xlu0 %v1028, 16
    %v1795 = vpop.permute.xlu0 %1794
    %1796 = vrot.lane.b32.xlu0 %v1029, 16
    %v1797 = vpop.permute.xlu0 %1796
    %1798 = vrot.lane.b32.xlu0 %v1030, 16
    %v1799 = vpop.permute.xlu0 %1798
    %1800 = vrot.lane.b32.xlu0 %v1031, 16
    %v1801 = vpop.permute.xlu0 %1800
    %1802 = vrot.lane.b32.xlu0 %v1032, 16
    %v1803 = vpop.permute.xlu0 %1802
    %1804 = vrot.lane.b32.xlu0 %v1033, 16
    %v1805 = vpop.permute.xlu0 %1804
    %1806 = vrot.lane.b32.xlu0 %v1034, 16
    %v1807 = vpop.permute.xlu0 %1806
    %1808 = vrot.lane.b32.xlu0 %v1035, 16
    %v1809 = vpop.permute.xlu0 %1808
    %1810 = vrot.lane.b32.xlu0 %v1036, 16
    %v1811 = vpop.permute.xlu0 %1810
    %1812 = vrot.lane.b32.xlu0 %v1037, 16
    %v1813 = vpop.permute.xlu0 %1812
    %1814 = vrot.lane.b32.xlu0 %v1038, 16
    %v1815 = vpop.permute.xlu0 %1814
    %1816 = vrot.lane.b32.xlu0 %v1039, 16
    %v1817 = vpop.permute.xlu0 %1816
    %1818 = vrot.lane.b32.xlu0 %v1040, 16
    %v1819 = vpop.permute.xlu0 %1818
    %1820 = vrot.lane.b32.xlu0 %v1041, 16
    %v1821 = vpop.permute.xlu0 %1820
    %1822 = vrot.lane.b32.xlu0 %v1042, 16
    %v1823 = vpop.permute.xlu0 %1822
    %1824 = vrot.lane.b32.xlu0 %v1043, 16
    %v1825 = vpop.permute.xlu0 %1824
    %1954 = vrot.lane.b32.xlu0 %v1314, 24
    %v1955 = vpop.permute.xlu0 %1954
    %1956 = vrot.lane.b32.xlu0 %v1315, 24
    %v1957 = vpop.permute.xlu0 %1956
    %1958 = vrot.lane.b32.xlu0 %v1316, 24
    %v1959 = vpop.permute.xlu0 %1958
    %1960 = vrot.lane.b32.xlu0 %v1317, 24
    %v1961 = vpop.permute.xlu0 %1960
    %1962 = vrot.lane.b32.xlu0 %v1318, 24
    %v1963 = vpop.permute.xlu0 %1962
    %1964 = vrot.lane.b32.xlu0 %v1319, 24
    %v1965 = vpop.permute.xlu0 %1964
    %1966 = vrot.lane.b32.xlu0 %v1320, 24
    %v1967 = vpop.permute.xlu0 %1966
    %1968 = vrot.lane.b32.xlu0 %v1321, 24
    %v1969 = vpop.permute.xlu0 %1968
    %1970 = vrot.lane.b32.xlu0 %v1322, 24
    %v1971 = vpop.permute.xlu0 %1970
    %1972 = vrot.lane.b32.xlu0 %v1323, 24
    %v1973 = vpop.permute.xlu0 %1972
    %1974 = vrot.lane.b32.xlu0 %v1324, 24
    %v1975 = vpop.permute.xlu0 %1974
    %1976 = vrot.lane.b32.xlu0 %v1325, 24
    %v1977 = vpop.permute.xlu0 %1976
    %1978 = vrot.lane.b32.xlu0 %v1326, 24
    %v1979 = vpop.permute.xlu0 %1978
    %1980 = vrot.lane.b32.xlu0 %v1327, 24
    %v1981 = vpop.permute.xlu0 %1980
    %1982 = vrot.lane.b32.xlu0 %v1328, 24
    %v1983 = vpop.permute.xlu0 %1982
    %1984 = vrot.lane.b32.xlu0 %v1329, 24
    %v1985 = vpop.permute.xlu0 %1984
    %1986 = vrot.lane.b32.xlu0 %v1330, 24
    %v1987 = vpop.permute.xlu0 %1986
    %1988 = vrot.lane.b32.xlu0 %v1331, 24
    %v1989 = vpop.permute.xlu0 %1988
    %1990 = vrot.lane.b32.xlu0 %v1332, 24
    %v1991 = vpop.permute.xlu0 %1990
    %1992 = vrot.lane.b32.xlu0 %v1333, 24
    %v1993 = vpop.permute.xlu0 %1992
    %1994 = vrot.lane.b32.xlu0 %v1334, 24
    %v1995 = vpop.permute.xlu0 %1994
    %1996 = vrot.lane.b32.xlu0 %v1335, 24
    %v1997 = vpop.permute.xlu0 %1996
    %1998 = vrot.lane.b32.xlu0 %v1336, 24
    %v1999 = vpop.permute.xlu0 %1998
    %2000 = vrot.lane.b32.xlu0 %v1337, 24
    %v2001 = vpop.permute.xlu0 %2000
    %2002 = vrot.lane.b32.xlu0 %v1338, 24
    %v2003 = vpop.permute.xlu0 %2002
    %2004 = vrot.lane.b32.xlu0 %v1339, 24
    %v2005 = vpop.permute.xlu0 %2004
    %2006 = vrot.lane.b32.xlu0 %v1340, 24
    %v2007 = vpop.permute.xlu0 %2006
    %2008 = vrot.lane.b32.xlu0 %v1341, 24
    %v2009 = vpop.permute.xlu0 %2008
    %2010 = vrot.lane.b32.xlu0 %v1342, 24
    %v2011 = vpop.permute.xlu0 %2010
    %2012 = vrot.lane.b32.xlu0 %v1343, 24
    %v2013 = vpop.permute.xlu0 %2012
    %2014 = vrot.lane.b32.xlu0 %v1344, 24
    %v2015 = vpop.permute.xlu0 %2014
    %2016 = vrot.lane.b32.xlu0 %v1345, 24
    %v2017 = vpop.permute.xlu0 %2016
    %2018 = vrot.lane.b32.xlu0 %v1346, 24
    %v2019 = vpop.permute.xlu0 %2018
    %2020 = vrot.lane.b32.xlu0 %v1347, 24
    %v2021 = vpop.permute.xlu0 %2020
    %2022 = vrot.lane.b32.xlu0 %v1348, 24
    %v2023 = vpop.permute.xlu0 %2022
    %2024 = vrot.lane.b32.xlu0 %v1349, 24
    %v2025 = vpop.permute.xlu0 %2024
    %2026 = vrot.lane.b32.xlu0 %v1350, 24
    %v2027 = vpop.permute.xlu0 %2026
    %2028 = vrot.lane.b32.xlu0 %v1351, 24
    %v2029 = vpop.permute.xlu0 %2028
    %2030 = vrot.lane.b32.xlu0 %v1352, 24
    %v2031 = vpop.permute.xlu0 %2030
    %2032 = vrot.lane.b32.xlu0 %v1353, 24
    %v2033 = vpop.permute.xlu0 %2032
    %2034 = vrot.lane.b32.xlu0 %v1354, 24
    %v2035 = vpop.permute.xlu0 %2034
    %2036 = vrot.lane.b32.xlu0 %v1355, 24
    %v2037 = vpop.permute.xlu0 %2036
    %2038 = vrot.lane.b32.xlu0 %v1356, 24
    %v2039 = vpop.permute.xlu0 %2038
    %2040 = vrot.lane.b32.xlu0 %v1357, 24
    %v2041 = vpop.permute.xlu0 %2040
    %2042 = vrot.lane.b32.xlu0 %v1358, 24
    %v2043 = vpop.permute.xlu0 %2042
    %2044 = vrot.lane.b32.xlu0 %v1359, 24
    %v2045 = vpop.permute.xlu0 %2044
    %2046 = vrot.lane.b32.xlu0 %v1360, 24
    %v2047 = vpop.permute.xlu0 %2046
    %2048 = vrot.lane.b32.xlu0 %v1361, 24
    %v2049 = vpop.permute.xlu0 %2048
    %2050 = vrot.lane.b32.xlu0 %v1362, 24
    %v2051 = vpop.permute.xlu0 %2050
    %2052 = vrot.lane.b32.xlu0 %v1363, 24
    %v2053 = vpop.permute.xlu0 %2052
    %2054 = vrot.lane.b32.xlu0 %v1364, 24
    %v2055 = vpop.permute.xlu0 %2054
    %2056 = vrot.lane.b32.xlu0 %v1365, 24
    %v2057 = vpop.permute.xlu0 %2056
    %2058 = vrot.lane.b32.xlu0 %v1366, 24
    %v2059 = vpop.permute.xlu0 %2058
    %2060 = vrot.lane.b32.xlu0 %v1367, 24
    %v2061 = vpop.permute.xlu0 %2060
    %2062 = vrot.lane.b32.xlu0 %v1368, 24
    %v2063 = vpop.permute.xlu0 %2062
    %2064 = vrot.lane.b32.xlu0 %v1369, 24
    %v2065 = vpop.permute.xlu0 %2064
    %2066 = vrot.lane.b32.xlu0 %v1370, 24
    %v2067 = vpop.permute.xlu0 %2066
    %2068 = vrot.lane.b32.xlu0 %v1371, 24
    %v2069 = vpop.permute.xlu0 %2068
    %2070 = vrot.lane.b32.xlu0 %v1372, 24
    %v2071 = vpop.permute.xlu0 %2070
    %2072 = vrot.lane.b32.xlu0 %v1373, 24
    %v2073 = vpop.permute.xlu0 %2072
    %2074 = vrot.lane.b32.xlu0 %v1374, 24
    %v2075 = vpop.permute.xlu0 %2074
    %2076 = vrot.lane.b32.xlu0 %v1375, 24
    %v2077 = vpop.permute.xlu0 %2076
    %2078 = vrot.lane.b32.xlu0 %v1376, 24
    %v2079 = vpop.permute.xlu0 %2078
    %2080 = vrot.lane.b32.xlu0 %v1377, 24
    %v2081 = vpop.permute.xlu0 %2080
    %vm2146 = vcmask 64512
    %v2147 = vsel %vm2146, %v312, %v1443
    %v2148 = vsel %vm2146, %v313, %v1445
    %v2149 = vsel %vm2146, %v314, %v1447
    %v2150 = vsel %vm2146, %v315, %v1449
    %v2151 = vsel %vm2146, %v316, %v1451
    %v2152 = vsel %vm2146, %v317, %v1453
    %v2153 = vsel %vm2146, %v318, %v1455
    %v2154 = vsel %vm2146, %v319, %v1457
    %v2155 = vsel %vm2146, %v320, %v1459
    %v2156 = vsel %vm2146, %v321, %v1461
    %v2157 = vsel %vm2146, %v322, %v1463
    %v2158 = vsel %vm2146, %v323, %v1465
    %v2159 = vsel %vm2146, %v324, %v1467
    %v2160 = vsel %vm2146, %v325, %v1469
    %v2161 = vsel %vm2146, %v326, %v1471
    %v2162 = vsel %vm2146, %v327, %v1473
    %v2163 = vsel %vm2146, %v328, %v1475
    %v2164 = vsel %vm2146, %v329, %v1477
    %v2165 = vsel %vm2146, %v330, %v1479
    %v2166 = vsel %vm2146, %v331, %v1481
    %v2167 = vsel %vm2146, %v332, %v1483
    %v2168 = vsel %vm2146, %v333, %v1485
    %v2169 = vsel %vm2146, %v334, %v1487
    %v2170 = vsel %vm2146, %v335, %v1489
    %v2171 = vsel %vm2146, %v336, %v1491
    %v2172 = vsel %vm2146, %v337, %v1493
    %v2173 = vsel %vm2146, %v338, %v1495
    %v2174 = vsel %vm2146, %v339, %v1497
    %v2175 = vsel %vm2146, %v340, %v1499
    %v2176 = vsel %vm2146, %v341, %v1501
    %v2177 = vsel %vm2146, %v342, %v1503
    %v2178 = vsel %vm2146, %v343, %v1505
    %v2179 = vsel %vm2146, %v344, %v1507
    %v2180 = vsel %vm2146, %v345, %v1509
    %v2181 = vsel %vm2146, %v346, %v1511
    %v2182 = vsel %vm2146, %v347, %v1513
    %v2183 = vsel %vm2146, %v348, %v1515
    %v2184 = vsel %vm2146, %v349, %v1517
    %v2185 = vsel %vm2146, %v350, %v1519
    %v2186 = vsel %vm2146, %v351, %v1521
    %v2187 = vsel %vm2146, %v352, %v1523
    %v2188 = vsel %vm2146, %v353, %v1525
    %v2189 = vsel %vm2146, %v354, %v1527
    %v2190 = vsel %vm2146, %v355, %v1529
    %v2191 = vsel %vm2146, %v356, %v1531
    %v2192 = vsel %vm2146, %v357, %v1533
    %v2193 = vsel %vm2146, %v358, %v1535
    %v2194 = vsel %vm2146, %v359, %v1537
    %v2195 = vsel %vm2146, %v360, %v1539
    %v2196 = vsel %vm2146, %v361, %v1541
    %v2197 = vsel %vm2146, %v362, %v1543
    %v2198 = vsel %vm2146, %v363, %v1545
    %v2199 = vsel %vm2146, %v364, %v1547
    %v2200 = vsel %vm2146, %v365, %v1549
    %v2201 = vsel %vm2146, %v366, %v1551
    %v2202 = vsel %vm2146, %v367, %v1553
    %v2203 = vsel %vm2146, %v368, %v1555
    %v2204 = vsel %vm2146, %v369, %v1557
    %v2205 = vsel %vm2146, %v370, %v1559
    %v2206 = vsel %vm2146, %v371, %v1561
    %v2207 = vsel %vm2146, %v372, %v1563
    %v2208 = vsel %vm2146, %v373, %v1565
    %v2209 = vsel %vm2146, %v374, %v1567
    %v2210 = vsel %vm2146, %v375, %v1569
    %vm2211 = vcmask 130048
    %v2212 = vsel %vm2211, %v2147, %v1699
    %v2213 = vsel %vm2211, %v2148, %v1701
    %v2214 = vsel %vm2211, %v2149, %v1703
    %v2215 = vsel %vm2211, %v2150, %v1705
    %v2216 = vsel %vm2211, %v2151, %v1707
    %v2217 = vsel %vm2211, %v2152, %v1709
    %v2218 = vsel %vm2211, %v2153, %v1711
    %v2219 = vsel %vm2211, %v2154, %v1713
    %v2220 = vsel %vm2211, %v2155, %v1715
    %v2221 = vsel %vm2211, %v2156, %v1717
    %v2222 = vsel %vm2211, %v2157, %v1719
    %v2223 = vsel %vm2211, %v2158, %v1721
    %v2224 = vsel %vm2211, %v2159, %v1723
    %v2225 = vsel %vm2211, %v2160, %v1725
    %v2226 = vsel %vm2211, %v2161, %v1727
    %v2227 = vsel %vm2211, %v2162, %v1729
    %v2228 = vsel %vm2211, %v2163, %v1731
    %v2229 = vsel %vm2211, %v2164, %v1733
    %v2230 = vsel %vm2211, %v2165, %v1735
    %v2231 = vsel %vm2211, %v2166, %v1737
    %v2232 = vsel %vm2211, %v2167, %v1739
    %v2233 = vsel %vm2211, %v2168, %v1741
    %v2234 = vsel %vm2211, %v2169, %v1743
    %v2235 = vsel %vm2211, %v2170, %v1745
    %v2236 = vsel %vm2211, %v2171, %v1747
    %v2237 = vsel %vm2211, %v2172, %v1749
    %v2238 = vsel %vm2211, %v2173, %v1751
    %v2239 = vsel %vm2211, %v2174, %v1753
    %v2240 = vsel %vm2211, %v2175, %v1755
    %v2241 = vsel %vm2211, %v2176, %v1757
    %v2242 = vsel %vm2211, %v2177, %v1759
    %v2243 = vsel %vm2211, %v2178, %v1761
    %v2244 = vsel %vm2211, %v2179, %v1763
    %v2245 = vsel %vm2211, %v2180, %v1765
    %v2246 = vsel %vm2211, %v2181, %v1767
    %v2247 = vsel %vm2211, %v2182, %v1769
    %v2248 = vsel %vm2211, %v2183, %v1771
    %v2249 = vsel %vm2211, %v2184, %v1773
    %v2250 = vsel %vm2211, %v2185, %v1775
    %v2251 = vsel %vm2211, %v2186, %v1777
    %v2252 = vsel %vm2211, %v2187, %v1779
    %v2253 = vsel %vm2211, %v2188, %v1781
    %v2254 = vsel %vm2211, %v2189, %v1783
    %v2255 = vsel %vm2211, %v2190, %v1785
    %v2256 = vsel %vm2211, %v2191, %v1787
    %v2257 = vsel %vm2211, %v2192, %v1789
    %v2258 = vsel %vm2211, %v2193, %v1791
    %v2259 = vsel %vm2211, %v2194, %v1793
    %v2260 = vsel %vm2211, %v2195, %v1795
    %v2261 = vsel %vm2211, %v2196, %v1797
    %v2262 = vsel %vm2211, %v2197, %v1799
    %v2263 = vsel %vm2211, %v2198, %v1801
    %v2264 = vsel %vm2211, %v2199, %v1803
    %v2265 = vsel %vm2211, %v2200, %v1805
    %v2266 = vsel %vm2211, %v2201, %v1807
    %v2267 = vsel %vm2211, %v2202, %v1809
    %v2268 = vsel %vm2211, %v2203, %v1811
    %v2269 = vsel %vm2211, %v2204, %v1813
    %v2270 = vsel %vm2211, %v2205, %v1815
    %v2271 = vsel %vm2211, %v2206, %v1817
    %v2272 = vsel %vm2211, %v2207, %v1819
    %v2273 = vsel %vm2211, %v2208, %v1821
    %v2274 = vsel %vm2211, %v2209, %v1823
    %v2275 = vsel %vm2211, %v2210, %v1825
    %vm2276 = vcmask 195584
    %v2277 = vsel %vm2276, %v2212, %v1955
    %v2278 = vsel %vm2276, %v2213, %v1957
    %v2279 = vsel %vm2276, %v2214, %v1959
    %v2280 = vsel %vm2276, %v2215, %v1961
    %v2281 = vsel %vm2276, %v2216, %v1963
    %v2282 = vsel %vm2276, %v2217, %v1965
    %v2283 = vsel %vm2276, %v2218, %v1967
    %v2284 = vsel %vm2276, %v2219, %v1969
    %v2285 = vsel %vm2276, %v2220, %v1971
    %v2286 = vsel %vm2276, %v2221, %v1973
    %v2287 = vsel %vm2276, %v2222, %v1975
    %v2288 = vsel %vm2276, %v2223, %v1977
    %v2289 = vsel %vm2276, %v2224, %v1979
    %v2290 = vsel %vm2276, %v2225, %v1981
    %v2291 = vsel %vm2276, %v2226, %v1983
    %v2292 = vsel %vm2276, %v2227, %v1985
    %v2293 = vsel %vm2276, %v2228, %v1987
    %v2294 = vsel %vm2276, %v2229, %v1989
    %v2295 = vsel %vm2276, %v2230, %v1991
    %v2296 = vsel %vm2276, %v2231, %v1993
    %v2297 = vsel %vm2276, %v2232, %v1995
    %v2298 = vsel %vm2276, %v2233, %v1997
    %v2299 = vsel %vm2276, %v2234, %v1999
    %v2300 = vsel %vm2276, %v2235, %v2001
    %v2301 = vsel %vm2276, %v2236, %v2003
    %v2302 = vsel %vm2276, %v2237, %v2005
    %v2303 = vsel %vm2276, %v2238, %v2007
    %v2304 = vsel %vm2276, %v2239, %v2009
    %v2305 = vsel %vm2276, %v2240, %v2011
    %v2306 = vsel %vm2276, %v2241, %v2013
    %v2307 = vsel %vm2276, %v2242, %v2015
    %v2308 = vsel %vm2276, %v2243, %v2017
    %v2309 = vsel %vm2276, %v2244, %v2019
    %v2310 = vsel %vm2276, %v2245, %v2021
    %v2311 = vsel %vm2276, %v2246, %v2023
    %v2312 = vsel %vm2276, %v2247, %v2025
    %v2313 = vsel %vm2276, %v2248, %v2027
    %v2314 = vsel %vm2276, %v2249, %v2029
    %v2315 = vsel %vm2276, %v2250, %v2031
    %v2316 = vsel %vm2276, %v2251, %v2033
    %v2317 = vsel %vm2276, %v2252, %v2035
    %v2318 = vsel %vm2276, %v2253, %v2037
    %v2319 = vsel %vm2276, %v2254, %v2039
    %v2320 = vsel %vm2276, %v2255, %v2041
    %v2321 = vsel %vm2276, %v2256, %v2043
    %v2322 = vsel %vm2276, %v2257, %v2045
    %v2323 = vsel %vm2276, %v2258, %v2047
    %v2324 = vsel %vm2276, %v2259, %v2049
    %v2325 = vsel %vm2276, %v2260, %v2051
    %v2326 = vsel %vm2276, %v2261, %v2053
    %v2327 = vsel %vm2276, %v2262, %v2055
    %v2328 = vsel %vm2276, %v2263, %v2057
    %v2329 = vsel %vm2276, %v2264, %v2059
    %v2330 = vsel %vm2276, %v2265, %v2061
    %v2331 = vsel %vm2276, %v2266, %v2063
    %v2332 = vsel %vm2276, %v2267, %v2065
    %v2333 = vsel %vm2276, %v2268, %v2067
    %v2334 = vsel %vm2276, %v2269, %v2069
    %v2335 = vsel %vm2276, %v2270, %v2071
    %v2336 = vsel %vm2276, %v2271, %v2073
    %v2337 = vsel %vm2276, %v2272, %v2075
    %v2338 = vsel %vm2276, %v2273, %v2077
    %v2339 = vsel %vm2276, %v2274, %v2079
    %v2340 = vsel %vm2276, %v2275, %v2081
    %vm2341 = vcmask 261120
    %2342 = vst.msk [vmem:[#allocation2] sm:$0xff] %vm2341, %v2277
    %2343 = vst.msk [vmem:[#allocation2 + $0x8] sm:$0xff] %vm2341, %v2278
    %2344 = vst.msk [vmem:[#allocation2 + $0x10] sm:$0xff] %vm2341, %v2279
    %2345 = vst.msk [vmem:[#allocation2 + $0x18] sm:$0xff] %vm2341, %v2280
    %2346 = vst.msk [vmem:[#allocation2 + $0x20] sm:$0xff] %vm2341, %v2281
    %2347 = vst.msk [vmem:[#allocation2 + $0x28] sm:$0xff] %vm2341, %v2282
    %2348 = vst.msk [vmem:[#allocation2 + $0x30] sm:$0xff] %vm2341, %v2283
    %2349 = vst.msk [vmem:[#allocation2 + $0x38] sm:$0xff] %vm2341, %v2284
    %2350 = vst.msk [vmem:[#allocation2 + $0x40] sm:$0xff] %vm2341, %v2285
    %2351 = vst.msk [vmem:[#allocation2 + $0x48] sm:$0xff] %vm2341, %v2286
    %2352 = vst.msk [vmem:[#allocation2 + $0x50] sm:$0xff] %vm2341, %v2287
    %2353 = vst.msk [vmem:[#allocation2 + $0x58] sm:$0xff] %vm2341, %v2288
    %2354 = vst.msk [vmem:[#allocation2 + $0x60] sm:$0xff] %vm2341, %v2289
    %2355 = vst.msk [vmem:[#allocation2 + $0x68] sm:$0xff] %vm2341, %v2290
    %2356 = vst.msk [vmem:[#allocation2 + $0x70] sm:$0xff] %vm2341, %v2291
    %2357 = vst.msk [vmem:[#allocation2 + $0x78] sm:$0xff] %vm2341, %v2292
    %2358 = vst.msk [vmem:[#allocation2 + $0x80] sm:$0xff] %vm2341, %v2293
    %2359 = vst.msk [vmem:[#allocation2 + $0x88] sm:$0xff] %vm2341, %v2294
    %2360 = vst.msk [vmem:[#allocation2 + $0x90] sm:$0xff] %vm2341, %v2295
    %2361 = vst.msk [vmem:[#allocation2 + $0x98] sm:$0xff] %vm2341, %v2296
    %2362 = vst.msk [vmem:[#allocation2 + $0xa0] sm:$0xff] %vm2341, %v2297
    %2363 = vst.msk [vmem:[#allocation2 + $0xa8] sm:$0xff] %vm2341, %v2298
    %2364 = vst.msk [vmem:[#allocation2 + $0xb0] sm:$0xff] %vm2341, %v2299
    %2365 = vst.msk [vmem:[#allocation2 + $0xb8] sm:$0xff] %vm2341, %v2300
    %2366 = vst.msk [vmem:[#allocation2 + $0xc0] sm:$0xff] %vm2341, %v2301
    %2367 = vst.msk [vmem:[#allocation2 + $0xc8] sm:$0xff] %vm2341, %v2302
    %2368 = vst.msk [vmem:[#allocation2 + $0xd0] sm:$0xff] %vm2341, %v2303
    %2369 = vst.msk [vmem:[#allocation2 + $0xd8] sm:$0xff] %vm2341, %v2304
    %2370 = vst.msk [vmem:[#allocation2 + $0xe0] sm:$0xff] %vm2341, %v2305
    %2371 = vst.msk [vmem:[#allocation2 + $0xe8] sm:$0xff] %vm2341, %v2306
    %2372 = vst.msk [vmem:[#allocation2 + $0xf0] sm:$0xff] %vm2341, %v2307
    %2373 = vst.msk [vmem:[#allocation2 + $0xf8] sm:$0xff] %vm2341, %v2308
    %2374 = vst.msk [vmem:[#allocation2 + $0x100] sm:$0xff] %vm2341, %v2309
    %2375 = vst.msk [vmem:[#allocation2 + $0x108] sm:$0xff] %vm2341, %v2310
    %2376 = vst.msk [vmem:[#allocation2 + $0x110] sm:$0xff] %vm2341, %v2311
    %2377 = vst.msk [vmem:[#allocation2 + $0x118] sm:$0xff] %vm2341, %v2312
    %2378 = vst.msk [vmem:[#allocation2 + $0x120] sm:$0xff] %vm2341, %v2313
    %2379 = vst.msk [vmem:[#allocation2 + $0x128] sm:$0xff] %vm2341, %v2314
    %2380 = vst.msk [vmem:[#allocation2 + $0x130] sm:$0xff] %vm2341, %v2315
    %2381 = vst.msk [vmem:[#allocation2 + $0x138] sm:$0xff] %vm2341, %v2316
    %2382 = vst.msk [vmem:[#allocation2 + $0x140] sm:$0xff] %vm2341, %v2317
    %2383 = vst.msk [vmem:[#allocation2 + $0x148] sm:$0xff] %vm2341, %v2318
    %2384 = vst.msk [vmem:[#allocation2 + $0x150] sm:$0xff] %vm2341, %v2319
    %2385 = vst.msk [vmem:[#allocation2 + $0x158] sm:$0xff] %vm2341, %v2320
    %2386 = vst.msk [vmem:[#allocation2 + $0x160] sm:$0xff] %vm2341, %v2321
    %2387 = vst.msk [vmem:[#allocation2 + $0x168] sm:$0xff] %vm2341, %v2322
    %2388 = vst.msk [vmem:[#allocation2 + $0x170] sm:$0xff] %vm2341, %v2323
    %2389 = vst.msk [vmem:[#allocation2 + $0x178] sm:$0xff] %vm2341, %v2324
    %2390 = vst.msk [vmem:[#allocation2 + $0x180] sm:$0xff] %vm2341, %v2325
    %2391 = vst.msk [vmem:[#allocation2 + $0x188] sm:$0xff] %vm2341, %v2326
    %2392 = vst.msk [vmem:[#allocation2 + $0x190] sm:$0xff] %vm2341, %v2327
    %2393 = vst.msk [vmem:[#allocation2 + $0x198] sm:$0xff] %vm2341, %v2328
    %2394 = vst.msk [vmem:[#allocation2 + $0x1a0] sm:$0xff] %vm2341, %v2329
    %2395 = vst.msk [vmem:[#allocation2 + $0x1a8] sm:$0xff] %vm2341, %v2330
    %2396 = vst.msk [vmem:[#allocation2 + $0x1b0] sm:$0xff] %vm2341, %v2331
    %2397 = vst.msk [vmem:[#allocation2 + $0x1b8] sm:$0xff] %vm2341, %v2332
    %2398 = vst.msk [vmem:[#allocation2 + $0x1c0] sm:$0xff] %vm2341, %v2333
    %2399 = vst.msk [vmem:[#allocation2 + $0x1c8] sm:$0xff] %vm2341, %v2334
    %2400 = vst.msk [vmem:[#allocation2 + $0x1d0] sm:$0xff] %vm2341, %v2335
    %2401 = vst.msk [vmem:[#allocation2 + $0x1d8] sm:$0xff] %vm2341, %v2336
    %2402 = vst.msk [vmem:[#allocation2 + $0x1e0] sm:$0xff] %vm2341, %v2337
    %2403 = vst.msk [vmem:[#allocation2 + $0x1e8] sm:$0xff] %vm2341, %v2338
    %2404 = vst.msk [vmem:[#allocation2 + $0x1f0] sm:$0xff] %vm2341, %v2339
    %2405 = vst.msk [vmem:[#allocation2 + $0x1f8] sm:$0xff] %vm2341, %v2340
    // Predicated region
    $region50: #{inception_forward.11} parent=1 // pred_check
      _
    $region51: #{inception_forward.11} parent=1 // pred_check_branch
      %2407 = sbr.rel (0) target = $region53
    $region52: #{inception_forward.11} parent=1 // pred_region
      %s2409 = ssub.s32 8192, 8192
      %2410 = vsyncadd [#allocation3], %s2409
      %s2411 = sshll.u32 [#allocation2], 4
      %s2412 = int_to_ptr.vmem [resolvable:$true] %s2411
      %2417 = dma.vmem_to_hbm [thread:$0]  %s2412, 8192, %s12, [#allocation3], 128, 128, 8
    $region53: #{inception_forward.11} parent=1 // pred_fallthru
      _
    // Predicated region
    $region54: #{inception_forward.11} parent=1 // pred_check
      _
    $region55: #{inception_forward.11} parent=1 // pred_check_branch
      %2419 = sbr.rel (0) target = $region57
    $region56: #{inception_forward.11} parent=1 // pred_region
      %2420 = dma.done [#allocation3], 8192
    $region57: #{inception_forward.11} parent=1 // pred_fallthru
      _
    %2421 = vsyncpa [#allocation3], 1

</llo_original>
